<compile_context>
chip_gen: v7x
topology: tpu7x:2x2x1
jax: 0.10.0
libtpu: 0.0.40
codegen_flags: <defaults>
</compile_context>

<pallas_src>
import functools
import math

import jax
import jax.numpy as jnp
from jax.experimental import pallas as pl
from jax.experimental.pallas import tpu as pltpu

_EPS = 1e-5
_TILE_ROWS = 512  # row tile for the pipelined linear / layernorm kernels


# ---------------------------------------------------------------------------
# Row-tiling helpers
# ---------------------------------------------------------------------------
def _row_tiles(n):
    """Pick a row tile: whole array if small, else 512-row tiles (pipelined)."""
    if n <= _TILE_ROWS:
        return n, 1, n
    g = -(-n // _TILE_ROWS)
    return _TILE_ROWS, g, g * _TILE_ROWS


def _pad_rows(x, n_pad):
    n = x.shape[0]
    if n_pad == n:
        return x
    return jnp.pad(x, ((0, n_pad - n), (0, 0)))


def _row_call(kernel, x, consts, dout):
    """Run `kernel` over row tiles of x; `consts` stay resident at block (0, 0)."""
    n, din = x.shape
    tile, g, n_pad = _row_tiles(n)
    xp = _pad_rows(x, n_pad)
    in_specs = [pl.BlockSpec((tile, din), lambda i: (i, 0))]
    for c in consts:
        in_specs.append(pl.BlockSpec(c.shape, lambda i: (0, 0)))
    out = pl.pallas_call(
        kernel,
        grid=(g,),
        in_specs=in_specs,
        out_specs=pl.BlockSpec((tile, dout), lambda i: (i, 0)),
        out_shape=jax.ShapeDtypeStruct((n_pad, dout), jnp.float32),
        compiler_params=pltpu.CompilerParams(dimension_semantics=("parallel",)),
    )(xp, *consts)
    return out[:n]


# ---------------------------------------------------------------------------
# Kernel bodies: fused linear / layernorm variants
# ---------------------------------------------------------------------------
def _linear_kernel(x_ref, w_ref, b_ref, a_ref, o_ref):
    """o = PReLU(x @ w + b); per-output-column alpha row (ones => plain linear)."""
    y = jnp.dot(x_ref[...], w_ref[...], preferred_element_type=jnp.float32)
    y = y + b_ref[...]
    o_ref[...] = jnp.where(y >= 0.0, y, a_ref[...] * y)


def _layernorm_kernel(x_ref, g_ref, b_ref, o_ref, *, eps):
    x = x_ref[...]
    mean = jnp.mean(x, axis=-1, keepdims=True)
    xc = x - mean
    var = jnp.mean(xc * xc, axis=-1, keepdims=True)
    o_ref[...] = xc * jax.lax.rsqrt(var + eps) * g_ref[...] + b_ref[...]


def _linear_prelu_ln_kernel(x_ref, w_ref, b_ref, a_ref, g_ref, be_ref, o_ref, *, eps):
    """o = LN(PReLU(x @ w + b)) with LN over the output feature dim."""
    y = jnp.dot(x_ref[...], w_ref[...], preferred_element_type=jnp.float32)
    y = y + b_ref[...]
    y = jnp.where(y >= 0.0, y, a_ref[...] * y)
    mean = jnp.mean(y, axis=-1, keepdims=True)
    yc = y - mean
    var = jnp.mean(yc * yc, axis=-1, keepdims=True)
    o_ref[...] = yc * jax.lax.rsqrt(var + eps) * g_ref[...] + be_ref[...]


def _conv_ln_proj_kernel(x_ref, w1_ref, b1_ref, a_ref, g_ref, be_ref,
                         w2_ref, b2_ref, o_ref, *, eps):
    """o = LN(PReLU(x @ w1 + b1)) @ w2 + b2   (conv + act + norm + LSTM in-proj)."""
    y = jnp.dot(x_ref[...], w1_ref[...], preferred_element_type=jnp.float32)
    y = y + b1_ref[...]
    y = jnp.where(y >= 0.0, y, a_ref[...] * y)
    mean = jnp.mean(y, axis=-1, keepdims=True)
    yc = y - mean
    var = jnp.mean(yc * yc, axis=-1, keepdims=True)
    y = yc * jax.lax.rsqrt(var + eps) * g_ref[...] + be_ref[...]
    o_ref[...] = jnp.dot(y, w2_ref[...], preferred_element_type=jnp.float32) + b2_ref[...]


def _ln_linear_kernel(x_ref, g_ref, be_ref, w_ref, b_ref, o_ref, *, eps):
    """o = LN(x) @ w + b   (inter norm + inter-LSTM input projection)."""
    x = x_ref[...]
    mean = jnp.mean(x, axis=-1, keepdims=True)
    xc = x - mean
    var = jnp.mean(xc * xc, axis=-1, keepdims=True)
    y = xc * jax.lax.rsqrt(var + eps) * g_ref[...] + be_ref[...]
    o_ref[...] = jnp.dot(y, w_ref[...], preferred_element_type=jnp.float32) + b_ref[...]


# ---------------------------------------------------------------------------
# Wrappers for the row-tiled kernels
# ---------------------------------------------------------------------------
def pallas_linear(x, w, b, alpha_row=None):
    dout = w.shape[1]
    if alpha_row is None:
        alpha_row = jnp.ones((1, dout), jnp.float32)
    return _row_call(_linear_kernel, x, (w, b.reshape(1, dout), alpha_row), dout)


def pallas_layernorm(x, g, b, eps=_EPS):
    d = x.shape[1]
    return _row_call(functools.partial(_layernorm_kernel, eps=eps), x,
                     (g.reshape(1, d), b.reshape(1, d)), d)


def pallas_linear_prelu_ln(x, w, b, alpha, g, be, eps=_EPS):
    dout = w.shape[1]
    a_row = jnp.broadcast_to(jnp.reshape(alpha, (1, 1)), (1, dout))
    return _row_call(functools.partial(_linear_prelu_ln_kernel, eps=eps), x,
                     (w, b.reshape(1, dout), a_row,
                      g.reshape(1, dout), be.reshape(1, dout)), dout)


def pallas_conv_ln_proj(x, w1, b1, alpha, g, be, w2, b2, eps=_EPS):
    d1 = w1.shape[1]
    d2 = w2.shape[1]
    a_row = jnp.broadcast_to(jnp.reshape(alpha, (1, 1)), (1, d1))
    return _row_call(functools.partial(_conv_ln_proj_kernel, eps=eps), x,
                     (w1, b1.reshape(1, d1), a_row,
                      g.reshape(1, d1), be.reshape(1, d1),
                      w2, b2.reshape(1, d2)), d2)


def pallas_ln_linear(x, g, be, w, b, eps=_EPS):
    d = x.shape[1]
    dout = w.shape[1]
    return _row_call(functools.partial(_ln_linear_kernel, eps=eps), x,
                     (g.reshape(1, d), be.reshape(1, d), w, b.reshape(1, dout)), dout)


# ---------------------------------------------------------------------------
# LSTM kernels (input projections are pre-computed; only h @ W_hh per step)
# ---------------------------------------------------------------------------
def _lstm_cell(gates, c_prev, H):
    i = jax.nn.sigmoid(gates[:, 0 * H:1 * H])
    f = jax.nn.sigmoid(gates[:, 1 * H:2 * H])
    g = jnp.tanh(gates[:, 2 * H:3 * H])
    o = jax.nn.sigmoid(gates[:, 3 * H:4 * H])
    c_new = f * c_prev + i * g
    h_new = o * jnp.tanh(c_new)
    return h_new, c_new


def _lstm_kernel(xp_ref, whh_ref, h0_ref, c0_ref, y_ref, hT_ref, cT_ref, h_s, c_s):
    t = pl.program_id(0)
    H = whh_ref.shape[0]

    @pl.when(t == 0)
    def _():
        h_s[...] = h0_ref[...]
        c_s[...] = c0_ref[...]

    gates = xp_ref[0] + jnp.dot(h_s[...], whh_ref[...],
                                preferred_element_type=jnp.float32)
    h_new, c_new = _lstm_cell(gates, c_s[...], H)
    h_s[...] = h_new
    c_s[...] = c_new
    y_ref[0] = h_new

    @pl.when(t == pl.num_programs(0) - 1)
    def _():
        hT_ref[...] = h_new
        cT_ref[...] = c_new


def pallas_lstm(xp, whh, h0, c0):
    """xp: [T, N, 4H] pre-computed x@W_ih + biases. Returns (y [T,N,H], hT, cT)."""
    T, N, H4 = xp.shape
    H = H4 // 4
    y, hT, cT = pl.pallas_call(
        _lstm_kernel,
        grid=(T,),
        in_specs=[
            pl.BlockSpec((1, N, 4 * H), lambda t: (t, 0, 0)),
            pl.BlockSpec((H, 4 * H), lambda t: (0, 0)),
            pl.BlockSpec((N, H), lambda t: (0, 0)),
            pl.BlockSpec((N, H), lambda t: (0, 0)),
        ],
        out_specs=[
            pl.BlockSpec((1, N, H), lambda t: (t, 0, 0)),
            pl.BlockSpec((N, H), lambda t: (0, 0)),
            pl.BlockSpec((N, H), lambda t: (0, 0)),
        ],
        out_shape=[
            jax.ShapeDtypeStruct((T, N, H), jnp.float32),
            jax.ShapeDtypeStruct((N, H), jnp.float32),
            jax.ShapeDtypeStruct((N, H), jnp.float32),
        ],
        scratch_shapes=[pltpu.VMEM((N, H), jnp.float32),
                        pltpu.VMEM((N, H), jnp.float32)],
        compiler_params=pltpu.CompilerParams(dimension_semantics=("arbitrary",)),
    )(xp, whh, h0, c0)
    return y, hT, cT


def _bilstm_kernel(xpf_ref, xpb_ref, whhf_ref, whhb_ref, yf_ref, yb_ref,
                   hf_s, cf_s, hb_s, cb_s):
    t = pl.program_id(0)
    H = whhf_ref.shape[0]

    @pl.when(t == 0)
    def _():
        hf_s[...] = jnp.zeros_like(hf_s)
        cf_s[...] = jnp.zeros_like(cf_s)
        hb_s[...] = jnp.zeros_like(hb_s)
        cb_s[...] = jnp.zeros_like(cb_s)

    gf = xpf_ref[0] + jnp.dot(hf_s[...], whhf_ref[...],
                              preferred_element_type=jnp.float32)
    hf, cf = _lstm_cell(gf, cf_s[...], H)
    hf_s[...] = hf
    cf_s[...] = cf
    yf_ref[0] = hf

    gb = xpb_ref[0] + jnp.dot(hb_s[...], whhb_ref[...],
                              preferred_element_type=jnp.float32)
    hb, cb = _lstm_cell(gb, cb_s[...], H)
    hb_s[...] = hb
    cb_s[...] = cb
    yb_ref[0] = hb


def pallas_bilstm(xpf, xpb, whh_f, whh_b):
    """Fused fwd+bwd LSTM (zero init state).

    xpf / xpb: [T, N, 4H] pre-computed input projections.  The backward direction
    reads/writes via reversed index_maps, so no [::-1] copies are materialized.
    Returns yf, yb each [T, N, H] in forward time order.
    """
    T, N, H4 = xpf.shape
    H = H4 // 4
    yf, yb = pl.pallas_call(
        _bilstm_kernel,
        grid=(T,),
        in_specs=[
            pl.BlockSpec((1, N, 4 * H), lambda t: (t, 0, 0)),
            pl.BlockSpec((1, N, 4 * H), lambda t: (T - 1 - t, 0, 0)),
            pl.BlockSpec((H, 4 * H), lambda t: (0, 0)),
            pl.BlockSpec((H, 4 * H), lambda t: (0, 0)),
        ],
        out_specs=[
            pl.BlockSpec((1, N, H), lambda t: (t, 0, 0)),
            pl.BlockSpec((1, N, H), lambda t: (T - 1 - t, 0, 0)),
        ],
        out_shape=[
            jax.ShapeDtypeStruct((T, N, H), jnp.float32),
            jax.ShapeDtypeStruct((T, N, H), jnp.float32),
        ],
        scratch_shapes=[pltpu.VMEM((N, H), jnp.float32),
                        pltpu.VMEM((N, H), jnp.float32),
                        pltpu.VMEM((N, H), jnp.float32),
                        pltpu.VMEM((N, H), jnp.float32)],
        compiler_params=pltpu.CompilerParams(dimension_semantics=("arbitrary",)),
    )(xpf, xpb, whh_f, whh_b)
    return yf, yb


# ---------------------------------------------------------------------------
# Local (windowed, causal) attention, blocked over queries
# ---------------------------------------------------------------------------
def _local_attn_kernel(q_ref, k_ref, v_ref, o_ref, *, win, tq, scale):
    i = pl.program_id(0)
    t0 = i * tq
    if tq % 8 == 0:
        t0 = pl.multiple_of(t0, 8)
    lw = tq + win - 1

    q = q_ref[...]                               # [Bh, tq, Dq]
    k = k_ref[:, pl.ds(t0, lw), :]               # window of resident K: [Bh, lw, Dq]
    v = v_ref[:, pl.ds(t0, lw), :]               # [Bh, lw, Dv]

    s = jnp.einsum("bqd,bkd->bqk", q, k,
                   preferred_element_type=jnp.float32) * scale      # [Bh, tq, lw]
    qi = jax.lax.broadcasted_iota(jnp.int32, s.shape, 1)
    kj = jax.lax.broadcasted_iota(jnp.int32, s.shape, 2)
    band = (kj >= qi) & (kj < qi + win)          # each query sees its L-window
    s = jnp.where(band, s, -jnp.inf)
    m = jnp.max(s, axis=-1, keepdims=True)
    p = jnp.where(band, jnp.exp(s - m), 0.0)
    denom = jnp.sum(p, axis=-1, keepdims=True)
    p = p * pl.reciprocal(denom, approx=True)
    o_ref[...] = jnp.einsum("bqk,bkd->bqd", p, v,
                            preferred_element_type=jnp.float32)


def pallas_local_attention(q, k_full, v_full, win, scale):
    """q: [Bh, T, Dq]; k_full: [Bh, T+win-1, Dq]; v_full: [Bh, T+win-1, Dv]."""
    Bh, T, Dq = q.shape
    Dv = v_full.shape[2]
    tq = T if T <= 128 else 128
    Tp = -(-T // tq) * tq
    if Tp != T:
        q = jnp.pad(q, ((0, 0), (0, Tp - T), (0, 0)))
        k_full = jnp.pad(k_full, ((0, 0), (0, Tp - T), (0, 0)))
        v_full = jnp.pad(v_full, ((0, 0), (0, Tp - T), (0, 0)))
    Lk = k_full.shape[1]                          # Tp + win - 1
    out = pl.pallas_call(
        functools.partial(_local_attn_kernel, win=win, tq=tq, scale=scale),
        grid=(Tp // tq,),
        in_specs=[
            pl.BlockSpec((Bh, tq, Dq), lambda i: (0, i, 0)),
            pl.BlockSpec((Bh, Lk, Dq), lambda i: (0, 0, 0)),
            pl.BlockSpec((Bh, Lk, Dv), lambda i: (0, 0, 0)),
        ],
        out_specs=pl.BlockSpec((Bh, tq, Dv), lambda i: (0, i, 0)),
        out_shape=jax.ShapeDtypeStruct((Bh, Tp, Dv), jnp.float32),
        compiler_params=pltpu.CompilerParams(dimension_semantics=("parallel",)),
    )(q, k_full, v_full)
    return out[:, :T]


# ---------------------------------------------------------------------------
# GridNetBlock forward (conv_lstm=True, use_attn=True branch)
# ---------------------------------------------------------------------------
def gridnet_block_forward(x, params, state, cfg):
    B, T, Qf, C = x.shape
    down = cfg["lstm_down"]
    H = cfg["hidden"]
    nh = cfg["n_head"]
    E = cfg["E"]
    Vd = C // nh
    L = cfg["local_atten_len"]
    input_ = x

    # ---- intra (frequency) path ------------------------------------------
    # conv(k=stride) + PReLU + LN(C) + BiLSTM-input-proj fused into one kernel.
    N = B * T
    Qd = Qf // down
    xr = x.reshape(N, Qf, C)[:, :Qd * down, :].reshape(N * Qd, down * C)
    # Conv1d(kernel=stride=down) == matmul on unfolded windows; weight [Cout,Cin,k]
    w_conv = jnp.transpose(params["conv_w"], (2, 1, 0)).reshape(down * C, C)
    wih_cat = jnp.concatenate([params["intra_f_wih"], params["intra_b_wih"]], axis=1)
    bih_cat = jnp.concatenate([params["intra_f_b"], params["intra_b_b"]], axis=0)
    xp = pallas_conv_ln_proj(xr, w_conv, params["conv_b"], params["act_alpha"],
                             params["norm_w"], params["norm_b"],
                             wih_cat, bih_cat)                  # [N*Qd, 8H] lane-dense
    xp = xp.reshape(N, Qd, 8 * H).transpose(1, 0, 2)            # [Qd, N, 8H] time-major
    yf, yb = pallas_bilstm(xp[:, :, :4 * H], xp[:, :, 4 * H:],
                           params["intra_f_whh"], params["intra_b_whh"])
    y = jnp.concatenate([yf, yb], axis=-1)                      # [Qd, N, 2H]
    y = y.transpose(1, 0, 2).reshape(N * Qd, 2 * H)

    # ConvTranspose1d(kernel=stride=down, output_padding=pad) == matmul + reshape.
    w_dec = jnp.transpose(params["deconv_w"], (0, 2, 1)).reshape(2 * H, down * C)
    b_dec = jnp.tile(params["deconv_b"], down)
    dec = pallas_linear(y, w_dec, b_dec)
    dec = dec.reshape(N, Qd * down, C)
    pad = Qf - Qd * down
    if pad > 0:
        # TODO(synk): bias-only fill is exact only for kernel_size == stride deconv.
        dec = jnp.concatenate(
            [dec, jnp.broadcast_to(params["deconv_b"], (N, pad, C))], axis=1)
    intra = dec.reshape(B, T, Qf, C) + input_
    input_ = intra

    # ---- inter (time) path: fused LN + LSTM in-proj -> LSTM -> Linear -----
    xp_i = pallas_ln_linear(intra.reshape(-1, C),
                            params["inter_norm_w"], params["inter_norm_b"],
                            params["inter_wih"], params["inter_b"])     # [B*T*Qf, 4H]
    xp_i = xp_i.reshape(B, T, Qf, 4 * H).transpose(1, 0, 2, 3).reshape(T, B * Qf, 4 * H)
    h0 = state["h0"][0]
    c0 = state["c0"][0]
    yi, hT, cT = pallas_lstm(xp_i, params["inter_whh"], h0, c0)
    new_state = dict(state)
    new_state["h0"] = hT[None]
    new_state["c0"] = cT[None]
    yl = pallas_linear(yi.reshape(T * B * Qf, H),
                       params["inter_lin_w"], params["inter_lin_b"])
    yl = yl.reshape(T, B, Qf, C).transpose(1, 0, 2, 3)
    inter = yl + input_
    out = inter

    # ---- local causal self-attention over time ----------------------------
    flat = inter.reshape(B * T * Qf, C)
    dq = nh * E
    dk = nh * E
    dv = nh * Vd
    # Fused Q|K|V projection + per-section PReLU in a single matmul.
    w_qkv = jnp.concatenate([params["q_w"], params["k_w"], params["v_w"]], axis=1)
    b_qkv = jnp.concatenate([params["q_b"], params["k_b"], params["v_b"]], axis=0)
    a_qkv = jnp.concatenate([
        jnp.broadcast_to(params["q_alpha"], (dq,)),
        jnp.broadcast_to(params["k_alpha"], (dk,)),
        jnp.broadcast_to(params["v_alpha"], (dv,))]).reshape(1, dq + dk + dv)
    qkv = pallas_linear(flat, w_qkv, b_qkv, a_qkv)              # [B*T*Qf, dq+dk+dv]

    def to_heads(p, d_head):
        p = p.reshape(B, T, Qf, nh, d_head)
        return jnp.transpose(p, (0, 3, 1, 2, 4)).reshape(B * nh, T, Qf * d_head)

    Qh = to_heads(qkv[:, :dq], E)
    Kh = to_heads(qkv[:, dq:dq + dk], E)
    Vh = to_heads(qkv[:, dq + dk:], Vd)
    Qh = pallas_layernorm(Qh.reshape(B * nh * T, Qf * E),
                          params["q_ln_w"], params["q_ln_b"]).reshape(B * nh, T, Qf * E)
    Kh = pallas_layernorm(Kh.reshape(B * nh * T, Qf * E),
                          params["k_ln_w"], params["k_ln_b"]).reshape(B * nh, T, Qf * E)
    Vh = pallas_layernorm(Vh.reshape(B * nh * T, Qf * Vd),
                          params["v_ln_w"], params["v_ln_b"]).reshape(B * nh, T, Qf * Vd)

    K_full = jnp.concatenate([state["K_buf"], Kh], axis=1)      # [B*nh, L-1+T, Qf*E]
    V_full = jnp.concatenate([state["V_buf"], Vh], axis=1)      # [B*nh, L-1+T, Qf*Vd]
    new_state["K_buf"] = K_full[:, K_full.shape[1] - (L - 1):]
    new_state["V_buf"] = V_full[:, V_full.shape[1] - (L - 1):]

    scale = 1.0 / math.sqrt(Qf * E)
    att = pallas_local_attention(Qh, K_full, V_full, L, scale)  # [B*nh, T, Qf*Vd]
    att = att.reshape(B, nh, T, Qf, Vd)
    att = jnp.transpose(att, (0, 2, 3, 1, 4)).reshape(B * T, Qf * C)

    # Fused proj Linear + PReLU + LayerNorm(Qf*C) via a block-diagonal weight:
    # 256-lane-dense input/output, no intermediate HBM round trip.
    w_bd = jnp.kron(jnp.eye(Qf, dtype=jnp.float32), params["proj_w"])
    b_bd = jnp.tile(params["proj_b"], Qf)
    pr = pallas_linear_prelu_ln(att, w_bd, b_bd, params["proj_alpha"],
                                params["proj_ln_w"], params["proj_ln_b"])
    out = out + pr.reshape(B, T, Qf, C)
    return out, new_state


# ---------------------------------------------------------------------------
# Deterministic synthetic parameter / state init (shapes from __init__)
# ---------------------------------------------------------------------------
def init_params(key, cfg):
    C = cfg["emb_dim"]; H = cfg["hidden"]; down = cfg["lstm_down"]
    Qf = cfg["n_freqs"]; nh = cfg["n_head"]; E = cfg["E"]; Vd = C // nh
    keys = iter(jax.random.split(key, 32))

    def u(shape, scale=0.1):
        return jax.random.uniform(next(keys), shape, jnp.float32, -scale, scale)

    def ones(n): return jnp.ones((n,), jnp.float32)
    def zeros(n): return jnp.zeros((n,), jnp.float32)
    alpha = jnp.full((1,), 0.25, jnp.float32)

    return {
        "conv_w": u((C, C, down)), "conv_b": u((C,)), "act_alpha": alpha,
        "norm_w": ones(C), "norm_b": zeros(C),
        "intra_f_wih": u((C, 4 * H)), "intra_f_whh": u((H, 4 * H)), "intra_f_b": u((4 * H,)),
        "intra_b_wih": u((C, 4 * H)), "intra_b_whh": u((H, 4 * H)), "intra_b_b": u((4 * H,)),
        "deconv_w": u((2 * H, C, down)), "deconv_b": u((C,)),
        "inter_norm_w": ones(C), "inter_norm_b": zeros(C),
        "inter_wih": u((C, 4 * H)), "inter_whh": u((H, 4 * H)), "inter_b": u((4 * H,)),
        "inter_lin_w": u((H, C)), "inter_lin_b": u((C,)),
        "q_w": u((C, nh * E)), "q_b": u((nh * E,)), "q_alpha": alpha,
        "q_ln_w": ones(Qf * E), "q_ln_b": zeros(Qf * E),
        "k_w": u((C, nh * E)), "k_b": u((nh * E,)), "k_alpha": alpha,
        "k_ln_w": ones(Qf * E), "k_ln_b": zeros(Qf * E),
        "v_w": u((C, nh * Vd)), "v_b": u((nh * Vd,)), "v_alpha": alpha,
        "v_ln_w": ones(Qf * Vd), "v_ln_b": zeros(Qf * Vd),
        "proj_w": u((C, C)), "proj_b": u((C,)), "proj_alpha": alpha,
        "proj_ln_w": ones(Qf * C), "proj_ln_b": zeros(Qf * C),
    }


def init_state(cfg, B):
    C = cfg["emb_dim"]; H = cfg["hidden"]; Qf = cfg["n_freqs"]
    nh = cfg["n_head"]; E = cfg["E"]; Vd = C // nh; L = cfg["local_atten_len"]
    return {
        "K_buf": jnp.zeros((B * nh, L - 1, E * Qf), jnp.float32),
        "V_buf": jnp.zeros((B * nh, L - 1, Vd * Qf), jnp.float32),
        "h0": jnp.zeros((1, B * Qf, H), jnp.float32),
        "c0": jnp.zeros((1, B * Qf, H), jnp.float32),
    }


if __name__ == "__main__":
    cfg = dict(emb_dim=16, emb_ks=4, emb_hs=1, n_freqs=16, hidden=16,
               lstm_down=2, n_head=4, local_atten_len=4, approx_qk_dim=64)
    cfg["E"] = math.ceil(cfg["approx_qk_dim"] * 1.0 / cfg["n_freqs"])

    B, T = 2, 8
    key = jax.random.PRNGKey(0)
    kx, kp = jax.random.split(key)
    x = jax.random.normal(kx, (B, T, cfg["n_freqs"], cfg["emb_dim"]), jnp.float32)
    params = init_params(kp, cfg)
    state = init_state(cfg, B)

    fwd = jax.jit(lambda xx, pp, ss: gridnet_block_forward(xx, pp, ss, cfg))
    out, new_state = fwd(x, params, state)
    jax.block_until_ready((out, new_state))

    assert out.shape == x.shape
    assert new_state["h0"].shape == state["h0"].shape
    assert new_state["c0"].shape == state["c0"].shape
    assert new_state["K_buf"].shape == state["K_buf"].shape
    assert new_state["V_buf"].shape == state["V_buf"].shape
    assert bool(jnp.isfinite(out).all())
    print("KERNEL_OK")
</pallas_src>

<mosaic_0001>
module attributes {stable_mosaic.version = 11 : i64} {
  func.func @_conv_ln_proj_kernel(%arg0: i32, %arg1: memref<128x32xf32, #tpu.memory_space<vmem>>, %arg2: memref<32x16xf32, #tpu.memory_space<vmem>>, %arg3: memref<1x16xf32, #tpu.memory_space<vmem>>, %arg4: memref<1x16xf32, #tpu.memory_space<vmem>>, %arg5: memref<1x16xf32, #tpu.memory_space<vmem>>, %arg6: memref<1x16xf32, #tpu.memory_space<vmem>>, %arg7: memref<16x128xf32, #tpu.memory_space<vmem>>, %arg8: memref<1x128xf32, #tpu.memory_space<vmem>>, %arg9: memref<128x128xf32, #tpu.memory_space<vmem>>) attributes {dimension_semantics = [#tpu.dimension_semantics<parallel>], iteration_bounds = array<i64: 1>, scalar_prefetch = 0 : i64, scratch_operands = 0 : i64, tpu.core_type = #tpu.core_type<tc>, window_params = [{transform_indices = @transform_0, window_bounds = array<i64: 128, 32>}, {pipeline_mode = #tpu.pipeline_mode<synchronous>, transform_indices = @transform_1, window_bounds = array<i64: 32, 16>}, {pipeline_mode = #tpu.pipeline_mode<synchronous>, transform_indices = @transform_2, window_bounds = array<i64: 1, 16>}, {pipeline_mode = #tpu.pipeline_mode<synchronous>, transform_indices = @transform_3, window_bounds = array<i64: 1, 16>}, {pipeline_mode = #tpu.pipeline_mode<synchronous>, transform_indices = @transform_4, window_bounds = array<i64: 1, 16>}, {pipeline_mode = #tpu.pipeline_mode<synchronous>, transform_indices = @transform_5, window_bounds = array<i64: 1, 16>}, {pipeline_mode = #tpu.pipeline_mode<synchronous>, transform_indices = @transform_6, window_bounds = array<i64: 16, 128>}, {pipeline_mode = #tpu.pipeline_mode<synchronous>, transform_indices = @transform_7, window_bounds = array<i64: 1, 128>}, {transform_indices = @transform_8, window_bounds = array<i64: 128, 128>}]} {
    %c0 = arith.constant 0 : index
    %c0_0 = arith.constant 0 : index
    %0 = vector.load %arg1[%c0, %c0_0] : memref<128x32xf32, #tpu.memory_space<vmem>>, vector<128x32xf32>
    %c0_1 = arith.constant 0 : index
    %c0_2 = arith.constant 0 : index
    %1 = vector.load %arg2[%c0_1, %c0_2] : memref<32x16xf32, #tpu.memory_space<vmem>>, vector<32x16xf32>
    %cst = arith.constant dense<0.000000e+00> : vector<128x16xf32>
    %2 = tpu.matmul %0, %1, %cst {dimension_numbers = #tpu.dot_dimension_numbers<[1], [0], [0], [1], [0, 0, 1, 1], [], []>} : vector<128x32xf32>, vector<32x16xf32>, vector<128x16xf32> -> vector<128x16xf32>
    %c0_3 = arith.constant 0 : index
    %c0_4 = arith.constant 0 : index
    %3 = vector.load %arg3[%c0_3, %c0_4] : memref<1x16xf32, #tpu.memory_space<vmem>>, vector<1x16xf32>
    %4 = vector.broadcast %3 : vector<1x16xf32> to vector<128x16xf32>
    %5 = arith.addf %2, %4 : vector<128x16xf32>
    %cst_5 = arith.constant 0.000000e+00 : f32
    %6 = vector.broadcast %cst_5 : f32 to vector<128x16xf32>
    %7 = arith.cmpf oge, %5, %6 : vector<128x16xf32>
    %c0_6 = arith.constant 0 : index
    %c0_7 = arith.constant 0 : index
    %8 = vector.load %arg4[%c0_6, %c0_7] : memref<1x16xf32, #tpu.memory_space<vmem>>, vector<1x16xf32>
    %9 = vector.broadcast %8 : vector<1x16xf32> to vector<128x16xf32>
    %10 = arith.mulf %9, %5 : vector<128x16xf32>
    %11 = arith.select %7, %5, %10 : vector<128x16xi1>, vector<128x16xf32>
    %cst_8 = arith.constant dense<0.000000e+00> : vector<128xf32>
    %12 = vector.multi_reduction <add>, %11, %cst_8 [1] : vector<128x16xf32> to vector<128xf32>
    %13 = vector.shape_cast %12 : vector<128xf32> to vector<128x1xf32>
    %cst_9 = arith.constant 1.600000e+01 : f32
    %14 = vector.broadcast %cst_9 : f32 to vector<128x1xf32>
    %15 = arith.divf %13, %14 : vector<128x1xf32>
    %16 = vector.broadcast %15 : vector<128x1xf32> to vector<128x16xf32>
    %17 = arith.subf %11, %16 : vector<128x16xf32>
    %18 = arith.mulf %17, %17 : vector<128x16xf32>
    %cst_10 = arith.constant dense<0.000000e+00> : vector<128xf32>
    %19 = vector.multi_reduction <add>, %18, %cst_10 [1] : vector<128x16xf32> to vector<128xf32>
    %20 = vector.shape_cast %19 : vector<128xf32> to vector<128x1xf32>
    %cst_11 = arith.constant 1.600000e+01 : f32
    %21 = vector.broadcast %cst_11 : f32 to vector<128x1xf32>
    %22 = arith.divf %20, %21 : vector<128x1xf32>
    %cst_12 = arith.constant 9.99999974E-6 : f32
    %23 = vector.broadcast %cst_12 : f32 to vector<128x1xf32>
    %24 = arith.addf %22, %23 : vector<128x1xf32>
    %25 = math.rsqrt %24 : vector<128x1xf32>
    %26 = vector.broadcast %25 : vector<128x1xf32> to vector<128x16xf32>
    %27 = arith.mulf %17, %26 : vector<128x16xf32>
    %c0_13 = arith.constant 0 : index
    %c0_14 = arith.constant 0 : index
    %28 = vector.load %arg5[%c0_13, %c0_14] : memref<1x16xf32, #tpu.memory_space<vmem>>, vector<1x16xf32>
    %29 = vector.broadcast %28 : vector<1x16xf32> to vector<128x16xf32>
    %30 = arith.mulf %27, %29 : vector<128x16xf32>
    %c0_15 = arith.constant 0 : index
    %c0_16 = arith.constant 0 : index
    %31 = vector.load %arg6[%c0_15, %c0_16] : memref<1x16xf32, #tpu.memory_space<vmem>>, vector<1x16xf32>
    %32 = vector.broadcast %31 : vector<1x16xf32> to vector<128x16xf32>
    %33 = arith.addf %30, %32 : vector<128x16xf32>
    %c0_17 = arith.constant 0 : index
    %c0_18 = arith.constant 0 : index
    %34 = vector.load %arg7[%c0_17, %c0_18] : memref<16x128xf32, #tpu.memory_space<vmem>>, vector<16x128xf32>
    %cst_19 = arith.constant dense<0.000000e+00> : vector<128x128xf32>
    %35 = tpu.matmul %33, %34, %cst_19 {dimension_numbers = #tpu.dot_dimension_numbers<[1], [0], [0], [1], [0, 0, 1, 1], [], []>} : vector<128x16xf32>, vector<16x128xf32>, vector<128x128xf32> -> vector<128x128xf32>
    %c0_20 = arith.constant 0 : index
    %c0_21 = arith.constant 0 : index
    %36 = vector.load %arg8[%c0_20, %c0_21] : memref<1x128xf32, #tpu.memory_space<vmem>>, vector<1x128xf32>
    %37 = vector.broadcast %36 : vector<1x128xf32> to vector<128x128xf32>
    %38 = arith.addf %35, %37 : vector<128x128xf32>
    %c0_22 = arith.constant 0 : index
    %c0_23 = arith.constant 0 : index
    %39 = vector.load %arg9[%c0_22, %c0_23] : memref<128x128xf32, #tpu.memory_space<vmem>>, vector<128x128xf32>
    tpu.vector_store %arg9[%c0_22, %c0_23], %38 {strides = array<i32>} : memref<128x128xf32, #tpu.memory_space<vmem>>, vector<128x128xf32>,
    return
  }
  func.func @transform_0(%arg0: i32) -> (i32, i32) {
    %c0_i32 = arith.constant 0 : i32
    %c0_i32_0 = arith.constant 0 : i32
    return %arg0, %c0_i32 : i32, i32
  }
  func.func @transform_1(%arg0: i32) -> (i32, i32) {
    %c0_i32 = arith.constant 0 : i32
    %c0_i32_0 = arith.constant 0 : i32
    %c0_i32_1 = arith.constant 0 : i32
    return %c0_i32, %c0_i32_0 : i32, i32
  }
  func.func @transform_2(%arg0: i32) -> (i32, i32) {
    %c0_i32 = arith.constant 0 : i32
    %c0_i32_0 = arith.constant 0 : i32
    %c0_i32_1 = arith.constant 0 : i32
    return %c0_i32, %c0_i32_0 : i32, i32
  }
  func.func @transform_3(%arg0: i32) -> (i32, i32) {
    %c0_i32 = arith.constant 0 : i32
    %c0_i32_0 = arith.constant 0 : i32
    %c0_i32_1 = arith.constant 0 : i32
    return %c0_i32, %c0_i32_0 : i32, i32
  }
  func.func @transform_4(%arg0: i32) -> (i32, i32) {
    %c0_i32 = arith.constant 0 : i32
    %c0_i32_0 = arith.constant 0 : i32
    %c0_i32_1 = arith.constant 0 : i32
    return %c0_i32, %c0_i32_0 : i32, i32
  }
  func.func @transform_5(%arg0: i32) -> (i32, i32) {
    %c0_i32 = arith.constant 0 : i32
    %c0_i32_0 = arith.constant 0 : i32
    %c0_i32_1 = arith.constant 0 : i32
    return %c0_i32, %c0_i32_0 : i32, i32
  }
  func.func @transform_6(%arg0: i32) -> (i32, i32) {
    %c0_i32 = arith.constant 0 : i32
    %c0_i32_0 = arith.constant 0 : i32
    %c0_i32_1 = arith.constant 0 : i32
    return %c0_i32, %c0_i32_0 : i32, i32
  }
  func.func @transform_7(%arg0: i32) -> (i32, i32) {
    %c0_i32 = arith.constant 0 : i32
    %c0_i32_0 = arith.constant 0 : i32
    %c0_i32_1 = arith.constant 0 : i32
    return %c0_i32, %c0_i32_0 : i32, i32
  }
  func.func @transform_8(%arg0: i32) -> (i32, i32) {
    %c0_i32 = arith.constant 0 : i32
    %c0_i32_0 = arith.constant 0 : i32
    return %arg0, %c0_i32 : i32, i32
  }
}

module attributes {stable_mosaic.version = 11 : i64} {
  func.func @_linear_kernel(%arg0: i32, %arg1: memref<128x32xf32, #tpu.memory_space<vmem>>, %arg2: memref<32x32xf32, #tpu.memory_space<vmem>>, %arg3: memref<1x32xf32, #tpu.memory_space<vmem>>, %arg4: memref<1x32xf32, #tpu.memory_space<vmem>>, %arg5: memref<128x32xf32, #tpu.memory_space<vmem>>) attributes {dimension_semantics = [#tpu.dimension_semantics<parallel>], iteration_bounds = array<i64: 1>, scalar_prefetch = 0 : i64, scratch_operands = 0 : i64, tpu.core_type = #tpu.core_type<tc>, window_params = [{transform_indices = @transform_0, window_bounds = array<i64: 128, 32>}, {pipeline_mode = #tpu.pipeline_mode<synchronous>, transform_indices = @transform_1, window_bounds = array<i64: 32, 32>}, {pipeline_mode = #tpu.pipeline_mode<synchronous>, transform_indices = @transform_2, window_bounds = array<i64: 1, 32>}, {pipeline_mode = #tpu.pipeline_mode<synchronous>, transform_indices = @transform_3, window_bounds = array<i64: 1, 32>}, {transform_indices = @transform_4, window_bounds = array<i64: 128, 32>}]} {
    %c0 = arith.constant 0 : index
    %c0_0 = arith.constant 0 : index
    %0 = vector.load %arg1[%c0, %c0_0] : memref<128x32xf32, #tpu.memory_space<vmem>>, vector<128x32xf32>
    %c0_1 = arith.constant 0 : index
    %c0_2 = arith.constant 0 : index
    %1 = vector.load %arg2[%c0_1, %c0_2] : memref<32x32xf32, #tpu.memory_space<vmem>>, vector<32x32xf32>
    %cst = arith.constant dense<0.000000e+00> : vector<128x32xf32>
    %2 = tpu.matmul %0, %1, %cst {dimension_numbers = #tpu.dot_dimension_numbers<[1], [0], [0], [1], [0, 0, 1, 1], [], []>} : vector<128x32xf32>, vector<32x32xf32>, vector<128x32xf32> -> vector<128x32xf32>
    %c0_3 = arith.constant 0 : index
    %c0_4 = arith.constant 0 : index
    %3 = vector.load %arg3[%c0_3, %c0_4] : memref<1x32xf32, #tpu.memory_space<vmem>>, vector<1x32xf32>
    %4 = vector.broadcast %3 : vector<1x32xf32> to vector<128x32xf32>
    %5 = arith.addf %2, %4 : vector<128x32xf32>
    %cst_5 = arith.constant 0.000000e+00 : f32
    %6 = vector.broadcast %cst_5 : f32 to vector<128x32xf32>
    %7 = arith.cmpf oge, %5, %6 : vector<128x32xf32>
    %c0_6 = arith.constant 0 : index
    %c0_7 = arith.constant 0 : index
    %8 = vector.load %arg4[%c0_6, %c0_7] : memref<1x32xf32, #tpu.memory_space<vmem>>, vector<1x32xf32>
    %9 = vector.broadcast %8 : vector<1x32xf32> to vector<128x32xf32>
    %10 = arith.mulf %9, %5 : vector<128x32xf32>
    %11 = arith.select %7, %5, %10 : vector<128x32xi1>, vector<128x32xf32>
    %c0_8 = arith.constant 0 : index
    %c0_9 = arith.constant 0 : index
    %12 = vector.load %arg5[%c0_8, %c0_9] : memref<128x32xf32, #tpu.memory_space<vmem>>, vector<128x32xf32>
    tpu.vector_store %arg5[%c0_8, %c0_9], %11 {strides = array<i32>} : memref<128x32xf32, #tpu.memory_space<vmem>>, vector<128x32xf32>,
    return
  }
  func.func @transform_0(%arg0: i32) -> (i32, i32) {
    %c0_i32 = arith.constant 0 : i32
    %c0_i32_0 = arith.constant 0 : i32
    return %arg0, %c0_i32 : i32, i32
  }
  func.func @transform_1(%arg0: i32) -> (i32, i32) {
    %c0_i32 = arith.constant 0 : i32
    %c0_i32_0 = arith.constant 0 : i32
    %c0_i32_1 = arith.constant 0 : i32
    return %c0_i32, %c0_i32_0 : i32, i32
  }
  func.func @transform_2(%arg0: i32) -> (i32, i32) {
    %c0_i32 = arith.constant 0 : i32
    %c0_i32_0 = arith.constant 0 : i32
    %c0_i32_1 = arith.constant 0 : i32
    return %c0_i32, %c0_i32_0 : i32, i32
  }
  func.func @transform_3(%arg0: i32) -> (i32, i32) {
    %c0_i32 = arith.constant 0 : i32
    %c0_i32_0 = arith.constant 0 : i32
    %c0_i32_1 = arith.constant 0 : i32
    return %c0_i32, %c0_i32_0 : i32, i32
  }
  func.func @transform_4(%arg0: i32) -> (i32, i32) {
    %c0_i32 = arith.constant 0 : i32
    %c0_i32_0 = arith.constant 0 : i32
    return %arg0, %c0_i32 : i32, i32
  }
}

module attributes {stable_mosaic.version = 11 : i64} {
  func.func @_bilstm_kernel(%arg0: i32, %arg1: memref<1x16x64xf32, #tpu.memory_space<vmem>>, %arg2: memref<1x16x64xf32, #tpu.memory_space<vmem>>, %arg3: memref<16x64xf32, #tpu.memory_space<vmem>>, %arg4: memref<16x64xf32, #tpu.memory_space<vmem>>, %arg5: memref<1x16x16xf32, #tpu.memory_space<vmem>>, %arg6: memref<1x16x16xf32, #tpu.memory_space<vmem>>, %arg7: memref<16x16xf32, #tpu.memory_space<vmem>>, %arg8: memref<16x16xf32, #tpu.memory_space<vmem>>, %arg9: memref<16x16xf32, #tpu.memory_space<vmem>>, %arg10: memref<16x16xf32, #tpu.memory_space<vmem>>) attributes {dimension_semantics = [#tpu.dimension_semantics<arbitrary>], iteration_bounds = array<i64: 8>, scalar_prefetch = 0 : i64, scratch_operands = 4 : i64, tpu.core_type = #tpu.core_type<tc>, window_params = [{transform_indices = @transform_0, window_bounds = array<i64: 1, 16, 64>}, {transform_indices = @transform_1, window_bounds = array<i64: 1, 16, 64>}, {pipeline_mode = #tpu.pipeline_mode<synchronous>, transform_indices = @transform_2, window_bounds = array<i64: 16, 64>}, {pipeline_mode = #tpu.pipeline_mode<synchronous>, transform_indices = @transform_3, window_bounds = array<i64: 16, 64>}, {transform_indices = @transform_4, window_bounds = array<i64: 1, 16, 16>}, {transform_indices = @transform_5, window_bounds = array<i64: 1, 16, 16>}]} {
    %c0_i32 = arith.constant 0 : i32
    %0 = arith.cmpi eq, %arg0, %c0_i32 : i32
    %1 = arith.extui %0 : i1 to i32
    %c0_i32_0 = arith.constant 0 : i32
    %2 = arith.cmpi ne, %1, %c0_i32_0 : i32
    scf.if %2 {
      %cst_39 = arith.constant 0.000000e+00 : f32
      %77 = vector.broadcast %cst_39 : f32 to vector<16x16xf32>
      %c0_40 = arith.constant 0 : index
      %c0_41 = arith.constant 0 : index
      %78 = vector.load %arg7[%c0_40, %c0_41] : memref<16x16xf32, #tpu.memory_space<vmem>>, vector<16x16xf32>
      tpu.vector_store %arg7[%c0_40, %c0_41], %77 {strides = array<i32>} : memref<16x16xf32, #tpu.memory_space<vmem>>, vector<16x16xf32>,
      %cst_42 = arith.constant 0.000000e+00 : f32
      %79 = vector.broadcast %cst_42 : f32 to vector<16x16xf32>
      %c0_43 = arith.constant 0 : index
      %c0_44 = arith.constant 0 : index
      %80 = vector.load %arg8[%c0_43, %c0_44] : memref<16x16xf32, #tpu.memory_space<vmem>>, vector<16x16xf32>
      tpu.vector_store %arg8[%c0_43, %c0_44], %79 {strides = array<i32>} : memref<16x16xf32, #tpu.memory_space<vmem>>, vector<16x16xf32>,
      %cst_45 = arith.constant 0.000000e+00 : f32
      %81 = vector.broadcast %cst_45 : f32 to vector<16x16xf32>
      %c0_46 = arith.constant 0 : index
      %c0_47 = arith.constant 0 : index
      %82 = vector.load %arg9[%c0_46, %c0_47] : memref<16x16xf32, #tpu.memory_space<vmem>>, vector<16x16xf32>
      tpu.vector_store %arg9[%c0_46, %c0_47], %81 {strides = array<i32>} : memref<16x16xf32, #tpu.memory_space<vmem>>, vector<16x16xf32>,
      %cst_48 = arith.constant 0.000000e+00 : f32
      %83 = vector.broadcast %cst_48 : f32 to vector<16x16xf32>
      %c0_49 = arith.constant 0 : index
      %c0_50 = arith.constant 0 : index
      %84 = vector.load %arg10[%c0_49, %c0_50] : memref<16x16xf32, #tpu.memory_space<vmem>>, vector<16x16xf32>
      tpu.vector_store %arg10[%c0_49, %c0_50], %83 {strides = array<i32>} : memref<16x16xf32, #tpu.memory_space<vmem>>, vector<16x16xf32>,
    } else {
    }
    %c0 = arith.constant 0 : index
    %c0_1 = arith.constant 0 : index
    %c0_2 = arith.constant 0 : index
    %3 = vector.load %arg1[%c0, %c0_1, %c0_2] : memref<1x16x64xf32, #tpu.memory_space<vmem>>, vector<1x16x64xf32>
    %4 = vector.shape_cast %3 : vector<1x16x64xf32> to vector<16x64xf32>
    %c0_3 = arith.constant 0 : index
    %c0_4 = arith.constant 0 : index
    %5 = vector.load %arg7[%c0_3, %c0_4] : memref<16x16xf32, #tpu.memory_space<vmem>>, vector<16x16xf32>
    %c0_5 = arith.constant 0 : index
    %c0_6 = arith.constant 0 : index
    %6 = vector.load %arg3[%c0_5, %c0_6] : memref<16x64xf32, #tpu.memory_space<vmem>>, vector<16x64xf32>
    %cst = arith.constant dense<0.000000e+00> : vector<16x64xf32>
    %7 = tpu.matmul %5, %6, %cst {dimension_numbers = #tpu.dot_dimension_numbers<[1], [0], [0], [1], [0, 0, 1, 1], [], []>} : vector<16x16xf32>, vector<16x64xf32>, vector<16x64xf32> -> vector<16x64xf32>
    %8 = arith.addf %4, %7 : vector<16x64xf32>
    %c0_7 = arith.constant 0 : index
    %c0_8 = arith.constant 0 : index
    %9 = vector.load %arg8[%c0_7, %c0_8] : memref<16x16xf32, #tpu.memory_space<vmem>>, vector<16x16xf32>
    %10 = vector.extract_strided_slice %8 {offsets = [0, 0], sizes = [16, 16], strides = [1, 1]} : vector<16x64xf32> to vector<16x16xf32>
    %11 = arith.negf %10 : vector<16x16xf32>
    %12 = math.exp %11 : vector<16x16xf32>
    %cst_9 = arith.constant 1.000000e+00 : f32
    %13 = vector.broadcast %cst_9 : f32 to vector<16x16xf32>
    %14 = arith.addf %13, %12 : vector<16x16xf32>
    %15 = arith.divf %13, %14 : vector<16x16xf32>
    %16 = vector.extract_strided_slice %8 {offsets = [0, 16], sizes = [16, 16], strides = [1, 1]} : vector<16x64xf32> to vector<16x16xf32>
    %17 = arith.negf %16 : vector<16x16xf32>
    %18 = math.exp %17 : vector<16x16xf32>
    %cst_10 = arith.constant 1.000000e+00 : f32
    %19 = vector.broadcast %cst_10 : f32 to vector<16x16xf32>
    %20 = arith.addf %19, %18 : vector<16x16xf32>
    %21 = arith.divf %19, %20 : vector<16x16xf32>
    %22 = vector.extract_strided_slice %8 {offsets = [0, 32], sizes = [16, 16], strides = [1, 1]} : vector<16x64xf32> to vector<16x16xf32>
    %23 = math.tanh %22 : vector<16x16xf32>
    %24 = vector.extract_strided_slice %8 {offsets = [0, 48], sizes = [16, 16], strides = [1, 1]} : vector<16x64xf32> to vector<16x16xf32>
    %25 = arith.negf %24 : vector<16x16xf32>
    %26 = math.exp %25 : vector<16x16xf32>
    %cst_11 = arith.constant 1.000000e+00 : f32
    %27 = vector.broadcast %cst_11 : f32 to vector<16x16xf32>
    %28 = arith.addf %27, %26 : vector<16x16xf32>
    %29 = arith.divf %27, %28 : vector<16x16xf32>
    %30 = arith.mulf %21, %9 : vector<16x16xf32>
    %31 = arith.mulf %15, %23 : vector<16x16xf32>
    %32 = arith.addf %30, %31 : vector<16x16xf32>
    %33 = math.tanh %32 : vector<16x16xf32>
    %34 = arith.mulf %29, %33 : vector<16x16xf32>
    %c0_12 = arith.constant 0 : index
    %c0_13 = arith.constant 0 : index
    %35 = vector.load %arg7[%c0_12, %c0_13] : memref<16x16xf32, #tpu.memory_space<vmem>>, vector<16x16xf32>
    tpu.vector_store %arg7[%c0_12, %c0_13], %34 {strides = array<i32>} : memref<16x16xf32, #tpu.memory_space<vmem>>, vector<16x16xf32>,
    %c0_14 = arith.constant 0 : index
    %c0_15 = arith.constant 0 : index
    %36 = vector.load %arg8[%c0_14, %c0_15] : memref<16x16xf32, #tpu.memory_space<vmem>>, vector<16x16xf32>
    tpu.vector_store %arg8[%c0_14, %c0_15], %32 {strides = array<i32>} : memref<16x16xf32, #tpu.memory_space<vmem>>, vector<16x16xf32>,
    %c0_16 = arith.constant 0 : index
    %c0_17 = arith.constant 0 : index
    %c0_18 = arith.constant 0 : index
    %37 = vector.load %arg5[%c0_16, %c0_17, %c0_18] : memref<1x16x16xf32, #tpu.memory_space<vmem>>, vector<1x16x16xf32>
    %38 = vector.shape_cast %37 : vector<1x16x16xf32> to vector<16x16xf32>
    %39 = vector.shape_cast %34 : vector<16x16xf32> to vector<1x16x16xf32>
    tpu.vector_store %arg5[%c0_16, %c0_17, %c0_18], %39 {strides = array<i32>} : memref<1x16x16xf32, #tpu.memory_space<vmem>>, vector<1x16x16xf32>,
    %c0_19 = arith.constant 0 : index
    %c0_20 = arith.constant 0 : index
    %c0_21 = arith.constant 0 : index
    %40 = vector.load %arg2[%c0_19, %c0_20, %c0_21] : memref<1x16x64xf32, #tpu.memory_space<vmem>>, vector<1x16x64xf32>
    %41 = vector.shape_cast %40 : vector<1x16x64xf32> to vector<16x64xf32>
    %c0_22 = arith.constant 0 : index
    %c0_23 = arith.constant 0 : index
    %42 = vector.load %arg9[%c0_22, %c0_23] : memref<16x16xf32, #tpu.memory_space<vmem>>, vector<16x16xf32>
    %c0_24 = arith.constant 0 : index
    %c0_25 = arith.constant 0 : index
    %43 = vector.load %arg4[%c0_24, %c0_25] : memref<16x64xf32, #tpu.memory_space<vmem>>, vector<16x64xf32>
    %cst_26 = arith.constant dense<0.000000e+00> : vector<16x64xf32>
    %44 = tpu.matmul %42, %43, %cst_26 {dimension_numbers = #tpu.dot_dimension_numbers<[1], [0], [0], [1], [0, 0, 1, 1], [], []>} : vector<16x16xf32>, vector<16x64xf32>, vector<16x64xf32> -> vector<16x64xf32>
    %45 = arith.addf %41, %44 : vector<16x64xf32>
    %c0_27 = arith.constant 0 : index
    %c0_28 = arith.constant 0 : index
    %46 = vector.load %arg10[%c0_27, %c0_28] : memref<16x16xf32, #tpu.memory_space<vmem>>, vector<16x16xf32>
    %47 = vector.extract_strided_slice %45 {offsets = [0, 0], sizes = [16, 16], strides = [1, 1]} : vector<16x64xf32> to vector<16x16xf32>
    %48 = arith.negf %47 : vector<16x16xf32>
    %49 = math.exp %48 : vector<16x16xf32>
    %cst_29 = arith.constant 1.000000e+00 : f32
    %50 = vector.broadcast %cst_29 : f32 to vector<16x16xf32>
    %51 = arith.addf %50, %49 : vector<16x16xf32>
    %52 = arith.divf %50, %51 : vector<16x16xf32>
    %53 = vector.extract_strided_slice %45 {offsets = [0, 16], sizes = [16, 16], strides = [1, 1]} : vector<16x64xf32> to vector<16x16xf32>
    %54 = arith.negf %53 : vector<16x16xf32>
    %55 = math.exp %54 : vector<16x16xf32>
    %cst_30 = arith.constant 1.000000e+00 : f32
    %56 = vector.broadcast %cst_30 : f32 to vector<16x16xf32>
    %57 = arith.addf %56, %55 : vector<16x16xf32>
    %58 = arith.divf %56, %57 : vector<16x16xf32>
    %59 = vector.extract_strided_slice %45 {offsets = [0, 32], sizes = [16, 16], strides = [1, 1]} : vector<16x64xf32> to vector<16x16xf32>
    %60 = math.tanh %59 : vector<16x16xf32>
    %61 = vector.extract_strided_slice %45 {offsets = [0, 48], sizes = [16, 16], strides = [1, 1]} : vector<16x64xf32> to vector<16x16xf32>
    %62 = arith.negf %61 : vector<16x16xf32>
    %63 = math.exp %62 : vector<16x16xf32>
    %cst_31 = arith.constant 1.000000e+00 : f32
    %64 = vector.broadcast %cst_31 : f32 to vector<16x16xf32>
    %65 = arith.addf %64, %63 : vector<16x16xf32>
    %66 = arith.divf %64, %65 : vector<16x16xf32>
    %67 = arith.mulf %58, %46 : vector<16x16xf32>
    %68 = arith.mulf %52, %60 : vector<16x16xf32>
    %69 = arith.addf %67, %68 : vector<16x16xf32>
    %70 = math.tanh %69 : vector<16x16xf32>
    %71 = arith.mulf %66, %70 : vector<16x16xf32>
    %c0_32 = arith.constant 0 : index
    %c0_33 = arith.constant 0 : index
    %72 = vector.load %arg9[%c0_32, %c0_33] : memref<16x16xf32, #tpu.memory_space<vmem>>, vector<16x16xf32>
    tpu.vector_store %arg9[%c0_32, %c0_33], %71 {strides = array<i32>} : memref<16x16xf32, #tpu.memory_space<vmem>>, vector<16x16xf32>,
    %c0_34 = arith.constant 0 : index
    %c0_35 = arith.constant 0 : index
    %73 = vector.load %arg10[%c0_34, %c0_35] : memref<16x16xf32, #tpu.memory_space<vmem>>, vector<16x16xf32>
    tpu.vector_store %arg10[%c0_34, %c0_35], %69 {strides = array<i32>} : memref<16x16xf32, #tpu.memory_space<vmem>>, vector<16x16xf32>,
    %c0_36 = arith.constant 0 : index
    %c0_37 = arith.constant 0 : index
    %c0_38 = arith.constant 0 : index
    %74 = vector.load %arg6[%c0_36, %c0_37, %c0_38] : memref<1x16x16xf32, #tpu.memory_space<vmem>>, vector<1x16x16xf32>
    %75 = vector.shape_cast %74 : vector<1x16x16xf32> to vector<16x16xf32>
    %76 = vector.shape_cast %71 : vector<16x16xf32> to vector<1x16x16xf32>
    tpu.vector_store %arg6[%c0_36, %c0_37, %c0_38], %76 {strides = array<i32>} : memref<1x16x16xf32, #tpu.memory_space<vmem>>, vector<1x16x16xf32>,
    return
  }
  func.func @transform_0(%arg0: i32) -> (i32, i32, i32) {
    %c0_i32 = arith.constant 0 : i32
    %c0_i32_0 = arith.constant 0 : i32
    %c0_i32_1 = arith.constant 0 : i32
    return %arg0, %c0_i32, %c0_i32_0 : i32, i32, i32
  }
  func.func @transform_1(%arg0: i32) -> (i32, i32, i32) {
    %c7_i32 = arith.constant 7 : i32
    %0 = arith.subi %c7_i32, %arg0 : i32
    %c0_i32 = arith.constant 0 : i32
    %c0_i32_0 = arith.constant 0 : i32
    %c0_i32_1 = arith.constant 0 : i32
    return %0, %c0_i32, %c0_i32_0 : i32, i32, i32
  }
  func.func @transform_2(%arg0: i32) -> (i32, i32) {
    %c0_i32 = arith.constant 0 : i32
    %c0_i32_0 = arith.constant 0 : i32
    %c0_i32_1 = arith.constant 0 : i32
    return %c0_i32, %c0_i32_0 : i32, i32
  }
  func.func @transform_3(%arg0: i32) -> (i32, i32) {
    %c0_i32 = arith.constant 0 : i32
    %c0_i32_0 = arith.constant 0 : i32
    %c0_i32_1 = arith.constant 0 : i32
    return %c0_i32, %c0_i32_0 : i32, i32
  }
  func.func @transform_4(%arg0: i32) -> (i32, i32, i32) {
    %c0_i32 = arith.constant 0 : i32
    %c0_i32_0 = arith.constant 0 : i32
    %c0_i32_1 = arith.constant 0 : i32
    return %arg0, %c0_i32, %c0_i32_0 : i32, i32, i32
  }
  func.func @transform_5(%arg0: i32) -> (i32, i32, i32) {
    %c7_i32 = arith.constant 7 : i32
    %0 = arith.subi %c7_i32, %arg0 : i32
    %c0_i32 = arith.constant 0 : i32
    %c0_i32_0 = arith.constant 0 : i32
    %c0_i32_1 = arith.constant 0 : i32
    return %0, %c0_i32, %c0_i32_0 : i32, i32, i32
  }
}

module attributes {stable_mosaic.version = 11 : i64} {
  func.func @_ln_linear_kernel(%arg0: i32, %arg1: memref<256x16xf32, #tpu.memory_space<vmem>>, %arg2: memref<1x16xf32, #tpu.memory_space<vmem>>, %arg3: memref<1x16xf32, #tpu.memory_space<vmem>>, %arg4: memref<16x64xf32, #tpu.memory_space<vmem>>, %arg5: memref<1x64xf32, #tpu.memory_space<vmem>>, %arg6: memref<256x64xf32, #tpu.memory_space<vmem>>) attributes {dimension_semantics = [#tpu.dimension_semantics<parallel>], iteration_bounds = array<i64: 1>, scalar_prefetch = 0 : i64, scratch_operands = 0 : i64, tpu.core_type = #tpu.core_type<tc>, window_params = [{transform_indices = @transform_0, window_bounds = array<i64: 256, 16>}, {pipeline_mode = #tpu.pipeline_mode<synchronous>, transform_indices = @transform_1, window_bounds = array<i64: 1, 16>}, {pipeline_mode = #tpu.pipeline_mode<synchronous>, transform_indices = @transform_2, window_bounds = array<i64: 1, 16>}, {pipeline_mode = #tpu.pipeline_mode<synchronous>, transform_indices = @transform_3, window_bounds = array<i64: 16, 64>}, {pipeline_mode = #tpu.pipeline_mode<synchronous>, transform_indices = @transform_4, window_bounds = array<i64: 1, 64>}, {transform_indices = @transform_5, window_bounds = array<i64: 256, 64>}]} {
    %c0 = arith.constant 0 : index
    %c0_0 = arith.constant 0 : index
    %0 = vector.load %arg1[%c0, %c0_0] : memref<256x16xf32, #tpu.memory_space<vmem>>, vector<256x16xf32>
    %cst = arith.constant dense<0.000000e+00> : vector<256xf32>
    %1 = vector.multi_reduction <add>, %0, %cst [1] : vector<256x16xf32> to vector<256xf32>
    %2 = vector.shape_cast %1 : vector<256xf32> to vector<256x1xf32>
    %cst_1 = arith.constant 1.600000e+01 : f32
    %3 = vector.broadcast %cst_1 : f32 to vector<256x1xf32>
    %4 = arith.divf %2, %3 : vector<256x1xf32>
    %5 = vector.broadcast %4 : vector<256x1xf32> to vector<256x16xf32>
    %6 = arith.subf %0, %5 : vector<256x16xf32>
    %7 = arith.mulf %6, %6 : vector<256x16xf32>
    %cst_2 = arith.constant dense<0.000000e+00> : vector<256xf32>
    %8 = vector.multi_reduction <add>, %7, %cst_2 [1] : vector<256x16xf32> to vector<256xf32>
    %9 = vector.shape_cast %8 : vector<256xf32> to vector<256x1xf32>
    %cst_3 = arith.constant 1.600000e+01 : f32
    %10 = vector.broadcast %cst_3 : f32 to vector<256x1xf32>
    %11 = arith.divf %9, %10 : vector<256x1xf32>
    %cst_4 = arith.constant 9.99999974E-6 : f32
    %12 = vector.broadcast %cst_4 : f32 to vector<256x1xf32>
    %13 = arith.addf %11, %12 : vector<256x1xf32>
    %14 = math.rsqrt %13 : vector<256x1xf32>
    %15 = vector.broadcast %14 : vector<256x1xf32> to vector<256x16xf32>
    %16 = arith.mulf %6, %15 : vector<256x16xf32>
    %c0_5 = arith.constant 0 : index
    %c0_6 = arith.constant 0 : index
    %17 = vector.load %arg2[%c0_5, %c0_6] : memref<1x16xf32, #tpu.memory_space<vmem>>, vector<1x16xf32>
    %18 = vector.broadcast %17 : vector<1x16xf32> to vector<256x16xf32>
    %19 = arith.mulf %16, %18 : vector<256x16xf32>
    %c0_7 = arith.constant 0 : index
    %c0_8 = arith.constant 0 : index
    %20 = vector.load %arg3[%c0_7, %c0_8] : memref<1x16xf32, #tpu.memory_space<vmem>>, vector<1x16xf32>
    %21 = vector.broadcast %20 : vector<1x16xf32> to vector<256x16xf32>
    %22 = arith.addf %19, %21 : vector<256x16xf32>
    %c0_9 = arith.constant 0 : index
    %c0_10 = arith.constant 0 : index
    %23 = vector.load %arg4[%c0_9, %c0_10] : memref<16x64xf32, #tpu.memory_space<vmem>>, vector<16x64xf32>
    %cst_11 = arith.constant dense<0.000000e+00> : vector<256x64xf32>
    %24 = tpu.matmul %22, %23, %cst_11 {dimension_numbers = #tpu.dot_dimension_numbers<[1], [0], [0], [1], [0, 0, 1, 1], [], []>} : vector<256x16xf32>, vector<16x64xf32>, vector<256x64xf32> -> vector<256x64xf32>
    %c0_12 = arith.constant 0 : index
    %c0_13 = arith.constant 0 : index
    %25 = vector.load %arg5[%c0_12, %c0_13] : memref<1x64xf32, #tpu.memory_space<vmem>>, vector<1x64xf32>
    %26 = vector.broadcast %25 : vector<1x64xf32> to vector<256x64xf32>
    %27 = arith.addf %24, %26 : vector<256x64xf32>
    %c0_14 = arith.constant 0 : index
    %c0_15 = arith.constant 0 : index
    %28 = vector.load %arg6[%c0_14, %c0_15] : memref<256x64xf32, #tpu.memory_space<vmem>>, vector<256x64xf32>
    tpu.vector_store %arg6[%c0_14, %c0_15], %27 {strides = array<i32>} : memref<256x64xf32, #tpu.memory_space<vmem>>, vector<256x64xf32>,
    return
  }
  func.func @transform_0(%arg0: i32) -> (i32, i32) {
    %c0_i32 = arith.constant 0 : i32
    %c0_i32_0 = arith.constant 0 : i32
    return %arg0, %c0_i32 : i32, i32
  }
  func.func @transform_1(%arg0: i32) -> (i32, i32) {
    %c0_i32 = arith.constant 0 : i32
    %c0_i32_0 = arith.constant 0 : i32
    %c0_i32_1 = arith.constant 0 : i32
    return %c0_i32, %c0_i32_0 : i32, i32
  }
  func.func @transform_2(%arg0: i32) -> (i32, i32) {
    %c0_i32 = arith.constant 0 : i32
    %c0_i32_0 = arith.constant 0 : i32
    %c0_i32_1 = arith.constant 0 : i32
    return %c0_i32, %c0_i32_0 : i32, i32
  }
  func.func @transform_3(%arg0: i32) -> (i32, i32) {
    %c0_i32 = arith.constant 0 : i32
    %c0_i32_0 = arith.constant 0 : i32
    %c0_i32_1 = arith.constant 0 : i32
    return %c0_i32, %c0_i32_0 : i32, i32
  }
  func.func @transform_4(%arg0: i32) -> (i32, i32) {
    %c0_i32 = arith.constant 0 : i32
    %c0_i32_0 = arith.constant 0 : i32
    %c0_i32_1 = arith.constant 0 : i32
    return %c0_i32, %c0_i32_0 : i32, i32
  }
  func.func @transform_5(%arg0: i32) -> (i32, i32) {
    %c0_i32 = arith.constant 0 : i32
    %c0_i32_0 = arith.constant 0 : i32
    return %arg0, %c0_i32 : i32, i32
  }
}

module attributes {stable_mosaic.version = 11 : i64} {
  func.func @_lstm_kernel(%arg0: i32, %arg1: memref<1x32x64xf32, #tpu.memory_space<vmem>>, %arg2: memref<16x64xf32, #tpu.memory_space<vmem>>, %arg3: memref<32x16xf32, #tpu.memory_space<vmem>>, %arg4: memref<32x16xf32, #tpu.memory_space<vmem>>, %arg5: memref<1x32x16xf32, #tpu.memory_space<vmem>>, %arg6: memref<32x16xf32, #tpu.memory_space<vmem>>, %arg7: memref<32x16xf32, #tpu.memory_space<vmem>>, %arg8: memref<32x16xf32, #tpu.memory_space<vmem>>, %arg9: memref<32x16xf32, #tpu.memory_space<vmem>>) attributes {dimension_semantics = [#tpu.dimension_semantics<arbitrary>], iteration_bounds = array<i64: 8>, scalar_prefetch = 0 : i64, scratch_operands = 2 : i64, tpu.core_type = #tpu.core_type<tc>, window_params = [{transform_indices = @transform_0, window_bounds = array<i64: 1, 32, 64>}, {pipeline_mode = #tpu.pipeline_mode<synchronous>, transform_indices = @transform_1, window_bounds = array<i64: 16, 64>}, {pipeline_mode = #tpu.pipeline_mode<synchronous>, transform_indices = @transform_2, window_bounds = array<i64: 32, 16>}, {pipeline_mode = #tpu.pipeline_mode<synchronous>, transform_indices = @transform_3, window_bounds = array<i64: 32, 16>}, {transform_indices = @transform_4, window_bounds = array<i64: 1, 32, 16>}, {pipeline_mode = #tpu.pipeline_mode<synchronous>, transform_indices = @transform_5, window_bounds = array<i64: 32, 16>}, {pipeline_mode = #tpu.pipeline_mode<synchronous>, transform_indices = @transform_6, window_bounds = array<i64: 32, 16>}]} {
    %c0_i32 = arith.constant 0 : i32
    %0 = arith.cmpi eq, %arg0, %c0_i32 : i32
    %1 = arith.extui %0 : i1 to i32
    %c0_i32_0 = arith.constant 0 : i32
    %2 = arith.cmpi ne, %1, %c0_i32_0 : i32
    scf.if %2 {
      %c0_20 = arith.constant 0 : index
      %c0_21 = arith.constant 0 : index
      %43 = vector.load %arg3[%c0_20, %c0_21] : memref<32x16xf32, #tpu.memory_space<vmem>>, vector<32x16xf32>
      %c0_22 = arith.constant 0 : index
      %c0_23 = arith.constant 0 : index
      %44 = vector.load %arg8[%c0_22, %c0_23] : memref<32x16xf32, #tpu.memory_space<vmem>>, vector<32x16xf32>
      tpu.vector_store %arg8[%c0_22, %c0_23], %43 {strides = array<i32>} : memref<32x16xf32, #tpu.memory_space<vmem>>, vector<32x16xf32>,
      %c0_24 = arith.constant 0 : index
      %c0_25 = arith.constant 0 : index
      %45 = vector.load %arg4[%c0_24, %c0_25] : memref<32x16xf32, #tpu.memory_space<vmem>>, vector<32x16xf32>
      %c0_26 = arith.constant 0 : index
      %c0_27 = arith.constant 0 : index
      %46 = vector.load %arg9[%c0_26, %c0_27] : memref<32x16xf32, #tpu.memory_space<vmem>>, vector<32x16xf32>
      tpu.vector_store %arg9[%c0_26, %c0_27], %45 {strides = array<i32>} : memref<32x16xf32, #tpu.memory_space<vmem>>, vector<32x16xf32>,
    } else {
    }
    %c0 = arith.constant 0 : index
    %c0_1 = arith.constant 0 : index
    %c0_2 = arith.constant 0 : index
    %3 = vector.load %arg1[%c0, %c0_1, %c0_2] : memref<1x32x64xf32, #tpu.memory_space<vmem>>, vector<1x32x64xf32>
    %4 = vector.shape_cast %3 : vector<1x32x64xf32> to vector<32x64xf32>
    %c0_3 = arith.constant 0 : index
    %c0_4 = arith.constant 0 : index
    %5 = vector.load %arg8[%c0_3, %c0_4] : memref<32x16xf32, #tpu.memory_space<vmem>>, vector<32x16xf32>
    %c0_5 = arith.constant 0 : index
    %c0_6 = arith.constant 0 : index
    %6 = vector.load %arg2[%c0_5, %c0_6] : memref<16x64xf32, #tpu.memory_space<vmem>>, vector<16x64xf32>
    %cst = arith.constant dense<0.000000e+00> : vector<32x64xf32>
    %7 = tpu.matmul %5, %6, %cst {dimension_numbers = #tpu.dot_dimension_numbers<[1], [0], [0], [1], [0, 0, 1, 1], [], []>} : vector<32x16xf32>, vector<16x64xf32>, vector<32x64xf32> -> vector<32x64xf32>
    %8 = arith.addf %4, %7 : vector<32x64xf32>
    %c0_7 = arith.constant 0 : index
    %c0_8 = arith.constant 0 : index
    %9 = vector.load %arg9[%c0_7, %c0_8] : memref<32x16xf32, #tpu.memory_space<vmem>>, vector<32x16xf32>
    %10 = vector.extract_strided_slice %8 {offsets = [0, 0], sizes = [32, 16], strides = [1, 1]} : vector<32x64xf32> to vector<32x16xf32>
    %11 = arith.negf %10 : vector<32x16xf32>
    %12 = math.exp %11 : vector<32x16xf32>
    %cst_9 = arith.constant 1.000000e+00 : f32
    %13 = vector.broadcast %cst_9 : f32 to vector<32x16xf32>
    %14 = arith.addf %13, %12 : vector<32x16xf32>
    %15 = arith.divf %13, %14 : vector<32x16xf32>
    %16 = vector.extract_strided_slice %8 {offsets = [0, 16], sizes = [32, 16], strides = [1, 1]} : vector<32x64xf32> to vector<32x16xf32>
    %17 = arith.negf %16 : vector<32x16xf32>
    %18 = math.exp %17 : vector<32x16xf32>
    %cst_10 = arith.constant 1.000000e+00 : f32
    %19 = vector.broadcast %cst_10 : f32 to vector<32x16xf32>
    %20 = arith.addf %19, %18 : vector<32x16xf32>
    %21 = arith.divf %19, %20 : vector<32x16xf32>
    %22 = vector.extract_strided_slice %8 {offsets = [0, 32], sizes = [32, 16], strides = [1, 1]} : vector<32x64xf32> to vector<32x16xf32>
    %23 = math.tanh %22 : vector<32x16xf32>
    %24 = vector.extract_strided_slice %8 {offsets = [0, 48], sizes = [32, 16], strides = [1, 1]} : vector<32x64xf32> to vector<32x16xf32>
    %25 = arith.negf %24 : vector<32x16xf32>
    %26 = math.exp %25 : vector<32x16xf32>
    %cst_11 = arith.constant 1.000000e+00 : f32
    %27 = vector.broadcast %cst_11 : f32 to vector<32x16xf32>
    %28 = arith.addf %27, %26 : vector<32x16xf32>
    %29 = arith.divf %27, %28 : vector<32x16xf32>
    %30 = arith.mulf %21, %9 : vector<32x16xf32>
    %31 = arith.mulf %15, %23 : vector<32x16xf32>
    %32 = arith.addf %30, %31 : vector<32x16xf32>
    %33 = math.tanh %32 : vector<32x16xf32>
    %34 = arith.mulf %29, %33 : vector<32x16xf32>
    %c0_12 = arith.constant 0 : index
    %c0_13 = arith.constant 0 : index
    %35 = vector.load %arg8[%c0_12, %c0_13] : memref<32x16xf32, #tpu.memory_space<vmem>>, vector<32x16xf32>
    tpu.vector_store %arg8[%c0_12, %c0_13], %34 {strides = array<i32>} : memref<32x16xf32, #tpu.memory_space<vmem>>, vector<32x16xf32>,
    %c0_14 = arith.constant 0 : index
    %c0_15 = arith.constant 0 : index
    %36 = vector.load %arg9[%c0_14, %c0_15] : memref<32x16xf32, #tpu.memory_space<vmem>>, vector<32x16xf32>
    tpu.vector_store %arg9[%c0_14, %c0_15], %32 {strides = array<i32>} : memref<32x16xf32, #tpu.memory_space<vmem>>, vector<32x16xf32>,
    %c0_16 = arith.constant 0 : index
    %c0_17 = arith.constant 0 : index
    %c0_18 = arith.constant 0 : index
    %37 = vector.load %arg5[%c0_16, %c0_17, %c0_18] : memref<1x32x16xf32, #tpu.memory_space<vmem>>, vector<1x32x16xf32>
    %38 = vector.shape_cast %37 : vector<1x32x16xf32> to vector<32x16xf32>
    %39 = vector.shape_cast %34 : vector<32x16xf32> to vector<1x32x16xf32>
    tpu.vector_store %arg5[%c0_16, %c0_17, %c0_18], %39 {strides = array<i32>} : memref<1x32x16xf32, #tpu.memory_space<vmem>>, vector<1x32x16xf32>,
    %c7_i32 = arith.constant 7 : i32
    %40 = arith.cmpi eq, %arg0, %c7_i32 : i32
    %41 = arith.extui %40 : i1 to i32
    %c0_i32_19 = arith.constant 0 : i32
    %42 = arith.cmpi ne, %41, %c0_i32_19 : i32
    scf.if %42 {
      %c0_20 = arith.constant 0 : index
      %c0_21 = arith.constant 0 : index
      %43 = vector.load %arg6[%c0_20, %c0_21] : memref<32x16xf32, #tpu.memory_space<vmem>>, vector<32x16xf32>
      tpu.vector_store %arg6[%c0_20, %c0_21], %34 {strides = array<i32>} : memref<32x16xf32, #tpu.memory_space<vmem>>, vector<32x16xf32>,
      %c0_22 = arith.constant 0 : index
      %c0_23 = arith.constant 0 : index
      %44 = vector.load %arg7[%c0_22, %c0_23] : memref<32x16xf32, #tpu.memory_space<vmem>>, vector<32x16xf32>
      tpu.vector_store %arg7[%c0_22, %c0_23], %32 {strides = array<i32>} : memref<32x16xf32, #tpu.memory_space<vmem>>, vector<32x16xf32>,
    } else {
    }
    return
  }
  func.func @transform_0(%arg0: i32) -> (i32, i32, i32) {
    %c0_i32 = arith.constant 0 : i32
    %c0_i32_0 = arith.constant 0 : i32
    %c0_i32_1 = arith.constant 0 : i32
    return %arg0, %c0_i32, %c0_i32_0 : i32, i32, i32
  }
  func.func @transform_1(%arg0: i32) -> (i32, i32) {
    %c0_i32 = arith.constant 0 : i32
    %c0_i32_0 = arith.constant 0 : i32
    %c0_i32_1 = arith.constant 0 : i32
    return %c0_i32, %c0_i32_0 : i32, i32
  }
  func.func @transform_2(%arg0: i32) -> (i32, i32) {
    %c0_i32 = arith.constant 0 : i32
    %c0_i32_0 = arith.constant 0 : i32
    %c0_i32_1 = arith.constant 0 : i32
    return %c0_i32, %c0_i32_0 : i32, i32
  }
  func.func @transform_3(%arg0: i32) -> (i32, i32) {
    %c0_i32 = arith.constant 0 : i32
    %c0_i32_0 = arith.constant 0 : i32
    %c0_i32_1 = arith.constant 0 : i32
    return %c0_i32, %c0_i32_0 : i32, i32
  }
  func.func @transform_4(%arg0: i32) -> (i32, i32, i32) {
    %c0_i32 = arith.constant 0 : i32
    %c0_i32_0 = arith.constant 0 : i32
    %c0_i32_1 = arith.constant 0 : i32
    return %arg0, %c0_i32, %c0_i32_0 : i32, i32, i32
  }
  func.func @transform_5(%arg0: i32) -> (i32, i32) {
    %c0_i32 = arith.constant 0 : i32
    %c0_i32_0 = arith.constant 0 : i32
    %c0_i32_1 = arith.constant 0 : i32
    return %c0_i32, %c0_i32_0 : i32, i32
  }
  func.func @transform_6(%arg0: i32) -> (i32, i32) {
    %c0_i32 = arith.constant 0 : i32
    %c0_i32_0 = arith.constant 0 : i32
    %c0_i32_1 = arith.constant 0 : i32
    return %c0_i32, %c0_i32_0 : i32, i32
  }
}

module attributes {stable_mosaic.version = 11 : i64} {
  func.func @_linear_kernel(%arg0: i32, %arg1: memref<256x16xf32, #tpu.memory_space<vmem>>, %arg2: memref<16x16xf32, #tpu.memory_space<vmem>>, %arg3: memref<1x16xf32, #tpu.memory_space<vmem>>, %arg4: memref<1x16xf32, #tpu.memory_space<vmem>>, %arg5: memref<256x16xf32, #tpu.memory_space<vmem>>) attributes {dimension_semantics = [#tpu.dimension_semantics<parallel>], iteration_bounds = array<i64: 1>, scalar_prefetch = 0 : i64, scratch_operands = 0 : i64, tpu.core_type = #tpu.core_type<tc>, window_params = [{transform_indices = @transform_0, window_bounds = array<i64: 256, 16>}, {pipeline_mode = #tpu.pipeline_mode<synchronous>, transform_indices = @transform_1, window_bounds = array<i64: 16, 16>}, {pipeline_mode = #tpu.pipeline_mode<synchronous>, transform_indices = @transform_2, window_bounds = array<i64: 1, 16>}, {pipeline_mode = #tpu.pipeline_mode<synchronous>, transform_indices = @transform_3, window_bounds = array<i64: 1, 16>}, {transform_indices = @transform_4, window_bounds = array<i64: 256, 16>}]} {
    %c0 = arith.constant 0 : index
    %c0_0 = arith.constant 0 : index
    %0 = vector.load %arg1[%c0, %c0_0] : memref<256x16xf32, #tpu.memory_space<vmem>>, vector<256x16xf32>
    %c0_1 = arith.constant 0 : index
    %c0_2 = arith.constant 0 : index
    %1 = vector.load %arg2[%c0_1, %c0_2] : memref<16x16xf32, #tpu.memory_space<vmem>>, vector<16x16xf32>
    %cst = arith.constant dense<0.000000e+00> : vector<256x16xf32>
    %2 = tpu.matmul %0, %1, %cst {dimension_numbers = #tpu.dot_dimension_numbers<[1], [0], [0], [1], [0, 0, 1, 1], [], []>} : vector<256x16xf32>, vector<16x16xf32>, vector<256x16xf32> -> vector<256x16xf32>
    %c0_3 = arith.constant 0 : index
    %c0_4 = arith.constant 0 : index
    %3 = vector.load %arg3[%c0_3, %c0_4] : memref<1x16xf32, #tpu.memory_space<vmem>>, vector<1x16xf32>
    %4 = vector.broadcast %3 : vector<1x16xf32> to vector<256x16xf32>
    %5 = arith.addf %2, %4 : vector<256x16xf32>
    %cst_5 = arith.constant 0.000000e+00 : f32
    %6 = vector.broadcast %cst_5 : f32 to vector<256x16xf32>
    %7 = arith.cmpf oge, %5, %6 : vector<256x16xf32>
    %c0_6 = arith.constant 0 : index
    %c0_7 = arith.constant 0 : index
    %8 = vector.load %arg4[%c0_6, %c0_7] : memref<1x16xf32, #tpu.memory_space<vmem>>, vector<1x16xf32>
    %9 = vector.broadcast %8 : vector<1x16xf32> to vector<256x16xf32>
    %10 = arith.mulf %9, %5 : vector<256x16xf32>
    %11 = arith.select %7, %5, %10 : vector<256x16xi1>, vector<256x16xf32>
    %c0_8 = arith.constant 0 : index
    %c0_9 = arith.constant 0 : index
    %12 = vector.load %arg5[%c0_8, %c0_9] : memref<256x16xf32, #tpu.memory_space<vmem>>, vector<256x16xf32>
    tpu.vector_store %arg5[%c0_8, %c0_9], %11 {strides = array<i32>} : memref<256x16xf32, #tpu.memory_space<vmem>>, vector<256x16xf32>,
    return
  }
  func.func @transform_0(%arg0: i32) -> (i32, i32) {
    %c0_i32 = arith.constant 0 : i32
    %c0_i32_0 = arith.constant 0 : i32
    return %arg0, %c0_i32 : i32, i32
  }
  func.func @transform_1(%arg0: i32) -> (i32, i32) {
    %c0_i32 = arith.constant 0 : i32
    %c0_i32_0 = arith.constant 0 : i32
    %c0_i32_1 = arith.constant 0 : i32
    return %c0_i32, %c0_i32_0 : i32, i32
  }
  func.func @transform_2(%arg0: i32) -> (i32, i32) {
    %c0_i32 = arith.constant 0 : i32
    %c0_i32_0 = arith.constant 0 : i32
    %c0_i32_1 = arith.constant 0 : i32
    return %c0_i32, %c0_i32_0 : i32, i32
  }
  func.func @transform_3(%arg0: i32) -> (i32, i32) {
    %c0_i32 = arith.constant 0 : i32
    %c0_i32_0 = arith.constant 0 : i32
    %c0_i32_1 = arith.constant 0 : i32
    return %c0_i32, %c0_i32_0 : i32, i32
  }
  func.func @transform_4(%arg0: i32) -> (i32, i32) {
    %c0_i32 = arith.constant 0 : i32
    %c0_i32_0 = arith.constant 0 : i32
    return %arg0, %c0_i32 : i32, i32
  }
}

module attributes {stable_mosaic.version = 11 : i64} {
  func.func @_linear_kernel(%arg0: i32, %arg1: memref<256x16xf32, #tpu.memory_space<vmem>>, %arg2: memref<16x48xf32, #tpu.memory_space<vmem>>, %arg3: memref<1x48xf32, #tpu.memory_space<vmem>>, %arg4: memref<1x48xf32, #tpu.memory_space<vmem>>, %arg5: memref<256x48xf32, #tpu.memory_space<vmem>>) attributes {dimension_semantics = [#tpu.dimension_semantics<parallel>], iteration_bounds = array<i64: 1>, scalar_prefetch = 0 : i64, scratch_operands = 0 : i64, tpu.core_type = #tpu.core_type<tc>, window_params = [{transform_indices = @transform_0, window_bounds = array<i64: 256, 16>}, {pipeline_mode = #tpu.pipeline_mode<synchronous>, transform_indices = @transform_1, window_bounds = array<i64: 16, 48>}, {pipeline_mode = #tpu.pipeline_mode<synchronous>, transform_indices = @transform_2, window_bounds = array<i64: 1, 48>}, {pipeline_mode = #tpu.pipeline_mode<synchronous>, transform_indices = @transform_3, window_bounds = array<i64: 1, 48>}, {transform_indices = @transform_4, window_bounds = array<i64: 256, 48>}]} {
    %c0 = arith.constant 0 : index
    %c0_0 = arith.constant 0 : index
    %0 = vector.load %arg1[%c0, %c0_0] : memref<256x16xf32, #tpu.memory_space<vmem>>, vector<256x16xf32>
    %c0_1 = arith.constant 0 : index
    %c0_2 = arith.constant 0 : index
    %1 = vector.load %arg2[%c0_1, %c0_2] : memref<16x48xf32, #tpu.memory_space<vmem>>, vector<16x48xf32>
    %cst = arith.constant dense<0.000000e+00> : vector<256x48xf32>
    %2 = tpu.matmul %0, %1, %cst {dimension_numbers = #tpu.dot_dimension_numbers<[1], [0], [0], [1], [0, 0, 1, 1], [], []>} : vector<256x16xf32>, vector<16x48xf32>, vector<256x48xf32> -> vector<256x48xf32>
    %c0_3 = arith.constant 0 : index
    %c0_4 = arith.constant 0 : index
    %3 = vector.load %arg3[%c0_3, %c0_4] : memref<1x48xf32, #tpu.memory_space<vmem>>, vector<1x48xf32>
    %4 = vector.broadcast %3 : vector<1x48xf32> to vector<256x48xf32>
    %5 = arith.addf %2, %4 : vector<256x48xf32>
    %cst_5 = arith.constant 0.000000e+00 : f32
    %6 = vector.broadcast %cst_5 : f32 to vector<256x48xf32>
    %7 = arith.cmpf oge, %5, %6 : vector<256x48xf32>
    %c0_6 = arith.constant 0 : index
    %c0_7 = arith.constant 0 : index
    %8 = vector.load %arg4[%c0_6, %c0_7] : memref<1x48xf32, #tpu.memory_space<vmem>>, vector<1x48xf32>
    %9 = vector.broadcast %8 : vector<1x48xf32> to vector<256x48xf32>
    %10 = arith.mulf %9, %5 : vector<256x48xf32>
    %11 = arith.select %7, %5, %10 : vector<256x48xi1>, vector<256x48xf32>
    %c0_8 = arith.constant 0 : index
    %c0_9 = arith.constant 0 : index
    %12 = vector.load %arg5[%c0_8, %c0_9] : memref<256x48xf32, #tpu.memory_space<vmem>>, vector<256x48xf32>
    tpu.vector_store %arg5[%c0_8, %c0_9], %11 {strides = array<i32>} : memref<256x48xf32, #tpu.memory_space<vmem>>, vector<256x48xf32>,
    return
  }
  func.func @transform_0(%arg0: i32) -> (i32, i32) {
    %c0_i32 = arith.constant 0 : i32
    %c0_i32_0 = arith.constant 0 : i32
    return %arg0, %c0_i32 : i32, i32
  }
  func.func @transform_1(%arg0: i32) -> (i32, i32) {
    %c0_i32 = arith.constant 0 : i32
    %c0_i32_0 = arith.constant 0 : i32
    %c0_i32_1 = arith.constant 0 : i32
    return %c0_i32, %c0_i32_0 : i32, i32
  }
  func.func @transform_2(%arg0: i32) -> (i32, i32) {
    %c0_i32 = arith.constant 0 : i32
    %c0_i32_0 = arith.constant 0 : i32
    %c0_i32_1 = arith.constant 0 : i32
    return %c0_i32, %c0_i32_0 : i32, i32
  }
  func.func @transform_3(%arg0: i32) -> (i32, i32) {
    %c0_i32 = arith.constant 0 : i32
    %c0_i32_0 = arith.constant 0 : i32
    %c0_i32_1 = arith.constant 0 : i32
    return %c0_i32, %c0_i32_0 : i32, i32
  }
  func.func @transform_4(%arg0: i32) -> (i32, i32) {
    %c0_i32 = arith.constant 0 : i32
    %c0_i32_0 = arith.constant 0 : i32
    return %arg0, %c0_i32 : i32, i32
  }
}

module attributes {stable_mosaic.version = 11 : i64} {
  func.func @_layernorm_kernel(%arg0: i32, %arg1: memref<64x64xf32, #tpu.memory_space<vmem>>, %arg2: memref<1x64xf32, #tpu.memory_space<vmem>>, %arg3: memref<1x64xf32, #tpu.memory_space<vmem>>, %arg4: memref<64x64xf32, #tpu.memory_space<vmem>>) attributes {dimension_semantics = [#tpu.dimension_semantics<parallel>], iteration_bounds = array<i64: 1>, scalar_prefetch = 0 : i64, scratch_operands = 0 : i64, tpu.core_type = #tpu.core_type<tc>, window_params = [{transform_indices = @transform_0, window_bounds = array<i64: 64, 64>}, {pipeline_mode = #tpu.pipeline_mode<synchronous>, transform_indices = @transform_1, window_bounds = array<i64: 1, 64>}, {pipeline_mode = #tpu.pipeline_mode<synchronous>, transform_indices = @transform_2, window_bounds = array<i64: 1, 64>}, {transform_indices = @transform_3, window_bounds = array<i64: 64, 64>}]} {
    %c0 = arith.constant 0 : index
    %c0_0 = arith.constant 0 : index
    %0 = vector.load %arg1[%c0, %c0_0] : memref<64x64xf32, #tpu.memory_space<vmem>>, vector<64x64xf32>
    %cst = arith.constant dense<0.000000e+00> : vector<64xf32>
    %1 = vector.multi_reduction <add>, %0, %cst [1] : vector<64x64xf32> to vector<64xf32>
    %2 = vector.shape_cast %1 : vector<64xf32> to vector<64x1xf32>
    %cst_1 = arith.constant 6.400000e+01 : f32
    %3 = vector.broadcast %cst_1 : f32 to vector<64x1xf32>
    %4 = arith.divf %2, %3 : vector<64x1xf32>
    %5 = vector.broadcast %4 : vector<64x1xf32> to vector<64x64xf32>
    %6 = arith.subf %0, %5 : vector<64x64xf32>
    %7 = arith.mulf %6, %6 : vector<64x64xf32>
    %cst_2 = arith.constant dense<0.000000e+00> : vector<64xf32>
    %8 = vector.multi_reduction <add>, %7, %cst_2 [1] : vector<64x64xf32> to vector<64xf32>
    %9 = vector.shape_cast %8 : vector<64xf32> to vector<64x1xf32>
    %cst_3 = arith.constant 6.400000e+01 : f32
    %10 = vector.broadcast %cst_3 : f32 to vector<64x1xf32>
    %11 = arith.divf %9, %10 : vector<64x1xf32>
    %cst_4 = arith.constant 9.99999974E-6 : f32
    %12 = vector.broadcast %cst_4 : f32 to vector<64x1xf32>
    %13 = arith.addf %11, %12 : vector<64x1xf32>
    %14 = math.rsqrt %13 : vector<64x1xf32>
    %15 = vector.broadcast %14 : vector<64x1xf32> to vector<64x64xf32>
    %16 = arith.mulf %6, %15 : vector<64x64xf32>
    %c0_5 = arith.constant 0 : index
    %c0_6 = arith.constant 0 : index
    %17 = vector.load %arg2[%c0_5, %c0_6] : memref<1x64xf32, #tpu.memory_space<vmem>>, vector<1x64xf32>
    %18 = vector.broadcast %17 : vector<1x64xf32> to vector<64x64xf32>
    %19 = arith.mulf %16, %18 : vector<64x64xf32>
    %c0_7 = arith.constant 0 : index
    %c0_8 = arith.constant 0 : index
    %20 = vector.load %arg3[%c0_7, %c0_8] : memref<1x64xf32, #tpu.memory_space<vmem>>, vector<1x64xf32>
    %21 = vector.broadcast %20 : vector<1x64xf32> to vector<64x64xf32>
    %22 = arith.addf %19, %21 : vector<64x64xf32>
    %c0_9 = arith.constant 0 : index
    %c0_10 = arith.constant 0 : index
    %23 = vector.load %arg4[%c0_9, %c0_10] : memref<64x64xf32, #tpu.memory_space<vmem>>, vector<64x64xf32>
    tpu.vector_store %arg4[%c0_9, %c0_10], %22 {strides = array<i32>} : memref<64x64xf32, #tpu.memory_space<vmem>>, vector<64x64xf32>,
    return
  }
  func.func @transform_0(%arg0: i32) -> (i32, i32) {
    %c0_i32 = arith.constant 0 : i32
    %c0_i32_0 = arith.constant 0 : i32
    return %arg0, %c0_i32 : i32, i32
  }
  func.func @transform_1(%arg0: i32) -> (i32, i32) {
    %c0_i32 = arith.constant 0 : i32
    %c0_i32_0 = arith.constant 0 : i32
    %c0_i32_1 = arith.constant 0 : i32
    return %c0_i32, %c0_i32_0 : i32, i32
  }
  func.func @transform_2(%arg0: i32) -> (i32, i32) {
    %c0_i32 = arith.constant 0 : i32
    %c0_i32_0 = arith.constant 0 : i32
    %c0_i32_1 = arith.constant 0 : i32
    return %c0_i32, %c0_i32_0 : i32, i32
  }
  func.func @transform_3(%arg0: i32) -> (i32, i32) {
    %c0_i32 = arith.constant 0 : i32
    %c0_i32_0 = arith.constant 0 : i32
    return %arg0, %c0_i32 : i32, i32
  }
}

module attributes {stable_mosaic.version = 11 : i64} {
  func.func @_local_attn_kernel(%arg0: i32, %arg1: memref<8x8x64xf32, #tpu.memory_space<vmem>>, %arg2: memref<8x11x64xf32, #tpu.memory_space<vmem>>, %arg3: memref<8x11x64xf32, #tpu.memory_space<vmem>>, %arg4: memref<8x8x64xf32, #tpu.memory_space<vmem>>) attributes {dimension_semantics = [#tpu.dimension_semantics<parallel>], iteration_bounds = array<i64: 1>, scalar_prefetch = 0 : i64, scratch_operands = 0 : i64, tpu.core_type = #tpu.core_type<tc>, window_params = [{transform_indices = @transform_0, window_bounds = array<i64: 8, 8, 64>}, {pipeline_mode = #tpu.pipeline_mode<synchronous>, transform_indices = @transform_1, window_bounds = array<i64: 8, 11, 64>}, {pipeline_mode = #tpu.pipeline_mode<synchronous>, transform_indices = @transform_2, window_bounds = array<i64: 8, 11, 64>}, {transform_indices = @transform_3, window_bounds = array<i64: 8, 8, 64>}]} {
    %c8_i32 = arith.constant 8 : i32
    %0 = arith.muli %arg0, %c8_i32 : i32
    %1 = tpu.assume_multiple %0, 8 : i32
    %c0 = arith.constant 0 : index
    %c0_0 = arith.constant 0 : index
    %c0_1 = arith.constant 0 : index
    %2 = vector.load %arg1[%c0, %c0_0, %c0_1] : memref<8x8x64xf32, #tpu.memory_space<vmem>>, vector<8x8x64xf32>
    %c0_2 = arith.constant 0 : index
    %3 = arith.index_cast %1 : i32 to index
    %c0_3 = arith.constant 0 : index
    %4 = vector.load %arg2[%c0_2, %3, %c0_3] : memref<8x11x64xf32, #tpu.memory_space<vmem>>, vector<8x11x64xf32>
    %c0_4 = arith.constant 0 : index
    %5 = arith.index_cast %1 : i32 to index
    %c0_5 = arith.constant 0 : index
    %6 = vector.load %arg3[%c0_4, %5, %c0_5] : memref<8x11x64xf32, #tpu.memory_space<vmem>>, vector<8x11x64xf32>
    "tpu.trace_start"() <{level = 10 : i32, message = "bqd,bkd->bqk"}> : () -> ()
    %cst = arith.constant dense<0.000000e+00> : vector<8x8x11xf32>
    %7 = tpu.matmul %2, %4, %cst {dimension_numbers = #tpu.dot_dimension_numbers<[2], [2], [1], [1], [0, 0, 0, 1, 1, 1], [0], [0]>} : vector<8x8x64xf32>, vector<8x11x64xf32>, vector<8x8x11xf32> -> vector<8x8x11xf32>
    "tpu.trace_stop"() : () -> ()
    %cst_6 = arith.constant 1.250000e-01 : f32
    %8 = vector.broadcast %cst_6 : f32 to vector<8x8x11xf32>
    %9 = arith.mulf %7, %8 : vector<8x8x11xf32>
    %10 = tpu.iota {dimensions = array<i32: 1>} : vector<8x8x11xi32>
    %11 = tpu.iota {dimensions = array<i32: 2>} : vector<8x8x11xi32>
    %12 = arith.cmpi sge, %11, %10 : vector<8x8x11xi32>
    %c4_i32 = arith.constant 4 : i32
    %13 = vector.broadcast %c4_i32 : i32 to vector<8x8x11xi32>
    %14 = arith.addi %10, %13 : vector<8x8x11xi32>
    %15 = arith.cmpi slt, %11, %14 : vector<8x8x11xi32>
    %16 = arith.andi %12, %15 : vector<8x8x11xi1>
    %cst_7 = arith.constant 0xFF800000 : f32
    %17 = vector.broadcast %cst_7 : f32 to vector<8x8x11xf32>
    %18 = arith.select %16, %9, %17 : vector<8x8x11xi1>, vector<8x8x11xf32>
    %cst_8 = arith.constant dense<0xFF800000> : vector<8x8xf32>
    %19 = vector.multi_reduction <maximumf>, %18, %cst_8 [2] : vector<8x8x11xf32> to vector<8x8xf32>
    %20 = vector.shape_cast %19 : vector<8x8xf32> to vector<8x8x1xf32>
    %21 = vector.broadcast %20 : vector<8x8x1xf32> to vector<8x8x11xf32>
    %22 = arith.subf %18, %21 : vector<8x8x11xf32>
    %23 = math.exp %22 : vector<8x8x11xf32>
    %cst_9 = arith.constant 0.000000e+00 : f32
    %24 = vector.broadcast %cst_9 : f32 to vector<8x8x11xf32>
    %25 = arith.select %16, %23, %24 : vector<8x8x11xi1>, vector<8x8x11xf32>
    %cst_10 = arith.constant dense<0.000000e+00> : vector<8x8xf32>
    %26 = vector.multi_reduction <add>, %25, %cst_10 [2] : vector<8x8x11xf32> to vector<8x8xf32>
    %27 = vector.shape_cast %26 : vector<8x8xf32> to vector<8x8x1xf32>
    %28 = tpu.reciprocal %27 {approx = true} : vector<8x8x1xf32> -> vector<8x8x1xf32>
    %29 = vector.broadcast %28 : vector<8x8x1xf32> to vector<8x8x11xf32>
    %30 = arith.mulf %25, %29 : vector<8x8x11xf32>
    "tpu.trace_start"() <{level = 10 : i32, message = "bqk,bkd->bqd"}> : () -> ()
    %cst_11 = arith.constant dense<0.000000e+00> : vector<8x8x64xf32>
    %31 = tpu.matmul %30, %6, %cst_11 {dimension_numbers = #tpu.dot_dimension_numbers<[2], [1], [1], [2], [0, 0, 0, 1, 1, 2], [0], [0]>} : vector<8x8x11xf32>, vector<8x11x64xf32>, vector<8x8x64xf32> -> vector<8x8x64xf32>
    "tpu.trace_stop"() : () -> ()
    %c0_12 = arith.constant 0 : index
    %c0_13 = arith.constant 0 : index
    %c0_14 = arith.constant 0 : index
    %32 = vector.load %arg4[%c0_12, %c0_13, %c0_14] : memref<8x8x64xf32, #tpu.memory_space<vmem>>, vector<8x8x64xf32>
    tpu.vector_store %arg4[%c0_12, %c0_13, %c0_14], %31 {strides = array<i32>} : memref<8x8x64xf32, #tpu.memory_space<vmem>>, vector<8x8x64xf32>,
    return
  }
  func.func @transform_0(%arg0: i32) -> (i32, i32, i32) {
    %c0_i32 = arith.constant 0 : i32
    %c0_i32_0 = arith.constant 0 : i32
    %c0_i32_1 = arith.constant 0 : i32
    return %c0_i32, %arg0, %c0_i32_0 : i32, i32, i32
  }
  func.func @transform_1(%arg0: i32) -> (i32, i32, i32) {
    %c0_i32 = arith.constant 0 : i32
    %c0_i32_0 = arith.constant 0 : i32
    %c0_i32_1 = arith.constant 0 : i32
    %c0_i32_2 = arith.constant 0 : i32
    return %c0_i32, %c0_i32_0, %c0_i32_1 : i32, i32, i32
  }
  func.func @transform_2(%arg0: i32) -> (i32, i32, i32) {
    %c0_i32 = arith.constant 0 : i32
    %c0_i32_0 = arith.constant 0 : i32
    %c0_i32_1 = arith.constant 0 : i32
    %c0_i32_2 = arith.constant 0 : i32
    return %c0_i32, %c0_i32_0, %c0_i32_1 : i32, i32, i32
  }
  func.func @transform_3(%arg0: i32) -> (i32, i32, i32) {
    %c0_i32 = arith.constant 0 : i32
    %c0_i32_0 = arith.constant 0 : i32
    %c0_i32_1 = arith.constant 0 : i32
    return %c0_i32, %arg0, %c0_i32_0 : i32, i32, i32
  }
}

module attributes {stable_mosaic.version = 11 : i64} {
  func.func @_linear_prelu_ln_kernel(%arg0: i32, %arg1: memref<16x256xf32, #tpu.memory_space<vmem>>, %arg2: memref<256x256xf32, #tpu.memory_space<vmem>>, %arg3: memref<1x256xf32, #tpu.memory_space<vmem>>, %arg4: memref<1x256xf32, #tpu.memory_space<vmem>>, %arg5: memref<1x256xf32, #tpu.memory_space<vmem>>, %arg6: memref<1x256xf32, #tpu.memory_space<vmem>>, %arg7: memref<16x256xf32, #tpu.memory_space<vmem>>) attributes {dimension_semantics = [#tpu.dimension_semantics<parallel>], iteration_bounds = array<i64: 1>, scalar_prefetch = 0 : i64, scratch_operands = 0 : i64, tpu.core_type = #tpu.core_type<tc>, window_params = [{transform_indices = @transform_0, window_bounds = array<i64: 16, 256>}, {pipeline_mode = #tpu.pipeline_mode<synchronous>, transform_indices = @transform_1, window_bounds = array<i64: 256, 256>}, {pipeline_mode = #tpu.pipeline_mode<synchronous>, transform_indices = @transform_2, window_bounds = array<i64: 1, 256>}, {pipeline_mode = #tpu.pipeline_mode<synchronous>, transform_indices = @transform_3, window_bounds = array<i64: 1, 256>}, {pipeline_mode = #tpu.pipeline_mode<synchronous>, transform_indices = @transform_4, window_bounds = array<i64: 1, 256>}, {pipeline_mode = #tpu.pipeline_mode<synchronous>, transform_indices = @transform_5, window_bounds = array<i64: 1, 256>}, {transform_indices = @transform_6, window_bounds = array<i64: 16, 256>}]} {
    %c0 = arith.constant 0 : index
    %c0_0 = arith.constant 0 : index
    %0 = vector.load %arg1[%c0, %c0_0] : memref<16x256xf32, #tpu.memory_space<vmem>>, vector<16x256xf32>
    %c0_1 = arith.constant 0 : index
    %c0_2 = arith.constant 0 : index
    %1 = vector.load %arg2[%c0_1, %c0_2] : memref<256x256xf32, #tpu.memory_space<vmem>>, vector<256x256xf32>
    %cst = arith.constant dense<0.000000e+00> : vector<16x256xf32>
    %2 = tpu.matmul %0, %1, %cst {dimension_numbers = #tpu.dot_dimension_numbers<[1], [0], [0], [1], [0, 0, 1, 1], [], []>} : vector<16x256xf32>, vector<256x256xf32>, vector<16x256xf32> -> vector<16x256xf32>
    %c0_3 = arith.constant 0 : index
    %c0_4 = arith.constant 0 : index
    %3 = vector.load %arg3[%c0_3, %c0_4] : memref<1x256xf32, #tpu.memory_space<vmem>>, vector<1x256xf32>
    %4 = vector.broadcast %3 : vector<1x256xf32> to vector<16x256xf32>
    %5 = arith.addf %2, %4 : vector<16x256xf32>
    %cst_5 = arith.constant 0.000000e+00 : f32
    %6 = vector.broadcast %cst_5 : f32 to vector<16x256xf32>
    %7 = arith.cmpf oge, %5, %6 : vector<16x256xf32>
    %c0_6 = arith.constant 0 : index
    %c0_7 = arith.constant 0 : index
    %8 = vector.load %arg4[%c0_6, %c0_7] : memref<1x256xf32, #tpu.memory_space<vmem>>, vector<1x256xf32>
    %9 = vector.broadcast %8 : vector<1x256xf32> to vector<16x256xf32>
    %10 = arith.mulf %9, %5 : vector<16x256xf32>
    %11 = arith.select %7, %5, %10 : vector<16x256xi1>, vector<16x256xf32>
    %cst_8 = arith.constant dense<0.000000e+00> : vector<16xf32>
    %12 = vector.multi_reduction <add>, %11, %cst_8 [1] : vector<16x256xf32> to vector<16xf32>
    %13 = vector.shape_cast %12 : vector<16xf32> to vector<16x1xf32>
    %cst_9 = arith.constant 2.560000e+02 : f32
    %14 = vector.broadcast %cst_9 : f32 to vector<16x1xf32>
    %15 = arith.divf %13, %14 : vector<16x1xf32>
    %16 = vector.broadcast %15 : vector<16x1xf32> to vector<16x256xf32>
    %17 = arith.subf %11, %16 : vector<16x256xf32>
    %18 = arith.mulf %17, %17 : vector<16x256xf32>
    %cst_10 = arith.constant dense<0.000000e+00> : vector<16xf32>
    %19 = vector.multi_reduction <add>, %18, %cst_10 [1] : vector<16x256xf32> to vector<16xf32>
    %20 = vector.shape_cast %19 : vector<16xf32> to vector<16x1xf32>
    %cst_11 = arith.constant 2.560000e+02 : f32
    %21 = vector.broadcast %cst_11 : f32 to vector<16x1xf32>
    %22 = arith.divf %20, %21 : vector<16x1xf32>
    %cst_12 = arith.constant 9.99999974E-6 : f32
    %23 = vector.broadcast %cst_12 : f32 to vector<16x1xf32>
    %24 = arith.addf %22, %23 : vector<16x1xf32>
    %25 = math.rsqrt %24 : vector<16x1xf32>
    %26 = vector.broadcast %25 : vector<16x1xf32> to vector<16x256xf32>
    %27 = arith.mulf %17, %26 : vector<16x256xf32>
    %c0_13 = arith.constant 0 : index
    %c0_14 = arith.constant 0 : index
    %28 = vector.load %arg5[%c0_13, %c0_14] : memref<1x256xf32, #tpu.memory_space<vmem>>, vector<1x256xf32>
    %29 = vector.broadcast %28 : vector<1x256xf32> to vector<16x256xf32>
    %30 = arith.mulf %27, %29 : vector<16x256xf32>
    %c0_15 = arith.constant 0 : index
    %c0_16 = arith.constant 0 : index
    %31 = vector.load %arg6[%c0_15, %c0_16] : memref<1x256xf32, #tpu.memory_space<vmem>>, vector<1x256xf32>
    %32 = vector.broadcast %31 : vector<1x256xf32> to vector<16x256xf32>
    %33 = arith.addf %30, %32 : vector<16x256xf32>
    %c0_17 = arith.constant 0 : index
    %c0_18 = arith.constant 0 : index
    %34 = vector.load %arg7[%c0_17, %c0_18] : memref<16x256xf32, #tpu.memory_space<vmem>>, vector<16x256xf32>
    tpu.vector_store %arg7[%c0_17, %c0_18], %33 {strides = array<i32>} : memref<16x256xf32, #tpu.memory_space<vmem>>, vector<16x256xf32>,
    return
  }
  func.func @transform_0(%arg0: i32) -> (i32, i32) {
    %c0_i32 = arith.constant 0 : i32
    %c0_i32_0 = arith.constant 0 : i32
    return %arg0, %c0_i32 : i32, i32
  }
  func.func @transform_1(%arg0: i32) -> (i32, i32) {
    %c0_i32 = arith.constant 0 : i32
    %c0_i32_0 = arith.constant 0 : i32
    %c0_i32_1 = arith.constant 0 : i32
    return %c0_i32, %c0_i32_0 : i32, i32
  }
  func.func @transform_2(%arg0: i32) -> (i32, i32) {
    %c0_i32 = arith.constant 0 : i32
    %c0_i32_0 = arith.constant 0 : i32
    %c0_i32_1 = arith.constant 0 : i32
    return %c0_i32, %c0_i32_0 : i32, i32
  }
  func.func @transform_3(%arg0: i32) -> (i32, i32) {
    %c0_i32 = arith.constant 0 : i32
    %c0_i32_0 = arith.constant 0 : i32
    %c0_i32_1 = arith.constant 0 : i32
    return %c0_i32, %c0_i32_0 : i32, i32
  }
  func.func @transform_4(%arg0: i32) -> (i32, i32) {
    %c0_i32 = arith.constant 0 : i32
    %c0_i32_0 = arith.constant 0 : i32
    %c0_i32_1 = arith.constant 0 : i32
    return %c0_i32, %c0_i32_0 : i32, i32
  }
  func.func @transform_5(%arg0: i32) -> (i32, i32) {
    %c0_i32 = arith.constant 0 : i32
    %c0_i32_0 = arith.constant 0 : i32
    %c0_i32_1 = arith.constant 0 : i32
    return %c0_i32, %c0_i32_0 : i32, i32
  }
  func.func @transform_6(%arg0: i32) -> (i32, i32) {
    %c0_i32 = arith.constant 0 : i32
    %c0_i32_0 = arith.constant 0 : i32
    return %arg0, %c0_i32 : i32, i32
  }
}

</mosaic_0001>

<llo_original>
// kernel: tile.13
$region0: #{tile.13}
  #allocation2 [shape = 's32[1]{0}', space=sflag, size = 0x4, scoped, tag = 'scoped memory for tile.13']
  %s0 = inlined_call_operand.hbm [shape: f32[16], index: 0, kind: input, shape index: {}]
  %s1 = inlined_call_operand.vmem [shape: f32[2,16], index: 1, kind: output, shape index: {}]
  $region1: #{tile.13} parent=0
    #allocation0 [shape = 'u8[512]{0}', space=vmem, size = 0x400, scoped, tag = 'operand span for operand 0']
    #allocation1 [shape = 's32[1]{0}', space=sflag, size = 0x4, scoped, tag = 'scoped memory for tile.13']
    %2 = vsyncpa [#allocation1], 0
    // Predicated region
    $region2: #{tile.13} parent=1 // pred_check
      _
    $region3: #{tile.13} parent=1 // pred_check_branch
      %4 = sbr.rel (0) target = $region5
    $region4: #{tile.13} parent=1 // pred_region
      %s6 = ssub.s32 16, 16
      %7 = vsyncadd [#allocation1], %s6
      %s9 = sshll.u32 [#allocation0], 4
      %s10 = int_to_ptr.vmem [resolvable:$true] %s9
      %12 = dma.hbm_to_vmem [thread:$0]  %s0, 16, %s10, [#allocation1]
    $region5: #{tile.13} parent=1 // pred_fallthru
      _
    // Predicated region
    $region6: #{tile.13} parent=1 // pred_check
      _
    $region7: #{tile.13} parent=1 // pred_check_branch
      %14 = sbr.rel (0) target = $region9
    $region8: #{tile.13} parent=1 // pred_region
      %15 = dma.done [#allocation1], 16
    $region9: #{tile.13} parent=1 // pred_fallthru
      _
    %v16 = vld [vmem:[#allocation0] ss:$0 sm:$0xff]
    %17 = vst [vmem:[%s1] sm:$0x3] %v16
    %18 = vsyncpa [#allocation1], 1

// kernel: tile.14
$region0: #{tile.14}
  %s0 = inlined_call_operand.vmem [shape: f32[2,16], index: 0, kind: input, shape index: {}]
  %s1 = inlined_call_operand.vmem [shape: f32[1,32], index: 1, kind: output, shape index: {}]
  $region1: #{tile.14} parent=0
    #allocation0 [shape = 'u8[4096]{0}', space=vmem, size = 0x1000, scoped, tag = 'scoped mem for output reshape']
    #allocation1 [shape = 'u8[4096]{0}', space=vmem, size = 0x1000, scoped, tag = 'scoped mem for input reshape']
    %s3 = sshllo.u32 0, 2
    %v4 = vld [vmem:[%s0] sm:%s3]
    %5 = vst [vmem:[#allocation1] sm:%s3] %v4
    %v6 = vld [vmem:[#allocation1] sm:$0x1]
    %vm7 = vcmask 130048
    %8 = vst.msk [vmem:[#allocation0] sm:$0x1] %vm7, %v6
    %s9 = scalar_lea.vmem [#allocation1], 1
    %v10 = vld [vmem:[%s9] sm:$0x1]
    %11 = vrot.lane.b32.xlu0 %v10, 16
    %v12 = vpop.permute.xlu0 %11
    %vm13 = vcmask 261248
    %14 = vst.msk [vmem:[#allocation0] sm:$0x1] %vm13, %v12
    %s16 = sshllo.u32 0, 1
    %v18 = vld [vmem:[#allocation0] sm:%s16]
    %s19 = sshllo.u32 0, 1
    %20 = vst [vmem:[%s1] sm:%s19] %v18

// kernel: tile.18
$region0: #{tile.18}
  #allocation2 [shape = 's32[1]{0}', space=sflag, size = 0x4, scoped, tag = 'scoped memory for tile.18']
  %s0 = inlined_call_operand.hbm [shape: f32[16], index: 0, kind: input, shape index: {}]
  %s1 = inlined_call_operand.vmem [shape: f32[16,16], index: 1, kind: output, shape index: {}]
  $region1: #{tile.18} parent=0
    #allocation0 [shape = 'u8[512]{0}', space=vmem, size = 0x400, scoped, tag = 'operand span for operand 0']
    #allocation1 [shape = 's32[1]{0}', space=sflag, size = 0x4, scoped, tag = 'scoped memory for tile.18']
    %2 = vsyncpa [#allocation1], 0
    // Predicated region
    $region2: #{tile.18} parent=1 // pred_check
      _
    $region3: #{tile.18} parent=1 // pred_check_branch
      %4 = sbr.rel (0) target = $region5
    $region4: #{tile.18} parent=1 // pred_region
      %s6 = ssub.s32 16, 16
      %7 = vsyncadd [#allocation1], %s6
      %s9 = sshll.u32 [#allocation0], 4
      %s10 = int_to_ptr.vmem [resolvable:$true] %s9
      %12 = dma.hbm_to_vmem [thread:$0]  %s0, 16, %s10, [#allocation1]
    $region5: #{tile.18} parent=1 // pred_fallthru
      _
    // Predicated region
    $region6: #{tile.18} parent=1 // pred_check
      _
    $region7: #{tile.18} parent=1 // pred_check_branch
      %14 = sbr.rel (0) target = $region9
    $region8: #{tile.18} parent=1 // pred_region
      %15 = dma.done [#allocation1], 16
    $region9: #{tile.18} parent=1 // pred_fallthru
      _
    %v16 = vld [vmem:[#allocation0] ss:$0 sm:$0xff]
    %17 = vst [vmem:[%s1] sm:$0xff] %v16
    %s18 = scalar_lea.vmem %s1, 8
    %19 = vst [vmem:[%s18] sm:$0xff] %v16
    %20 = vsyncpa [#allocation1], 1

// kernel: tile.19
$region0: #{tile.19}
  %s0 = inlined_call_operand.vmem [shape: f32[16,16], index: 0, kind: input, shape index: {}]
  %s1 = inlined_call_operand.vmem [shape: f32[1,256], index: 1, kind: output, shape index: {}]
  $region1: #{tile.19} parent=0
    #allocation0 [shape = 'u8[8192]{0}', space=vmem, size = 0x2000, scoped, tag = 'scoped mem for output reshape']
    %s2 = smov 3
    %v3 = vld [vmem:[%s0] ss:$8 sm:%s2]
    %vm4 = vcmask 130048
    %5 = vst.msk [vmem:[#allocation0] ss:$8 sm:$0x3] %vm4, %v3
    %s6 = scalar_lea.vmem %s0, 7
    %s7 = smov 3
    %v8 = vld [vmem:[%s6] ss:$8 sm:%s7]
    %9 = vrot.lane.b32.xlu0 %v8, 112
    %v10 = vpop.permute.xlu0 %9
    %vm11 = vcmask 1048448
    %12 = vst.msk [vmem:[#allocation0] ss:$8 sm:$0x3] %vm11, %v10
    %s13 = scalar_lea.vmem %s0, 6
    %s14 = smov 3
    %v15 = vld [vmem:[%s13] ss:$8 sm:%s14]
    %16 = vrot.lane.b32.xlu0 %v15, 96
    %v17 = vpop.permute.xlu0 %16
    %vm18 = vcmask 917248
    %19 = vst.msk [vmem:[#allocation0] ss:$8 sm:$0x3] %vm18, %v17
    %s20 = scalar_lea.vmem %s0, 5
    %s21 = smov 3
    %v22 = vld [vmem:[%s20] ss:$8 sm:%s21]
    %23 = vrot.lane.b32.xlu0 %v22, 80
    %v24 = vpop.permute.xlu0 %23
    %vm25 = vcmask 786048
    %26 = vst.msk [vmem:[#allocation0] ss:$8 sm:$0x3] %vm25, %v24
    %s27 = scalar_lea.vmem %s0, 4
    %s28 = smov 3
    %v29 = vld [vmem:[%s27] ss:$8 sm:%s28]
    %30 = vrot.lane.b32.xlu0 %v29, 64
    %v31 = vpop.permute.xlu0 %30
    %vm32 = vcmask 654848
    %33 = vst.msk [vmem:[#allocation0] ss:$8 sm:$0x3] %vm32, %v31
    %s34 = scalar_lea.vmem %s0, 3
    %s35 = smov 3
    %v36 = vld [vmem:[%s34] ss:$8 sm:%s35]
    %37 = vrot.lane.b32.xlu0 %v36, 48
    %v38 = vpop.permute.xlu0 %37
    %vm39 = vcmask 523648
    %40 = vst.msk [vmem:[#allocation0] ss:$8 sm:$0x3] %vm39, %v38
    %s41 = scalar_lea.vmem %s0, 2
    %s42 = smov 3
    %v43 = vld [vmem:[%s41] ss:$8 sm:%s42]
    %44 = vrot.lane.b32.xlu0 %v43, 32
    %v45 = vpop.permute.xlu0 %44
    %vm46 = vcmask 392448
    %47 = vst.msk [vmem:[#allocation0] ss:$8 sm:$0x3] %vm46, %v45
    %s48 = scalar_lea.vmem %s0, 1
    %s49 = smov 3
    %v50 = vld [vmem:[%s48] ss:$8 sm:%s49]
    %51 = vrot.lane.b32.xlu0 %v50, 16
    %v52 = vpop.permute.xlu0 %51
    %vm53 = vcmask 261248
    %54 = vst.msk [vmem:[#allocation0] ss:$8 sm:$0x3] %vm53, %v52
    %s56 = sshllo.u32 0, 1
    %v58 = vld [vmem:[#allocation0] sm:%s56]
    %s59 = sshllo.u32 0, 1
    %60 = vst [vmem:[%s1] sm:%s59] %v58
    %s61 = scalar_lea.vmem [#allocation0], 8
    %v62 = vld [vmem:[%s61] sm:%s56]
    %s63 = sshllo.u32 0, 1
    %s64 = scalar_lea.vmem %s1, 1
    %65 = vst [vmem:[%s64] sm:%s63] %v62

// kernel: _lambda_.14
$region0: #{_lambda_.14}
  #allocation0 [shape = 'u32[]', space=smem, size = 0x4, offset = 0x4, fixed_abs, tag = 'smem constant byte address 0x4 - core index']
  #allocation1 [shape = 'u32[144,128]{1,0:T(1,128)}', space=vmem, size = 0x12000, scoped, tag = 'internal scratch']
  %s0 = inlined_call_operand.vmem [shape: f32[128,32], index: 0, kind: input, shape index: {}]
  %s1 = inlined_call_operand.vmem [shape: f32[32,32], index: 1, kind: input, shape index: {}]
  %s2 = inlined_call_operand.vmem [shape: f32[1,32], index: 2, kind: input, shape index: {}]
  %s3 = inlined_call_operand.vmem [shape: f32[1,32], index: 3, kind: input, shape index: {}]
  %s4 = inlined_call_operand.vmem [shape: f32[128,32], index: 4, kind: output, shape index: {}]
  %s5 = sld [smem:[#allocation0]]
  $region26: #{_lambda_.14} parent=0
    _
  %s7 = ssub.s32 1, %s5
  %s8 = scalar_select 0, %s7, %s5
  // Predicated region
  $region2: #{_lambda_.14} parent=0 // pred_check
    _
  $region3: #{_lambda_.14} parent=0 // pred_check_branch
    %10 = sbr.rel (0) target = $region5
  $region4: #{_lambda_.14} parent=0 // pred_region
    _
  $region5: #{_lambda_.14} parent=0 // pred_fallthru
    _
  // Predicated region
  $region6: #{_lambda_.14} parent=0 // pred_check
    _
  $region7: #{_lambda_.14} parent=0 // pred_check_branch
    %12 = sbr.rel (0) target = $region9
  $region8: #{_lambda_.14} parent=0 // pred_region
    _
  $region9: #{_lambda_.14} parent=0 // pred_fallthru
    _
  // Predicated region
  $region10: #{_lambda_.14} parent=0 // pred_check
    _
  $region11: #{_lambda_.14} parent=0 // pred_check_branch
    %14 = sbr.rel (0) target = $region13
  $region12: #{_lambda_.14} parent=0 // pred_region
    _
  $region13: #{_lambda_.14} parent=0 // pred_fallthru
    _
  // Predicated region
  $region14: #{_lambda_.14} parent=0 // pred_check
    _
  $region15: #{_lambda_.14} parent=0 // pred_check_branch
    %16 = sbr.rel (0) target = $region17
  $region16: #{_lambda_.14} parent=0 // pred_region
    _
  $region17: #{_lambda_.14} parent=0 // pred_fallthru
    _
  %v17 = vld [vmem:[%s0] sm:$0xff]
  %v18 = vld [vmem:[%s0 + $0x8] sm:$0xff]
  %v19 = vld [vmem:[%s0 + $0x10] sm:$0xff]
  %v20 = vld [vmem:[%s0 + $0x18] sm:$0xff]
  %v21 = vld [vmem:[%s0 + $0x20] sm:$0xff]
  %v22 = vld [vmem:[%s0 + $0x28] sm:$0xff]
  %v23 = vld [vmem:[%s0 + $0x30] sm:$0xff]
  %v24 = vld [vmem:[%s0 + $0x38] sm:$0xff]
  %v25 = vld [vmem:[%s0 + $0x40] sm:$0xff]
  %v26 = vld [vmem:[%s0 + $0x48] sm:$0xff]
  %v27 = vld [vmem:[%s0 + $0x50] sm:$0xff]
  %v28 = vld [vmem:[%s0 + $0x58] sm:$0xff]
  %v29 = vld [vmem:[%s0 + $0x60] sm:$0xff]
  %v30 = vld [vmem:[%s0 + $0x68] sm:$0xff]
  %v31 = vld [vmem:[%s0 + $0x70] sm:$0xff]
  %v32 = vld [vmem:[%s0 + $0x78] sm:$0xff]
  %v33 = vld [vmem:[%s1] sm:$0xff]
  %v34 = vld [vmem:[%s1 + $0x8] sm:$0xff]
  %v35 = vld [vmem:[%s1 + $0x10] sm:$0xff]
  %v36 = vld [vmem:[%s1 + $0x18] sm:$0xff]
  %v37 = vld [vmem:[%s2] sm:$0x1]
  %v39 = vlaneseq
  %v40 = vshrl.u32 %v39, 7
  %v41 = vsub.s32 0, %v40
  %v42 = vrot.slane %v37, %v41
  %vm44 = vcmask 261120
  %v46 = vsel %vm44, %v17, 0
  %v49 = vsel %vm44, %v18, 0
  %v52 = vsel %vm44, %v19, 0
  %v55 = vsel %vm44, %v20, 0
  %v58 = vsel %vm44, %v21, 0
  %v61 = vsel %vm44, %v22, 0
  %v64 = vsel %vm44, %v23, 0
  %v67 = vsel %vm44, %v24, 0
  %v70 = vsel %vm44, %v25, 0
  %v73 = vsel %vm44, %v26, 0
  %v76 = vsel %vm44, %v27, 0
  %v79 = vsel %vm44, %v28, 0
  %v82 = vsel %vm44, %v29, 0
  %v85 = vsel %vm44, %v30, 0
  %v88 = vsel %vm44, %v31, 0
  %v91 = vsel %vm44, %v32, 0
  %93 = vmatprep.subr.mxu0 0.0
  %94 = vmatpush1.msra.mxu0 %v33
  %95 = vmatprep.subr.mxu0 0.0
  %96 = vmatpush1.msra.mxu0 %v34
  %97 = vmatprep.subr.mxu0 0.0
  %98 = vmatpush1.msra.mxu0 %v35
  %99 = vmatprep.subr.mxu0 0.0
  %100 = vmatpush1.msra.mxu0 %v36
  %101 = vmatprep.subr.mxu0 0.0
  %102 = vmatpush1.msra.mxu0 0.0
  %103 = vmatprep.subr.mxu0 0.0
  %104 = vmatpush1.msra.mxu0 0.0
  %105 = vmatprep.subr.mxu0 0.0
  %106 = vmatpush1.msra.mxu0 0.0
  %107 = vmatprep.subr.mxu0 0.0
  %108 = vmatpush1.msra.mxu0 0.0
  %109 = vmatprep.subr.mxu0 0.0
  %110 = vmatpush1.msra.mxu0 0.0
  %111 = vmatprep.subr.mxu0 0.0
  %112 = vmatpush1.msra.mxu0 0.0
  %113 = vmatprep.subr.mxu0 0.0
  %114 = vmatpush1.msra.mxu0 0.0
  %115 = vmatprep.subr.mxu0 0.0
  %116 = vmatpush1.msra.mxu0 0.0
  %117 = vmatprep.subr.mxu0 0.0
  %118 = vmatpush1.msra.mxu0 0.0
  %119 = vmatprep.subr.mxu0 0.0
  %120 = vmatpush1.msra.mxu0 0.0
  %121 = vmatprep.subr.mxu0 0.0
  %122 = vmatpush1.msra.mxu0 0.0
  %123 = vmatprep.subr.mxu0 0.0
  %124 = vmatpush1.msra.mxu0 0.0
  %125 = vmatprep.subr.mxu0 0.0
  %126 = vmatpush1.msra.mxu0 0.0
  %127 = vmatprep.subr.mxu0 0.0
  %128 = vmatpush1.msra.mxu0 0.0
  %129 = vmatprep.subr.mxu0 0.0
  %130 = vmatpush1.msra.mxu0 0.0
  %131 = vmatprep.subr.mxu0 0.0
  %132 = vmatpush1.msra.mxu0 0.0
  %133 = vmatprep.subr.mxu0 0.0
  %134 = vmatpush1.msra.mxu0 0.0
  %135 = vmatprep.subr.mxu0 0.0
  %136 = vmatpush1.msra.mxu0 0.0
  %137 = vmatprep.subr.mxu0 0.0
  %138 = vmatpush1.msra.mxu0 0.0
  %139 = vmatprep.subr.mxu0 0.0
  %140 = vmatpush1.msra.mxu0 0.0
  %141 = vmatprep.subr.mxu0 0.0
  %142 = vmatpush1.msra.mxu0 0.0
  %143 = vmatprep.subr.mxu0 0.0
  %144 = vmatpush1.msra.mxu0 0.0
  %145 = vmatprep.subr.mxu0 0.0
  %146 = vmatpush1.msra.mxu0 0.0
  %147 = vmatprep.subr.mxu0 0.0
  %148 = vmatpush1.msra.mxu0 0.0
  %149 = vmatprep.subr.mxu0 0.0
  %150 = vmatpush1.msra.mxu0 0.0
  %151 = vmatprep.subr.mxu0 0.0
  %152 = vmatpush1.msra.mxu0 0.0
  %153 = vmatprep.subr.mxu0 0.0
  %154 = vmatpush1.msra.mxu0 0.0
  %155 = vmatprep.subr.mxu0 0.0
  %156 = vmatpush1.msra.mxu0 0.0
  %157 = vmatprep.mubr.f32.mxu0 0.0
  %158 = vmatmul.mubr.f32.gmra.mrb[0].mxu0 %v46
  %v159 = vpop.f32.mrb[0].mxu0
  %v160 = vadd.f32 %v42, %v159
  %v161 = vpop.f32.mrb[0].mxu0
  %162 = vmatprep.mubr.f32.mxu0 0.0
  %163 = vmatmul.mubr.f32.gmra.mrb[0].mxu0 %v49
  %v164 = vpop.f32.mrb[0].mxu0
  %v165 = vadd.f32 %v42, %v164
  %v166 = vpop.f32.mrb[0].mxu0
  %167 = vmatprep.mubr.f32.mxu0 0.0
  %168 = vmatmul.mubr.f32.gmra.mrb[0].mxu0 %v52
  %v169 = vpop.f32.mrb[0].mxu0
  %v170 = vadd.f32 %v42, %v169
  %v171 = vpop.f32.mrb[0].mxu0
  %172 = vmatprep.mubr.f32.mxu0 0.0
  %173 = vmatmul.mubr.f32.gmra.mrb[0].mxu0 %v55
  %v174 = vpop.f32.mrb[0].mxu0
  %v175 = vadd.f32 %v42, %v174
  %v176 = vpop.f32.mrb[0].mxu0
  %177 = vmatprep.mubr.f32.mxu0 0.0
  %178 = vmatmul.mubr.f32.gmra.mrb[0].mxu0 %v58
  %v179 = vpop.f32.mrb[0].mxu0
  %v180 = vadd.f32 %v42, %v179
  %v181 = vpop.f32.mrb[0].mxu0
  %182 = vmatprep.mubr.f32.mxu0 0.0
  %183 = vmatmul.mubr.f32.gmra.mrb[0].mxu0 %v61
  %v184 = vpop.f32.mrb[0].mxu0
  %v185 = vadd.f32 %v42, %v184
  %v186 = vpop.f32.mrb[0].mxu0
  %187 = vmatprep.mubr.f32.mxu0 0.0
  %188 = vmatmul.mubr.f32.gmra.mrb[0].mxu0 %v64
  %v189 = vpop.f32.mrb[0].mxu0
  %v190 = vadd.f32 %v42, %v189
  %v191 = vpop.f32.mrb[0].mxu0
  %192 = vmatprep.mubr.f32.mxu0 0.0
  %193 = vmatmul.mubr.f32.gmra.mrb[0].mxu0 %v67
  %v194 = vpop.f32.mrb[0].mxu0
  %v195 = vadd.f32 %v42, %v194
  %v196 = vpop.f32.mrb[0].mxu0
  %197 = vmatprep.mubr.f32.mxu0 0.0
  %198 = vmatmul.mubr.f32.gmra.mrb[0].mxu0 %v70
  %v199 = vpop.f32.mrb[0].mxu0
  %v200 = vadd.f32 %v42, %v199
  %v201 = vpop.f32.mrb[0].mxu0
  %202 = vmatprep.mubr.f32.mxu0 0.0
  %203 = vmatmul.mubr.f32.gmra.mrb[0].mxu0 %v73
  %v204 = vpop.f32.mrb[0].mxu0
  %v205 = vadd.f32 %v42, %v204
  %v206 = vpop.f32.mrb[0].mxu0
  %207 = vmatprep.mubr.f32.mxu0 0.0
  %208 = vmatmul.mubr.f32.gmra.mrb[0].mxu0 %v76
  %v209 = vpop.f32.mrb[0].mxu0
  %v210 = vadd.f32 %v42, %v209
  %v211 = vpop.f32.mrb[0].mxu0
  %212 = vmatprep.mubr.f32.mxu0 0.0
  %213 = vmatmul.mubr.f32.gmra.mrb[0].mxu0 %v79
  %v214 = vpop.f32.mrb[0].mxu0
  %v215 = vadd.f32 %v42, %v214
  %v216 = vpop.f32.mrb[0].mxu0
  %217 = vmatprep.mubr.f32.mxu0 0.0
  %218 = vmatmul.mubr.f32.gmra.mrb[0].mxu0 %v82
  %v219 = vpop.f32.mrb[0].mxu0
  %v220 = vadd.f32 %v42, %v219
  %v221 = vpop.f32.mrb[0].mxu0
  %222 = vmatprep.mubr.f32.mxu0 0.0
  %223 = vmatmul.mubr.f32.gmra.mrb[0].mxu0 %v85
  %v224 = vpop.f32.mrb[0].mxu0
  %v225 = vadd.f32 %v42, %v224
  %v226 = vpop.f32.mrb[0].mxu0
  %227 = vmatprep.mubr.f32.mxu0 0.0
  %228 = vmatmul.mubr.f32.gmra.mrb[0].mxu0 %v88
  %v229 = vpop.f32.mrb[0].mxu0
  %v230 = vadd.f32 %v42, %v229
  %v231 = vpop.f32.mrb[0].mxu0
  %232 = vmatprep.mubr.f32.mxu0 0.0
  %233 = vmatmul.mubr.f32.gmra.mrb[0].mxu0 %v91
  %v234 = vpop.f32.mrb[0].mxu0
  %v235 = vadd.f32 %v42, %v234
  %v236 = vpop.f32.mrb[0].mxu0
  %237 = vdwg.mxu0
  %vm238 = vcmp.ge.f32.partialorder %v160, 0.0
  %vm239 = vcmp.ge.f32.partialorder %v165, 0.0
  %vm240 = vcmp.ge.f32.partialorder %v170, 0.0
  %vm241 = vcmp.ge.f32.partialorder %v175, 0.0
  %vm242 = vcmp.ge.f32.partialorder %v180, 0.0
  %vm243 = vcmp.ge.f32.partialorder %v185, 0.0
  %vm244 = vcmp.ge.f32.partialorder %v190, 0.0
  %vm245 = vcmp.ge.f32.partialorder %v195, 0.0
  %vm246 = vcmp.ge.f32.partialorder %v200, 0.0
  %vm247 = vcmp.ge.f32.partialorder %v205, 0.0
  %vm248 = vcmp.ge.f32.partialorder %v210, 0.0
  %vm249 = vcmp.ge.f32.partialorder %v215, 0.0
  %vm250 = vcmp.ge.f32.partialorder %v220, 0.0
  %vm251 = vcmp.ge.f32.partialorder %v225, 0.0
  %vm252 = vcmp.ge.f32.partialorder %v230, 0.0
  %vm253 = vcmp.ge.f32.partialorder %v235, 0.0
  %v254 = vld [vmem:[%s3] sm:$0x1]
  %v256 = vlaneseq
  %v257 = vshrl.u32 %v256, 7
  %v258 = vsub.s32 0, %v257
  %v259 = vrot.slane %v254, %v258
  %v261 = vmul.f32 %v259, %v160
  %v262 = vmul.f32 %v259, %v165
  %v263 = vmul.f32 %v259, %v170
  %v264 = vmul.f32 %v259, %v175
  %v265 = vmul.f32 %v259, %v180
  %v266 = vmul.f32 %v259, %v185
  %v267 = vmul.f32 %v259, %v190
  %v268 = vmul.f32 %v259, %v195
  %v269 = vmul.f32 %v259, %v200
  %v270 = vmul.f32 %v259, %v205
  %v271 = vmul.f32 %v259, %v210
  %v272 = vmul.f32 %v259, %v215
  %v273 = vmul.f32 %v259, %v220
  %v274 = vmul.f32 %v259, %v225
  %v275 = vmul.f32 %v259, %v230
  %v276 = vmul.f32 %v259, %v235
  %v277 = vsel %vm238, %v160, %v261
  %v278 = vsel %vm239, %v165, %v262
  %v279 = vsel %vm240, %v170, %v263
  %v280 = vsel %vm241, %v175, %v264
  %v281 = vsel %vm242, %v180, %v265
  %v282 = vsel %vm243, %v185, %v266
  %v283 = vsel %vm244, %v190, %v267
  %v284 = vsel %vm245, %v195, %v268
  %v285 = vsel %vm246, %v200, %v269
  %v286 = vsel %vm247, %v205, %v270
  %v287 = vsel %vm248, %v210, %v271
  %v288 = vsel %vm249, %v215, %v272
  %v289 = vsel %vm250, %v220, %v273
  %v290 = vsel %vm251, %v225, %v274
  %v291 = vsel %vm252, %v230, %v275
  %v292 = vsel %vm253, %v235, %v276
  %293 = vst.msk [vmem:[%s4] sm:$0xff] %vm44, %v277
  %294 = vst.msk [vmem:[%s4 + $0x8] sm:$0xff] %vm44, %v278
  %295 = vst.msk [vmem:[%s4 + $0x10] sm:$0xff] %vm44, %v279
  %296 = vst.msk [vmem:[%s4 + $0x18] sm:$0xff] %vm44, %v280
  %297 = vst.msk [vmem:[%s4 + $0x20] sm:$0xff] %vm44, %v281
  %298 = vst.msk [vmem:[%s4 + $0x28] sm:$0xff] %vm44, %v282
  %299 = vst.msk [vmem:[%s4 + $0x30] sm:$0xff] %vm44, %v283
  %300 = vst.msk [vmem:[%s4 + $0x38] sm:$0xff] %vm44, %v284
  %301 = vst.msk [vmem:[%s4 + $0x40] sm:$0xff] %vm44, %v285
  %302 = vst.msk [vmem:[%s4 + $0x48] sm:$0xff] %vm44, %v286
  %303 = vst.msk [vmem:[%s4 + $0x50] sm:$0xff] %vm44, %v287
  %304 = vst.msk [vmem:[%s4 + $0x58] sm:$0xff] %vm44, %v288
  %305 = vst.msk [vmem:[%s4 + $0x60] sm:$0xff] %vm44, %v289
  %306 = vst.msk [vmem:[%s4 + $0x68] sm:$0xff] %vm44, %v290
  %307 = vst.msk [vmem:[%s4 + $0x70] sm:$0xff] %vm44, %v291
  %308 = vst.msk [vmem:[%s4 + $0x78] sm:$0xff] %vm44, %v292
  // Predicated region
  $region18: #{_lambda_.14} parent=0 // pred_check
    _
  $region19: #{_lambda_.14} parent=0 // pred_check_branch
    %310 = sbr.rel (0) target = $region21
  $region20: #{_lambda_.14} parent=0 // pred_region
    _
  $region21: #{_lambda_.14} parent=0 // pred_fallthru
    _
  // Predicated region
  $region22: #{_lambda_.14} parent=0 // pred_check
    _
  $region23: #{_lambda_.14} parent=0 // pred_check_branch
    %312 = sbr.rel (0) target = $region25
  $region24: #{_lambda_.14} parent=0 // pred_region
    _
  $region25: #{_lambda_.14} parent=0 // pred_fallthru
    _

// kernel: _lambda_.13
$region0: #{_lambda_.13}
  #allocation0 [shape = 'u32[]', space=smem, size = 0x4, offset = 0x4, fixed_abs, tag = 'smem constant byte address 0x4 - core index']
  #allocation1 [shape = 'u32[144,128]{1,0:T(1,128)}', space=vmem, size = 0x12000, scoped, tag = 'internal scratch']
  #allocation2 [shape = 'f32[16,16]{1,0:T(8,128)}', space=vmem, size = 0x2000, scoped, tag = 'scratch operand']
  #allocation3 [shape = 'f32[16,16]{1,0:T(8,128)}', space=vmem, size = 0x2000, scoped, tag = 'scratch operand']
  #allocation4 [shape = 'f32[16,16]{1,0:T(8,128)}', space=vmem, size = 0x2000, scoped, tag = 'scratch operand']
  #allocation5 [shape = 'f32[16,16]{1,0:T(8,128)}', space=vmem, size = 0x2000, scoped, tag = 'scratch operand']
  %s0 = inlined_call_operand.vmem [shape: f32[8,16,64], index: 0, kind: input, shape index: {}]
  %s1 = inlined_call_operand.vmem [shape: f32[8,16,64], index: 1, kind: input, shape index: {}]
  %s2 = inlined_call_operand.hbm [shape: f32[16,64], index: 2, kind: input, shape index: {}]
  %s3 = inlined_call_operand.hbm [shape: f32[16,64], index: 3, kind: input, shape index: {}]
  %s4 = inlined_call_operand.vmem [shape: f32[8,16,16], index: 4, kind: output, shape index: {0}]
  %s5 = inlined_call_operand.vmem [shape: f32[8,16,16], index: 5, kind: output, shape index: {1}]
  %6 = xla_tuple %s4, %s5
  %s7 = sld [smem:[#allocation0]]
  $region69: #{_lambda_.13} parent=0
    _
  %s9 = ssub.s32 1, %s7
  %s10 = scalar_select 0, %s9, %s7
  $region1: #{_lambda_.13} parent=0
    #allocation6 [shape = 'u8[8192]{0}', space=vmem, size = 0x2000, scoped, tag = 'input window, operand 2, single buffered']
    #allocation7 [shape = 's32[2]{0}', space=sflag, size = 0x8, scoped, tag = 'scoped memory for _lambda_.13']
    #allocation8 [shape = 'u8[8192]{0}', space=vmem, size = 0x2000, scoped, tag = 'input window, operand 3, single buffered']
    #allocation9 [shape = 's32[1]{0}', space=sflag, size = 0x4, scoped, tag = 'scoped memory for _lambda_.13']
    %11 = vsyncpa [#allocation7], 0
    %12 = vsyncpa [#allocation9], 0
    loop: start=0, step=1, limit=10
    $region2: #{_lambda_.13} parent=1 // loop_pre_header
      _
    $region3: #{_lambda_.13} parent=1 // loop_header
      %s14 = sphi 0, %s18
      %p15 = scmp.ge.s32.totalorder %s14, 10
      %s24 = sphi 0, %s26
      %s27 = sphi 0, %s24
      %s28 = sphi 0, %s27
      %s44 = sphi 0, %s28
      %s52 = sphi 0, %s54
      %s55 = sphi 0, %s52
      %s56 = sphi 0, %s55
      %s72 = sphi 0, %s56
      %s76 = sphi 0, %s76
      %s78 = sphi 0, %s76
      %s79 = sphi 0, %s78
      %s93 = sphi 0, %s79
      %s97 = sphi 0, %s97
      %s99 = sphi 0, %s97
      %s100 = sphi 0, %s99
      %s114 = sphi 0, %s100
      %s120 = sphi 0, %s122
      %s123 = sphi 0, %s120
      %s124 = sphi 0, %s123
      %s140 = sphi 0, %s124
      %s148 = sphi 0, %s150
      %s151 = sphi 0, %s148
      %s152 = sphi 0, %s151
      %s168 = sphi 0, %s152
    $region4: #{_lambda_.13} parent=1 // loop_header_branch
      %17 = sbr.rel (%p15) target = $region8
    $region5: #{_lambda_.13} parent=1 // loop_body
      %s19 = ssub.s32 %s14, 1
      %s20 = ssub.s32 %s14, 2
      %s21 = sadd.s32 %s14, 1
      %s22 = ssub.s32 %s14, %s21
      %p23 = scmp.eq.s32.totalorder %s22, 0
      %s25 = sadd.s32 %s24, 1
      %s26 = scalar_select %p23, %s24, %s25
      %p29 = pneg %p23
      %p30 = scmp.eq.s32.totalorder %s14, 7
      %p31 = por %p29, %p30
      %p32 = scmp.ne.s32.totalorder %s24, %s27
      %p33 = scmp.eq.s32.totalorder %s14, 0
      %p34 = por %p32, %p33
      %p35 = scmp.ne.s32.totalorder %s24, %s27
      %p36 = scmp.eq.s32.totalorder %s19, 7
      %p37 = por %p35, %p36
      %p38 = scmp.ne.s32.totalorder %s27, %s28
      %p39 = scmp.eq.s32.totalorder %s19, 0
      %p40 = por %p38, %p39
      %p41 = scmp.ne.s32.totalorder %s27, %s28
      %p42 = scmp.eq.s32.totalorder %s20, 7
      %p43 = por %p41, %p42
      %p45 = scmp.ne.s32.totalorder %s28, %s44
      %p46 = scmp.eq.s32.totalorder %s20, 0
      %p47 = por %p45, %p46
      %s48 = ssub.s32 7, %s14
      %s49 = ssub.s32 7, %s21
      %s50 = ssub.s32 %s48, %s49
      %p51 = scmp.eq.s32.totalorder %s50, 0
      %s53 = sadd.s32 %s52, 1
      %s54 = scalar_select %p51, %s52, %s53
      %p57 = pneg %p51
      %p58 = scmp.eq.s32.totalorder %s14, 7
      %p59 = por %p57, %p58
      %p60 = scmp.ne.s32.totalorder %s52, %s55
      %p61 = scmp.eq.s32.totalorder %s14, 0
      %p62 = por %p60, %p61
      %p63 = scmp.ne.s32.totalorder %s52, %s55
      %p64 = scmp.eq.s32.totalorder %s19, 7
      %p65 = por %p63, %p64
      %p66 = scmp.ne.s32.totalorder %s55, %s56
      %p67 = scmp.eq.s32.totalorder %s19, 0
      %p68 = por %p66, %p67
      %p69 = scmp.ne.s32.totalorder %s55, %s56
      %p70 = scmp.eq.s32.totalorder %s20, 7
      %p71 = por %p69, %p70
      %p73 = scmp.ne.s32.totalorder %s56, %s72
      %p74 = scmp.eq.s32.totalorder %s20, 0
      %p75 = por %p73, %p74
      %s77 = sadd.s32 %s76, 1
      %p80 = scmp.eq.s32.totalorder %s14, 7
      %p81 = scmp.ne.s32.totalorder %s76, %s78
      %p82 = scmp.eq.s32.totalorder %s14, 0
      %p83 = por %p81, %p82
      %p84 = scmp.ne.s32.totalorder %s76, %s78
      %p85 = scmp.eq.s32.totalorder %s19, 7
      %p86 = por %p84, %p85
      %p87 = scmp.ne.s32.totalorder %s78, %s79
      %p88 = scmp.eq.s32.totalorder %s19, 0
      %p89 = por %p87, %p88
      %p90 = scmp.ne.s32.totalorder %s78, %s79
      %p91 = scmp.eq.s32.totalorder %s20, 7
      %p92 = por %p90, %p91
      %p94 = scmp.ne.s32.totalorder %s79, %s93
      %p95 = scmp.eq.s32.totalorder %s20, 0
      %p96 = por %p94, %p95
      %s98 = sadd.s32 %s97, 1
      %p101 = scmp.eq.s32.totalorder %s14, 7
      %p102 = scmp.ne.s32.totalorder %s97, %s99
      %p103 = scmp.eq.s32.totalorder %s14, 0
      %p104 = por %p102, %p103
      %p105 = scmp.ne.s32.totalorder %s97, %s99
      %p106 = scmp.eq.s32.totalorder %s19, 7
      %p107 = por %p105, %p106
      %p108 = scmp.ne.s32.totalorder %s99, %s100
      %p109 = scmp.eq.s32.totalorder %s19, 0
      %p110 = por %p108, %p109
      %p111 = scmp.ne.s32.totalorder %s99, %s100
      %p112 = scmp.eq.s32.totalorder %s20, 7
      %p113 = por %p111, %p112
      %p115 = scmp.ne.s32.totalorder %s100, %s114
      %p116 = scmp.eq.s32.totalorder %s20, 0
      %p117 = por %p115, %p116
      %s118 = ssub.s32 %s14, %s21
      %p119 = scmp.eq.s32.totalorder %s118, 0
      %s121 = sadd.s32 %s120, 1
      %s122 = scalar_select %p119, %s120, %s121
      %p125 = pneg %p119
      %p126 = scmp.eq.s32.totalorder %s14, 7
      %p127 = por %p125, %p126
      %p128 = scmp.ne.s32.totalorder %s120, %s123
      %p129 = scmp.eq.s32.totalorder %s14, 0
      %p130 = por %p128, %p129
      %p131 = scmp.ne.s32.totalorder %s120, %s123
      %p132 = scmp.eq.s32.totalorder %s19, 7
      %p133 = por %p131, %p132
      %p134 = scmp.ne.s32.totalorder %s123, %s124
      %p135 = scmp.eq.s32.totalorder %s19, 0
      %p136 = por %p134, %p135
      %p137 = scmp.ne.s32.totalorder %s123, %s124
      %p138 = scmp.eq.s32.totalorder %s20, 7
      %p139 = por %p137, %p138
      %p141 = scmp.ne.s32.totalorder %s124, %s140
      %p142 = scmp.eq.s32.totalorder %s20, 0
      %p143 = por %p141, %p142
      %s144 = ssub.s32 7, %s14
      %s145 = ssub.s32 7, %s21
      %s146 = ssub.s32 %s144, %s145
      %p147 = scmp.eq.s32.totalorder %s146, 0
      %s149 = sadd.s32 %s148, 1
      %s150 = scalar_select %p147, %s148, %s149
      %p153 = pneg %p147
      %p154 = scmp.eq.s32.totalorder %s14, 7
      %p155 = por %p153, %p154
      %p156 = scmp.ne.s32.totalorder %s148, %s151
      %p157 = scmp.eq.s32.totalorder %s14, 0
      %p158 = por %p156, %p157
      %p159 = scmp.ne.s32.totalorder %s148, %s151
      %p160 = scmp.eq.s32.totalorder %s19, 7
      %p161 = por %p159, %p160
      %p162 = scmp.ne.s32.totalorder %s151, %s152
      %p163 = scmp.eq.s32.totalorder %s19, 0
      %p164 = por %p162, %p163
      %p165 = scmp.ne.s32.totalorder %s151, %s152
      %p166 = scmp.eq.s32.totalorder %s20, 7
      %p167 = por %p165, %p166
      %p169 = scmp.ne.s32.totalorder %s152, %s168
      %p170 = scmp.eq.s32.totalorder %s20, 0
      %p171 = por %p169, %p170
      %p172 = scmp.le.s32.totalorder 1, %s14
      %p173 = scmp.lt.s32.totalorder %s14, 9
      %p174 = pnand %p172, %p173
      %p175 = pneg %p174
      // Predicated region
      $region9: #{_lambda_.13} parent=5 // pred_check
        _
      $region10: #{_lambda_.13} parent=5 // pred_check_branch
        %177 = sbr.rel (%p174) target = $region12
      $region11: #{_lambda_.13} parent=5 // pred_region
        %s178 = ssub.s32 %s14, 1
        // Predicated region
        $region13: #{_lambda_.13} parent=11 // pred_check
          %p179 = pneg %p89
        $region14: #{_lambda_.13} parent=11 // pred_check_branch
          %181 = sbr.rel (%p179) target = $region16
        $region15: #{_lambda_.13} parent=11 // pred_region
          %s183 = ssub.s32 256, 256
          %184 = vsyncadd [#allocation7], %s183
          %s185 = sshll.u32 [#allocation6], 4
          %s186 = int_to_ptr.vmem [resolvable:$true] %s185
          %191 = dma.hbm_to_vmem [thread:$0]  %s2, 256, %s186, [#allocation7], 128, 128, 8
        $region16: #{_lambda_.13} parent=11 // pred_fallthru
          _
        // Predicated region
        $region17: #{_lambda_.13} parent=11 // pred_check
          %p192 = pneg %p110
        $region18: #{_lambda_.13} parent=11 // pred_check_branch
          %194 = sbr.rel (%p192) target = $region20
        $region19: #{_lambda_.13} parent=11 // pred_region
          %s196 = ssub.s32 256, 256
          %197 = vsyncadd [#allocation9], %s196
          %s198 = sshll.u32 [#allocation8], 4
          %s199 = int_to_ptr.vmem [resolvable:$true] %s198
          %204 = dma.hbm_to_vmem [thread:$0]  %s3, 256, %s199, [#allocation9], 128, 128, 8
        $region20: #{_lambda_.13} parent=11 // pred_fallthru
          _
      $region12: #{_lambda_.13} parent=5 // pred_fallthru
        _
      %p205 = scmp.lt.s32.totalorder %s14, 8
      // Predicated region
      $region21: #{_lambda_.13} parent=5 // pred_check
        %p206 = pneg %p205
      $region22: #{_lambda_.13} parent=5 // pred_check_branch
        %208 = sbr.rel (%p206) target = $region24
      $region23: #{_lambda_.13} parent=5 // pred_region
        // Predicated region
        $region25: #{_lambda_.13} parent=23 // pred_check
          %p209 = pneg %p34
        $region26: #{_lambda_.13} parent=23 // pred_check_branch
          %211 = sbr.rel (%p209) target = $region28
        $region27: #{_lambda_.13} parent=23 // pred_region
          %p212 = scmp.lt.s32.totalorder %s14, 7
          %s213 = scalar_select %p212, %s14, 7
          %s214 = smul.addr %s213, 2
          %s215 = smul.addr %s214, 8
          %s216 = scalar_lea.vmem %s0, %s215
        $region28: #{_lambda_.13} parent=23 // pred_fallthru
          _
        // Predicated region
        $region29: #{_lambda_.13} parent=23 // pred_check
          %p217 = pneg %p62
        $region30: #{_lambda_.13} parent=23 // pred_check_branch
          %219 = sbr.rel (%p217) target = $region32
        $region31: #{_lambda_.13} parent=23 // pred_region
          %s220 = ssub.s32 7, %s14
          %p221 = scmp.lt.s32.totalorder %s220, 7
          %s222 = scalar_select %p221, %s220, 7
          %s223 = smul.addr %s222, 2
          %s224 = smul.addr %s223, 8
          %s225 = scalar_lea.vmem %s1, %s224
          %s226 = ssub.s32 7, %s14
        $region32: #{_lambda_.13} parent=23 // pred_fallthru
          _
      $region24: #{_lambda_.13} parent=5 // pred_fallthru
        _
      %p227 = scmp.le.s32.totalorder 1, %s14
      %p228 = scmp.lt.s32.totalorder %s14, 9
      %p229 = pnand %p227, %p228
      %p230 = pneg %p229
      // Predicated region
      $region33: #{_lambda_.13} parent=5 // pred_check
        _
      $region34: #{_lambda_.13} parent=5 // pred_check_branch
        %232 = sbr.rel (%p229) target = $region36
      $region35: #{_lambda_.13} parent=5 // pred_region
        %s233 = ssub.s32 %s14, 1
        // Predicated region
        $region37: #{_lambda_.13} parent=35 // pred_check
          %p234 = pneg %p89
        $region38: #{_lambda_.13} parent=35 // pred_check_branch
          %236 = sbr.rel (%p234) target = $region40
        $region39: #{_lambda_.13} parent=35 // pred_region
          %237 = dma.done [#allocation7], 256
        $region40: #{_lambda_.13} parent=35 // pred_fallthru
          _
        // Predicated region
        $region41: #{_lambda_.13} parent=35 // pred_check
          %p238 = pneg %p110
        $region42: #{_lambda_.13} parent=35 // pred_check_branch
          %240 = sbr.rel (%p238) target = $region44
        $region43: #{_lambda_.13} parent=35 // pred_region
          %241 = dma.done [#allocation9], 256
        $region44: #{_lambda_.13} parent=35 // pred_fallthru
          _
        %p242 = scmp.lt.s32.totalorder %s19, 7
        %s243 = scalar_select %p242, %s19, 7
        %s244 = smul.addr %s243, 2
        %s245 = smul.addr %s244, 8
        %s246 = scalar_lea.vmem %s0, %s245
        %p247 = pneg %p40
        %p248 = pneg %p37
        %s249 = ssub.s32 7, %s19
        %p250 = scmp.lt.s32.totalorder %s249, 7
        %s251 = scalar_select %p250, %s249, 7
        %s252 = smul.addr %s251, 2
        %s253 = smul.addr %s252, 8
        %s254 = scalar_lea.vmem %s1, %s253
        %p255 = pneg %p68
        %p256 = pneg %p65
        %p257 = pneg %p89
        %p258 = pneg %p86
        %p259 = pneg %p110
        %p260 = pneg %p107
        %p261 = pneg %p136
        %p262 = pneg %p133
        %p263 = scmp.lt.s32.totalorder %s19, 7
        %s264 = scalar_select %p263, %s19, 7
        %s265 = smul.addr %s264, 2
        %s266 = smul.addr %s265, 8
        %s267 = scalar_lea.vmem %s4, %s266
        %p268 = pneg %p164
        %p269 = pneg %p161
        %s270 = ssub.s32 7, %s19
        %p271 = scmp.lt.s32.totalorder %s270, 7
        %s272 = scalar_select %p271, %s270, 7
        %s273 = smul.addr %s272, 2
        %s274 = smul.addr %s273, 8
        %s275 = scalar_lea.vmem %s5, %s274
        %p276 = scmp.lt.s32.totalorder %s19, 7
        %s277 = scalar_select %p276, %s19, 7
        %s278 = smul.addr %s277, 2
        %s279 = smul.addr %s278, 8
        %s280 = scalar_lea.vmem %s0, %s279
        %s281 = ssub.s32 7, %s19
        %p282 = scmp.lt.s32.totalorder %s281, 7
        %s283 = scalar_select %p282, %s281, 7
        %s284 = smul.addr %s283, 2
        %s285 = smul.addr %s284, 8
        %s286 = scalar_lea.vmem %s1, %s285
        %s287 = ssub.s32 7, %s19
        %p288 = scmp.lt.s32.totalorder %s19, 7
        %s289 = scalar_select %p288, %s19, 7
        %s290 = smul.addr %s289, 2
        %s291 = smul.addr %s290, 8
        %s292 = scalar_lea.vmem %s4, %s291
        %s293 = ssub.s32 7, %s19
        %p294 = scmp.lt.s32.totalorder %s293, 7
        %s295 = scalar_select %p294, %s293, 7
        %s296 = smul.addr %s295, 2
        %s297 = smul.addr %s296, 8
        %s298 = scalar_lea.vmem %s5, %s297
        %s299 = ssub.s32 7, %s19
        %p300 = scmp.eq.s32.totalorder %s19, 0
        // Predicated region
        $region45: #{_lambda_.13} parent=35 // pred_check
          %p301 = pneg %p300
        $region46: #{_lambda_.13} parent=35 // pred_check_branch
          %303 = sbr.rel (%p301) target = $region48
        $region47: #{_lambda_.13} parent=35 // pred_region
          %vm304 = vcmask 130048
          %305 = vst.msk [vmem:[#allocation2] sm:$0xff] %vm304, 0.0
          %306 = vst.msk [vmem:[#allocation2 + $0x8] sm:$0xff] %vm304, 0.0
          %307 = vst.msk [vmem:[#allocation3] sm:$0xff] %vm304, 0.0
          %308 = vst.msk [vmem:[#allocation3 + $0x8] sm:$0xff] %vm304, 0.0
          %309 = vst.msk [vmem:[#allocation4] sm:$0xff] %vm304, 0.0
          %310 = vst.msk [vmem:[#allocation4 + $0x8] sm:$0xff] %vm304, 0.0
          %311 = vst.msk [vmem:[#allocation5] sm:$0xff] %vm304, 0.0
          %312 = vst.msk [vmem:[#allocation5 + $0x8] sm:$0xff] %vm304, 0.0
        $region48: #{_lambda_.13} parent=35 // pred_fallthru
          _
        %v313 = vld [vmem:[%s280] sm:$0xff]
        %v314 = vld [vmem:[%s280 + $0x8] sm:$0xff]
        %v315 = vld [vmem:[#allocation2] sm:$0xff]
        %v316 = vld [vmem:[#allocation2 + $0x8] sm:$0xff]
        %v317 = vld [vmem:[#allocation6] sm:$0xff]
        %v318 = vld [vmem:[#allocation6 + $0x8] sm:$0xff]
        %vm319 = vcmask 130048
        %v321 = vsel %vm319, %v315, 0
        %v324 = vsel %vm319, %v316, 0
        %326 = vmatprep.subr.mxu0 0.0
        %327 = vmatpush1.msra.mxu0 %v317
        %328 = vmatprep.subr.mxu0 0.0
        %329 = vmatpush1.msra.mxu0 %v318
        %330 = vmatprep.subr.mxu0 0.0
        %331 = vmatpush1.msra.mxu0 0.0
        %332 = vmatprep.subr.mxu0 0.0
        %333 = vmatpush1.msra.mxu0 0.0
        %334 = vmatprep.subr.mxu0 0.0
        %335 = vmatpush1.msra.mxu0 0.0
        %336 = vmatprep.subr.mxu0 0.0
        %337 = vmatpush1.msra.mxu0 0.0
        %338 = vmatprep.subr.mxu0 0.0
        %339 = vmatpush1.msra.mxu0 0.0
        %340 = vmatprep.subr.mxu0 0.0
        %341 = vmatpush1.msra.mxu0 0.0
        %342 = vmatprep.subr.mxu0 0.0
        %343 = vmatpush1.msra.mxu0 0.0
        %344 = vmatprep.subr.mxu0 0.0
        %345 = vmatpush1.msra.mxu0 0.0
        %346 = vmatprep.subr.mxu0 0.0
        %347 = vmatpush1.msra.mxu0 0.0
        %348 = vmatprep.subr.mxu0 0.0
        %349 = vmatpush1.msra.mxu0 0.0
        %350 = vmatprep.subr.mxu0 0.0
        %351 = vmatpush1.msra.mxu0 0.0
        %352 = vmatprep.subr.mxu0 0.0
        %353 = vmatpush1.msra.mxu0 0.0
        %354 = vmatprep.subr.mxu0 0.0
        %355 = vmatpush1.msra.mxu0 0.0
        %356 = vmatprep.subr.mxu0 0.0
        %357 = vmatpush1.msra.mxu0 0.0
        %358 = vmatprep.subr.mxu0 0.0
        %359 = vmatpush1.msra.mxu0 0.0
        %360 = vmatprep.subr.mxu0 0.0
        %361 = vmatpush1.msra.mxu0 0.0
        %362 = vmatprep.subr.mxu0 0.0
        %363 = vmatpush1.msra.mxu0 0.0
        %364 = vmatprep.subr.mxu0 0.0
        %365 = vmatpush1.msra.mxu0 0.0
        %366 = vmatprep.subr.mxu0 0.0
        %367 = vmatpush1.msra.mxu0 0.0
        %368 = vmatprep.subr.mxu0 0.0
        %369 = vmatpush1.msra.mxu0 0.0
        %370 = vmatprep.subr.mxu0 0.0
        %371 = vmatpush1.msra.mxu0 0.0
        %372 = vmatprep.subr.mxu0 0.0
        %373 = vmatpush1.msra.mxu0 0.0
        %374 = vmatprep.subr.mxu0 0.0
        %375 = vmatpush1.msra.mxu0 0.0
        %376 = vmatprep.subr.mxu0 0.0
        %377 = vmatpush1.msra.mxu0 0.0
        %378 = vmatprep.subr.mxu0 0.0
        %379 = vmatpush1.msra.mxu0 0.0
        %380 = vmatprep.subr.mxu0 0.0
        %381 = vmatpush1.msra.mxu0 0.0
        %382 = vmatprep.subr.mxu0 0.0
        %383 = vmatpush1.msra.mxu0 0.0
        %384 = vmatprep.subr.mxu0 0.0
        %385 = vmatpush1.msra.mxu0 0.0
        %386 = vmatprep.subr.mxu0 0.0
        %387 = vmatpush1.msra.mxu0 0.0
        %388 = vmatprep.subr.mxu0 0.0
        %389 = vmatpush1.msra.mxu0 0.0
        %390 = vmatprep.mubr.f32.mxu0 0.0
        %391 = vmatmul.mubr.f32.gmra.mrb[0].mxu0 %v321
        %v392 = vpop.f32.mrb[0].mxu0
        %v393 = vadd.f32 0.0, %v392
        %v394 = vpop.f32.mrb[0].mxu0
        %395 = vmatprep.mubr.f32.mxu0 0.0
        %396 = vmatmul.mubr.f32.gmra.mrb[0].mxu0 %v324
        %v397 = vpop.f32.mrb[0].mxu0
        %v398 = vadd.f32 0.0, %v397
        %v399 = vpop.f32.mrb[0].mxu0
        %400 = vdwg.mxu0
        %v401 = vadd.f32 %v313, %v393
        %v402 = vadd.f32 %v314, %v398
        %v403 = vld [vmem:[#allocation3] sm:$0xff]
        %v404 = vld [vmem:[#allocation3 + $0x8] sm:$0xff]
        %v405 = vxor.u32 %v401, 2147483648
        %v406 = vxor.u32 %v402, 2147483648
        %v407 = vmul.f32 %v405, 1.442695
        %v408 = vpow.pop %v407
        %v409 = vmul.f32 %v406, 1.442695
        %v410 = vpow.pop %v409
        %v411 = vadd.f32 %v408, 1.0
        %v412 = vadd.f32 %v410, 1.0
        %v413 = vrcp.pop %v411
        %v414 = vmul.f32 1.0, %v413
        %v415 = vrcp.pop %v412
        %v416 = vmul.f32 1.0, %v415
        %v417 = vtanh.pop %v401
        %v418 = vtanh.pop %v402
        %421 = vrot.lane.b32.xlu0 %v403, 16
        %v422 = vpop.permute.xlu0 %421
        %423 = vrot.lane.b32.xlu0 %v404, 16
        %v424 = vpop.permute.xlu0 %423
        %v427 = vmul.f32 %v414, %v422
        %v428 = vmul.f32 %v416, %v424
        %431 = vrot.lane.b32.xlu0 %v417, 96
        %v432 = vpop.permute.xlu0 %431
        %433 = vrot.lane.b32.xlu0 %v418, 96
        %v434 = vpop.permute.xlu0 %433
        %v437 = vmul.f32 %v414, %v432
        %v438 = vmul.f32 %v416, %v434
        %441 = vrot.lane.b32.xlu0 %v437, 16
        %v442 = vpop.permute.xlu0 %441
        %443 = vrot.lane.b32.xlu0 %v438, 16
        %v444 = vpop.permute.xlu0 %443
        %v447 = vadd.f32 %v427, %v442
        %v448 = vadd.f32 %v428, %v444
        %v449 = vtanh.pop %v447
        %v450 = vtanh.pop %v448
        %453 = vrot.lane.b32.xlu0 %v449, 32
        %v454 = vpop.permute.xlu0 %453
        %455 = vrot.lane.b32.xlu0 %v450, 32
        %v456 = vpop.permute.xlu0 %455
        %v459 = vmul.f32 %v414, %v454
        %v460 = vmul.f32 %v416, %v456
        %463 = vrot.lane.b32.xlu0 %v459, 80
        %v464 = vpop.permute.xlu0 %463
        %465 = vrot.lane.b32.xlu0 %v460, 80
        %v466 = vpop.permute.xlu0 %465
        %469 = vst.msk [vmem:[#allocation2] sm:$0xff] %vm319, %v464
        %470 = vst.msk [vmem:[#allocation2 + $0x8] sm:$0xff] %vm319, %v466
        %473 = vrot.lane.b32.xlu0 %v447, 112
        %v474 = vpop.permute.xlu0 %473
        %475 = vrot.lane.b32.xlu0 %v448, 112
        %v476 = vpop.permute.xlu0 %475
        %479 = vst.msk [vmem:[#allocation3] sm:$0xff] %vm319, %v474
        %480 = vst.msk [vmem:[#allocation3 + $0x8] sm:$0xff] %vm319, %v476
        %481 = vst.msk [vmem:[%s292] sm:$0xff] %vm319, %v464
        %482 = vst.msk [vmem:[%s292 + $0x8] sm:$0xff] %vm319, %v466
        %v483 = vld [vmem:[%s286] sm:$0xff]
        %v484 = vld [vmem:[%s286 + $0x8] sm:$0xff]
        %v485 = vld [vmem:[#allocation4] sm:$0xff]
        %v486 = vld [vmem:[#allocation4 + $0x8] sm:$0xff]
        %v487 = vld [vmem:[#allocation8] sm:$0xff]
        %v488 = vld [vmem:[#allocation8 + $0x8] sm:$0xff]
        %v490 = vsel %vm319, %v485, 0
        %v493 = vsel %vm319, %v486, 0
        %495 = vmatprep.subr.mxu0 0.0
        %496 = vmatpush1.msra.mxu0 %v487
        %497 = vmatprep.subr.mxu0 0.0
        %498 = vmatpush1.msra.mxu0 %v488
        %499 = vmatprep.subr.mxu0 0.0
        %500 = vmatpush1.msra.mxu0 0.0
        %501 = vmatprep.subr.mxu0 0.0
        %502 = vmatpush1.msra.mxu0 0.0
        %503 = vmatprep.subr.mxu0 0.0
        %504 = vmatpush1.msra.mxu0 0.0
        %505 = vmatprep.subr.mxu0 0.0
        %506 = vmatpush1.msra.mxu0 0.0
        %507 = vmatprep.subr.mxu0 0.0
        %508 = vmatpush1.msra.mxu0 0.0
        %509 = vmatprep.subr.mxu0 0.0
        %510 = vmatpush1.msra.mxu0 0.0
        %511 = vmatprep.subr.mxu0 0.0
        %512 = vmatpush1.msra.mxu0 0.0
        %513 = vmatprep.subr.mxu0 0.0
        %514 = vmatpush1.msra.mxu0 0.0
        %515 = vmatprep.subr.mxu0 0.0
        %516 = vmatpush1.msra.mxu0 0.0
        %517 = vmatprep.subr.mxu0 0.0
        %518 = vmatpush1.msra.mxu0 0.0
        %519 = vmatprep.subr.mxu0 0.0
        %520 = vmatpush1.msra.mxu0 0.0
        %521 = vmatprep.subr.mxu0 0.0
        %522 = vmatpush1.msra.mxu0 0.0
        %523 = vmatprep.subr.mxu0 0.0
        %524 = vmatpush1.msra.mxu0 0.0
        %525 = vmatprep.subr.mxu0 0.0
        %526 = vmatpush1.msra.mxu0 0.0
        %527 = vmatprep.subr.mxu0 0.0
        %528 = vmatpush1.msra.mxu0 0.0
        %529 = vmatprep.subr.mxu0 0.0
        %530 = vmatpush1.msra.mxu0 0.0
        %531 = vmatprep.subr.mxu0 0.0
        %532 = vmatpush1.msra.mxu0 0.0
        %533 = vmatprep.subr.mxu0 0.0
        %534 = vmatpush1.msra.mxu0 0.0
        %535 = vmatprep.subr.mxu0 0.0
        %536 = vmatpush1.msra.mxu0 0.0
        %537 = vmatprep.subr.mxu0 0.0
        %538 = vmatpush1.msra.mxu0 0.0
        %539 = vmatprep.subr.mxu0 0.0
        %540 = vmatpush1.msra.mxu0 0.0
        %541 = vmatprep.subr.mxu0 0.0
        %542 = vmatpush1.msra.mxu0 0.0
        %543 = vmatprep.subr.mxu0 0.0
        %544 = vmatpush1.msra.mxu0 0.0
        %545 = vmatprep.subr.mxu0 0.0
        %546 = vmatpush1.msra.mxu0 0.0
        %547 = vmatprep.subr.mxu0 0.0
        %548 = vmatpush1.msra.mxu0 0.0
        %549 = vmatprep.subr.mxu0 0.0
        %550 = vmatpush1.msra.mxu0 0.0
        %551 = vmatprep.subr.mxu0 0.0
        %552 = vmatpush1.msra.mxu0 0.0
        %553 = vmatprep.subr.mxu0 0.0
        %554 = vmatpush1.msra.mxu0 0.0
        %555 = vmatprep.subr.mxu0 0.0
        %556 = vmatpush1.msra.mxu0 0.0
        %557 = vmatprep.subr.mxu0 0.0
        %558 = vmatpush1.msra.mxu0 0.0
        %559 = vmatprep.mubr.f32.mxu0 0.0
        %560 = vmatmul.mubr.f32.gmra.mrb[0].mxu0 %v490
        %v561 = vpop.f32.mrb[0].mxu0
        %v562 = vadd.f32 0.0, %v561
        %v563 = vpop.f32.mrb[0].mxu0
        %564 = vmatprep.mubr.f32.mxu0 0.0
        %565 = vmatmul.mubr.f32.gmra.mrb[0].mxu0 %v493
        %v566 = vpop.f32.mrb[0].mxu0
        %v567 = vadd.f32 0.0, %v566
        %v568 = vpop.f32.mrb[0].mxu0
        %569 = vdwg.mxu0
        %v570 = vadd.f32 %v483, %v562
        %v571 = vadd.f32 %v484, %v567
        %v572 = vld [vmem:[#allocation5] sm:$0xff]
        %v573 = vld [vmem:[#allocation5 + $0x8] sm:$0xff]
        %v574 = vxor.u32 %v570, 2147483648
        %v575 = vxor.u32 %v571, 2147483648
        %v576 = vmul.f32 %v574, 1.442695
        %v577 = vpow.pop %v576
        %v578 = vmul.f32 %v575, 1.442695
        %v579 = vpow.pop %v578
        %v580 = vadd.f32 %v577, 1.0
        %v581 = vadd.f32 %v579, 1.0
        %v582 = vrcp.pop %v580
        %v583 = vmul.f32 1.0, %v582
        %v584 = vrcp.pop %v581
        %v585 = vmul.f32 1.0, %v584
        %v586 = vtanh.pop %v570
        %v587 = vtanh.pop %v571
        %590 = vrot.lane.b32.xlu0 %v572, 16
        %v591 = vpop.permute.xlu0 %590
        %592 = vrot.lane.b32.xlu0 %v573, 16
        %v593 = vpop.permute.xlu0 %592
        %v596 = vmul.f32 %v583, %v591
        %v597 = vmul.f32 %v585, %v593
        %600 = vrot.lane.b32.xlu0 %v586, 96
        %v601 = vpop.permute.xlu0 %600
        %602 = vrot.lane.b32.xlu0 %v587, 96
        %v603 = vpop.permute.xlu0 %602
        %v606 = vmul.f32 %v583, %v601
        %v607 = vmul.f32 %v585, %v603
        %610 = vrot.lane.b32.xlu0 %v606, 16
        %v611 = vpop.permute.xlu0 %610
        %612 = vrot.lane.b32.xlu0 %v607, 16
        %v613 = vpop.permute.xlu0 %612
        %v616 = vadd.f32 %v596, %v611
        %v617 = vadd.f32 %v597, %v613
        %v618 = vtanh.pop %v616
        %v619 = vtanh.pop %v617
        %622 = vrot.lane.b32.xlu0 %v618, 32
        %v623 = vpop.permute.xlu0 %622
        %624 = vrot.lane.b32.xlu0 %v619, 32
        %v625 = vpop.permute.xlu0 %624
        %v628 = vmul.f32 %v583, %v623
        %v629 = vmul.f32 %v585, %v625
        %632 = vrot.lane.b32.xlu0 %v628, 80
        %v633 = vpop.permute.xlu0 %632
        %634 = vrot.lane.b32.xlu0 %v629, 80
        %v635 = vpop.permute.xlu0 %634
        %638 = vst.msk [vmem:[#allocation4] sm:$0xff] %vm319, %v633
        %639 = vst.msk [vmem:[#allocation4 + $0x8] sm:$0xff] %vm319, %v635
        %642 = vrot.lane.b32.xlu0 %v616, 112
        %v643 = vpop.permute.xlu0 %642
        %644 = vrot.lane.b32.xlu0 %v617, 112
        %v645 = vpop.permute.xlu0 %644
        %648 = vst.msk [vmem:[#allocation5] sm:$0xff] %vm319, %v643
        %649 = vst.msk [vmem:[#allocation5 + $0x8] sm:$0xff] %vm319, %v645
        %650 = vst.msk [vmem:[%s298] sm:$0xff] %vm319, %v633
        %651 = vst.msk [vmem:[%s298 + $0x8] sm:$0xff] %vm319, %v635
        %p652 = scmp.lt.s32.totalorder %s19, 7
        %s653 = scalar_select %p652, %s19, 7
        %s654 = smul.addr %s653, 2
        %s655 = smul.addr %s654, 8
        %s656 = scalar_lea.vmem %s4, %s655
        %s657 = ssub.s32 7, %s19
        %p658 = scmp.lt.s32.totalorder %s657, 7
        %s659 = scalar_select %p658, %s657, 7
        %s660 = smul.addr %s659, 2
        %s661 = smul.addr %s660, 8
        %s662 = scalar_lea.vmem %s5, %s661
        // Predicated region
        $region49: #{_lambda_.13} parent=35 // pred_check
          %p663 = pneg %p133
        $region50: #{_lambda_.13} parent=35 // pred_check_branch
          %665 = sbr.rel (%p663) target = $region52
        $region51: #{_lambda_.13} parent=35 // pred_region
          _
        $region52: #{_lambda_.13} parent=35 // pred_fallthru
          _
        // Predicated region
        $region53: #{_lambda_.13} parent=35 // pred_check
          %p666 = pneg %p161
        $region54: #{_lambda_.13} parent=35 // pred_check_branch
          %668 = sbr.rel (%p666) target = $region56
        $region55: #{_lambda_.13} parent=35 // pred_region
          %s669 = ssub.s32 7, %s19
        $region56: #{_lambda_.13} parent=35 // pred_fallthru
          _
      $region36: #{_lambda_.13} parent=5 // pred_fallthru
        _
      %p670 = scmp.le.s32.totalorder 2, %s14
      // Predicated region
      $region57: #{_lambda_.13} parent=5 // pred_check
        %p671 = pneg %p670
      $region58: #{_lambda_.13} parent=5 // pred_check_branch
        %673 = sbr.rel (%p671) target = $region60
      $region59: #{_lambda_.13} parent=5 // pred_region
        %s674 = ssub.s32 %s14, 2
        // Predicated region
        $region61: #{_lambda_.13} parent=59 // pred_check
          %p675 = pneg %p139
        $region62: #{_lambda_.13} parent=59 // pred_check_branch
          %677 = sbr.rel (%p675) target = $region64
        $region63: #{_lambda_.13} parent=59 // pred_region
          %p678 = scmp.lt.s32.totalorder %s20, 7
          %s679 = scalar_select %p678, %s20, 7
          %s680 = smul.addr %s679, 2
          %s681 = smul.addr %s680, 8
          %s682 = scalar_lea.vmem %s4, %s681
        $region64: #{_lambda_.13} parent=59 // pred_fallthru
          _
        // Predicated region
        $region65: #{_lambda_.13} parent=59 // pred_check
          %p683 = pneg %p167
        $region66: #{_lambda_.13} parent=59 // pred_check_branch
          %685 = sbr.rel (%p683) target = $region68
        $region67: #{_lambda_.13} parent=59 // pred_region
          %s686 = ssub.s32 7, %s20
          %p687 = scmp.lt.s32.totalorder %s686, 7
          %s688 = scalar_select %p687, %s686, 7
          %s689 = smul.addr %s688, 2
          %s690 = smul.addr %s689, 8
          %s691 = scalar_lea.vmem %s5, %s690
        $region68: #{_lambda_.13} parent=59 // pred_fallthru
          _
      $region60: #{_lambda_.13} parent=5 // pred_fallthru
        _
    $region6: #{_lambda_.13} parent=1 // loop_footer
      %s18 = sadd.s32 1, %s14
    $region7: #{_lambda_.13} parent=1 // loop_footer_branch
      %13 = sbr.rel target = $region3
    $region8: #{_lambda_.13} parent=1 // loop_exit
      _
    %692 = vsyncpa [#allocation7], 1
    %s693 = scalar_lea.sflag [#allocation7], 1
    %694 = vsyncpa %s693, 1
    %695 = vsyncpa [#allocation9], 1

// kernel: _lambda_.12
$region0: #{_lambda_.12}
  #allocation0 [shape = 'u32[]', space=smem, size = 0x4, offset = 0x4, fixed_abs, tag = 'smem constant byte address 0x4 - core index']
  #allocation1 [shape = 'u32[144,128]{1,0:T(1,128)}', space=vmem, size = 0x12000, scoped, tag = 'internal scratch']
  %s0 = inlined_call_operand.vmem [shape: f32[128,32], index: 0, kind: input, shape index: {}]
  %s1 = inlined_call_operand.vmem [shape: f32[32,16], index: 1, kind: input, shape index: {}]
  %s2 = inlined_call_operand.hbm [shape: f32[1,16], index: 2, kind: input, shape index: {}]
  %s3 = inlined_call_operand.vmem [shape: f32[1,16], index: 3, kind: input, shape index: {}]
  %s4 = inlined_call_operand.hbm [shape: f32[1,16], index: 4, kind: input, shape index: {}]
  %s5 = inlined_call_operand.hbm [shape: f32[1,16], index: 5, kind: input, shape index: {}]
  %s6 = inlined_call_operand.vmem [shape: f32[16,128], index: 6, kind: input, shape index: {}]
  %s7 = inlined_call_operand.vmem [shape: f32[1,128], index: 7, kind: input, shape index: {}]
  %s8 = inlined_call_operand.vmem [shape: f32[128,128], index: 8, kind: output, shape index: {}]
  %s9 = sld [smem:[#allocation0]]
  $region54: #{_lambda_.12} parent=0
    _
  %s11 = ssub.s32 1, %s9
  %s12 = scalar_select 0, %s11, %s9
  $region1: #{_lambda_.12} parent=0
    #allocation2 [shape = 'u8[512]{0}', space=vmem, size = 0x400, scoped, tag = 'input window, operand 2, single buffered']
    #allocation3 [shape = 's32[1]{0}', space=sflag, size = 0x4, scoped, tag = 'scoped memory for _lambda_.12']
    #allocation4 [shape = 'u8[512]{0}', space=vmem, size = 0x400, scoped, tag = 'input window, operand 4, single buffered']
    #allocation5 [shape = 's32[1]{0}', space=sflag, size = 0x4, scoped, tag = 'scoped memory for _lambda_.12']
    #allocation6 [shape = 'u8[512]{0}', space=vmem, size = 0x400, scoped, tag = 'input window, operand 5, single buffered']
    %13 = vsyncpa [#allocation3], 0
    %14 = vsyncpa [#allocation5], 0
    // Predicated region
    $region2: #{_lambda_.12} parent=1 // pred_check
      _
    $region3: #{_lambda_.12} parent=1 // pred_check_branch
      %16 = sbr.rel (0) target = $region5
    $region4: #{_lambda_.12} parent=1 // pred_region
      _
    $region5: #{_lambda_.12} parent=1 // pred_fallthru
      _
    // Predicated region
    $region6: #{_lambda_.12} parent=1 // pred_check
      _
    $region7: #{_lambda_.12} parent=1 // pred_check_branch
      %18 = sbr.rel (0) target = $region9
    $region8: #{_lambda_.12} parent=1 // pred_region
      _
    $region9: #{_lambda_.12} parent=1 // pred_fallthru
      _
    // Predicated region
    $region10: #{_lambda_.12} parent=1 // pred_check
      _
    $region11: #{_lambda_.12} parent=1 // pred_check_branch
      %20 = sbr.rel (0) target = $region13
    $region12: #{_lambda_.12} parent=1 // pred_region
      %s22 = ssub.s32 16, 16
      %23 = vsyncadd [#allocation3], %s22
      %s25 = sshll.u32 [#allocation2], 4
      %s26 = int_to_ptr.vmem [resolvable:$true] %s25
      %28 = dma.hbm_to_vmem [thread:$0]  %s2, 16, %s26, [#allocation3]
    $region13: #{_lambda_.12} parent=1 // pred_fallthru
      _
    // Predicated region
    $region14: #{_lambda_.12} parent=1 // pred_check
      _
    $region15: #{_lambda_.12} parent=1 // pred_check_branch
      %30 = sbr.rel (0) target = $region17
    $region16: #{_lambda_.12} parent=1 // pred_region
      _
    $region17: #{_lambda_.12} parent=1 // pred_fallthru
      _
    // Predicated region
    $region18: #{_lambda_.12} parent=1 // pred_check
      _
    $region19: #{_lambda_.12} parent=1 // pred_check_branch
      %32 = sbr.rel (0) target = $region21
    $region20: #{_lambda_.12} parent=1 // pred_region
      %s34 = ssub.s32 16, 16
      %35 = vsyncadd [#allocation5], %s34
      %s37 = sshll.u32 [#allocation4], 4
      %s38 = int_to_ptr.vmem [resolvable:$true] %s37
      %40 = dma.hbm_to_vmem [thread:$0]  %s4, 16, %s38, [#allocation5]
    $region21: #{_lambda_.12} parent=1 // pred_fallthru
      _
    // Predicated region
    $region22: #{_lambda_.12} parent=1 // pred_check
      _
    $region23: #{_lambda_.12} parent=1 // pred_check_branch
      %42 = sbr.rel (0) target = $region25
    $region24: #{_lambda_.12} parent=1 // pred_region
      %s44 = ssub.s32 16, 16
      %45 = vsyncadd [#allocation5], %s44
      %s47 = sshll.u32 [#allocation6], 4
      %s48 = int_to_ptr.vmem [resolvable:$true] %s47
      %50 = dma.hbm_to_vmem [thread:$0]  %s5, 16, %s48, [#allocation5]
    $region25: #{_lambda_.12} parent=1 // pred_fallthru
      _
    // Predicated region
    $region26: #{_lambda_.12} parent=1 // pred_check
      _
    $region27: #{_lambda_.12} parent=1 // pred_check_branch
      %52 = sbr.rel (0) target = $region29
    $region28: #{_lambda_.12} parent=1 // pred_region
      _
    $region29: #{_lambda_.12} parent=1 // pred_fallthru
      _
    // Predicated region
    $region30: #{_lambda_.12} parent=1 // pred_check
      _
    $region31: #{_lambda_.12} parent=1 // pred_check_branch
      %54 = sbr.rel (0) target = $region33
    $region32: #{_lambda_.12} parent=1 // pred_region
      _
    $region33: #{_lambda_.12} parent=1 // pred_fallthru
      _
    // Predicated region
    $region34: #{_lambda_.12} parent=1 // pred_check
      _
    $region35: #{_lambda_.12} parent=1 // pred_check_branch
      %56 = sbr.rel (0) target = $region37
    $region36: #{_lambda_.12} parent=1 // pred_region
      %57 = dma.done [#allocation3], 16
    $region37: #{_lambda_.12} parent=1 // pred_fallthru
      _
    // Predicated region
    $region38: #{_lambda_.12} parent=1 // pred_check
      _
    $region39: #{_lambda_.12} parent=1 // pred_check_branch
      %59 = sbr.rel (0) target = $region41
    $region40: #{_lambda_.12} parent=1 // pred_region
      %60 = dma.done [#allocation5], 16
    $region41: #{_lambda_.12} parent=1 // pred_fallthru
      _
    // Predicated region
    $region42: #{_lambda_.12} parent=1 // pred_check
      _
    $region43: #{_lambda_.12} parent=1 // pred_check_branch
      %62 = sbr.rel (0) target = $region45
    $region44: #{_lambda_.12} parent=1 // pred_region
      %63 = dma.done [#allocation5], 16
    $region45: #{_lambda_.12} parent=1 // pred_fallthru
      _
    %v64 = vld [vmem:[%s0] sm:$0xff]
    %v65 = vld [vmem:[%s0 + $0x8] sm:$0xff]
    %v66 = vld [vmem:[%s0 + $0x10] sm:$0xff]
    %v67 = vld [vmem:[%s0 + $0x18] sm:$0xff]
    %v68 = vld [vmem:[%s0 + $0x20] sm:$0xff]
    %v69 = vld [vmem:[%s0 + $0x28] sm:$0xff]
    %v70 = vld [vmem:[%s0 + $0x30] sm:$0xff]
    %v71 = vld [vmem:[%s0 + $0x38] sm:$0xff]
    %v72 = vld [vmem:[%s0 + $0x40] sm:$0xff]
    %v73 = vld [vmem:[%s0 + $0x48] sm:$0xff]
    %v74 = vld [vmem:[%s0 + $0x50] sm:$0xff]
    %v75 = vld [vmem:[%s0 + $0x58] sm:$0xff]
    %v76 = vld [vmem:[%s0 + $0x60] sm:$0xff]
    %v77 = vld [vmem:[%s0 + $0x68] sm:$0xff]
    %v78 = vld [vmem:[%s0 + $0x70] sm:$0xff]
    %v79 = vld [vmem:[%s0 + $0x78] sm:$0xff]
    %v80 = vld [vmem:[%s1] sm:$0xff]
    %v81 = vld [vmem:[%s1 + $0x8] sm:$0xff]
    %v82 = vld [vmem:[%s1 + $0x10] sm:$0xff]
    %v83 = vld [vmem:[%s1 + $0x18] sm:$0xff]
    %v84 = vld [vmem:[#allocation2] sm:$0x1]
    %v86 = vlaneseq
    %v87 = vshrl.u32 %v86, 7
    %v88 = vsub.s32 0, %v87
    %v89 = vrot.slane %v84, %v88
    %vm91 = vcmask 261120
    %v93 = vsel %vm91, %v64, 0
    %v96 = vsel %vm91, %v65, 0
    %v99 = vsel %vm91, %v66, 0
    %v102 = vsel %vm91, %v67, 0
    %v105 = vsel %vm91, %v68, 0
    %v108 = vsel %vm91, %v69, 0
    %v111 = vsel %vm91, %v70, 0
    %v114 = vsel %vm91, %v71, 0
    %v117 = vsel %vm91, %v72, 0
    %v120 = vsel %vm91, %v73, 0
    %v123 = vsel %vm91, %v74, 0
    %v126 = vsel %vm91, %v75, 0
    %v129 = vsel %vm91, %v76, 0
    %v132 = vsel %vm91, %v77, 0
    %v135 = vsel %vm91, %v78, 0
    %v138 = vsel %vm91, %v79, 0
    %140 = vmatprep.subr.mxu0 0.0
    %141 = vmatpush1.msra.mxu0 %v80
    %142 = vmatprep.subr.mxu0 0.0
    %143 = vmatpush1.msra.mxu0 %v81
    %144 = vmatprep.subr.mxu0 0.0
    %145 = vmatpush1.msra.mxu0 %v82
    %146 = vmatprep.subr.mxu0 0.0
    %147 = vmatpush1.msra.mxu0 %v83
    %148 = vmatprep.subr.mxu0 0.0
    %149 = vmatpush1.msra.mxu0 0.0
    %150 = vmatprep.subr.mxu0 0.0
    %151 = vmatpush1.msra.mxu0 0.0
    %152 = vmatprep.subr.mxu0 0.0
    %153 = vmatpush1.msra.mxu0 0.0
    %154 = vmatprep.subr.mxu0 0.0
    %155 = vmatpush1.msra.mxu0 0.0
    %156 = vmatprep.subr.mxu0 0.0
    %157 = vmatpush1.msra.mxu0 0.0
    %158 = vmatprep.subr.mxu0 0.0
    %159 = vmatpush1.msra.mxu0 0.0
    %160 = vmatprep.subr.mxu0 0.0
    %161 = vmatpush1.msra.mxu0 0.0
    %162 = vmatprep.subr.mxu0 0.0
    %163 = vmatpush1.msra.mxu0 0.0
    %164 = vmatprep.subr.mxu0 0.0
    %165 = vmatpush1.msra.mxu0 0.0
    %166 = vmatprep.subr.mxu0 0.0
    %167 = vmatpush1.msra.mxu0 0.0
    %168 = vmatprep.subr.mxu0 0.0
    %169 = vmatpush1.msra.mxu0 0.0
    %170 = vmatprep.subr.mxu0 0.0
    %171 = vmatpush1.msra.mxu0 0.0
    %172 = vmatprep.subr.mxu0 0.0
    %173 = vmatpush1.msra.mxu0 0.0
    %174 = vmatprep.subr.mxu0 0.0
    %175 = vmatpush1.msra.mxu0 0.0
    %176 = vmatprep.subr.mxu0 0.0
    %177 = vmatpush1.msra.mxu0 0.0
    %178 = vmatprep.subr.mxu0 0.0
    %179 = vmatpush1.msra.mxu0 0.0
    %180 = vmatprep.subr.mxu0 0.0
    %181 = vmatpush1.msra.mxu0 0.0
    %182 = vmatprep.subr.mxu0 0.0
    %183 = vmatpush1.msra.mxu0 0.0
    %184 = vmatprep.subr.mxu0 0.0
    %185 = vmatpush1.msra.mxu0 0.0
    %186 = vmatprep.subr.mxu0 0.0
    %187 = vmatpush1.msra.mxu0 0.0
    %188 = vmatprep.subr.mxu0 0.0
    %189 = vmatpush1.msra.mxu0 0.0
    %190 = vmatprep.subr.mxu0 0.0
    %191 = vmatpush1.msra.mxu0 0.0
    %192 = vmatprep.subr.mxu0 0.0
    %193 = vmatpush1.msra.mxu0 0.0
    %194 = vmatprep.subr.mxu0 0.0
    %195 = vmatpush1.msra.mxu0 0.0
    %196 = vmatprep.subr.mxu0 0.0
    %197 = vmatpush1.msra.mxu0 0.0
    %198 = vmatprep.subr.mxu0 0.0
    %199 = vmatpush1.msra.mxu0 0.0
    %200 = vmatprep.subr.mxu0 0.0
    %201 = vmatpush1.msra.mxu0 0.0
    %202 = vmatprep.subr.mxu0 0.0
    %203 = vmatpush1.msra.mxu0 0.0
    %204 = vmatprep.mubr.f32.mxu0 0.0
    %205 = vmatmul.mubr.f32.gmra.mrb[0].mxu0 %v93
    %v206 = vpop.f32.mrb[0].mxu0
    %v207 = vadd.f32 %v89, %v206
    %v208 = vpop.f32.mrb[0].mxu0
    %209 = vmatprep.mubr.f32.mxu0 0.0
    %210 = vmatmul.mubr.f32.gmra.mrb[0].mxu0 %v96
    %v211 = vpop.f32.mrb[0].mxu0
    %v212 = vadd.f32 %v89, %v211
    %v213 = vpop.f32.mrb[0].mxu0
    %214 = vmatprep.mubr.f32.mxu0 0.0
    %215 = vmatmul.mubr.f32.gmra.mrb[0].mxu0 %v99
    %v216 = vpop.f32.mrb[0].mxu0
    %v217 = vadd.f32 %v89, %v216
    %v218 = vpop.f32.mrb[0].mxu0
    %219 = vmatprep.mubr.f32.mxu0 0.0
    %220 = vmatmul.mubr.f32.gmra.mrb[0].mxu0 %v102
    %v221 = vpop.f32.mrb[0].mxu0
    %v222 = vadd.f32 %v89, %v221
    %v223 = vpop.f32.mrb[0].mxu0
    %224 = vmatprep.mubr.f32.mxu0 0.0
    %225 = vmatmul.mubr.f32.gmra.mrb[0].mxu0 %v105
    %v226 = vpop.f32.mrb[0].mxu0
    %v227 = vadd.f32 %v89, %v226
    %v228 = vpop.f32.mrb[0].mxu0
    %229 = vmatprep.mubr.f32.mxu0 0.0
    %230 = vmatmul.mubr.f32.gmra.mrb[0].mxu0 %v108
    %v231 = vpop.f32.mrb[0].mxu0
    %v232 = vadd.f32 %v89, %v231
    %v233 = vpop.f32.mrb[0].mxu0
    %234 = vmatprep.mubr.f32.mxu0 0.0
    %235 = vmatmul.mubr.f32.gmra.mrb[0].mxu0 %v111
    %v236 = vpop.f32.mrb[0].mxu0
    %v237 = vadd.f32 %v89, %v236
    %v238 = vpop.f32.mrb[0].mxu0
    %239 = vmatprep.mubr.f32.mxu0 0.0
    %240 = vmatmul.mubr.f32.gmra.mrb[0].mxu0 %v114
    %v241 = vpop.f32.mrb[0].mxu0
    %v242 = vadd.f32 %v89, %v241
    %v243 = vpop.f32.mrb[0].mxu0
    %244 = vmatprep.mubr.f32.mxu0 0.0
    %245 = vmatmul.mubr.f32.gmra.mrb[0].mxu0 %v117
    %v246 = vpop.f32.mrb[0].mxu0
    %v247 = vadd.f32 %v89, %v246
    %v248 = vpop.f32.mrb[0].mxu0
    %249 = vmatprep.mubr.f32.mxu0 0.0
    %250 = vmatmul.mubr.f32.gmra.mrb[0].mxu0 %v120
    %v251 = vpop.f32.mrb[0].mxu0
    %v252 = vadd.f32 %v89, %v251
    %v253 = vpop.f32.mrb[0].mxu0
    %254 = vmatprep.mubr.f32.mxu0 0.0
    %255 = vmatmul.mubr.f32.gmra.mrb[0].mxu0 %v123
    %v256 = vpop.f32.mrb[0].mxu0
    %v257 = vadd.f32 %v89, %v256
    %v258 = vpop.f32.mrb[0].mxu0
    %259 = vmatprep.mubr.f32.mxu0 0.0
    %260 = vmatmul.mubr.f32.gmra.mrb[0].mxu0 %v126
    %v261 = vpop.f32.mrb[0].mxu0
    %v262 = vadd.f32 %v89, %v261
    %v263 = vpop.f32.mrb[0].mxu0
    %264 = vmatprep.mubr.f32.mxu0 0.0
    %265 = vmatmul.mubr.f32.gmra.mrb[0].mxu0 %v129
    %v266 = vpop.f32.mrb[0].mxu0
    %v267 = vadd.f32 %v89, %v266
    %v268 = vpop.f32.mrb[0].mxu0
    %269 = vmatprep.mubr.f32.mxu0 0.0
    %270 = vmatmul.mubr.f32.gmra.mrb[0].mxu0 %v132
    %v271 = vpop.f32.mrb[0].mxu0
    %v272 = vadd.f32 %v89, %v271
    %v273 = vpop.f32.mrb[0].mxu0
    %274 = vmatprep.mubr.f32.mxu0 0.0
    %275 = vmatmul.mubr.f32.gmra.mrb[0].mxu0 %v135
    %v276 = vpop.f32.mrb[0].mxu0
    %v277 = vadd.f32 %v89, %v276
    %v278 = vpop.f32.mrb[0].mxu0
    %279 = vmatprep.mubr.f32.mxu0 0.0
    %280 = vmatmul.mubr.f32.gmra.mrb[0].mxu0 %v138
    %v281 = vpop.f32.mrb[0].mxu0
    %v282 = vadd.f32 %v89, %v281
    %v283 = vpop.f32.mrb[0].mxu0
    %284 = vdwg.mxu0
    %vm285 = vcmp.ge.f32.partialorder %v207, 0.0
    %vm286 = vcmp.ge.f32.partialorder %v212, 0.0
    %vm287 = vcmp.ge.f32.partialorder %v217, 0.0
    %vm288 = vcmp.ge.f32.partialorder %v222, 0.0
    %vm289 = vcmp.ge.f32.partialorder %v227, 0.0
    %vm290 = vcmp.ge.f32.partialorder %v232, 0.0
    %vm291 = vcmp.ge.f32.partialorder %v237, 0.0
    %vm292 = vcmp.ge.f32.partialorder %v242, 0.0
    %vm293 = vcmp.ge.f32.partialorder %v247, 0.0
    %vm294 = vcmp.ge.f32.partialorder %v252, 0.0
    %vm295 = vcmp.ge.f32.partialorder %v257, 0.0
    %vm296 = vcmp.ge.f32.partialorder %v262, 0.0
    %vm297 = vcmp.ge.f32.partialorder %v267, 0.0
    %vm298 = vcmp.ge.f32.partialorder %v272, 0.0
    %vm299 = vcmp.ge.f32.partialorder %v277, 0.0
    %vm300 = vcmp.ge.f32.partialorder %v282, 0.0
    %v301 = vld [vmem:[%s3] sm:$0x1]
    %v303 = vlaneseq
    %v304 = vshrl.u32 %v303, 7
    %v305 = vsub.s32 0, %v304
    %v306 = vrot.slane %v301, %v305
    %v308 = vmul.f32 %v306, %v207
    %v309 = vmul.f32 %v306, %v212
    %v310 = vmul.f32 %v306, %v217
    %v311 = vmul.f32 %v306, %v222
    %v312 = vmul.f32 %v306, %v227
    %v313 = vmul.f32 %v306, %v232
    %v314 = vmul.f32 %v306, %v237
    %v315 = vmul.f32 %v306, %v242
    %v316 = vmul.f32 %v306, %v247
    %v317 = vmul.f32 %v306, %v252
    %v318 = vmul.f32 %v306, %v257
    %v319 = vmul.f32 %v306, %v262
    %v320 = vmul.f32 %v306, %v267
    %v321 = vmul.f32 %v306, %v272
    %v322 = vmul.f32 %v306, %v277
    %v323 = vmul.f32 %v306, %v282
    %v324 = vsel %vm285, %v207, %v308
    %v325 = vsel %vm286, %v212, %v309
    %v326 = vsel %vm287, %v217, %v310
    %v327 = vsel %vm288, %v222, %v311
    %v328 = vsel %vm289, %v227, %v312
    %v329 = vsel %vm290, %v232, %v313
    %v330 = vsel %vm291, %v237, %v314
    %v331 = vsel %vm292, %v242, %v315
    %v332 = vsel %vm293, %v247, %v316
    %v333 = vsel %vm294, %v252, %v317
    %v334 = vsel %vm295, %v257, %v318
    %v335 = vsel %vm296, %v262, %v319
    %v336 = vsel %vm297, %v267, %v320
    %v337 = vsel %vm298, %v272, %v321
    %v338 = vsel %vm299, %v277, %v322
    %v339 = vsel %vm300, %v282, %v323
    %vm340 = vcmask 130048
    %v341 = vsel %vm340, %v324, 0.0
    %342 = vadd.xlane.f32.xlu0 %v341
    %v343 = vpop.xlane.xlu0 %342
    %v344 = vsel %vm340, %v325, 0.0
    %345 = vadd.xlane.f32.xlu0 %v344
    %v346 = vpop.xlane.xlu0 %345
    %v347 = vsel %vm340, %v326, 0.0
    %348 = vadd.xlane.f32.xlu0 %v347
    %v349 = vpop.xlane.xlu0 %348
    %v350 = vsel %vm340, %v327, 0.0
    %351 = vadd.xlane.f32.xlu0 %v350
    %v352 = vpop.xlane.xlu0 %351
    %v353 = vsel %vm340, %v328, 0.0
    %354 = vadd.xlane.f32.xlu0 %v353
    %v355 = vpop.xlane.xlu0 %354
    %v356 = vsel %vm340, %v329, 0.0
    %357 = vadd.xlane.f32.xlu0 %v356
    %v358 = vpop.xlane.xlu0 %357
    %v359 = vsel %vm340, %v330, 0.0
    %360 = vadd.xlane.f32.xlu0 %v359
    %v361 = vpop.xlane.xlu0 %360
    %v362 = vsel %vm340, %v331, 0.0
    %363 = vadd.xlane.f32.xlu0 %v362
    %v364 = vpop.xlane.xlu0 %363
    %v365 = vsel %vm340, %v332, 0.0
    %366 = vadd.xlane.f32.xlu0 %v365
    %v367 = vpop.xlane.xlu0 %366
    %v368 = vsel %vm340, %v333, 0.0
    %369 = vadd.xlane.f32.xlu0 %v368
    %v370 = vpop.xlane.xlu0 %369
    %v371 = vsel %vm340, %v334, 0.0
    %372 = vadd.xlane.f32.xlu0 %v371
    %v373 = vpop.xlane.xlu0 %372
    %v374 = vsel %vm340, %v335, 0.0
    %375 = vadd.xlane.f32.xlu0 %v374
    %v376 = vpop.xlane.xlu0 %375
    %v377 = vsel %vm340, %v336, 0.0
    %378 = vadd.xlane.f32.xlu0 %v377
    %v379 = vpop.xlane.xlu0 %378
    %v380 = vsel %vm340, %v337, 0.0
    %381 = vadd.xlane.f32.xlu0 %v380
    %v382 = vpop.xlane.xlu0 %381
    %v383 = vsel %vm340, %v338, 0.0
    %384 = vadd.xlane.f32.xlu0 %v383
    %v385 = vpop.xlane.xlu0 %384
    %v386 = vsel %vm340, %v339, 0.0
    %387 = vadd.xlane.f32.xlu0 %v386
    %v388 = vpop.xlane.xlu0 %387
    %v389 = vrcp.pop 16.0
    %v390 = vmul.f32 %v343, %v389
    %v391 = vmul.f32 %v346, %v389
    %v392 = vmul.f32 %v349, %v389
    %v393 = vmul.f32 %v352, %v389
    %v394 = vmul.f32 %v355, %v389
    %v395 = vmul.f32 %v358, %v389
    %v396 = vmul.f32 %v361, %v389
    %v397 = vmul.f32 %v364, %v389
    %v398 = vmul.f32 %v367, %v389
    %v399 = vmul.f32 %v370, %v389
    %v400 = vmul.f32 %v373, %v389
    %v401 = vmul.f32 %v376, %v389
    %v402 = vmul.f32 %v379, %v389
    %v403 = vmul.f32 %v382, %v389
    %v404 = vmul.f32 %v385, %v389
    %v405 = vmul.f32 %v388, %v389
    %v406 = vsub.f32 %v324, %v390
    %v407 = vsub.f32 %v325, %v391
    %v408 = vsub.f32 %v326, %v392
    %v409 = vsub.f32 %v327, %v393
    %v410 = vsub.f32 %v328, %v394
    %v411 = vsub.f32 %v329, %v395
    %v412 = vsub.f32 %v330, %v396
    %v413 = vsub.f32 %v331, %v397
    %v414 = vsub.f32 %v332, %v398
    %v415 = vsub.f32 %v333, %v399
    %v416 = vsub.f32 %v334, %v400
    %v417 = vsub.f32 %v335, %v401
    %v418 = vsub.f32 %v336, %v402
    %v419 = vsub.f32 %v337, %v403
    %v420 = vsub.f32 %v338, %v404
    %v421 = vsub.f32 %v339, %v405
    %v422 = vmul.f32 %v406, %v406
    %v423 = vmul.f32 %v407, %v407
    %v424 = vmul.f32 %v408, %v408
    %v425 = vmul.f32 %v409, %v409
    %v426 = vmul.f32 %v410, %v410
    %v427 = vmul.f32 %v411, %v411
    %v428 = vmul.f32 %v412, %v412
    %v429 = vmul.f32 %v413, %v413
    %v430 = vmul.f32 %v414, %v414
    %v431 = vmul.f32 %v415, %v415
    %v432 = vmul.f32 %v416, %v416
    %v433 = vmul.f32 %v417, %v417
    %v434 = vmul.f32 %v418, %v418
    %v435 = vmul.f32 %v419, %v419
    %v436 = vmul.f32 %v420, %v420
    %v437 = vmul.f32 %v421, %v421
    %v438 = vsel %vm340, %v422, 0.0
    %439 = vadd.xlane.f32.xlu0 %v438
    %v440 = vpop.xlane.xlu0 %439
    %v441 = vsel %vm340, %v423, 0.0
    %442 = vadd.xlane.f32.xlu0 %v441
    %v443 = vpop.xlane.xlu0 %442
    %v444 = vsel %vm340, %v424, 0.0
    %445 = vadd.xlane.f32.xlu0 %v444
    %v446 = vpop.xlane.xlu0 %445
    %v447 = vsel %vm340, %v425, 0.0
    %448 = vadd.xlane.f32.xlu0 %v447
    %v449 = vpop.xlane.xlu0 %448
    %v450 = vsel %vm340, %v426, 0.0
    %451 = vadd.xlane.f32.xlu0 %v450
    %v452 = vpop.xlane.xlu0 %451
    %v453 = vsel %vm340, %v427, 0.0
    %454 = vadd.xlane.f32.xlu0 %v453
    %v455 = vpop.xlane.xlu0 %454
    %v456 = vsel %vm340, %v428, 0.0
    %457 = vadd.xlane.f32.xlu0 %v456
    %v458 = vpop.xlane.xlu0 %457
    %v459 = vsel %vm340, %v429, 0.0
    %460 = vadd.xlane.f32.xlu0 %v459
    %v461 = vpop.xlane.xlu0 %460
    %v462 = vsel %vm340, %v430, 0.0
    %463 = vadd.xlane.f32.xlu0 %v462
    %v464 = vpop.xlane.xlu0 %463
    %v465 = vsel %vm340, %v431, 0.0
    %466 = vadd.xlane.f32.xlu0 %v465
    %v467 = vpop.xlane.xlu0 %466
    %v468 = vsel %vm340, %v432, 0.0
    %469 = vadd.xlane.f32.xlu0 %v468
    %v470 = vpop.xlane.xlu0 %469
    %v471 = vsel %vm340, %v433, 0.0
    %472 = vadd.xlane.f32.xlu0 %v471
    %v473 = vpop.xlane.xlu0 %472
    %v474 = vsel %vm340, %v434, 0.0
    %475 = vadd.xlane.f32.xlu0 %v474
    %v476 = vpop.xlane.xlu0 %475
    %v477 = vsel %vm340, %v435, 0.0
    %478 = vadd.xlane.f32.xlu0 %v477
    %v479 = vpop.xlane.xlu0 %478
    %v480 = vsel %vm340, %v436, 0.0
    %481 = vadd.xlane.f32.xlu0 %v480
    %v482 = vpop.xlane.xlu0 %481
    %v483 = vsel %vm340, %v437, 0.0
    %484 = vadd.xlane.f32.xlu0 %v483
    %v485 = vpop.xlane.xlu0 %484
    %v486 = vmul.f32 %v440, %v389
    %v487 = vmul.f32 %v443, %v389
    %v488 = vmul.f32 %v446, %v389
    %v489 = vmul.f32 %v449, %v389
    %v490 = vmul.f32 %v452, %v389
    %v491 = vmul.f32 %v455, %v389
    %v492 = vmul.f32 %v458, %v389
    %v493 = vmul.f32 %v461, %v389
    %v494 = vmul.f32 %v464, %v389
    %v495 = vmul.f32 %v467, %v389
    %v496 = vmul.f32 %v470, %v389
    %v497 = vmul.f32 %v473, %v389
    %v498 = vmul.f32 %v476, %v389
    %v499 = vmul.f32 %v479, %v389
    %v500 = vmul.f32 %v482, %v389
    %v501 = vmul.f32 %v485, %v389
    %v502 = vadd.f32 %v486, 1e-05
    %v503 = vadd.f32 %v487, 1e-05
    %v504 = vadd.f32 %v488, 1e-05
    %v505 = vadd.f32 %v489, 1e-05
    %v506 = vadd.f32 %v490, 1e-05
    %v507 = vadd.f32 %v491, 1e-05
    %v508 = vadd.f32 %v492, 1e-05
    %v509 = vadd.f32 %v493, 1e-05
    %v510 = vadd.f32 %v494, 1e-05
    %v511 = vadd.f32 %v495, 1e-05
    %v512 = vadd.f32 %v496, 1e-05
    %v513 = vadd.f32 %v497, 1e-05
    %v514 = vadd.f32 %v498, 1e-05
    %v515 = vadd.f32 %v499, 1e-05
    %v516 = vadd.f32 %v500, 1e-05
    %v517 = vadd.f32 %v501, 1e-05
    %v518 = vrsqrt.pop %v502
    %v519 = vrsqrt.pop %v503
    %v520 = vrsqrt.pop %v504
    %v521 = vrsqrt.pop %v505
    %v522 = vrsqrt.pop %v506
    %v523 = vrsqrt.pop %v507
    %v524 = vrsqrt.pop %v508
    %v525 = vrsqrt.pop %v509
    %v526 = vrsqrt.pop %v510
    %v527 = vrsqrt.pop %v511
    %v528 = vrsqrt.pop %v512
    %v529 = vrsqrt.pop %v513
    %v530 = vrsqrt.pop %v514
    %v531 = vrsqrt.pop %v515
    %v532 = vrsqrt.pop %v516
    %v533 = vrsqrt.pop %v517
    %v534 = vmul.f32 %v406, %v518
    %v535 = vmul.f32 %v407, %v519
    %v536 = vmul.f32 %v408, %v520
    %v537 = vmul.f32 %v409, %v521
    %v538 = vmul.f32 %v410, %v522
    %v539 = vmul.f32 %v411, %v523
    %v540 = vmul.f32 %v412, %v524
    %v541 = vmul.f32 %v413, %v525
    %v542 = vmul.f32 %v414, %v526
    %v543 = vmul.f32 %v415, %v527
    %v544 = vmul.f32 %v416, %v528
    %v545 = vmul.f32 %v417, %v529
    %v546 = vmul.f32 %v418, %v530
    %v547 = vmul.f32 %v419, %v531
    %v548 = vmul.f32 %v420, %v532
    %v549 = vmul.f32 %v421, %v533
    %v550 = vld [vmem:[#allocation4] sm:$0x1]
    %v552 = vlaneseq
    %v553 = vshrl.u32 %v552, 7
    %v554 = vsub.s32 0, %v553
    %v555 = vrot.slane %v550, %v554
    %v557 = vmul.f32 %v534, %v555
    %v558 = vmul.f32 %v535, %v555
    %v559 = vmul.f32 %v536, %v555
    %v560 = vmul.f32 %v537, %v555
    %v561 = vmul.f32 %v538, %v555
    %v562 = vmul.f32 %v539, %v555
    %v563 = vmul.f32 %v540, %v555
    %v564 = vmul.f32 %v541, %v555
    %v565 = vmul.f32 %v542, %v555
    %v566 = vmul.f32 %v543, %v555
    %v567 = vmul.f32 %v544, %v555
    %v568 = vmul.f32 %v545, %v555
    %v569 = vmul.f32 %v546, %v555
    %v570 = vmul.f32 %v547, %v555
    %v571 = vmul.f32 %v548, %v555
    %v572 = vmul.f32 %v549, %v555
    %v573 = vld [vmem:[#allocation6] sm:$0x1]
    %v575 = vlaneseq
    %v576 = vshrl.u32 %v575, 7
    %v577 = vsub.s32 0, %v576
    %v578 = vrot.slane %v573, %v577
    %v580 = vadd.f32 %v557, %v578
    %v581 = vadd.f32 %v558, %v578
    %v582 = vadd.f32 %v559, %v578
    %v583 = vadd.f32 %v560, %v578
    %v584 = vadd.f32 %v561, %v578
    %v585 = vadd.f32 %v562, %v578
    %v586 = vadd.f32 %v563, %v578
    %v587 = vadd.f32 %v564, %v578
    %v588 = vadd.f32 %v565, %v578
    %v589 = vadd.f32 %v566, %v578
    %v590 = vadd.f32 %v567, %v578
    %v591 = vadd.f32 %v568, %v578
    %v592 = vadd.f32 %v569, %v578
    %v593 = vadd.f32 %v570, %v578
    %v594 = vadd.f32 %v571, %v578
    %v595 = vadd.f32 %v572, %v578
    %v596 = vld [vmem:[%s6] sm:$0xff]
    %v597 = vld [vmem:[%s6 + $0x8] sm:$0xff]
    %v598 = vld [vmem:[%s7] sm:$0x1]
    %v600 = vlaneseq
    %v601 = vshrl.u32 %v600, 7
    %v602 = vsub.s32 0, %v601
    %v603 = vrot.slane %v598, %v602
    %v606 = vsel %vm340, %v580, 0
    %v609 = vsel %vm340, %v581, 0
    %v612 = vsel %vm340, %v582, 0
    %v615 = vsel %vm340, %v583, 0
    %v618 = vsel %vm340, %v584, 0
    %v621 = vsel %vm340, %v585, 0
    %v624 = vsel %vm340, %v586, 0
    %v627 = vsel %vm340, %v587, 0
    %v630 = vsel %vm340, %v588, 0
    %v633 = vsel %vm340, %v589, 0
    %v636 = vsel %vm340, %v590, 0
    %v639 = vsel %vm340, %v591, 0
    %v642 = vsel %vm340, %v592, 0
    %v645 = vsel %vm340, %v593, 0
    %v648 = vsel %vm340, %v594, 0
    %v651 = vsel %vm340, %v595, 0
    %653 = vmatprep.subr.mxu0 0.0
    %654 = vmatpush1.msra.mxu0 %v596
    %655 = vmatprep.subr.mxu0 0.0
    %656 = vmatpush1.msra.mxu0 %v597
    %657 = vmatprep.subr.mxu0 0.0
    %658 = vmatpush1.msra.mxu0 0.0
    %659 = vmatprep.subr.mxu0 0.0
    %660 = vmatpush1.msra.mxu0 0.0
    %661 = vmatprep.subr.mxu0 0.0
    %662 = vmatpush1.msra.mxu0 0.0
    %663 = vmatprep.subr.mxu0 0.0
    %664 = vmatpush1.msra.mxu0 0.0
    %665 = vmatprep.subr.mxu0 0.0
    %666 = vmatpush1.msra.mxu0 0.0
    %667 = vmatprep.subr.mxu0 0.0
    %668 = vmatpush1.msra.mxu0 0.0
    %669 = vmatprep.subr.mxu0 0.0
    %670 = vmatpush1.msra.mxu0 0.0
    %671 = vmatprep.subr.mxu0 0.0
    %672 = vmatpush1.msra.mxu0 0.0
    %673 = vmatprep.subr.mxu0 0.0
    %674 = vmatpush1.msra.mxu0 0.0
    %675 = vmatprep.subr.mxu0 0.0
    %676 = vmatpush1.msra.mxu0 0.0
    %677 = vmatprep.subr.mxu0 0.0
    %678 = vmatpush1.msra.mxu0 0.0
    %679 = vmatprep.subr.mxu0 0.0
    %680 = vmatpush1.msra.mxu0 0.0
    %681 = vmatprep.subr.mxu0 0.0
    %682 = vmatpush1.msra.mxu0 0.0
    %683 = vmatprep.subr.mxu0 0.0
    %684 = vmatpush1.msra.mxu0 0.0
    %685 = vmatprep.subr.mxu0 0.0
    %686 = vmatpush1.msra.mxu0 0.0
    %687 = vmatprep.subr.mxu0 0.0
    %688 = vmatpush1.msra.mxu0 0.0
    %689 = vmatprep.subr.mxu0 0.0
    %690 = vmatpush1.msra.mxu0 0.0
    %691 = vmatprep.subr.mxu0 0.0
    %692 = vmatpush1.msra.mxu0 0.0
    %693 = vmatprep.subr.mxu0 0.0
    %694 = vmatpush1.msra.mxu0 0.0
    %695 = vmatprep.subr.mxu0 0.0
    %696 = vmatpush1.msra.mxu0 0.0
    %697 = vmatprep.subr.mxu0 0.0
    %698 = vmatpush1.msra.mxu0 0.0
    %699 = vmatprep.subr.mxu0 0.0
    %700 = vmatpush1.msra.mxu0 0.0
    %701 = vmatprep.subr.mxu0 0.0
    %702 = vmatpush1.msra.mxu0 0.0
    %703 = vmatprep.subr.mxu0 0.0
    %704 = vmatpush1.msra.mxu0 0.0
    %705 = vmatprep.subr.mxu0 0.0
    %706 = vmatpush1.msra.mxu0 0.0
    %707 = vmatprep.subr.mxu0 0.0
    %708 = vmatpush1.msra.mxu0 0.0
    %709 = vmatprep.subr.mxu0 0.0
    %710 = vmatpush1.msra.mxu0 0.0
    %711 = vmatprep.subr.mxu0 0.0
    %712 = vmatpush1.msra.mxu0 0.0
    %713 = vmatprep.subr.mxu0 0.0
    %714 = vmatpush1.msra.mxu0 0.0
    %715 = vmatprep.subr.mxu0 0.0
    %716 = vmatpush1.msra.mxu0 0.0
    %717 = vmatprep.mubr.f32.mxu0 0.0
    %718 = vmatmul.mubr.f32.gmra.mrb[0].mxu0 %v606
    %v719 = vpop.f32.mrb[0].mxu0
    %v720 = vadd.f32 %v603, %v719
    %v721 = vpop.f32.mrb[0].mxu0
    %722 = vmatprep.mubr.f32.mxu0 0.0
    %723 = vmatmul.mubr.f32.gmra.mrb[0].mxu0 %v609
    %v724 = vpop.f32.mrb[0].mxu0
    %v725 = vadd.f32 %v603, %v724
    %v726 = vpop.f32.mrb[0].mxu0
    %727 = vmatprep.mubr.f32.mxu0 0.0
    %728 = vmatmul.mubr.f32.gmra.mrb[0].mxu0 %v612
    %v729 = vpop.f32.mrb[0].mxu0
    %v730 = vadd.f32 %v603, %v729
    %v731 = vpop.f32.mrb[0].mxu0
    %732 = vmatprep.mubr.f32.mxu0 0.0
    %733 = vmatmul.mubr.f32.gmra.mrb[0].mxu0 %v615
    %v734 = vpop.f32.mrb[0].mxu0
    %v735 = vadd.f32 %v603, %v734
    %v736 = vpop.f32.mrb[0].mxu0
    %737 = vmatprep.mubr.f32.mxu0 0.0
    %738 = vmatmul.mubr.f32.gmra.mrb[0].mxu0 %v618
    %v739 = vpop.f32.mrb[0].mxu0
    %v740 = vadd.f32 %v603, %v739
    %v741 = vpop.f32.mrb[0].mxu0
    %742 = vmatprep.mubr.f32.mxu0 0.0
    %743 = vmatmul.mubr.f32.gmra.mrb[0].mxu0 %v621
    %v744 = vpop.f32.mrb[0].mxu0
    %v745 = vadd.f32 %v603, %v744
    %v746 = vpop.f32.mrb[0].mxu0
    %747 = vmatprep.mubr.f32.mxu0 0.0
    %748 = vmatmul.mubr.f32.gmra.mrb[0].mxu0 %v624
    %v749 = vpop.f32.mrb[0].mxu0
    %v750 = vadd.f32 %v603, %v749
    %v751 = vpop.f32.mrb[0].mxu0
    %752 = vmatprep.mubr.f32.mxu0 0.0
    %753 = vmatmul.mubr.f32.gmra.mrb[0].mxu0 %v627
    %v754 = vpop.f32.mrb[0].mxu0
    %v755 = vadd.f32 %v603, %v754
    %v756 = vpop.f32.mrb[0].mxu0
    %757 = vmatprep.mubr.f32.mxu0 0.0
    %758 = vmatmul.mubr.f32.gmra.mrb[0].mxu0 %v630
    %v759 = vpop.f32.mrb[0].mxu0
    %v760 = vadd.f32 %v603, %v759
    %v761 = vpop.f32.mrb[0].mxu0
    %762 = vmatprep.mubr.f32.mxu0 0.0
    %763 = vmatmul.mubr.f32.gmra.mrb[0].mxu0 %v633
    %v764 = vpop.f32.mrb[0].mxu0
    %v765 = vadd.f32 %v603, %v764
    %v766 = vpop.f32.mrb[0].mxu0
    %767 = vmatprep.mubr.f32.mxu0 0.0
    %768 = vmatmul.mubr.f32.gmra.mrb[0].mxu0 %v636
    %v769 = vpop.f32.mrb[0].mxu0
    %v770 = vadd.f32 %v603, %v769
    %v771 = vpop.f32.mrb[0].mxu0
    %772 = vmatprep.mubr.f32.mxu0 0.0
    %773 = vmatmul.mubr.f32.gmra.mrb[0].mxu0 %v639
    %v774 = vpop.f32.mrb[0].mxu0
    %v775 = vadd.f32 %v603, %v774
    %v776 = vpop.f32.mrb[0].mxu0
    %777 = vmatprep.mubr.f32.mxu0 0.0
    %778 = vmatmul.mubr.f32.gmra.mrb[0].mxu0 %v642
    %v779 = vpop.f32.mrb[0].mxu0
    %v780 = vadd.f32 %v603, %v779
    %v781 = vpop.f32.mrb[0].mxu0
    %782 = vmatprep.mubr.f32.mxu0 0.0
    %783 = vmatmul.mubr.f32.gmra.mrb[0].mxu0 %v645
    %v784 = vpop.f32.mrb[0].mxu0
    %v785 = vadd.f32 %v603, %v784
    %v786 = vpop.f32.mrb[0].mxu0
    %787 = vmatprep.mubr.f32.mxu0 0.0
    %788 = vmatmul.mubr.f32.gmra.mrb[0].mxu0 %v648
    %v789 = vpop.f32.mrb[0].mxu0
    %v790 = vadd.f32 %v603, %v789
    %v791 = vpop.f32.mrb[0].mxu0
    %792 = vmatprep.mubr.f32.mxu0 0.0
    %793 = vmatmul.mubr.f32.gmra.mrb[0].mxu0 %v651
    %v794 = vpop.f32.mrb[0].mxu0
    %v795 = vadd.f32 %v603, %v794
    %v796 = vpop.f32.mrb[0].mxu0
    %797 = vdwg.mxu0
    %798 = vst [vmem:[%s8] sm:$0xff] %v720
    %799 = vst [vmem:[%s8 + $0x8] sm:$0xff] %v725
    %800 = vst [vmem:[%s8 + $0x10] sm:$0xff] %v730
    %801 = vst [vmem:[%s8 + $0x18] sm:$0xff] %v735
    %802 = vst [vmem:[%s8 + $0x20] sm:$0xff] %v740
    %803 = vst [vmem:[%s8 + $0x28] sm:$0xff] %v745
    %804 = vst [vmem:[%s8 + $0x30] sm:$0xff] %v750
    %805 = vst [vmem:[%s8 + $0x38] sm:$0xff] %v755
    %806 = vst [vmem:[%s8 + $0x40] sm:$0xff] %v760
    %807 = vst [vmem:[%s8 + $0x48] sm:$0xff] %v765
    %808 = vst [vmem:[%s8 + $0x50] sm:$0xff] %v770
    %809 = vst [vmem:[%s8 + $0x58] sm:$0xff] %v775
    %810 = vst [vmem:[%s8 + $0x60] sm:$0xff] %v780
    %811 = vst [vmem:[%s8 + $0x68] sm:$0xff] %v785
    %812 = vst [vmem:[%s8 + $0x70] sm:$0xff] %v790
    %813 = vst [vmem:[%s8 + $0x78] sm:$0xff] %v795
    // Predicated region
    $region46: #{_lambda_.12} parent=1 // pred_check
      _
    $region47: #{_lambda_.12} parent=1 // pred_check_branch
      %815 = sbr.rel (0) target = $region49
    $region48: #{_lambda_.12} parent=1 // pred_region
      _
    $region49: #{_lambda_.12} parent=1 // pred_fallthru
      _
    // Predicated region
    $region50: #{_lambda_.12} parent=1 // pred_check
      _
    $region51: #{_lambda_.12} parent=1 // pred_check_branch
      %817 = sbr.rel (0) target = $region53
    $region52: #{_lambda_.12} parent=1 // pred_region
      _
    $region53: #{_lambda_.12} parent=1 // pred_fallthru
      _
    %818 = vsyncpa [#allocation3], 1
    %819 = vsyncpa [#allocation5], 1

// kernel: _lambda_.15
$region0: #{_lambda_.15}
  #allocation0 [shape = 'u32[]', space=smem, size = 0x4, offset = 0x4, fixed_abs, tag = 'smem constant byte address 0x4 - core index']
  #allocation1 [shape = 'u32[144,128]{1,0:T(1,128)}', space=vmem, size = 0x12000, scoped, tag = 'internal scratch']
  %s0 = inlined_call_operand.vmem [shape: f32[256,16], index: 0, kind: input, shape index: {}]
  %s1 = inlined_call_operand.vmem [shape: f32[1,16], index: 1, kind: input, shape index: {}]
  %s2 = inlined_call_operand.vmem [shape: f32[1,16], index: 2, kind: input, shape index: {}]
  %s3 = inlined_call_operand.vmem [shape: f32[16,64], index: 3, kind: input, shape index: {}]
  %s4 = inlined_call_operand.vmem [shape: f32[1,64], index: 4, kind: input, shape index: {}]
  %s5 = inlined_call_operand.vmem [shape: f32[256,64], index: 5, kind: output, shape index: {}]
  %s6 = sld [smem:[#allocation0]]
  $region30: #{_lambda_.15} parent=0
    _
  %s8 = ssub.s32 1, %s6
  %s9 = scalar_select 0, %s8, %s6
  // Predicated region
  $region2: #{_lambda_.15} parent=0 // pred_check
    _
  $region3: #{_lambda_.15} parent=0 // pred_check_branch
    %11 = sbr.rel (0) target = $region5
  $region4: #{_lambda_.15} parent=0 // pred_region
    _
  $region5: #{_lambda_.15} parent=0 // pred_fallthru
    _
  // Predicated region
  $region6: #{_lambda_.15} parent=0 // pred_check
    _
  $region7: #{_lambda_.15} parent=0 // pred_check_branch
    %13 = sbr.rel (0) target = $region9
  $region8: #{_lambda_.15} parent=0 // pred_region
    _
  $region9: #{_lambda_.15} parent=0 // pred_fallthru
    _
  // Predicated region
  $region10: #{_lambda_.15} parent=0 // pred_check
    _
  $region11: #{_lambda_.15} parent=0 // pred_check_branch
    %15 = sbr.rel (0) target = $region13
  $region12: #{_lambda_.15} parent=0 // pred_region
    _
  $region13: #{_lambda_.15} parent=0 // pred_fallthru
    _
  // Predicated region
  $region14: #{_lambda_.15} parent=0 // pred_check
    _
  $region15: #{_lambda_.15} parent=0 // pred_check_branch
    %17 = sbr.rel (0) target = $region17
  $region16: #{_lambda_.15} parent=0 // pred_region
    _
  $region17: #{_lambda_.15} parent=0 // pred_fallthru
    _
  // Predicated region
  $region18: #{_lambda_.15} parent=0 // pred_check
    _
  $region19: #{_lambda_.15} parent=0 // pred_check_branch
    %19 = sbr.rel (0) target = $region21
  $region20: #{_lambda_.15} parent=0 // pred_region
    _
  $region21: #{_lambda_.15} parent=0 // pred_fallthru
    _
  %v20 = vld [vmem:[%s0] sm:$0xff]
  %v21 = vld [vmem:[%s0 + $0x8] sm:$0xff]
  %v22 = vld [vmem:[%s0 + $0x10] sm:$0xff]
  %v23 = vld [vmem:[%s0 + $0x18] sm:$0xff]
  %v24 = vld [vmem:[%s0 + $0x20] sm:$0xff]
  %v25 = vld [vmem:[%s0 + $0x28] sm:$0xff]
  %v26 = vld [vmem:[%s0 + $0x30] sm:$0xff]
  %v27 = vld [vmem:[%s0 + $0x38] sm:$0xff]
  %v28 = vld [vmem:[%s0 + $0x40] sm:$0xff]
  %v29 = vld [vmem:[%s0 + $0x48] sm:$0xff]
  %v30 = vld [vmem:[%s0 + $0x50] sm:$0xff]
  %v31 = vld [vmem:[%s0 + $0x58] sm:$0xff]
  %v32 = vld [vmem:[%s0 + $0x60] sm:$0xff]
  %v33 = vld [vmem:[%s0 + $0x68] sm:$0xff]
  %v34 = vld [vmem:[%s0 + $0x70] sm:$0xff]
  %v35 = vld [vmem:[%s0 + $0x78] sm:$0xff]
  %v36 = vld [vmem:[%s0 + $0x80] sm:$0xff]
  %v37 = vld [vmem:[%s0 + $0x88] sm:$0xff]
  %v38 = vld [vmem:[%s0 + $0x90] sm:$0xff]
  %v39 = vld [vmem:[%s0 + $0x98] sm:$0xff]
  %v40 = vld [vmem:[%s0 + $0xa0] sm:$0xff]
  %v41 = vld [vmem:[%s0 + $0xa8] sm:$0xff]
  %v42 = vld [vmem:[%s0 + $0xb0] sm:$0xff]
  %v43 = vld [vmem:[%s0 + $0xb8] sm:$0xff]
  %v44 = vld [vmem:[%s0 + $0xc0] sm:$0xff]
  %v45 = vld [vmem:[%s0 + $0xc8] sm:$0xff]
  %v46 = vld [vmem:[%s0 + $0xd0] sm:$0xff]
  %v47 = vld [vmem:[%s0 + $0xd8] sm:$0xff]
  %v48 = vld [vmem:[%s0 + $0xe0] sm:$0xff]
  %v49 = vld [vmem:[%s0 + $0xe8] sm:$0xff]
  %v50 = vld [vmem:[%s0 + $0xf0] sm:$0xff]
  %v51 = vld [vmem:[%s0 + $0xf8] sm:$0xff]
  %vm52 = vcmask 130048
  %v53 = vsel %vm52, %v20, 0.0
  %54 = vadd.xlane.f32.xlu0 %v53
  %v55 = vpop.xlane.xlu0 %54
  %v56 = vsel %vm52, %v21, 0.0
  %57 = vadd.xlane.f32.xlu0 %v56
  %v58 = vpop.xlane.xlu0 %57
  %v59 = vsel %vm52, %v22, 0.0
  %60 = vadd.xlane.f32.xlu0 %v59
  %v61 = vpop.xlane.xlu0 %60
  %v62 = vsel %vm52, %v23, 0.0
  %63 = vadd.xlane.f32.xlu0 %v62
  %v64 = vpop.xlane.xlu0 %63
  %v65 = vsel %vm52, %v24, 0.0
  %66 = vadd.xlane.f32.xlu0 %v65
  %v67 = vpop.xlane.xlu0 %66
  %v68 = vsel %vm52, %v25, 0.0
  %69 = vadd.xlane.f32.xlu0 %v68
  %v70 = vpop.xlane.xlu0 %69
  %v71 = vsel %vm52, %v26, 0.0
  %72 = vadd.xlane.f32.xlu0 %v71
  %v73 = vpop.xlane.xlu0 %72
  %v74 = vsel %vm52, %v27, 0.0
  %75 = vadd.xlane.f32.xlu0 %v74
  %v76 = vpop.xlane.xlu0 %75
  %v77 = vsel %vm52, %v28, 0.0
  %78 = vadd.xlane.f32.xlu0 %v77
  %v79 = vpop.xlane.xlu0 %78
  %v80 = vsel %vm52, %v29, 0.0
  %81 = vadd.xlane.f32.xlu0 %v80
  %v82 = vpop.xlane.xlu0 %81
  %v83 = vsel %vm52, %v30, 0.0
  %84 = vadd.xlane.f32.xlu0 %v83
  %v85 = vpop.xlane.xlu0 %84
  %v86 = vsel %vm52, %v31, 0.0
  %87 = vadd.xlane.f32.xlu0 %v86
  %v88 = vpop.xlane.xlu0 %87
  %v89 = vsel %vm52, %v32, 0.0
  %90 = vadd.xlane.f32.xlu0 %v89
  %v91 = vpop.xlane.xlu0 %90
  %v92 = vsel %vm52, %v33, 0.0
  %93 = vadd.xlane.f32.xlu0 %v92
  %v94 = vpop.xlane.xlu0 %93
  %v95 = vsel %vm52, %v34, 0.0
  %96 = vadd.xlane.f32.xlu0 %v95
  %v97 = vpop.xlane.xlu0 %96
  %v98 = vsel %vm52, %v35, 0.0
  %99 = vadd.xlane.f32.xlu0 %v98
  %v100 = vpop.xlane.xlu0 %99
  %v101 = vsel %vm52, %v36, 0.0
  %102 = vadd.xlane.f32.xlu0 %v101
  %v103 = vpop.xlane.xlu0 %102
  %v104 = vsel %vm52, %v37, 0.0
  %105 = vadd.xlane.f32.xlu0 %v104
  %v106 = vpop.xlane.xlu0 %105
  %v107 = vsel %vm52, %v38, 0.0
  %108 = vadd.xlane.f32.xlu0 %v107
  %v109 = vpop.xlane.xlu0 %108
  %v110 = vsel %vm52, %v39, 0.0
  %111 = vadd.xlane.f32.xlu0 %v110
  %v112 = vpop.xlane.xlu0 %111
  %v113 = vsel %vm52, %v40, 0.0
  %114 = vadd.xlane.f32.xlu0 %v113
  %v115 = vpop.xlane.xlu0 %114
  %v116 = vsel %vm52, %v41, 0.0
  %117 = vadd.xlane.f32.xlu0 %v116
  %v118 = vpop.xlane.xlu0 %117
  %v119 = vsel %vm52, %v42, 0.0
  %120 = vadd.xlane.f32.xlu0 %v119
  %v121 = vpop.xlane.xlu0 %120
  %v122 = vsel %vm52, %v43, 0.0
  %123 = vadd.xlane.f32.xlu0 %v122
  %v124 = vpop.xlane.xlu0 %123
  %v125 = vsel %vm52, %v44, 0.0
  %126 = vadd.xlane.f32.xlu0 %v125
  %v127 = vpop.xlane.xlu0 %126
  %v128 = vsel %vm52, %v45, 0.0
  %129 = vadd.xlane.f32.xlu0 %v128
  %v130 = vpop.xlane.xlu0 %129
  %v131 = vsel %vm52, %v46, 0.0
  %132 = vadd.xlane.f32.xlu0 %v131
  %v133 = vpop.xlane.xlu0 %132
  %v134 = vsel %vm52, %v47, 0.0
  %135 = vadd.xlane.f32.xlu0 %v134
  %v136 = vpop.xlane.xlu0 %135
  %v137 = vsel %vm52, %v48, 0.0
  %138 = vadd.xlane.f32.xlu0 %v137
  %v139 = vpop.xlane.xlu0 %138
  %v140 = vsel %vm52, %v49, 0.0
  %141 = vadd.xlane.f32.xlu0 %v140
  %v142 = vpop.xlane.xlu0 %141
  %v143 = vsel %vm52, %v50, 0.0
  %144 = vadd.xlane.f32.xlu0 %v143
  %v145 = vpop.xlane.xlu0 %144
  %v146 = vsel %vm52, %v51, 0.0
  %147 = vadd.xlane.f32.xlu0 %v146
  %v148 = vpop.xlane.xlu0 %147
  %v149 = vrcp.pop 16.0
  %v150 = vmul.f32 %v55, %v149
  %v151 = vmul.f32 %v58, %v149
  %v152 = vmul.f32 %v61, %v149
  %v153 = vmul.f32 %v64, %v149
  %v154 = vmul.f32 %v67, %v149
  %v155 = vmul.f32 %v70, %v149
  %v156 = vmul.f32 %v73, %v149
  %v157 = vmul.f32 %v76, %v149
  %v158 = vmul.f32 %v79, %v149
  %v159 = vmul.f32 %v82, %v149
  %v160 = vmul.f32 %v85, %v149
  %v161 = vmul.f32 %v88, %v149
  %v162 = vmul.f32 %v91, %v149
  %v163 = vmul.f32 %v94, %v149
  %v164 = vmul.f32 %v97, %v149
  %v165 = vmul.f32 %v100, %v149
  %v166 = vmul.f32 %v103, %v149
  %v167 = vmul.f32 %v106, %v149
  %v168 = vmul.f32 %v109, %v149
  %v169 = vmul.f32 %v112, %v149
  %v170 = vmul.f32 %v115, %v149
  %v171 = vmul.f32 %v118, %v149
  %v172 = vmul.f32 %v121, %v149
  %v173 = vmul.f32 %v124, %v149
  %v174 = vmul.f32 %v127, %v149
  %v175 = vmul.f32 %v130, %v149
  %v176 = vmul.f32 %v133, %v149
  %v177 = vmul.f32 %v136, %v149
  %v178 = vmul.f32 %v139, %v149
  %v179 = vmul.f32 %v142, %v149
  %v180 = vmul.f32 %v145, %v149
  %v181 = vmul.f32 %v148, %v149
  %v182 = vsub.f32 %v20, %v150
  %v183 = vsub.f32 %v21, %v151
  %v184 = vsub.f32 %v22, %v152
  %v185 = vsub.f32 %v23, %v153
  %v186 = vsub.f32 %v24, %v154
  %v187 = vsub.f32 %v25, %v155
  %v188 = vsub.f32 %v26, %v156
  %v189 = vsub.f32 %v27, %v157
  %v190 = vsub.f32 %v28, %v158
  %v191 = vsub.f32 %v29, %v159
  %v192 = vsub.f32 %v30, %v160
  %v193 = vsub.f32 %v31, %v161
  %v194 = vsub.f32 %v32, %v162
  %v195 = vsub.f32 %v33, %v163
  %v196 = vsub.f32 %v34, %v164
  %v197 = vsub.f32 %v35, %v165
  %v198 = vsub.f32 %v36, %v166
  %v199 = vsub.f32 %v37, %v167
  %v200 = vsub.f32 %v38, %v168
  %v201 = vsub.f32 %v39, %v169
  %v202 = vsub.f32 %v40, %v170
  %v203 = vsub.f32 %v41, %v171
  %v204 = vsub.f32 %v42, %v172
  %v205 = vsub.f32 %v43, %v173
  %v206 = vsub.f32 %v44, %v174
  %v207 = vsub.f32 %v45, %v175
  %v208 = vsub.f32 %v46, %v176
  %v209 = vsub.f32 %v47, %v177
  %v210 = vsub.f32 %v48, %v178
  %v211 = vsub.f32 %v49, %v179
  %v212 = vsub.f32 %v50, %v180
  %v213 = vsub.f32 %v51, %v181
  %v214 = vmul.f32 %v182, %v182
  %v215 = vmul.f32 %v183, %v183
  %v216 = vmul.f32 %v184, %v184
  %v217 = vmul.f32 %v185, %v185
  %v218 = vmul.f32 %v186, %v186
  %v219 = vmul.f32 %v187, %v187
  %v220 = vmul.f32 %v188, %v188
  %v221 = vmul.f32 %v189, %v189
  %v222 = vmul.f32 %v190, %v190
  %v223 = vmul.f32 %v191, %v191
  %v224 = vmul.f32 %v192, %v192
  %v225 = vmul.f32 %v193, %v193
  %v226 = vmul.f32 %v194, %v194
  %v227 = vmul.f32 %v195, %v195
  %v228 = vmul.f32 %v196, %v196
  %v229 = vmul.f32 %v197, %v197
  %v230 = vmul.f32 %v198, %v198
  %v231 = vmul.f32 %v199, %v199
  %v232 = vmul.f32 %v200, %v200
  %v233 = vmul.f32 %v201, %v201
  %v234 = vmul.f32 %v202, %v202
  %v235 = vmul.f32 %v203, %v203
  %v236 = vmul.f32 %v204, %v204
  %v237 = vmul.f32 %v205, %v205
  %v238 = vmul.f32 %v206, %v206
  %v239 = vmul.f32 %v207, %v207
  %v240 = vmul.f32 %v208, %v208
  %v241 = vmul.f32 %v209, %v209
  %v242 = vmul.f32 %v210, %v210
  %v243 = vmul.f32 %v211, %v211
  %v244 = vmul.f32 %v212, %v212
  %v245 = vmul.f32 %v213, %v213
  %v246 = vsel %vm52, %v214, 0.0
  %247 = vadd.xlane.f32.xlu0 %v246
  %v248 = vpop.xlane.xlu0 %247
  %v249 = vsel %vm52, %v215, 0.0
  %250 = vadd.xlane.f32.xlu0 %v249
  %v251 = vpop.xlane.xlu0 %250
  %v252 = vsel %vm52, %v216, 0.0
  %253 = vadd.xlane.f32.xlu0 %v252
  %v254 = vpop.xlane.xlu0 %253
  %v255 = vsel %vm52, %v217, 0.0
  %256 = vadd.xlane.f32.xlu0 %v255
  %v257 = vpop.xlane.xlu0 %256
  %v258 = vsel %vm52, %v218, 0.0
  %259 = vadd.xlane.f32.xlu0 %v258
  %v260 = vpop.xlane.xlu0 %259
  %v261 = vsel %vm52, %v219, 0.0
  %262 = vadd.xlane.f32.xlu0 %v261
  %v263 = vpop.xlane.xlu0 %262
  %v264 = vsel %vm52, %v220, 0.0
  %265 = vadd.xlane.f32.xlu0 %v264
  %v266 = vpop.xlane.xlu0 %265
  %v267 = vsel %vm52, %v221, 0.0
  %268 = vadd.xlane.f32.xlu0 %v267
  %v269 = vpop.xlane.xlu0 %268
  %v270 = vsel %vm52, %v222, 0.0
  %271 = vadd.xlane.f32.xlu0 %v270
  %v272 = vpop.xlane.xlu0 %271
  %v273 = vsel %vm52, %v223, 0.0
  %274 = vadd.xlane.f32.xlu0 %v273
  %v275 = vpop.xlane.xlu0 %274
  %v276 = vsel %vm52, %v224, 0.0
  %277 = vadd.xlane.f32.xlu0 %v276
  %v278 = vpop.xlane.xlu0 %277
  %v279 = vsel %vm52, %v225, 0.0
  %280 = vadd.xlane.f32.xlu0 %v279
  %v281 = vpop.xlane.xlu0 %280
  %v282 = vsel %vm52, %v226, 0.0
  %283 = vadd.xlane.f32.xlu0 %v282
  %v284 = vpop.xlane.xlu0 %283
  %v285 = vsel %vm52, %v227, 0.0
  %286 = vadd.xlane.f32.xlu0 %v285
  %v287 = vpop.xlane.xlu0 %286
  %v288 = vsel %vm52, %v228, 0.0
  %289 = vadd.xlane.f32.xlu0 %v288
  %v290 = vpop.xlane.xlu0 %289
  %v291 = vsel %vm52, %v229, 0.0
  %292 = vadd.xlane.f32.xlu0 %v291
  %v293 = vpop.xlane.xlu0 %292
  %v294 = vsel %vm52, %v230, 0.0
  %295 = vadd.xlane.f32.xlu0 %v294
  %v296 = vpop.xlane.xlu0 %295
  %v297 = vsel %vm52, %v231, 0.0
  %298 = vadd.xlane.f32.xlu0 %v297
  %v299 = vpop.xlane.xlu0 %298
  %v300 = vsel %vm52, %v232, 0.0
  %301 = vadd.xlane.f32.xlu0 %v300
  %v302 = vpop.xlane.xlu0 %301
  %v303 = vsel %vm52, %v233, 0.0
  %304 = vadd.xlane.f32.xlu0 %v303
  %v305 = vpop.xlane.xlu0 %304
  %v306 = vsel %vm52, %v234, 0.0
  %307 = vadd.xlane.f32.xlu0 %v306
  %v308 = vpop.xlane.xlu0 %307
  %v309 = vsel %vm52, %v235, 0.0
  %310 = vadd.xlane.f32.xlu0 %v309
  %v311 = vpop.xlane.xlu0 %310
  %v312 = vsel %vm52, %v236, 0.0
  %313 = vadd.xlane.f32.xlu0 %v312
  %v314 = vpop.xlane.xlu0 %313
  %v315 = vsel %vm52, %v237, 0.0
  %316 = vadd.xlane.f32.xlu0 %v315
  %v317 = vpop.xlane.xlu0 %316
  %v318 = vsel %vm52, %v238, 0.0
  %319 = vadd.xlane.f32.xlu0 %v318
  %v320 = vpop.xlane.xlu0 %319
  %v321 = vsel %vm52, %v239, 0.0
  %322 = vadd.xlane.f32.xlu0 %v321
  %v323 = vpop.xlane.xlu0 %322
  %v324 = vsel %vm52, %v240, 0.0
  %325 = vadd.xlane.f32.xlu0 %v324
  %v326 = vpop.xlane.xlu0 %325
  %v327 = vsel %vm52, %v241, 0.0
  %328 = vadd.xlane.f32.xlu0 %v327
  %v329 = vpop.xlane.xlu0 %328
  %v330 = vsel %vm52, %v242, 0.0
  %331 = vadd.xlane.f32.xlu0 %v330
  %v332 = vpop.xlane.xlu0 %331
  %v333 = vsel %vm52, %v243, 0.0
  %334 = vadd.xlane.f32.xlu0 %v333
  %v335 = vpop.xlane.xlu0 %334
  %v336 = vsel %vm52, %v244, 0.0
  %337 = vadd.xlane.f32.xlu0 %v336
  %v338 = vpop.xlane.xlu0 %337
  %v339 = vsel %vm52, %v245, 0.0
  %340 = vadd.xlane.f32.xlu0 %v339
  %v341 = vpop.xlane.xlu0 %340
  %v342 = vmul.f32 %v248, %v149
  %v343 = vmul.f32 %v251, %v149
  %v344 = vmul.f32 %v254, %v149
  %v345 = vmul.f32 %v257, %v149
  %v346 = vmul.f32 %v260, %v149
  %v347 = vmul.f32 %v263, %v149
  %v348 = vmul.f32 %v266, %v149
  %v349 = vmul.f32 %v269, %v149
  %v350 = vmul.f32 %v272, %v149
  %v351 = vmul.f32 %v275, %v149
  %v352 = vmul.f32 %v278, %v149
  %v353 = vmul.f32 %v281, %v149
  %v354 = vmul.f32 %v284, %v149
  %v355 = vmul.f32 %v287, %v149
  %v356 = vmul.f32 %v290, %v149
  %v357 = vmul.f32 %v293, %v149
  %v358 = vmul.f32 %v296, %v149
  %v359 = vmul.f32 %v299, %v149
  %v360 = vmul.f32 %v302, %v149
  %v361 = vmul.f32 %v305, %v149
  %v362 = vmul.f32 %v308, %v149
  %v363 = vmul.f32 %v311, %v149
  %v364 = vmul.f32 %v314, %v149
  %v365 = vmul.f32 %v317, %v149
  %v366 = vmul.f32 %v320, %v149
  %v367 = vmul.f32 %v323, %v149
  %v368 = vmul.f32 %v326, %v149
  %v369 = vmul.f32 %v329, %v149
  %v370 = vmul.f32 %v332, %v149
  %v371 = vmul.f32 %v335, %v149
  %v372 = vmul.f32 %v338, %v149
  %v373 = vmul.f32 %v341, %v149
  %v374 = vadd.f32 %v342, 1e-05
  %v375 = vadd.f32 %v343, 1e-05
  %v376 = vadd.f32 %v344, 1e-05
  %v377 = vadd.f32 %v345, 1e-05
  %v378 = vadd.f32 %v346, 1e-05
  %v379 = vadd.f32 %v347, 1e-05
  %v380 = vadd.f32 %v348, 1e-05
  %v381 = vadd.f32 %v349, 1e-05
  %v382 = vadd.f32 %v350, 1e-05
  %v383 = vadd.f32 %v351, 1e-05
  %v384 = vadd.f32 %v352, 1e-05
  %v385 = vadd.f32 %v353, 1e-05
  %v386 = vadd.f32 %v354, 1e-05
  %v387 = vadd.f32 %v355, 1e-05
  %v388 = vadd.f32 %v356, 1e-05
  %v389 = vadd.f32 %v357, 1e-05
  %v390 = vadd.f32 %v358, 1e-05
  %v391 = vadd.f32 %v359, 1e-05
  %v392 = vadd.f32 %v360, 1e-05
  %v393 = vadd.f32 %v361, 1e-05
  %v394 = vadd.f32 %v362, 1e-05
  %v395 = vadd.f32 %v363, 1e-05
  %v396 = vadd.f32 %v364, 1e-05
  %v397 = vadd.f32 %v365, 1e-05
  %v398 = vadd.f32 %v366, 1e-05
  %v399 = vadd.f32 %v367, 1e-05
  %v400 = vadd.f32 %v368, 1e-05
  %v401 = vadd.f32 %v369, 1e-05
  %v402 = vadd.f32 %v370, 1e-05
  %v403 = vadd.f32 %v371, 1e-05
  %v404 = vadd.f32 %v372, 1e-05
  %v405 = vadd.f32 %v373, 1e-05
  %v406 = vrsqrt.pop %v374
  %v407 = vrsqrt.pop %v375
  %v408 = vrsqrt.pop %v376
  %v409 = vrsqrt.pop %v377
  %v410 = vrsqrt.pop %v378
  %v411 = vrsqrt.pop %v379
  %v412 = vrsqrt.pop %v380
  %v413 = vrsqrt.pop %v381
  %v414 = vrsqrt.pop %v382
  %v415 = vrsqrt.pop %v383
  %v416 = vrsqrt.pop %v384
  %v417 = vrsqrt.pop %v385
  %v418 = vrsqrt.pop %v386
  %v419 = vrsqrt.pop %v387
  %v420 = vrsqrt.pop %v388
  %v421 = vrsqrt.pop %v389
  %v422 = vrsqrt.pop %v390
  %v423 = vrsqrt.pop %v391
  %v424 = vrsqrt.pop %v392
  %v425 = vrsqrt.pop %v393
  %v426 = vrsqrt.pop %v394
  %v427 = vrsqrt.pop %v395
  %v428 = vrsqrt.pop %v396
  %v429 = vrsqrt.pop %v397
  %v430 = vrsqrt.pop %v398
  %v431 = vrsqrt.pop %v399
  %v432 = vrsqrt.pop %v400
  %v433 = vrsqrt.pop %v401
  %v434 = vrsqrt.pop %v402
  %v435 = vrsqrt.pop %v403
  %v436 = vrsqrt.pop %v404
  %v437 = vrsqrt.pop %v405
  %v438 = vmul.f32 %v182, %v406
  %v439 = vmul.f32 %v183, %v407
  %v440 = vmul.f32 %v184, %v408
  %v441 = vmul.f32 %v185, %v409
  %v442 = vmul.f32 %v186, %v410
  %v443 = vmul.f32 %v187, %v411
  %v444 = vmul.f32 %v188, %v412
  %v445 = vmul.f32 %v189, %v413
  %v446 = vmul.f32 %v190, %v414
  %v447 = vmul.f32 %v191, %v415
  %v448 = vmul.f32 %v192, %v416
  %v449 = vmul.f32 %v193, %v417
  %v450 = vmul.f32 %v194, %v418
  %v451 = vmul.f32 %v195, %v419
  %v452 = vmul.f32 %v196, %v420
  %v453 = vmul.f32 %v197, %v421
  %v454 = vmul.f32 %v198, %v422
  %v455 = vmul.f32 %v199, %v423
  %v456 = vmul.f32 %v200, %v424
  %v457 = vmul.f32 %v201, %v425
  %v458 = vmul.f32 %v202, %v426
  %v459 = vmul.f32 %v203, %v427
  %v460 = vmul.f32 %v204, %v428
  %v461 = vmul.f32 %v205, %v429
  %v462 = vmul.f32 %v206, %v430
  %v463 = vmul.f32 %v207, %v431
  %v464 = vmul.f32 %v208, %v432
  %v465 = vmul.f32 %v209, %v433
  %v466 = vmul.f32 %v210, %v434
  %v467 = vmul.f32 %v211, %v435
  %v468 = vmul.f32 %v212, %v436
  %v469 = vmul.f32 %v213, %v437
  %v470 = vld [vmem:[%s1] sm:$0x1]
  %v472 = vlaneseq
  %v473 = vshrl.u32 %v472, 7
  %v474 = vsub.s32 0, %v473
  %v475 = vrot.slane %v470, %v474
  %v477 = vmul.f32 %v438, %v475
  %v478 = vmul.f32 %v439, %v475
  %v479 = vmul.f32 %v440, %v475
  %v480 = vmul.f32 %v441, %v475
  %v481 = vmul.f32 %v442, %v475
  %v482 = vmul.f32 %v443, %v475
  %v483 = vmul.f32 %v444, %v475
  %v484 = vmul.f32 %v445, %v475
  %v485 = vmul.f32 %v446, %v475
  %v486 = vmul.f32 %v447, %v475
  %v487 = vmul.f32 %v448, %v475
  %v488 = vmul.f32 %v449, %v475
  %v489 = vmul.f32 %v450, %v475
  %v490 = vmul.f32 %v451, %v475
  %v491 = vmul.f32 %v452, %v475
  %v492 = vmul.f32 %v453, %v475
  %v493 = vmul.f32 %v454, %v475
  %v494 = vmul.f32 %v455, %v475
  %v495 = vmul.f32 %v456, %v475
  %v496 = vmul.f32 %v457, %v475
  %v497 = vmul.f32 %v458, %v475
  %v498 = vmul.f32 %v459, %v475
  %v499 = vmul.f32 %v460, %v475
  %v500 = vmul.f32 %v461, %v475
  %v501 = vmul.f32 %v462, %v475
  %v502 = vmul.f32 %v463, %v475
  %v503 = vmul.f32 %v464, %v475
  %v504 = vmul.f32 %v465, %v475
  %v505 = vmul.f32 %v466, %v475
  %v506 = vmul.f32 %v467, %v475
  %v507 = vmul.f32 %v468, %v475
  %v508 = vmul.f32 %v469, %v475
  %v509 = vld [vmem:[%s2] sm:$0x1]
  %v511 = vlaneseq
  %v512 = vshrl.u32 %v511, 7
  %v513 = vsub.s32 0, %v512
  %v514 = vrot.slane %v509, %v513
  %v516 = vadd.f32 %v477, %v514
  %v517 = vadd.f32 %v478, %v514
  %v518 = vadd.f32 %v479, %v514
  %v519 = vadd.f32 %v480, %v514
  %v520 = vadd.f32 %v481, %v514
  %v521 = vadd.f32 %v482, %v514
  %v522 = vadd.f32 %v483, %v514
  %v523 = vadd.f32 %v484, %v514
  %v524 = vadd.f32 %v485, %v514
  %v525 = vadd.f32 %v486, %v514
  %v526 = vadd.f32 %v487, %v514
  %v527 = vadd.f32 %v488, %v514
  %v528 = vadd.f32 %v489, %v514
  %v529 = vadd.f32 %v490, %v514
  %v530 = vadd.f32 %v491, %v514
  %v531 = vadd.f32 %v492, %v514
  %v532 = vadd.f32 %v493, %v514
  %v533 = vadd.f32 %v494, %v514
  %v534 = vadd.f32 %v495, %v514
  %v535 = vadd.f32 %v496, %v514
  %v536 = vadd.f32 %v497, %v514
  %v537 = vadd.f32 %v498, %v514
  %v538 = vadd.f32 %v499, %v514
  %v539 = vadd.f32 %v500, %v514
  %v540 = vadd.f32 %v501, %v514
  %v541 = vadd.f32 %v502, %v514
  %v542 = vadd.f32 %v503, %v514
  %v543 = vadd.f32 %v504, %v514
  %v544 = vadd.f32 %v505, %v514
  %v545 = vadd.f32 %v506, %v514
  %v546 = vadd.f32 %v507, %v514
  %v547 = vadd.f32 %v508, %v514
  %v548 = vld [vmem:[%s3] sm:$0xff]
  %v549 = vld [vmem:[%s3 + $0x8] sm:$0xff]
  %v550 = vld [vmem:[%s4] sm:$0x1]
  %v552 = vlaneseq
  %v553 = vshrl.u32 %v552, 7
  %v554 = vsub.s32 0, %v553
  %v555 = vrot.slane %v550, %v554
  %v558 = vsel %vm52, %v516, 0
  %v561 = vsel %vm52, %v517, 0
  %v564 = vsel %vm52, %v518, 0
  %v567 = vsel %vm52, %v519, 0
  %v570 = vsel %vm52, %v520, 0
  %v573 = vsel %vm52, %v521, 0
  %v576 = vsel %vm52, %v522, 0
  %v579 = vsel %vm52, %v523, 0
  %v582 = vsel %vm52, %v524, 0
  %v585 = vsel %vm52, %v525, 0
  %v588 = vsel %vm52, %v526, 0
  %v591 = vsel %vm52, %v527, 0
  %v594 = vsel %vm52, %v528, 0
  %v597 = vsel %vm52, %v529, 0
  %v600 = vsel %vm52, %v530, 0
  %v603 = vsel %vm52, %v531, 0
  %v606 = vsel %vm52, %v532, 0
  %v609 = vsel %vm52, %v533, 0
  %v612 = vsel %vm52, %v534, 0
  %v615 = vsel %vm52, %v535, 0
  %v618 = vsel %vm52, %v536, 0
  %v621 = vsel %vm52, %v537, 0
  %v624 = vsel %vm52, %v538, 0
  %v627 = vsel %vm52, %v539, 0
  %v630 = vsel %vm52, %v540, 0
  %v633 = vsel %vm52, %v541, 0
  %v636 = vsel %vm52, %v542, 0
  %v639 = vsel %vm52, %v543, 0
  %v642 = vsel %vm52, %v544, 0
  %v645 = vsel %vm52, %v545, 0
  %v648 = vsel %vm52, %v546, 0
  %v651 = vsel %vm52, %v547, 0
  %653 = vmatprep.subr.mxu0 0.0
  %654 = vmatpush1.msra.mxu0 %v548
  %655 = vmatprep.subr.mxu0 0.0
  %656 = vmatpush1.msra.mxu0 %v549
  %657 = vmatprep.subr.mxu0 0.0
  %658 = vmatpush1.msra.mxu0 0.0
  %659 = vmatprep.subr.mxu0 0.0
  %660 = vmatpush1.msra.mxu0 0.0
  %661 = vmatprep.subr.mxu0 0.0
  %662 = vmatpush1.msra.mxu0 0.0
  %663 = vmatprep.subr.mxu0 0.0
  %664 = vmatpush1.msra.mxu0 0.0
  %665 = vmatprep.subr.mxu0 0.0
  %666 = vmatpush1.msra.mxu0 0.0
  %667 = vmatprep.subr.mxu0 0.0
  %668 = vmatpush1.msra.mxu0 0.0
  %669 = vmatprep.subr.mxu0 0.0
  %670 = vmatpush1.msra.mxu0 0.0
  %671 = vmatprep.subr.mxu0 0.0
  %672 = vmatpush1.msra.mxu0 0.0
  %673 = vmatprep.subr.mxu0 0.0
  %674 = vmatpush1.msra.mxu0 0.0
  %675 = vmatprep.subr.mxu0 0.0
  %676 = vmatpush1.msra.mxu0 0.0
  %677 = vmatprep.subr.mxu0 0.0
  %678 = vmatpush1.msra.mxu0 0.0
  %679 = vmatprep.subr.mxu0 0.0
  %680 = vmatpush1.msra.mxu0 0.0
  %681 = vmatprep.subr.mxu0 0.0
  %682 = vmatpush1.msra.mxu0 0.0
  %683 = vmatprep.subr.mxu0 0.0
  %684 = vmatpush1.msra.mxu0 0.0
  %685 = vmatprep.subr.mxu0 0.0
  %686 = vmatpush1.msra.mxu0 0.0
  %687 = vmatprep.subr.mxu0 0.0
  %688 = vmatpush1.msra.mxu0 0.0
  %689 = vmatprep.subr.mxu0 0.0
  %690 = vmatpush1.msra.mxu0 0.0
  %691 = vmatprep.subr.mxu0 0.0
  %692 = vmatpush1.msra.mxu0 0.0
  %693 = vmatprep.subr.mxu0 0.0
  %694 = vmatpush1.msra.mxu0 0.0
  %695 = vmatprep.subr.mxu0 0.0
  %696 = vmatpush1.msra.mxu0 0.0
  %697 = vmatprep.subr.mxu0 0.0
  %698 = vmatpush1.msra.mxu0 0.0
  %699 = vmatprep.subr.mxu0 0.0
  %700 = vmatpush1.msra.mxu0 0.0
  %701 = vmatprep.subr.mxu0 0.0
  %702 = vmatpush1.msra.mxu0 0.0
  %703 = vmatprep.subr.mxu0 0.0
  %704 = vmatpush1.msra.mxu0 0.0
  %705 = vmatprep.subr.mxu0 0.0
  %706 = vmatpush1.msra.mxu0 0.0
  %707 = vmatprep.subr.mxu0 0.0
  %708 = vmatpush1.msra.mxu0 0.0
  %709 = vmatprep.subr.mxu0 0.0
  %710 = vmatpush1.msra.mxu0 0.0
  %711 = vmatprep.subr.mxu0 0.0
  %712 = vmatpush1.msra.mxu0 0.0
  %713 = vmatprep.subr.mxu0 0.0
  %714 = vmatpush1.msra.mxu0 0.0
  %715 = vmatprep.subr.mxu0 0.0
  %716 = vmatpush1.msra.mxu0 0.0
  %717 = vmatprep.mubr.f32.mxu0 0.0
  %718 = vmatmul.mubr.f32.gmra.mrb[0].mxu0 %v558
  %v719 = vpop.f32.mrb[0].mxu0
  %v720 = vadd.f32 %v555, %v719
  %v721 = vpop.f32.mrb[0].mxu0
  %722 = vmatprep.mubr.f32.mxu0 0.0
  %723 = vmatmul.mubr.f32.gmra.mrb[0].mxu0 %v561
  %v724 = vpop.f32.mrb[0].mxu0
  %v725 = vadd.f32 %v555, %v724
  %v726 = vpop.f32.mrb[0].mxu0
  %727 = vmatprep.mubr.f32.mxu0 0.0
  %728 = vmatmul.mubr.f32.gmra.mrb[0].mxu0 %v564
  %v729 = vpop.f32.mrb[0].mxu0
  %v730 = vadd.f32 %v555, %v729
  %v731 = vpop.f32.mrb[0].mxu0
  %732 = vmatprep.mubr.f32.mxu0 0.0
  %733 = vmatmul.mubr.f32.gmra.mrb[0].mxu0 %v567
  %v734 = vpop.f32.mrb[0].mxu0
  %v735 = vadd.f32 %v555, %v734
  %v736 = vpop.f32.mrb[0].mxu0
  %737 = vmatprep.mubr.f32.mxu0 0.0
  %738 = vmatmul.mubr.f32.gmra.mrb[0].mxu0 %v570
  %v739 = vpop.f32.mrb[0].mxu0
  %v740 = vadd.f32 %v555, %v739
  %v741 = vpop.f32.mrb[0].mxu0
  %742 = vmatprep.mubr.f32.mxu0 0.0
  %743 = vmatmul.mubr.f32.gmra.mrb[0].mxu0 %v573
  %v744 = vpop.f32.mrb[0].mxu0
  %v745 = vadd.f32 %v555, %v744
  %v746 = vpop.f32.mrb[0].mxu0
  %747 = vmatprep.mubr.f32.mxu0 0.0
  %748 = vmatmul.mubr.f32.gmra.mrb[0].mxu0 %v576
  %v749 = vpop.f32.mrb[0].mxu0
  %v750 = vadd.f32 %v555, %v749
  %v751 = vpop.f32.mrb[0].mxu0
  %752 = vmatprep.mubr.f32.mxu0 0.0
  %753 = vmatmul.mubr.f32.gmra.mrb[0].mxu0 %v579
  %v754 = vpop.f32.mrb[0].mxu0
  %v755 = vadd.f32 %v555, %v754
  %v756 = vpop.f32.mrb[0].mxu0
  %757 = vmatprep.mubr.f32.mxu0 0.0
  %758 = vmatmul.mubr.f32.gmra.mrb[0].mxu0 %v582
  %v759 = vpop.f32.mrb[0].mxu0
  %v760 = vadd.f32 %v555, %v759
  %v761 = vpop.f32.mrb[0].mxu0
  %762 = vmatprep.mubr.f32.mxu0 0.0
  %763 = vmatmul.mubr.f32.gmra.mrb[0].mxu0 %v585
  %v764 = vpop.f32.mrb[0].mxu0
  %v765 = vadd.f32 %v555, %v764
  %v766 = vpop.f32.mrb[0].mxu0
  %767 = vmatprep.mubr.f32.mxu0 0.0
  %768 = vmatmul.mubr.f32.gmra.mrb[0].mxu0 %v588
  %v769 = vpop.f32.mrb[0].mxu0
  %v770 = vadd.f32 %v555, %v769
  %v771 = vpop.f32.mrb[0].mxu0
  %772 = vmatprep.mubr.f32.mxu0 0.0
  %773 = vmatmul.mubr.f32.gmra.mrb[0].mxu0 %v591
  %v774 = vpop.f32.mrb[0].mxu0
  %v775 = vadd.f32 %v555, %v774
  %v776 = vpop.f32.mrb[0].mxu0
  %777 = vmatprep.mubr.f32.mxu0 0.0
  %778 = vmatmul.mubr.f32.gmra.mrb[0].mxu0 %v594
  %v779 = vpop.f32.mrb[0].mxu0
  %v780 = vadd.f32 %v555, %v779
  %v781 = vpop.f32.mrb[0].mxu0
  %782 = vmatprep.mubr.f32.mxu0 0.0
  %783 = vmatmul.mubr.f32.gmra.mrb[0].mxu0 %v597
  %v784 = vpop.f32.mrb[0].mxu0
  %v785 = vadd.f32 %v555, %v784
  %v786 = vpop.f32.mrb[0].mxu0
  %787 = vmatprep.mubr.f32.mxu0 0.0
  %788 = vmatmul.mubr.f32.gmra.mrb[0].mxu0 %v600
  %v789 = vpop.f32.mrb[0].mxu0
  %v790 = vadd.f32 %v555, %v789
  %v791 = vpop.f32.mrb[0].mxu0
  %792 = vmatprep.mubr.f32.mxu0 0.0
  %793 = vmatmul.mubr.f32.gmra.mrb[0].mxu0 %v603
  %v794 = vpop.f32.mrb[0].mxu0
  %v795 = vadd.f32 %v555, %v794
  %v796 = vpop.f32.mrb[0].mxu0
  %797 = vmatprep.mubr.f32.mxu0 0.0
  %798 = vmatmul.mubr.f32.gmra.mrb[0].mxu0 %v606
  %v799 = vpop.f32.mrb[0].mxu0
  %v800 = vadd.f32 %v555, %v799
  %v801 = vpop.f32.mrb[0].mxu0
  %802 = vmatprep.mubr.f32.mxu0 0.0
  %803 = vmatmul.mubr.f32.gmra.mrb[0].mxu0 %v609
  %v804 = vpop.f32.mrb[0].mxu0
  %v805 = vadd.f32 %v555, %v804
  %v806 = vpop.f32.mrb[0].mxu0
  %807 = vmatprep.mubr.f32.mxu0 0.0
  %808 = vmatmul.mubr.f32.gmra.mrb[0].mxu0 %v612
  %v809 = vpop.f32.mrb[0].mxu0
  %v810 = vadd.f32 %v555, %v809
  %v811 = vpop.f32.mrb[0].mxu0
  %812 = vmatprep.mubr.f32.mxu0 0.0
  %813 = vmatmul.mubr.f32.gmra.mrb[0].mxu0 %v615
  %v814 = vpop.f32.mrb[0].mxu0
  %v815 = vadd.f32 %v555, %v814
  %v816 = vpop.f32.mrb[0].mxu0
  %817 = vmatprep.mubr.f32.mxu0 0.0
  %818 = vmatmul.mubr.f32.gmra.mrb[0].mxu0 %v618
  %v819 = vpop.f32.mrb[0].mxu0
  %v820 = vadd.f32 %v555, %v819
  %v821 = vpop.f32.mrb[0].mxu0
  %822 = vmatprep.mubr.f32.mxu0 0.0
  %823 = vmatmul.mubr.f32.gmra.mrb[0].mxu0 %v621
  %v824 = vpop.f32.mrb[0].mxu0
  %v825 = vadd.f32 %v555, %v824
  %v826 = vpop.f32.mrb[0].mxu0
  %827 = vmatprep.mubr.f32.mxu0 0.0
  %828 = vmatmul.mubr.f32.gmra.mrb[0].mxu0 %v624
  %v829 = vpop.f32.mrb[0].mxu0
  %v830 = vadd.f32 %v555, %v829
  %v831 = vpop.f32.mrb[0].mxu0
  %832 = vmatprep.mubr.f32.mxu0 0.0
  %833 = vmatmul.mubr.f32.gmra.mrb[0].mxu0 %v627
  %v834 = vpop.f32.mrb[0].mxu0
  %v835 = vadd.f32 %v555, %v834
  %v836 = vpop.f32.mrb[0].mxu0
  %837 = vmatprep.mubr.f32.mxu0 0.0
  %838 = vmatmul.mubr.f32.gmra.mrb[0].mxu0 %v630
  %v839 = vpop.f32.mrb[0].mxu0
  %v840 = vadd.f32 %v555, %v839
  %v841 = vpop.f32.mrb[0].mxu0
  %842 = vmatprep.mubr.f32.mxu0 0.0
  %843 = vmatmul.mubr.f32.gmra.mrb[0].mxu0 %v633
  %v844 = vpop.f32.mrb[0].mxu0
  %v845 = vadd.f32 %v555, %v844
  %v846 = vpop.f32.mrb[0].mxu0
  %847 = vmatprep.mubr.f32.mxu0 0.0
  %848 = vmatmul.mubr.f32.gmra.mrb[0].mxu0 %v636
  %v849 = vpop.f32.mrb[0].mxu0
  %v850 = vadd.f32 %v555, %v849
  %v851 = vpop.f32.mrb[0].mxu0
  %852 = vmatprep.mubr.f32.mxu0 0.0
  %853 = vmatmul.mubr.f32.gmra.mrb[0].mxu0 %v639
  %v854 = vpop.f32.mrb[0].mxu0
  %v855 = vadd.f32 %v555, %v854
  %v856 = vpop.f32.mrb[0].mxu0
  %857 = vmatprep.mubr.f32.mxu0 0.0
  %858 = vmatmul.mubr.f32.gmra.mrb[0].mxu0 %v642
  %v859 = vpop.f32.mrb[0].mxu0
  %v860 = vadd.f32 %v555, %v859
  %v861 = vpop.f32.mrb[0].mxu0
  %862 = vmatprep.mubr.f32.mxu0 0.0
  %863 = vmatmul.mubr.f32.gmra.mrb[0].mxu0 %v645
  %v864 = vpop.f32.mrb[0].mxu0
  %v865 = vadd.f32 %v555, %v864
  %v866 = vpop.f32.mrb[0].mxu0
  %867 = vmatprep.mubr.f32.mxu0 0.0
  %868 = vmatmul.mubr.f32.gmra.mrb[0].mxu0 %v648
  %v869 = vpop.f32.mrb[0].mxu0
  %v870 = vadd.f32 %v555, %v869
  %v871 = vpop.f32.mrb[0].mxu0
  %872 = vmatprep.mubr.f32.mxu0 0.0
  %873 = vmatmul.mubr.f32.gmra.mrb[0].mxu0 %v651
  %v874 = vpop.f32.mrb[0].mxu0
  %v875 = vadd.f32 %v555, %v874
  %v876 = vpop.f32.mrb[0].mxu0
  %877 = vdwg.mxu0
  %vm878 = vcmask 523264
  %879 = vst.msk [vmem:[%s5] sm:$0xff] %vm878, %v720
  %880 = vst.msk [vmem:[%s5 + $0x8] sm:$0xff] %vm878, %v725
  %881 = vst.msk [vmem:[%s5 + $0x10] sm:$0xff] %vm878, %v730
  %882 = vst.msk [vmem:[%s5 + $0x18] sm:$0xff] %vm878, %v735
  %883 = vst.msk [vmem:[%s5 + $0x20] sm:$0xff] %vm878, %v740
  %884 = vst.msk [vmem:[%s5 + $0x28] sm:$0xff] %vm878, %v745
  %885 = vst.msk [vmem:[%s5 + $0x30] sm:$0xff] %vm878, %v750
  %886 = vst.msk [vmem:[%s5 + $0x38] sm:$0xff] %vm878, %v755
  %887 = vst.msk [vmem:[%s5 + $0x40] sm:$0xff] %vm878, %v760
  %888 = vst.msk [vmem:[%s5 + $0x48] sm:$0xff] %vm878, %v765
  %889 = vst.msk [vmem:[%s5 + $0x50] sm:$0xff] %vm878, %v770
  %890 = vst.msk [vmem:[%s5 + $0x58] sm:$0xff] %vm878, %v775
  %891 = vst.msk [vmem:[%s5 + $0x60] sm:$0xff] %vm878, %v780
  %892 = vst.msk [vmem:[%s5 + $0x68] sm:$0xff] %vm878, %v785
  %893 = vst.msk [vmem:[%s5 + $0x70] sm:$0xff] %vm878, %v790
  %894 = vst.msk [vmem:[%s5 + $0x78] sm:$0xff] %vm878, %v795
  %895 = vst.msk [vmem:[%s5 + $0x80] sm:$0xff] %vm878, %v800
  %896 = vst.msk [vmem:[%s5 + $0x88] sm:$0xff] %vm878, %v805
  %897 = vst.msk [vmem:[%s5 + $0x90] sm:$0xff] %vm878, %v810
  %898 = vst.msk [vmem:[%s5 + $0x98] sm:$0xff] %vm878, %v815
  %899 = vst.msk [vmem:[%s5 + $0xa0] sm:$0xff] %vm878, %v820
  %900 = vst.msk [vmem:[%s5 + $0xa8] sm:$0xff] %vm878, %v825
  %901 = vst.msk [vmem:[%s5 + $0xb0] sm:$0xff] %vm878, %v830
  %902 = vst.msk [vmem:[%s5 + $0xb8] sm:$0xff] %vm878, %v835
  %903 = vst.msk [vmem:[%s5 + $0xc0] sm:$0xff] %vm878, %v840
  %904 = vst.msk [vmem:[%s5 + $0xc8] sm:$0xff] %vm878, %v845
  %905 = vst.msk [vmem:[%s5 + $0xd0] sm:$0xff] %vm878, %v850
  %906 = vst.msk [vmem:[%s5 + $0xd8] sm:$0xff] %vm878, %v855
  %907 = vst.msk [vmem:[%s5 + $0xe0] sm:$0xff] %vm878, %v860
  %908 = vst.msk [vmem:[%s5 + $0xe8] sm:$0xff] %vm878, %v865
  %909 = vst.msk [vmem:[%s5 + $0xf0] sm:$0xff] %vm878, %v870
  %910 = vst.msk [vmem:[%s5 + $0xf8] sm:$0xff] %vm878, %v875
  // Predicated region
  $region22: #{_lambda_.15} parent=0 // pred_check
    _
  $region23: #{_lambda_.15} parent=0 // pred_check_branch
    %912 = sbr.rel (0) target = $region25
  $region24: #{_lambda_.15} parent=0 // pred_region
    _
  $region25: #{_lambda_.15} parent=0 // pred_fallthru
    _
  // Predicated region
  $region26: #{_lambda_.15} parent=0 // pred_check
    _
  $region27: #{_lambda_.15} parent=0 // pred_check_branch
    %914 = sbr.rel (0) target = $region29
  $region28: #{_lambda_.15} parent=0 // pred_region
    _
  $region29: #{_lambda_.15} parent=0 // pred_fallthru
    _

// kernel: _lambda_.16
$region0: #{_lambda_.16}
  #allocation0 [shape = 'u32[]', space=smem, size = 0x4, offset = 0x4, fixed_abs, tag = 'smem constant byte address 0x4 - core index']
  #allocation1 [shape = 'u32[144,128]{1,0:T(1,128)}', space=vmem, size = 0x12000, scoped, tag = 'internal scratch']
  #allocation2 [shape = 'f32[32,16]{1,0:T(8,128)}', space=vmem, size = 0x4000, scoped, tag = 'scratch operand']
  #allocation3 [shape = 'f32[32,16]{1,0:T(8,128)}', space=vmem, size = 0x4000, scoped, tag = 'scratch operand']
  %s0 = inlined_call_operand.vmem [shape: f32[8,32,64], index: 0, kind: input, shape index: {}]
  %s1 = inlined_call_operand.vmem [shape: f32[16,64], index: 1, kind: input, shape index: {}]
  %s2 = inlined_call_operand.vmem [shape: f32[32,16], index: 2, kind: input, shape index: {}]
  %s3 = inlined_call_operand.vmem [shape: f32[32,16], index: 3, kind: input, shape index: {}]
  %s4 = inlined_call_operand.vmem [shape: f32[8,32,16], index: 4, kind: output, shape index: {0}]
  %s5 = inlined_call_operand.vmem [shape: f32[32,16], index: 5, kind: output, shape index: {1}]
  %s6 = inlined_call_operand.vmem [shape: f32[32,16], index: 6, kind: output, shape index: {2}]
  %7 = xla_tuple %s4, %s5, %s6
  %s8 = sld [smem:[#allocation0]]
  $region73: #{_lambda_.16} parent=0
    _
  %s10 = ssub.s32 1, %s8
  %s11 = scalar_select 0, %s10, %s8
  loop: start=0, step=1, limit=10
  $region2: #{_lambda_.16} parent=0 // loop_pre_header
    _
  $region3: #{_lambda_.16} parent=0 // loop_header
    %s13 = sphi 0, %s17
    %p14 = scmp.ge.s32.totalorder %s13, 10
    %s23 = sphi 0, %s25
    %s26 = sphi 0, %s23
    %s27 = sphi 0, %s26
    %s43 = sphi 0, %s27
    %s47 = sphi 0, %s47
    %s49 = sphi 0, %s47
    %s50 = sphi 0, %s49
    %s64 = sphi 0, %s50
    %s68 = sphi 0, %s68
    %s70 = sphi 0, %s68
    %s71 = sphi 0, %s70
    %s85 = sphi 0, %s71
    %s89 = sphi 0, %s89
    %s91 = sphi 0, %s89
    %s92 = sphi 0, %s91
    %s106 = sphi 0, %s92
    %s112 = sphi 0, %s114
    %s115 = sphi 0, %s112
    %s116 = sphi 0, %s115
    %s132 = sphi 0, %s116
    %s136 = sphi 0, %s136
    %s138 = sphi 0, %s136
    %s139 = sphi 0, %s138
    %s153 = sphi 0, %s139
    %s157 = sphi 0, %s157
    %s159 = sphi 0, %s157
    %s160 = sphi 0, %s159
    %s174 = sphi 0, %s160
  $region4: #{_lambda_.16} parent=0 // loop_header_branch
    %16 = sbr.rel (%p14) target = $region8
  $region5: #{_lambda_.16} parent=0 // loop_body
    %s18 = ssub.s32 %s13, 1
    %s19 = ssub.s32 %s13, 2
    %s20 = sadd.s32 %s13, 1
    %s21 = ssub.s32 %s13, %s20
    %p22 = scmp.eq.s32.totalorder %s21, 0
    %s24 = sadd.s32 %s23, 1
    %s25 = scalar_select %p22, %s23, %s24
    %p28 = pneg %p22
    %p29 = scmp.eq.s32.totalorder %s13, 7
    %p30 = por %p28, %p29
    %p31 = scmp.ne.s32.totalorder %s23, %s26
    %p32 = scmp.eq.s32.totalorder %s13, 0
    %p33 = por %p31, %p32
    %p34 = scmp.ne.s32.totalorder %s23, %s26
    %p35 = scmp.eq.s32.totalorder %s18, 7
    %p36 = por %p34, %p35
    %p37 = scmp.ne.s32.totalorder %s26, %s27
    %p38 = scmp.eq.s32.totalorder %s18, 0
    %p39 = por %p37, %p38
    %p40 = scmp.ne.s32.totalorder %s26, %s27
    %p41 = scmp.eq.s32.totalorder %s19, 7
    %p42 = por %p40, %p41
    %p44 = scmp.ne.s32.totalorder %s27, %s43
    %p45 = scmp.eq.s32.totalorder %s19, 0
    %p46 = por %p44, %p45
    %s48 = sadd.s32 %s47, 1
    %p51 = scmp.eq.s32.totalorder %s13, 7
    %p52 = scmp.ne.s32.totalorder %s47, %s49
    %p53 = scmp.eq.s32.totalorder %s13, 0
    %p54 = por %p52, %p53
    %p55 = scmp.ne.s32.totalorder %s47, %s49
    %p56 = scmp.eq.s32.totalorder %s18, 7
    %p57 = por %p55, %p56
    %p58 = scmp.ne.s32.totalorder %s49, %s50
    %p59 = scmp.eq.s32.totalorder %s18, 0
    %p60 = por %p58, %p59
    %p61 = scmp.ne.s32.totalorder %s49, %s50
    %p62 = scmp.eq.s32.totalorder %s19, 7
    %p63 = por %p61, %p62
    %p65 = scmp.ne.s32.totalorder %s50, %s64
    %p66 = scmp.eq.s32.totalorder %s19, 0
    %p67 = por %p65, %p66
    %s69 = sadd.s32 %s68, 1
    %p72 = scmp.eq.s32.totalorder %s13, 7
    %p73 = scmp.ne.s32.totalorder %s68, %s70
    %p74 = scmp.eq.s32.totalorder %s13, 0
    %p75 = por %p73, %p74
    %p76 = scmp.ne.s32.totalorder %s68, %s70
    %p77 = scmp.eq.s32.totalorder %s18, 7
    %p78 = por %p76, %p77
    %p79 = scmp.ne.s32.totalorder %s70, %s71
    %p80 = scmp.eq.s32.totalorder %s18, 0
    %p81 = por %p79, %p80
    %p82 = scmp.ne.s32.totalorder %s70, %s71
    %p83 = scmp.eq.s32.totalorder %s19, 7
    %p84 = por %p82, %p83
    %p86 = scmp.ne.s32.totalorder %s71, %s85
    %p87 = scmp.eq.s32.totalorder %s19, 0
    %p88 = por %p86, %p87
    %s90 = sadd.s32 %s89, 1
    %p93 = scmp.eq.s32.totalorder %s13, 7
    %p94 = scmp.ne.s32.totalorder %s89, %s91
    %p95 = scmp.eq.s32.totalorder %s13, 0
    %p96 = por %p94, %p95
    %p97 = scmp.ne.s32.totalorder %s89, %s91
    %p98 = scmp.eq.s32.totalorder %s18, 7
    %p99 = por %p97, %p98
    %p100 = scmp.ne.s32.totalorder %s91, %s92
    %p101 = scmp.eq.s32.totalorder %s18, 0
    %p102 = por %p100, %p101
    %p103 = scmp.ne.s32.totalorder %s91, %s92
    %p104 = scmp.eq.s32.totalorder %s19, 7
    %p105 = por %p103, %p104
    %p107 = scmp.ne.s32.totalorder %s92, %s106
    %p108 = scmp.eq.s32.totalorder %s19, 0
    %p109 = por %p107, %p108
    %s110 = ssub.s32 %s13, %s20
    %p111 = scmp.eq.s32.totalorder %s110, 0
    %s113 = sadd.s32 %s112, 1
    %s114 = scalar_select %p111, %s112, %s113
    %p117 = pneg %p111
    %p118 = scmp.eq.s32.totalorder %s13, 7
    %p119 = por %p117, %p118
    %p120 = scmp.ne.s32.totalorder %s112, %s115
    %p121 = scmp.eq.s32.totalorder %s13, 0
    %p122 = por %p120, %p121
    %p123 = scmp.ne.s32.totalorder %s112, %s115
    %p124 = scmp.eq.s32.totalorder %s18, 7
    %p125 = por %p123, %p124
    %p126 = scmp.ne.s32.totalorder %s115, %s116
    %p127 = scmp.eq.s32.totalorder %s18, 0
    %p128 = por %p126, %p127
    %p129 = scmp.ne.s32.totalorder %s115, %s116
    %p130 = scmp.eq.s32.totalorder %s19, 7
    %p131 = por %p129, %p130
    %p133 = scmp.ne.s32.totalorder %s116, %s132
    %p134 = scmp.eq.s32.totalorder %s19, 0
    %p135 = por %p133, %p134
    %s137 = sadd.s32 %s136, 1
    %p140 = scmp.eq.s32.totalorder %s13, 7
    %p141 = scmp.ne.s32.totalorder %s136, %s138
    %p142 = scmp.eq.s32.totalorder %s13, 0
    %p143 = por %p141, %p142
    %p144 = scmp.ne.s32.totalorder %s136, %s138
    %p145 = scmp.eq.s32.totalorder %s18, 7
    %p146 = por %p144, %p145
    %p147 = scmp.ne.s32.totalorder %s138, %s139
    %p148 = scmp.eq.s32.totalorder %s18, 0
    %p149 = por %p147, %p148
    %p150 = scmp.ne.s32.totalorder %s138, %s139
    %p151 = scmp.eq.s32.totalorder %s19, 7
    %p152 = por %p150, %p151
    %p154 = scmp.ne.s32.totalorder %s139, %s153
    %p155 = scmp.eq.s32.totalorder %s19, 0
    %p156 = por %p154, %p155
    %s158 = sadd.s32 %s157, 1
    %p161 = scmp.eq.s32.totalorder %s13, 7
    %p162 = scmp.ne.s32.totalorder %s157, %s159
    %p163 = scmp.eq.s32.totalorder %s13, 0
    %p164 = por %p162, %p163
    %p165 = scmp.ne.s32.totalorder %s157, %s159
    %p166 = scmp.eq.s32.totalorder %s18, 7
    %p167 = por %p165, %p166
    %p168 = scmp.ne.s32.totalorder %s159, %s160
    %p169 = scmp.eq.s32.totalorder %s18, 0
    %p170 = por %p168, %p169
    %p171 = scmp.ne.s32.totalorder %s159, %s160
    %p172 = scmp.eq.s32.totalorder %s19, 7
    %p173 = por %p171, %p172
    %p175 = scmp.ne.s32.totalorder %s160, %s174
    %p176 = scmp.eq.s32.totalorder %s19, 0
    %p177 = por %p175, %p176
    %p178 = scmp.le.s32.totalorder 1, %s13
    %p179 = scmp.lt.s32.totalorder %s13, 9
    %p180 = pnand %p178, %p179
    %p181 = pneg %p180
    // Predicated region
    $region9: #{_lambda_.16} parent=5 // pred_check
      _
    $region10: #{_lambda_.16} parent=5 // pred_check_branch
      %183 = sbr.rel (%p180) target = $region12
    $region11: #{_lambda_.16} parent=5 // pred_region
      %s184 = ssub.s32 %s13, 1
      // Predicated region
      $region13: #{_lambda_.16} parent=11 // pred_check
        %p185 = pneg %p60
      $region14: #{_lambda_.16} parent=11 // pred_check_branch
        %187 = sbr.rel (%p185) target = $region16
      $region15: #{_lambda_.16} parent=11 // pred_region
        _
      $region16: #{_lambda_.16} parent=11 // pred_fallthru
        _
      // Predicated region
      $region17: #{_lambda_.16} parent=11 // pred_check
        %p188 = pneg %p81
      $region18: #{_lambda_.16} parent=11 // pred_check_branch
        %190 = sbr.rel (%p188) target = $region20
      $region19: #{_lambda_.16} parent=11 // pred_region
        _
      $region20: #{_lambda_.16} parent=11 // pred_fallthru
        _
      // Predicated region
      $region21: #{_lambda_.16} parent=11 // pred_check
        %p191 = pneg %p102
      $region22: #{_lambda_.16} parent=11 // pred_check_branch
        %193 = sbr.rel (%p191) target = $region24
      $region23: #{_lambda_.16} parent=11 // pred_region
        _
      $region24: #{_lambda_.16} parent=11 // pred_fallthru
        _
    $region12: #{_lambda_.16} parent=5 // pred_fallthru
      _
    %p194 = scmp.lt.s32.totalorder %s13, 8
    // Predicated region
    $region25: #{_lambda_.16} parent=5 // pred_check
      %p195 = pneg %p194
    $region26: #{_lambda_.16} parent=5 // pred_check_branch
      %197 = sbr.rel (%p195) target = $region28
    $region27: #{_lambda_.16} parent=5 // pred_region
      // Predicated region
      $region29: #{_lambda_.16} parent=27 // pred_check
        %p198 = pneg %p33
      $region30: #{_lambda_.16} parent=27 // pred_check_branch
        %200 = sbr.rel (%p198) target = $region32
      $region31: #{_lambda_.16} parent=27 // pred_region
        %p201 = scmp.lt.s32.totalorder %s13, 7
        %s202 = scalar_select %p201, %s13, 7
        %s203 = smul.addr %s202, 4
        %s204 = smul.addr %s203, 8
        %s205 = scalar_lea.vmem %s0, %s204
      $region32: #{_lambda_.16} parent=27 // pred_fallthru
        _
    $region28: #{_lambda_.16} parent=5 // pred_fallthru
      _
    %p206 = scmp.le.s32.totalorder 1, %s13
    %p207 = scmp.lt.s32.totalorder %s13, 9
    %p208 = pnand %p206, %p207
    %p209 = pneg %p208
    // Predicated region
    $region33: #{_lambda_.16} parent=5 // pred_check
      _
    $region34: #{_lambda_.16} parent=5 // pred_check_branch
      %211 = sbr.rel (%p208) target = $region36
    $region35: #{_lambda_.16} parent=5 // pred_region
      %s212 = ssub.s32 %s13, 1
      %p213 = scmp.lt.s32.totalorder %s18, 7
      %s214 = scalar_select %p213, %s18, 7
      %s215 = smul.addr %s214, 4
      %s216 = smul.addr %s215, 8
      %s217 = scalar_lea.vmem %s0, %s216
      %p218 = pneg %p39
      %p219 = pneg %p36
      %p220 = pneg %p60
      %p221 = pneg %p57
      %p222 = pneg %p81
      %p223 = pneg %p78
      %p224 = pneg %p102
      %p225 = pneg %p99
      %p226 = pneg %p128
      %p227 = pneg %p125
      %p228 = scmp.lt.s32.totalorder %s18, 7
      %s229 = scalar_select %p228, %s18, 7
      %s230 = smul.addr %s229, 4
      %s231 = smul.addr %s230, 8
      %s232 = scalar_lea.vmem %s4, %s231
      %p233 = pneg %p149
      %p234 = pneg %p146
      %p235 = pneg %p170
      %p236 = pneg %p167
      %p237 = scmp.lt.s32.totalorder %s18, 7
      %s238 = scalar_select %p237, %s18, 7
      %s239 = smul.addr %s238, 4
      %s240 = smul.addr %s239, 8
      %s241 = scalar_lea.vmem %s0, %s240
      %p242 = scmp.lt.s32.totalorder %s18, 7
      %s243 = scalar_select %p242, %s18, 7
      %s244 = smul.addr %s243, 4
      %s245 = smul.addr %s244, 8
      %s246 = scalar_lea.vmem %s4, %s245
      %p247 = scmp.eq.s32.totalorder %s18, 0
      // Predicated region
      $region37: #{_lambda_.16} parent=35 // pred_check
        %p248 = pneg %p247
      $region38: #{_lambda_.16} parent=35 // pred_check_branch
        %250 = sbr.rel (%p248) target = $region40
      $region39: #{_lambda_.16} parent=35 // pred_region
        %v251 = vld [vmem:[%s2] sm:$0xff]
        %v252 = vld [vmem:[%s2 + $0x8] sm:$0xff]
        %v253 = vld [vmem:[%s2 + $0x10] sm:$0xff]
        %v254 = vld [vmem:[%s2 + $0x18] sm:$0xff]
        %vm255 = vcmask 130048
        %256 = vst.msk [vmem:[#allocation2] sm:$0xff] %vm255, %v251
        %257 = vst.msk [vmem:[#allocation2 + $0x8] sm:$0xff] %vm255, %v252
        %258 = vst.msk [vmem:[#allocation2 + $0x10] sm:$0xff] %vm255, %v253
        %259 = vst.msk [vmem:[#allocation2 + $0x18] sm:$0xff] %vm255, %v254
        %v260 = vld [vmem:[%s3] sm:$0xff]
        %v261 = vld [vmem:[%s3 + $0x8] sm:$0xff]
        %v262 = vld [vmem:[%s3 + $0x10] sm:$0xff]
        %v263 = vld [vmem:[%s3 + $0x18] sm:$0xff]
        %264 = vst.msk [vmem:[#allocation3] sm:$0xff] %vm255, %v260
        %265 = vst.msk [vmem:[#allocation3 + $0x8] sm:$0xff] %vm255, %v261
        %266 = vst.msk [vmem:[#allocation3 + $0x10] sm:$0xff] %vm255, %v262
        %267 = vst.msk [vmem:[#allocation3 + $0x18] sm:$0xff] %vm255, %v263
      $region40: #{_lambda_.16} parent=35 // pred_fallthru
        _
      %v268 = vld [vmem:[%s241] sm:$0xff]
      %v269 = vld [vmem:[%s241 + $0x8] sm:$0xff]
      %v270 = vld [vmem:[%s241 + $0x10] sm:$0xff]
      %v271 = vld [vmem:[%s241 + $0x18] sm:$0xff]
      %v272 = vld [vmem:[#allocation2] sm:$0xff]
      %v273 = vld [vmem:[#allocation2 + $0x8] sm:$0xff]
      %v274 = vld [vmem:[#allocation2 + $0x10] sm:$0xff]
      %v275 = vld [vmem:[#allocation2 + $0x18] sm:$0xff]
      %v276 = vld [vmem:[%s1] sm:$0xff]
      %v277 = vld [vmem:[%s1 + $0x8] sm:$0xff]
      %vm278 = vcmask 130048
      %v280 = vsel %vm278, %v272, 0
      %v283 = vsel %vm278, %v273, 0
      %v286 = vsel %vm278, %v274, 0
      %v289 = vsel %vm278, %v275, 0
      %291 = vmatprep.subr.mxu0 0.0
      %292 = vmatpush1.msra.mxu0 %v276
      %293 = vmatprep.subr.mxu0 0.0
      %294 = vmatpush1.msra.mxu0 %v277
      %295 = vmatprep.subr.mxu0 0.0
      %296 = vmatpush1.msra.mxu0 0.0
      %297 = vmatprep.subr.mxu0 0.0
      %298 = vmatpush1.msra.mxu0 0.0
      %299 = vmatprep.subr.mxu0 0.0
      %300 = vmatpush1.msra.mxu0 0.0
      %301 = vmatprep.subr.mxu0 0.0
      %302 = vmatpush1.msra.mxu0 0.0
      %303 = vmatprep.subr.mxu0 0.0
      %304 = vmatpush1.msra.mxu0 0.0
      %305 = vmatprep.subr.mxu0 0.0
      %306 = vmatpush1.msra.mxu0 0.0
      %307 = vmatprep.subr.mxu0 0.0
      %308 = vmatpush1.msra.mxu0 0.0
      %309 = vmatprep.subr.mxu0 0.0
      %310 = vmatpush1.msra.mxu0 0.0
      %311 = vmatprep.subr.mxu0 0.0
      %312 = vmatpush1.msra.mxu0 0.0
      %313 = vmatprep.subr.mxu0 0.0
      %314 = vmatpush1.msra.mxu0 0.0
      %315 = vmatprep.subr.mxu0 0.0
      %316 = vmatpush1.msra.mxu0 0.0
      %317 = vmatprep.subr.mxu0 0.0
      %318 = vmatpush1.msra.mxu0 0.0
      %319 = vmatprep.subr.mxu0 0.0
      %320 = vmatpush1.msra.mxu0 0.0
      %321 = vmatprep.subr.mxu0 0.0
      %322 = vmatpush1.msra.mxu0 0.0
      %323 = vmatprep.subr.mxu0 0.0
      %324 = vmatpush1.msra.mxu0 0.0
      %325 = vmatprep.subr.mxu0 0.0
      %326 = vmatpush1.msra.mxu0 0.0
      %327 = vmatprep.subr.mxu0 0.0
      %328 = vmatpush1.msra.mxu0 0.0
      %329 = vmatprep.subr.mxu0 0.0
      %330 = vmatpush1.msra.mxu0 0.0
      %331 = vmatprep.subr.mxu0 0.0
      %332 = vmatpush1.msra.mxu0 0.0
      %333 = vmatprep.subr.mxu0 0.0
      %334 = vmatpush1.msra.mxu0 0.0
      %335 = vmatprep.subr.mxu0 0.0
      %336 = vmatpush1.msra.mxu0 0.0
      %337 = vmatprep.subr.mxu0 0.0
      %338 = vmatpush1.msra.mxu0 0.0
      %339 = vmatprep.subr.mxu0 0.0
      %340 = vmatpush1.msra.mxu0 0.0
      %341 = vmatprep.subr.mxu0 0.0
      %342 = vmatpush1.msra.mxu0 0.0
      %343 = vmatprep.subr.mxu0 0.0
      %344 = vmatpush1.msra.mxu0 0.0
      %345 = vmatprep.subr.mxu0 0.0
      %346 = vmatpush1.msra.mxu0 0.0
      %347 = vmatprep.subr.mxu0 0.0
      %348 = vmatpush1.msra.mxu0 0.0
      %349 = vmatprep.subr.mxu0 0.0
      %350 = vmatpush1.msra.mxu0 0.0
      %351 = vmatprep.subr.mxu0 0.0
      %352 = vmatpush1.msra.mxu0 0.0
      %353 = vmatprep.subr.mxu0 0.0
      %354 = vmatpush1.msra.mxu0 0.0
      %355 = vmatprep.mubr.f32.mxu0 0.0
      %356 = vmatmul.mubr.f32.gmra.mrb[0].mxu0 %v280
      %v357 = vpop.f32.mrb[0].mxu0
      %v358 = vadd.f32 0.0, %v357
      %v359 = vpop.f32.mrb[0].mxu0
      %360 = vmatprep.mubr.f32.mxu0 0.0
      %361 = vmatmul.mubr.f32.gmra.mrb[0].mxu0 %v283
      %v362 = vpop.f32.mrb[0].mxu0
      %v363 = vadd.f32 0.0, %v362
      %v364 = vpop.f32.mrb[0].mxu0
      %365 = vmatprep.mubr.f32.mxu0 0.0
      %366 = vmatmul.mubr.f32.gmra.mrb[0].mxu0 %v286
      %v367 = vpop.f32.mrb[0].mxu0
      %v368 = vadd.f32 0.0, %v367
      %v369 = vpop.f32.mrb[0].mxu0
      %370 = vmatprep.mubr.f32.mxu0 0.0
      %371 = vmatmul.mubr.f32.gmra.mrb[0].mxu0 %v289
      %v372 = vpop.f32.mrb[0].mxu0
      %v373 = vadd.f32 0.0, %v372
      %v374 = vpop.f32.mrb[0].mxu0
      %375 = vdwg.mxu0
      %v376 = vadd.f32 %v268, %v358
      %v377 = vadd.f32 %v269, %v363
      %v378 = vadd.f32 %v270, %v368
      %v379 = vadd.f32 %v271, %v373
      %v380 = vld [vmem:[#allocation3] sm:$0xff]
      %v381 = vld [vmem:[#allocation3 + $0x8] sm:$0xff]
      %v382 = vld [vmem:[#allocation3 + $0x10] sm:$0xff]
      %v383 = vld [vmem:[#allocation3 + $0x18] sm:$0xff]
      %v384 = vxor.u32 %v376, 2147483648
      %v385 = vxor.u32 %v377, 2147483648
      %v386 = vxor.u32 %v378, 2147483648
      %v387 = vxor.u32 %v379, 2147483648
      %v388 = vmul.f32 %v384, 1.442695
      %v389 = vpow.pop %v388
      %v390 = vmul.f32 %v385, 1.442695
      %v391 = vpow.pop %v390
      %v392 = vmul.f32 %v386, 1.442695
      %v393 = vpow.pop %v392
      %v394 = vmul.f32 %v387, 1.442695
      %v395 = vpow.pop %v394
      %v396 = vadd.f32 %v389, 1.0
      %v397 = vadd.f32 %v391, 1.0
      %v398 = vadd.f32 %v393, 1.0
      %v399 = vadd.f32 %v395, 1.0
      %v400 = vrcp.pop %v396
      %v401 = vmul.f32 1.0, %v400
      %v402 = vrcp.pop %v397
      %v403 = vmul.f32 1.0, %v402
      %v404 = vrcp.pop %v398
      %v405 = vmul.f32 1.0, %v404
      %v406 = vrcp.pop %v399
      %v407 = vmul.f32 1.0, %v406
      %v408 = vtanh.pop %v376
      %v409 = vtanh.pop %v377
      %v410 = vtanh.pop %v378
      %v411 = vtanh.pop %v379
      %416 = vrot.lane.b32.xlu0 %v380, 16
      %v417 = vpop.permute.xlu0 %416
      %418 = vrot.lane.b32.xlu0 %v381, 16
      %v419 = vpop.permute.xlu0 %418
      %420 = vrot.lane.b32.xlu0 %v382, 16
      %v421 = vpop.permute.xlu0 %420
      %422 = vrot.lane.b32.xlu0 %v383, 16
      %v423 = vpop.permute.xlu0 %422
      %v428 = vmul.f32 %v401, %v417
      %v429 = vmul.f32 %v403, %v419
      %v430 = vmul.f32 %v405, %v421
      %v431 = vmul.f32 %v407, %v423
      %436 = vrot.lane.b32.xlu0 %v408, 96
      %v437 = vpop.permute.xlu0 %436
      %438 = vrot.lane.b32.xlu0 %v409, 96
      %v439 = vpop.permute.xlu0 %438
      %440 = vrot.lane.b32.xlu0 %v410, 96
      %v441 = vpop.permute.xlu0 %440
      %442 = vrot.lane.b32.xlu0 %v411, 96
      %v443 = vpop.permute.xlu0 %442
      %v448 = vmul.f32 %v401, %v437
      %v449 = vmul.f32 %v403, %v439
      %v450 = vmul.f32 %v405, %v441
      %v451 = vmul.f32 %v407, %v443
      %456 = vrot.lane.b32.xlu0 %v448, 16
      %v457 = vpop.permute.xlu0 %456
      %458 = vrot.lane.b32.xlu0 %v449, 16
      %v459 = vpop.permute.xlu0 %458
      %460 = vrot.lane.b32.xlu0 %v450, 16
      %v461 = vpop.permute.xlu0 %460
      %462 = vrot.lane.b32.xlu0 %v451, 16
      %v463 = vpop.permute.xlu0 %462
      %v468 = vadd.f32 %v428, %v457
      %v469 = vadd.f32 %v429, %v459
      %v470 = vadd.f32 %v430, %v461
      %v471 = vadd.f32 %v431, %v463
      %v472 = vtanh.pop %v468
      %v473 = vtanh.pop %v469
      %v474 = vtanh.pop %v470
      %v475 = vtanh.pop %v471
      %480 = vrot.lane.b32.xlu0 %v472, 32
      %v481 = vpop.permute.xlu0 %480
      %482 = vrot.lane.b32.xlu0 %v473, 32
      %v483 = vpop.permute.xlu0 %482
      %484 = vrot.lane.b32.xlu0 %v474, 32
      %v485 = vpop.permute.xlu0 %484
      %486 = vrot.lane.b32.xlu0 %v475, 32
      %v487 = vpop.permute.xlu0 %486
      %v492 = vmul.f32 %v401, %v481
      %v493 = vmul.f32 %v403, %v483
      %v494 = vmul.f32 %v405, %v485
      %v495 = vmul.f32 %v407, %v487
      %500 = vrot.lane.b32.xlu0 %v492, 80
      %v501 = vpop.permute.xlu0 %500
      %502 = vrot.lane.b32.xlu0 %v493, 80
      %v503 = vpop.permute.xlu0 %502
      %504 = vrot.lane.b32.xlu0 %v494, 80
      %v505 = vpop.permute.xlu0 %504
      %506 = vrot.lane.b32.xlu0 %v495, 80
      %v507 = vpop.permute.xlu0 %506
      %512 = vst.msk [vmem:[#allocation2] sm:$0xff] %vm278, %v501
      %513 = vst.msk [vmem:[#allocation2 + $0x8] sm:$0xff] %vm278, %v503
      %514 = vst.msk [vmem:[#allocation2 + $0x10] sm:$0xff] %vm278, %v505
      %515 = vst.msk [vmem:[#allocation2 + $0x18] sm:$0xff] %vm278, %v507
      %520 = vrot.lane.b32.xlu0 %v468, 112
      %v521 = vpop.permute.xlu0 %520
      %522 = vrot.lane.b32.xlu0 %v469, 112
      %v523 = vpop.permute.xlu0 %522
      %524 = vrot.lane.b32.xlu0 %v470, 112
      %v525 = vpop.permute.xlu0 %524
      %526 = vrot.lane.b32.xlu0 %v471, 112
      %v527 = vpop.permute.xlu0 %526
      %532 = vst.msk [vmem:[#allocation3] sm:$0xff] %vm278, %v521
      %533 = vst.msk [vmem:[#allocation3 + $0x8] sm:$0xff] %vm278, %v523
      %534 = vst.msk [vmem:[#allocation3 + $0x10] sm:$0xff] %vm278, %v525
      %535 = vst.msk [vmem:[#allocation3 + $0x18] sm:$0xff] %vm278, %v527
      %536 = vst.msk [vmem:[%s246] sm:$0xff] %vm278, %v501
      %537 = vst.msk [vmem:[%s246 + $0x8] sm:$0xff] %vm278, %v503
      %538 = vst.msk [vmem:[%s246 + $0x10] sm:$0xff] %vm278, %v505
      %539 = vst.msk [vmem:[%s246 + $0x18] sm:$0xff] %vm278, %v507
      %p540 = scmp.eq.s32.totalorder %s18, 7
      // Predicated region
      $region41: #{_lambda_.16} parent=35 // pred_check
        %p541 = pneg %p540
      $region42: #{_lambda_.16} parent=35 // pred_check_branch
        %543 = sbr.rel (%p541) target = $region44
      $region43: #{_lambda_.16} parent=35 // pred_region
        %544 = vst.msk [vmem:[%s5] sm:$0xff] %vm278, %v501
        %545 = vst.msk [vmem:[%s5 + $0x8] sm:$0xff] %vm278, %v503
        %546 = vst.msk [vmem:[%s5 + $0x10] sm:$0xff] %vm278, %v505
        %547 = vst.msk [vmem:[%s5 + $0x18] sm:$0xff] %vm278, %v507
        %548 = vst.msk [vmem:[%s6] sm:$0xff] %vm278, %v521
        %549 = vst.msk [vmem:[%s6 + $0x8] sm:$0xff] %vm278, %v523
        %550 = vst.msk [vmem:[%s6 + $0x10] sm:$0xff] %vm278, %v525
        %551 = vst.msk [vmem:[%s6 + $0x18] sm:$0xff] %vm278, %v527
      $region44: #{_lambda_.16} parent=35 // pred_fallthru
        _
      %p552 = scmp.lt.s32.totalorder %s18, 7
      %s553 = scalar_select %p552, %s18, 7
      %s554 = smul.addr %s553, 4
      %s555 = smul.addr %s554, 8
      %s556 = scalar_lea.vmem %s4, %s555
      // Predicated region
      $region45: #{_lambda_.16} parent=35 // pred_check
        %p557 = pneg %p125
      $region46: #{_lambda_.16} parent=35 // pred_check_branch
        %559 = sbr.rel (%p557) target = $region48
      $region47: #{_lambda_.16} parent=35 // pred_region
        _
      $region48: #{_lambda_.16} parent=35 // pred_fallthru
        _
      // Predicated region
      $region49: #{_lambda_.16} parent=35 // pred_check
        %p560 = pneg %p146
      $region50: #{_lambda_.16} parent=35 // pred_check_branch
        %562 = sbr.rel (%p560) target = $region52
      $region51: #{_lambda_.16} parent=35 // pred_region
        _
      $region52: #{_lambda_.16} parent=35 // pred_fallthru
        _
      // Predicated region
      $region53: #{_lambda_.16} parent=35 // pred_check
        %p563 = pneg %p167
      $region54: #{_lambda_.16} parent=35 // pred_check_branch
        %565 = sbr.rel (%p563) target = $region56
      $region55: #{_lambda_.16} parent=35 // pred_region
        _
      $region56: #{_lambda_.16} parent=35 // pred_fallthru
        _
      // Predicated region
      $region57: #{_lambda_.16} parent=35 // pred_check
        %p566 = pneg %p146
      $region58: #{_lambda_.16} parent=35 // pred_check_branch
        %568 = sbr.rel (%p566) target = $region60
      $region59: #{_lambda_.16} parent=35 // pred_region
        _
      $region60: #{_lambda_.16} parent=35 // pred_fallthru
        _
      // Predicated region
      $region61: #{_lambda_.16} parent=35 // pred_check
        %p569 = pneg %p167
      $region62: #{_lambda_.16} parent=35 // pred_check_branch
        %571 = sbr.rel (%p569) target = $region64
      $region63: #{_lambda_.16} parent=35 // pred_region
        _
      $region64: #{_lambda_.16} parent=35 // pred_fallthru
        _
    $region36: #{_lambda_.16} parent=5 // pred_fallthru
      _
    %p572 = scmp.le.s32.totalorder 2, %s13
    // Predicated region
    $region65: #{_lambda_.16} parent=5 // pred_check
      %p573 = pneg %p572
    $region66: #{_lambda_.16} parent=5 // pred_check_branch
      %575 = sbr.rel (%p573) target = $region68
    $region67: #{_lambda_.16} parent=5 // pred_region
      %s576 = ssub.s32 %s13, 2
      // Predicated region
      $region69: #{_lambda_.16} parent=67 // pred_check
        %p577 = pneg %p131
      $region70: #{_lambda_.16} parent=67 // pred_check_branch
        %579 = sbr.rel (%p577) target = $region72
      $region71: #{_lambda_.16} parent=67 // pred_region
        %p580 = scmp.lt.s32.totalorder %s19, 7
        %s581 = scalar_select %p580, %s19, 7
        %s582 = smul.addr %s581, 4
        %s583 = smul.addr %s582, 8
        %s584 = scalar_lea.vmem %s4, %s583
      $region72: #{_lambda_.16} parent=67 // pred_fallthru
        _
    $region68: #{_lambda_.16} parent=5 // pred_fallthru
      _
  $region6: #{_lambda_.16} parent=0 // loop_footer
    %s17 = sadd.s32 1, %s13
  $region7: #{_lambda_.16} parent=0 // loop_footer_branch
    %12 = sbr.rel target = $region3
  $region8: #{_lambda_.16} parent=0 // loop_exit
    _

// kernel: _lambda_.17
$region0: #{_lambda_.17}
  #allocation0 [shape = 'u32[]', space=smem, size = 0x4, offset = 0x4, fixed_abs, tag = 'smem constant byte address 0x4 - core index']
  #allocation1 [shape = 'u32[144,128]{1,0:T(1,128)}', space=vmem, size = 0x12000, scoped, tag = 'internal scratch']
  %s0 = inlined_call_operand.vmem [shape: f32[256,16], index: 0, kind: input, shape index: {}]
  %s1 = inlined_call_operand.vmem [shape: f32[16,16], index: 1, kind: input, shape index: {}]
  %s2 = inlined_call_operand.vmem [shape: f32[1,16], index: 2, kind: input, shape index: {}]
  %s3 = inlined_call_operand.vmem [shape: f32[1,16], index: 3, kind: input, shape index: {}]
  %s4 = inlined_call_operand.vmem [shape: f32[256,16], index: 4, kind: output, shape index: {}]
  %s5 = sld [smem:[#allocation0]]
  $region26: #{_lambda_.17} parent=0
    _
  %s7 = ssub.s32 1, %s5
  %s8 = scalar_select 0, %s7, %s5
  // Predicated region
  $region2: #{_lambda_.17} parent=0 // pred_check
    _
  $region3: #{_lambda_.17} parent=0 // pred_check_branch
    %10 = sbr.rel (0) target = $region5
  $region4: #{_lambda_.17} parent=0 // pred_region
    _
  $region5: #{_lambda_.17} parent=0 // pred_fallthru
    _
  // Predicated region
  $region6: #{_lambda_.17} parent=0 // pred_check
    _
  $region7: #{_lambda_.17} parent=0 // pred_check_branch
    %12 = sbr.rel (0) target = $region9
  $region8: #{_lambda_.17} parent=0 // pred_region
    _
  $region9: #{_lambda_.17} parent=0 // pred_fallthru
    _
  // Predicated region
  $region10: #{_lambda_.17} parent=0 // pred_check
    _
  $region11: #{_lambda_.17} parent=0 // pred_check_branch
    %14 = sbr.rel (0) target = $region13
  $region12: #{_lambda_.17} parent=0 // pred_region
    _
  $region13: #{_lambda_.17} parent=0 // pred_fallthru
    _
  // Predicated region
  $region14: #{_lambda_.17} parent=0 // pred_check
    _
  $region15: #{_lambda_.17} parent=0 // pred_check_branch
    %16 = sbr.rel (0) target = $region17
  $region16: #{_lambda_.17} parent=0 // pred_region
    _
  $region17: #{_lambda_.17} parent=0 // pred_fallthru
    _
  %v17 = vld [vmem:[%s0] sm:$0xff]
  %v18 = vld [vmem:[%s0 + $0x8] sm:$0xff]
  %v19 = vld [vmem:[%s0 + $0x10] sm:$0xff]
  %v20 = vld [vmem:[%s0 + $0x18] sm:$0xff]
  %v21 = vld [vmem:[%s0 + $0x20] sm:$0xff]
  %v22 = vld [vmem:[%s0 + $0x28] sm:$0xff]
  %v23 = vld [vmem:[%s0 + $0x30] sm:$0xff]
  %v24 = vld [vmem:[%s0 + $0x38] sm:$0xff]
  %v25 = vld [vmem:[%s0 + $0x40] sm:$0xff]
  %v26 = vld [vmem:[%s0 + $0x48] sm:$0xff]
  %v27 = vld [vmem:[%s0 + $0x50] sm:$0xff]
  %v28 = vld [vmem:[%s0 + $0x58] sm:$0xff]
  %v29 = vld [vmem:[%s0 + $0x60] sm:$0xff]
  %v30 = vld [vmem:[%s0 + $0x68] sm:$0xff]
  %v31 = vld [vmem:[%s0 + $0x70] sm:$0xff]
  %v32 = vld [vmem:[%s0 + $0x78] sm:$0xff]
  %v33 = vld [vmem:[%s0 + $0x80] sm:$0xff]
  %v34 = vld [vmem:[%s0 + $0x88] sm:$0xff]
  %v35 = vld [vmem:[%s0 + $0x90] sm:$0xff]
  %v36 = vld [vmem:[%s0 + $0x98] sm:$0xff]
  %v37 = vld [vmem:[%s0 + $0xa0] sm:$0xff]
  %v38 = vld [vmem:[%s0 + $0xa8] sm:$0xff]
  %v39 = vld [vmem:[%s0 + $0xb0] sm:$0xff]
  %v40 = vld [vmem:[%s0 + $0xb8] sm:$0xff]
  %v41 = vld [vmem:[%s0 + $0xc0] sm:$0xff]
  %v42 = vld [vmem:[%s0 + $0xc8] sm:$0xff]
  %v43 = vld [vmem:[%s0 + $0xd0] sm:$0xff]
  %v44 = vld [vmem:[%s0 + $0xd8] sm:$0xff]
  %v45 = vld [vmem:[%s0 + $0xe0] sm:$0xff]
  %v46 = vld [vmem:[%s0 + $0xe8] sm:$0xff]
  %v47 = vld [vmem:[%s0 + $0xf0] sm:$0xff]
  %v48 = vld [vmem:[%s0 + $0xf8] sm:$0xff]
  %v49 = vld [vmem:[%s1] sm:$0xff]
  %v50 = vld [vmem:[%s1 + $0x8] sm:$0xff]
  %v51 = vld [vmem:[%s2] sm:$0x1]
  %v53 = vlaneseq
  %v54 = vshrl.u32 %v53, 7
  %v55 = vsub.s32 0, %v54
  %v56 = vrot.slane %v51, %v55
  %vm58 = vcmask 130048
  %v60 = vsel %vm58, %v17, 0
  %v63 = vsel %vm58, %v18, 0
  %v66 = vsel %vm58, %v19, 0
  %v69 = vsel %vm58, %v20, 0
  %v72 = vsel %vm58, %v21, 0
  %v75 = vsel %vm58, %v22, 0
  %v78 = vsel %vm58, %v23, 0
  %v81 = vsel %vm58, %v24, 0
  %v84 = vsel %vm58, %v25, 0
  %v87 = vsel %vm58, %v26, 0
  %v90 = vsel %vm58, %v27, 0
  %v93 = vsel %vm58, %v28, 0
  %v96 = vsel %vm58, %v29, 0
  %v99 = vsel %vm58, %v30, 0
  %v102 = vsel %vm58, %v31, 0
  %v105 = vsel %vm58, %v32, 0
  %v108 = vsel %vm58, %v33, 0
  %v111 = vsel %vm58, %v34, 0
  %v114 = vsel %vm58, %v35, 0
  %v117 = vsel %vm58, %v36, 0
  %v120 = vsel %vm58, %v37, 0
  %v123 = vsel %vm58, %v38, 0
  %v126 = vsel %vm58, %v39, 0
  %v129 = vsel %vm58, %v40, 0
  %v132 = vsel %vm58, %v41, 0
  %v135 = vsel %vm58, %v42, 0
  %v138 = vsel %vm58, %v43, 0
  %v141 = vsel %vm58, %v44, 0
  %v144 = vsel %vm58, %v45, 0
  %v147 = vsel %vm58, %v46, 0
  %v150 = vsel %vm58, %v47, 0
  %v153 = vsel %vm58, %v48, 0
  %155 = vmatprep.subr.mxu0 0.0
  %156 = vmatpush1.msra.mxu0 %v49
  %157 = vmatprep.subr.mxu0 0.0
  %158 = vmatpush1.msra.mxu0 %v50
  %159 = vmatprep.subr.mxu0 0.0
  %160 = vmatpush1.msra.mxu0 0.0
  %161 = vmatprep.subr.mxu0 0.0
  %162 = vmatpush1.msra.mxu0 0.0
  %163 = vmatprep.subr.mxu0 0.0
  %164 = vmatpush1.msra.mxu0 0.0
  %165 = vmatprep.subr.mxu0 0.0
  %166 = vmatpush1.msra.mxu0 0.0
  %167 = vmatprep.subr.mxu0 0.0
  %168 = vmatpush1.msra.mxu0 0.0
  %169 = vmatprep.subr.mxu0 0.0
  %170 = vmatpush1.msra.mxu0 0.0
  %171 = vmatprep.subr.mxu0 0.0
  %172 = vmatpush1.msra.mxu0 0.0
  %173 = vmatprep.subr.mxu0 0.0
  %174 = vmatpush1.msra.mxu0 0.0
  %175 = vmatprep.subr.mxu0 0.0
  %176 = vmatpush1.msra.mxu0 0.0
  %177 = vmatprep.subr.mxu0 0.0
  %178 = vmatpush1.msra.mxu0 0.0
  %179 = vmatprep.subr.mxu0 0.0
  %180 = vmatpush1.msra.mxu0 0.0
  %181 = vmatprep.subr.mxu0 0.0
  %182 = vmatpush1.msra.mxu0 0.0
  %183 = vmatprep.subr.mxu0 0.0
  %184 = vmatpush1.msra.mxu0 0.0
  %185 = vmatprep.subr.mxu0 0.0
  %186 = vmatpush1.msra.mxu0 0.0
  %187 = vmatprep.subr.mxu0 0.0
  %188 = vmatpush1.msra.mxu0 0.0
  %189 = vmatprep.subr.mxu0 0.0
  %190 = vmatpush1.msra.mxu0 0.0
  %191 = vmatprep.subr.mxu0 0.0
  %192 = vmatpush1.msra.mxu0 0.0
  %193 = vmatprep.subr.mxu0 0.0
  %194 = vmatpush1.msra.mxu0 0.0
  %195 = vmatprep.subr.mxu0 0.0
  %196 = vmatpush1.msra.mxu0 0.0
  %197 = vmatprep.subr.mxu0 0.0
  %198 = vmatpush1.msra.mxu0 0.0
  %199 = vmatprep.subr.mxu0 0.0
  %200 = vmatpush1.msra.mxu0 0.0
  %201 = vmatprep.subr.mxu0 0.0
  %202 = vmatpush1.msra.mxu0 0.0
  %203 = vmatprep.subr.mxu0 0.0
  %204 = vmatpush1.msra.mxu0 0.0
  %205 = vmatprep.subr.mxu0 0.0
  %206 = vmatpush1.msra.mxu0 0.0
  %207 = vmatprep.subr.mxu0 0.0
  %208 = vmatpush1.msra.mxu0 0.0
  %209 = vmatprep.subr.mxu0 0.0
  %210 = vmatpush1.msra.mxu0 0.0
  %211 = vmatprep.subr.mxu0 0.0
  %212 = vmatpush1.msra.mxu0 0.0
  %213 = vmatprep.subr.mxu0 0.0
  %214 = vmatpush1.msra.mxu0 0.0
  %215 = vmatprep.subr.mxu0 0.0
  %216 = vmatpush1.msra.mxu0 0.0
  %217 = vmatprep.subr.mxu0 0.0
  %218 = vmatpush1.msra.mxu0 0.0
  %219 = vmatprep.mubr.f32.mxu0 0.0
  %220 = vmatmul.mubr.f32.gmra.mrb[0].mxu0 %v60
  %v221 = vpop.f32.mrb[0].mxu0
  %v222 = vadd.f32 %v56, %v221
  %v223 = vpop.f32.mrb[0].mxu0
  %224 = vmatprep.mubr.f32.mxu0 0.0
  %225 = vmatmul.mubr.f32.gmra.mrb[0].mxu0 %v63
  %v226 = vpop.f32.mrb[0].mxu0
  %v227 = vadd.f32 %v56, %v226
  %v228 = vpop.f32.mrb[0].mxu0
  %229 = vmatprep.mubr.f32.mxu0 0.0
  %230 = vmatmul.mubr.f32.gmra.mrb[0].mxu0 %v66
  %v231 = vpop.f32.mrb[0].mxu0
  %v232 = vadd.f32 %v56, %v231
  %v233 = vpop.f32.mrb[0].mxu0
  %234 = vmatprep.mubr.f32.mxu0 0.0
  %235 = vmatmul.mubr.f32.gmra.mrb[0].mxu0 %v69
  %v236 = vpop.f32.mrb[0].mxu0
  %v237 = vadd.f32 %v56, %v236
  %v238 = vpop.f32.mrb[0].mxu0
  %239 = vmatprep.mubr.f32.mxu0 0.0
  %240 = vmatmul.mubr.f32.gmra.mrb[0].mxu0 %v72
  %v241 = vpop.f32.mrb[0].mxu0
  %v242 = vadd.f32 %v56, %v241
  %v243 = vpop.f32.mrb[0].mxu0
  %244 = vmatprep.mubr.f32.mxu0 0.0
  %245 = vmatmul.mubr.f32.gmra.mrb[0].mxu0 %v75
  %v246 = vpop.f32.mrb[0].mxu0
  %v247 = vadd.f32 %v56, %v246
  %v248 = vpop.f32.mrb[0].mxu0
  %249 = vmatprep.mubr.f32.mxu0 0.0
  %250 = vmatmul.mubr.f32.gmra.mrb[0].mxu0 %v78
  %v251 = vpop.f32.mrb[0].mxu0
  %v252 = vadd.f32 %v56, %v251
  %v253 = vpop.f32.mrb[0].mxu0
  %254 = vmatprep.mubr.f32.mxu0 0.0
  %255 = vmatmul.mubr.f32.gmra.mrb[0].mxu0 %v81
  %v256 = vpop.f32.mrb[0].mxu0
  %v257 = vadd.f32 %v56, %v256
  %v258 = vpop.f32.mrb[0].mxu0
  %259 = vmatprep.mubr.f32.mxu0 0.0
  %260 = vmatmul.mubr.f32.gmra.mrb[0].mxu0 %v84
  %v261 = vpop.f32.mrb[0].mxu0
  %v262 = vadd.f32 %v56, %v261
  %v263 = vpop.f32.mrb[0].mxu0
  %264 = vmatprep.mubr.f32.mxu0 0.0
  %265 = vmatmul.mubr.f32.gmra.mrb[0].mxu0 %v87
  %v266 = vpop.f32.mrb[0].mxu0
  %v267 = vadd.f32 %v56, %v266
  %v268 = vpop.f32.mrb[0].mxu0
  %269 = vmatprep.mubr.f32.mxu0 0.0
  %270 = vmatmul.mubr.f32.gmra.mrb[0].mxu0 %v90
  %v271 = vpop.f32.mrb[0].mxu0
  %v272 = vadd.f32 %v56, %v271
  %v273 = vpop.f32.mrb[0].mxu0
  %274 = vmatprep.mubr.f32.mxu0 0.0
  %275 = vmatmul.mubr.f32.gmra.mrb[0].mxu0 %v93
  %v276 = vpop.f32.mrb[0].mxu0
  %v277 = vadd.f32 %v56, %v276
  %v278 = vpop.f32.mrb[0].mxu0
  %279 = vmatprep.mubr.f32.mxu0 0.0
  %280 = vmatmul.mubr.f32.gmra.mrb[0].mxu0 %v96
  %v281 = vpop.f32.mrb[0].mxu0
  %v282 = vadd.f32 %v56, %v281
  %v283 = vpop.f32.mrb[0].mxu0
  %284 = vmatprep.mubr.f32.mxu0 0.0
  %285 = vmatmul.mubr.f32.gmra.mrb[0].mxu0 %v99
  %v286 = vpop.f32.mrb[0].mxu0
  %v287 = vadd.f32 %v56, %v286
  %v288 = vpop.f32.mrb[0].mxu0
  %289 = vmatprep.mubr.f32.mxu0 0.0
  %290 = vmatmul.mubr.f32.gmra.mrb[0].mxu0 %v102
  %v291 = vpop.f32.mrb[0].mxu0
  %v292 = vadd.f32 %v56, %v291
  %v293 = vpop.f32.mrb[0].mxu0
  %294 = vmatprep.mubr.f32.mxu0 0.0
  %295 = vmatmul.mubr.f32.gmra.mrb[0].mxu0 %v105
  %v296 = vpop.f32.mrb[0].mxu0
  %v297 = vadd.f32 %v56, %v296
  %v298 = vpop.f32.mrb[0].mxu0
  %299 = vmatprep.mubr.f32.mxu0 0.0
  %300 = vmatmul.mubr.f32.gmra.mrb[0].mxu0 %v108
  %v301 = vpop.f32.mrb[0].mxu0
  %v302 = vadd.f32 %v56, %v301
  %v303 = vpop.f32.mrb[0].mxu0
  %304 = vmatprep.mubr.f32.mxu0 0.0
  %305 = vmatmul.mubr.f32.gmra.mrb[0].mxu0 %v111
  %v306 = vpop.f32.mrb[0].mxu0
  %v307 = vadd.f32 %v56, %v306
  %v308 = vpop.f32.mrb[0].mxu0
  %309 = vmatprep.mubr.f32.mxu0 0.0
  %310 = vmatmul.mubr.f32.gmra.mrb[0].mxu0 %v114
  %v311 = vpop.f32.mrb[0].mxu0
  %v312 = vadd.f32 %v56, %v311
  %v313 = vpop.f32.mrb[0].mxu0
  %314 = vmatprep.mubr.f32.mxu0 0.0
  %315 = vmatmul.mubr.f32.gmra.mrb[0].mxu0 %v117
  %v316 = vpop.f32.mrb[0].mxu0
  %v317 = vadd.f32 %v56, %v316
  %v318 = vpop.f32.mrb[0].mxu0
  %319 = vmatprep.mubr.f32.mxu0 0.0
  %320 = vmatmul.mubr.f32.gmra.mrb[0].mxu0 %v120
  %v321 = vpop.f32.mrb[0].mxu0
  %v322 = vadd.f32 %v56, %v321
  %v323 = vpop.f32.mrb[0].mxu0
  %324 = vmatprep.mubr.f32.mxu0 0.0
  %325 = vmatmul.mubr.f32.gmra.mrb[0].mxu0 %v123
  %v326 = vpop.f32.mrb[0].mxu0
  %v327 = vadd.f32 %v56, %v326
  %v328 = vpop.f32.mrb[0].mxu0
  %329 = vmatprep.mubr.f32.mxu0 0.0
  %330 = vmatmul.mubr.f32.gmra.mrb[0].mxu0 %v126
  %v331 = vpop.f32.mrb[0].mxu0
  %v332 = vadd.f32 %v56, %v331
  %v333 = vpop.f32.mrb[0].mxu0
  %334 = vmatprep.mubr.f32.mxu0 0.0
  %335 = vmatmul.mubr.f32.gmra.mrb[0].mxu0 %v129
  %v336 = vpop.f32.mrb[0].mxu0
  %v337 = vadd.f32 %v56, %v336
  %v338 = vpop.f32.mrb[0].mxu0
  %339 = vmatprep.mubr.f32.mxu0 0.0
  %340 = vmatmul.mubr.f32.gmra.mrb[0].mxu0 %v132
  %v341 = vpop.f32.mrb[0].mxu0
  %v342 = vadd.f32 %v56, %v341
  %v343 = vpop.f32.mrb[0].mxu0
  %344 = vmatprep.mubr.f32.mxu0 0.0
  %345 = vmatmul.mubr.f32.gmra.mrb[0].mxu0 %v135
  %v346 = vpop.f32.mrb[0].mxu0
  %v347 = vadd.f32 %v56, %v346
  %v348 = vpop.f32.mrb[0].mxu0
  %349 = vmatprep.mubr.f32.mxu0 0.0
  %350 = vmatmul.mubr.f32.gmra.mrb[0].mxu0 %v138
  %v351 = vpop.f32.mrb[0].mxu0
  %v352 = vadd.f32 %v56, %v351
  %v353 = vpop.f32.mrb[0].mxu0
  %354 = vmatprep.mubr.f32.mxu0 0.0
  %355 = vmatmul.mubr.f32.gmra.mrb[0].mxu0 %v141
  %v356 = vpop.f32.mrb[0].mxu0
  %v357 = vadd.f32 %v56, %v356
  %v358 = vpop.f32.mrb[0].mxu0
  %359 = vmatprep.mubr.f32.mxu0 0.0
  %360 = vmatmul.mubr.f32.gmra.mrb[0].mxu0 %v144
  %v361 = vpop.f32.mrb[0].mxu0
  %v362 = vadd.f32 %v56, %v361
  %v363 = vpop.f32.mrb[0].mxu0
  %364 = vmatprep.mubr.f32.mxu0 0.0
  %365 = vmatmul.mubr.f32.gmra.mrb[0].mxu0 %v147
  %v366 = vpop.f32.mrb[0].mxu0
  %v367 = vadd.f32 %v56, %v366
  %v368 = vpop.f32.mrb[0].mxu0
  %369 = vmatprep.mubr.f32.mxu0 0.0
  %370 = vmatmul.mubr.f32.gmra.mrb[0].mxu0 %v150
  %v371 = vpop.f32.mrb[0].mxu0
  %v372 = vadd.f32 %v56, %v371
  %v373 = vpop.f32.mrb[0].mxu0
  %374 = vmatprep.mubr.f32.mxu0 0.0
  %375 = vmatmul.mubr.f32.gmra.mrb[0].mxu0 %v153
  %v376 = vpop.f32.mrb[0].mxu0
  %v377 = vadd.f32 %v56, %v376
  %v378 = vpop.f32.mrb[0].mxu0
  %379 = vdwg.mxu0
  %vm380 = vcmp.ge.f32.partialorder %v222, 0.0
  %vm381 = vcmp.ge.f32.partialorder %v227, 0.0
  %vm382 = vcmp.ge.f32.partialorder %v232, 0.0
  %vm383 = vcmp.ge.f32.partialorder %v237, 0.0
  %vm384 = vcmp.ge.f32.partialorder %v242, 0.0
  %vm385 = vcmp.ge.f32.partialorder %v247, 0.0
  %vm386 = vcmp.ge.f32.partialorder %v252, 0.0
  %vm387 = vcmp.ge.f32.partialorder %v257, 0.0
  %vm388 = vcmp.ge.f32.partialorder %v262, 0.0
  %vm389 = vcmp.ge.f32.partialorder %v267, 0.0
  %vm390 = vcmp.ge.f32.partialorder %v272, 0.0
  %vm391 = vcmp.ge.f32.partialorder %v277, 0.0
  %vm392 = vcmp.ge.f32.partialorder %v282, 0.0
  %vm393 = vcmp.ge.f32.partialorder %v287, 0.0
  %vm394 = vcmp.ge.f32.partialorder %v292, 0.0
  %vm395 = vcmp.ge.f32.partialorder %v297, 0.0
  %vm396 = vcmp.ge.f32.partialorder %v302, 0.0
  %vm397 = vcmp.ge.f32.partialorder %v307, 0.0
  %vm398 = vcmp.ge.f32.partialorder %v312, 0.0
  %vm399 = vcmp.ge.f32.partialorder %v317, 0.0
  %vm400 = vcmp.ge.f32.partialorder %v322, 0.0
  %vm401 = vcmp.ge.f32.partialorder %v327, 0.0
  %vm402 = vcmp.ge.f32.partialorder %v332, 0.0
  %vm403 = vcmp.ge.f32.partialorder %v337, 0.0
  %vm404 = vcmp.ge.f32.partialorder %v342, 0.0
  %vm405 = vcmp.ge.f32.partialorder %v347, 0.0
  %vm406 = vcmp.ge.f32.partialorder %v352, 0.0
  %vm407 = vcmp.ge.f32.partialorder %v357, 0.0
  %vm408 = vcmp.ge.f32.partialorder %v362, 0.0
  %vm409 = vcmp.ge.f32.partialorder %v367, 0.0
  %vm410 = vcmp.ge.f32.partialorder %v372, 0.0
  %vm411 = vcmp.ge.f32.partialorder %v377, 0.0
  %v412 = vld [vmem:[%s3] sm:$0x1]
  %v414 = vlaneseq
  %v415 = vshrl.u32 %v414, 7
  %v416 = vsub.s32 0, %v415
  %v417 = vrot.slane %v412, %v416
  %v419 = vmul.f32 %v417, %v222
  %v420 = vmul.f32 %v417, %v227
  %v421 = vmul.f32 %v417, %v232
  %v422 = vmul.f32 %v417, %v237
  %v423 = vmul.f32 %v417, %v242
  %v424 = vmul.f32 %v417, %v247
  %v425 = vmul.f32 %v417, %v252
  %v426 = vmul.f32 %v417, %v257
  %v427 = vmul.f32 %v417, %v262
  %v428 = vmul.f32 %v417, %v267
  %v429 = vmul.f32 %v417, %v272
  %v430 = vmul.f32 %v417, %v277
  %v431 = vmul.f32 %v417, %v282
  %v432 = vmul.f32 %v417, %v287
  %v433 = vmul.f32 %v417, %v292
  %v434 = vmul.f32 %v417, %v297
  %v435 = vmul.f32 %v417, %v302
  %v436 = vmul.f32 %v417, %v307
  %v437 = vmul.f32 %v417, %v312
  %v438 = vmul.f32 %v417, %v317
  %v439 = vmul.f32 %v417, %v322
  %v440 = vmul.f32 %v417, %v327
  %v441 = vmul.f32 %v417, %v332
  %v442 = vmul.f32 %v417, %v337
  %v443 = vmul.f32 %v417, %v342
  %v444 = vmul.f32 %v417, %v347
  %v445 = vmul.f32 %v417, %v352
  %v446 = vmul.f32 %v417, %v357
  %v447 = vmul.f32 %v417, %v362
  %v448 = vmul.f32 %v417, %v367
  %v449 = vmul.f32 %v417, %v372
  %v450 = vmul.f32 %v417, %v377
  %v451 = vsel %vm380, %v222, %v419
  %v452 = vsel %vm381, %v227, %v420
  %v453 = vsel %vm382, %v232, %v421
  %v454 = vsel %vm383, %v237, %v422
  %v455 = vsel %vm384, %v242, %v423
  %v456 = vsel %vm385, %v247, %v424
  %v457 = vsel %vm386, %v252, %v425
  %v458 = vsel %vm387, %v257, %v426
  %v459 = vsel %vm388, %v262, %v427
  %v460 = vsel %vm389, %v267, %v428
  %v461 = vsel %vm390, %v272, %v429
  %v462 = vsel %vm391, %v277, %v430
  %v463 = vsel %vm392, %v282, %v431
  %v464 = vsel %vm393, %v287, %v432
  %v465 = vsel %vm394, %v292, %v433
  %v466 = vsel %vm395, %v297, %v434
  %v467 = vsel %vm396, %v302, %v435
  %v468 = vsel %vm397, %v307, %v436
  %v469 = vsel %vm398, %v312, %v437
  %v470 = vsel %vm399, %v317, %v438
  %v471 = vsel %vm400, %v322, %v439
  %v472 = vsel %vm401, %v327, %v440
  %v473 = vsel %vm402, %v332, %v441
  %v474 = vsel %vm403, %v337, %v442
  %v475 = vsel %vm404, %v342, %v443
  %v476 = vsel %vm405, %v347, %v444
  %v477 = vsel %vm406, %v352, %v445
  %v478 = vsel %vm407, %v357, %v446
  %v479 = vsel %vm408, %v362, %v447
  %v480 = vsel %vm409, %v367, %v448
  %v481 = vsel %vm410, %v372, %v449
  %v482 = vsel %vm411, %v377, %v450
  %483 = vst.msk [vmem:[%s4] sm:$0xff] %vm58, %v451
  %484 = vst.msk [vmem:[%s4 + $0x8] sm:$0xff] %vm58, %v452
  %485 = vst.msk [vmem:[%s4 + $0x10] sm:$0xff] %vm58, %v453
  %486 = vst.msk [vmem:[%s4 + $0x18] sm:$0xff] %vm58, %v454
  %487 = vst.msk [vmem:[%s4 + $0x20] sm:$0xff] %vm58, %v455
  %488 = vst.msk [vmem:[%s4 + $0x28] sm:$0xff] %vm58, %v456
  %489 = vst.msk [vmem:[%s4 + $0x30] sm:$0xff] %vm58, %v457
  %490 = vst.msk [vmem:[%s4 + $0x38] sm:$0xff] %vm58, %v458
  %491 = vst.msk [vmem:[%s4 + $0x40] sm:$0xff] %vm58, %v459
  %492 = vst.msk [vmem:[%s4 + $0x48] sm:$0xff] %vm58, %v460
  %493 = vst.msk [vmem:[%s4 + $0x50] sm:$0xff] %vm58, %v461
  %494 = vst.msk [vmem:[%s4 + $0x58] sm:$0xff] %vm58, %v462
  %495 = vst.msk [vmem:[%s4 + $0x60] sm:$0xff] %vm58, %v463
  %496 = vst.msk [vmem:[%s4 + $0x68] sm:$0xff] %vm58, %v464
  %497 = vst.msk [vmem:[%s4 + $0x70] sm:$0xff] %vm58, %v465
  %498 = vst.msk [vmem:[%s4 + $0x78] sm:$0xff] %vm58, %v466
  %499 = vst.msk [vmem:[%s4 + $0x80] sm:$0xff] %vm58, %v467
  %500 = vst.msk [vmem:[%s4 + $0x88] sm:$0xff] %vm58, %v468
  %501 = vst.msk [vmem:[%s4 + $0x90] sm:$0xff] %vm58, %v469
  %502 = vst.msk [vmem:[%s4 + $0x98] sm:$0xff] %vm58, %v470
  %503 = vst.msk [vmem:[%s4 + $0xa0] sm:$0xff] %vm58, %v471
  %504 = vst.msk [vmem:[%s4 + $0xa8] sm:$0xff] %vm58, %v472
  %505 = vst.msk [vmem:[%s4 + $0xb0] sm:$0xff] %vm58, %v473
  %506 = vst.msk [vmem:[%s4 + $0xb8] sm:$0xff] %vm58, %v474
  %507 = vst.msk [vmem:[%s4 + $0xc0] sm:$0xff] %vm58, %v475
  %508 = vst.msk [vmem:[%s4 + $0xc8] sm:$0xff] %vm58, %v476
  %509 = vst.msk [vmem:[%s4 + $0xd0] sm:$0xff] %vm58, %v477
  %510 = vst.msk [vmem:[%s4 + $0xd8] sm:$0xff] %vm58, %v478
  %511 = vst.msk [vmem:[%s4 + $0xe0] sm:$0xff] %vm58, %v479
  %512 = vst.msk [vmem:[%s4 + $0xe8] sm:$0xff] %vm58, %v480
  %513 = vst.msk [vmem:[%s4 + $0xf0] sm:$0xff] %vm58, %v481
  %514 = vst.msk [vmem:[%s4 + $0xf8] sm:$0xff] %vm58, %v482
  // Predicated region
  $region18: #{_lambda_.17} parent=0 // pred_check
    _
  $region19: #{_lambda_.17} parent=0 // pred_check_branch
    %516 = sbr.rel (0) target = $region21
  $region20: #{_lambda_.17} parent=0 // pred_region
    _
  $region21: #{_lambda_.17} parent=0 // pred_fallthru
    _
  // Predicated region
  $region22: #{_lambda_.17} parent=0 // pred_check
    _
  $region23: #{_lambda_.17} parent=0 // pred_check_branch
    %518 = sbr.rel (0) target = $region25
  $region24: #{_lambda_.17} parent=0 // pred_region
    _
  $region25: #{_lambda_.17} parent=0 // pred_fallthru
    _

// kernel: _lambda_.18
$region0: #{_lambda_.18}
  #allocation0 [shape = 'u32[]', space=smem, size = 0x4, offset = 0x4, fixed_abs, tag = 'smem constant byte address 0x4 - core index']
  #allocation1 [shape = 'u32[144,128]{1,0:T(1,128)}', space=vmem, size = 0x12000, scoped, tag = 'internal scratch']
  %s0 = inlined_call_operand.vmem [shape: f32[256,16], index: 0, kind: input, shape index: {}]
  %s1 = inlined_call_operand.vmem [shape: f32[16,48], index: 1, kind: input, shape index: {}]
  %s2 = inlined_call_operand.vmem [shape: f32[1,48], index: 2, kind: input, shape index: {}]
  %s3 = inlined_call_operand.vmem [shape: f32[1,48], index: 3, kind: input, shape index: {}]
  %s4 = inlined_call_operand.vmem [shape: f32[256,48], index: 4, kind: output, shape index: {}]
  %s5 = sld [smem:[#allocation0]]
  $region26: #{_lambda_.18} parent=0
    _
  %s7 = ssub.s32 1, %s5
  %s8 = scalar_select 0, %s7, %s5
  // Predicated region
  $region2: #{_lambda_.18} parent=0 // pred_check
    _
  $region3: #{_lambda_.18} parent=0 // pred_check_branch
    %10 = sbr.rel (0) target = $region5
  $region4: #{_lambda_.18} parent=0 // pred_region
    _
  $region5: #{_lambda_.18} parent=0 // pred_fallthru
    _
  // Predicated region
  $region6: #{_lambda_.18} parent=0 // pred_check
    _
  $region7: #{_lambda_.18} parent=0 // pred_check_branch
    %12 = sbr.rel (0) target = $region9
  $region8: #{_lambda_.18} parent=0 // pred_region
    _
  $region9: #{_lambda_.18} parent=0 // pred_fallthru
    _
  // Predicated region
  $region10: #{_lambda_.18} parent=0 // pred_check
    _
  $region11: #{_lambda_.18} parent=0 // pred_check_branch
    %14 = sbr.rel (0) target = $region13
  $region12: #{_lambda_.18} parent=0 // pred_region
    _
  $region13: #{_lambda_.18} parent=0 // pred_fallthru
    _
  // Predicated region
  $region14: #{_lambda_.18} parent=0 // pred_check
    _
  $region15: #{_lambda_.18} parent=0 // pred_check_branch
    %16 = sbr.rel (0) target = $region17
  $region16: #{_lambda_.18} parent=0 // pred_region
    _
  $region17: #{_lambda_.18} parent=0 // pred_fallthru
    _
  %v17 = vld [vmem:[%s0] sm:$0xff]
  %v18 = vld [vmem:[%s0 + $0x8] sm:$0xff]
  %v19 = vld [vmem:[%s0 + $0x10] sm:$0xff]
  %v20 = vld [vmem:[%s0 + $0x18] sm:$0xff]
  %v21 = vld [vmem:[%s0 + $0x20] sm:$0xff]
  %v22 = vld [vmem:[%s0 + $0x28] sm:$0xff]
  %v23 = vld [vmem:[%s0 + $0x30] sm:$0xff]
  %v24 = vld [vmem:[%s0 + $0x38] sm:$0xff]
  %v25 = vld [vmem:[%s0 + $0x40] sm:$0xff]
  %v26 = vld [vmem:[%s0 + $0x48] sm:$0xff]
  %v27 = vld [vmem:[%s0 + $0x50] sm:$0xff]
  %v28 = vld [vmem:[%s0 + $0x58] sm:$0xff]
  %v29 = vld [vmem:[%s0 + $0x60] sm:$0xff]
  %v30 = vld [vmem:[%s0 + $0x68] sm:$0xff]
  %v31 = vld [vmem:[%s0 + $0x70] sm:$0xff]
  %v32 = vld [vmem:[%s0 + $0x78] sm:$0xff]
  %v33 = vld [vmem:[%s0 + $0x80] sm:$0xff]
  %v34 = vld [vmem:[%s0 + $0x88] sm:$0xff]
  %v35 = vld [vmem:[%s0 + $0x90] sm:$0xff]
  %v36 = vld [vmem:[%s0 + $0x98] sm:$0xff]
  %v37 = vld [vmem:[%s0 + $0xa0] sm:$0xff]
  %v38 = vld [vmem:[%s0 + $0xa8] sm:$0xff]
  %v39 = vld [vmem:[%s0 + $0xb0] sm:$0xff]
  %v40 = vld [vmem:[%s0 + $0xb8] sm:$0xff]
  %v41 = vld [vmem:[%s0 + $0xc0] sm:$0xff]
  %v42 = vld [vmem:[%s0 + $0xc8] sm:$0xff]
  %v43 = vld [vmem:[%s0 + $0xd0] sm:$0xff]
  %v44 = vld [vmem:[%s0 + $0xd8] sm:$0xff]
  %v45 = vld [vmem:[%s0 + $0xe0] sm:$0xff]
  %v46 = vld [vmem:[%s0 + $0xe8] sm:$0xff]
  %v47 = vld [vmem:[%s0 + $0xf0] sm:$0xff]
  %v48 = vld [vmem:[%s0 + $0xf8] sm:$0xff]
  %v49 = vld [vmem:[%s1] sm:$0xff]
  %v50 = vld [vmem:[%s1 + $0x8] sm:$0xff]
  %v51 = vld [vmem:[%s2] sm:$0x1]
  %v53 = vlaneseq
  %v54 = vshrl.u32 %v53, 7
  %v55 = vsub.s32 0, %v54
  %v56 = vrot.slane %v51, %v55
  %vm58 = vcmask 130048
  %v60 = vsel %vm58, %v17, 0
  %v63 = vsel %vm58, %v18, 0
  %v66 = vsel %vm58, %v19, 0
  %v69 = vsel %vm58, %v20, 0
  %v72 = vsel %vm58, %v21, 0
  %v75 = vsel %vm58, %v22, 0
  %v78 = vsel %vm58, %v23, 0
  %v81 = vsel %vm58, %v24, 0
  %v84 = vsel %vm58, %v25, 0
  %v87 = vsel %vm58, %v26, 0
  %v90 = vsel %vm58, %v27, 0
  %v93 = vsel %vm58, %v28, 0
  %v96 = vsel %vm58, %v29, 0
  %v99 = vsel %vm58, %v30, 0
  %v102 = vsel %vm58, %v31, 0
  %v105 = vsel %vm58, %v32, 0
  %v108 = vsel %vm58, %v33, 0
  %v111 = vsel %vm58, %v34, 0
  %v114 = vsel %vm58, %v35, 0
  %v117 = vsel %vm58, %v36, 0
  %v120 = vsel %vm58, %v37, 0
  %v123 = vsel %vm58, %v38, 0
  %v126 = vsel %vm58, %v39, 0
  %v129 = vsel %vm58, %v40, 0
  %v132 = vsel %vm58, %v41, 0
  %v135 = vsel %vm58, %v42, 0
  %v138 = vsel %vm58, %v43, 0
  %v141 = vsel %vm58, %v44, 0
  %v144 = vsel %vm58, %v45, 0
  %v147 = vsel %vm58, %v46, 0
  %v150 = vsel %vm58, %v47, 0
  %v153 = vsel %vm58, %v48, 0
  %155 = vmatprep.subr.mxu0 0.0
  %156 = vmatpush1.msra.mxu0 %v49
  %157 = vmatprep.subr.mxu0 0.0
  %158 = vmatpush1.msra.mxu0 %v50
  %159 = vmatprep.subr.mxu0 0.0
  %160 = vmatpush1.msra.mxu0 0.0
  %161 = vmatprep.subr.mxu0 0.0
  %162 = vmatpush1.msra.mxu0 0.0
  %163 = vmatprep.subr.mxu0 0.0
  %164 = vmatpush1.msra.mxu0 0.0
  %165 = vmatprep.subr.mxu0 0.0
  %166 = vmatpush1.msra.mxu0 0.0
  %167 = vmatprep.subr.mxu0 0.0
  %168 = vmatpush1.msra.mxu0 0.0
  %169 = vmatprep.subr.mxu0 0.0
  %170 = vmatpush1.msra.mxu0 0.0
  %171 = vmatprep.subr.mxu0 0.0
  %172 = vmatpush1.msra.mxu0 0.0
  %173 = vmatprep.subr.mxu0 0.0
  %174 = vmatpush1.msra.mxu0 0.0
  %175 = vmatprep.subr.mxu0 0.0
  %176 = vmatpush1.msra.mxu0 0.0
  %177 = vmatprep.subr.mxu0 0.0
  %178 = vmatpush1.msra.mxu0 0.0
  %179 = vmatprep.subr.mxu0 0.0
  %180 = vmatpush1.msra.mxu0 0.0
  %181 = vmatprep.subr.mxu0 0.0
  %182 = vmatpush1.msra.mxu0 0.0
  %183 = vmatprep.subr.mxu0 0.0
  %184 = vmatpush1.msra.mxu0 0.0
  %185 = vmatprep.subr.mxu0 0.0
  %186 = vmatpush1.msra.mxu0 0.0
  %187 = vmatprep.subr.mxu0 0.0
  %188 = vmatpush1.msra.mxu0 0.0
  %189 = vmatprep.subr.mxu0 0.0
  %190 = vmatpush1.msra.mxu0 0.0
  %191 = vmatprep.subr.mxu0 0.0
  %192 = vmatpush1.msra.mxu0 0.0
  %193 = vmatprep.subr.mxu0 0.0
  %194 = vmatpush1.msra.mxu0 0.0
  %195 = vmatprep.subr.mxu0 0.0
  %196 = vmatpush1.msra.mxu0 0.0
  %197 = vmatprep.subr.mxu0 0.0
  %198 = vmatpush1.msra.mxu0 0.0
  %199 = vmatprep.subr.mxu0 0.0
  %200 = vmatpush1.msra.mxu0 0.0
  %201 = vmatprep.subr.mxu0 0.0
  %202 = vmatpush1.msra.mxu0 0.0
  %203 = vmatprep.subr.mxu0 0.0
  %204 = vmatpush1.msra.mxu0 0.0
  %205 = vmatprep.subr.mxu0 0.0
  %206 = vmatpush1.msra.mxu0 0.0
  %207 = vmatprep.subr.mxu0 0.0
  %208 = vmatpush1.msra.mxu0 0.0
  %209 = vmatprep.subr.mxu0 0.0
  %210 = vmatpush1.msra.mxu0 0.0
  %211 = vmatprep.subr.mxu0 0.0
  %212 = vmatpush1.msra.mxu0 0.0
  %213 = vmatprep.subr.mxu0 0.0
  %214 = vmatpush1.msra.mxu0 0.0
  %215 = vmatprep.subr.mxu0 0.0
  %216 = vmatpush1.msra.mxu0 0.0
  %217 = vmatprep.subr.mxu0 0.0
  %218 = vmatpush1.msra.mxu0 0.0
  %219 = vmatprep.mubr.f32.mxu0 0.0
  %220 = vmatmul.mubr.f32.gmra.mrb[0].mxu0 %v60
  %v221 = vpop.f32.mrb[0].mxu0
  %v222 = vadd.f32 %v56, %v221
  %v223 = vpop.f32.mrb[0].mxu0
  %224 = vmatprep.mubr.f32.mxu0 0.0
  %225 = vmatmul.mubr.f32.gmra.mrb[0].mxu0 %v63
  %v226 = vpop.f32.mrb[0].mxu0
  %v227 = vadd.f32 %v56, %v226
  %v228 = vpop.f32.mrb[0].mxu0
  %229 = vmatprep.mubr.f32.mxu0 0.0
  %230 = vmatmul.mubr.f32.gmra.mrb[0].mxu0 %v66
  %v231 = vpop.f32.mrb[0].mxu0
  %v232 = vadd.f32 %v56, %v231
  %v233 = vpop.f32.mrb[0].mxu0
  %234 = vmatprep.mubr.f32.mxu0 0.0
  %235 = vmatmul.mubr.f32.gmra.mrb[0].mxu0 %v69
  %v236 = vpop.f32.mrb[0].mxu0
  %v237 = vadd.f32 %v56, %v236
  %v238 = vpop.f32.mrb[0].mxu0
  %239 = vmatprep.mubr.f32.mxu0 0.0
  %240 = vmatmul.mubr.f32.gmra.mrb[0].mxu0 %v72
  %v241 = vpop.f32.mrb[0].mxu0
  %v242 = vadd.f32 %v56, %v241
  %v243 = vpop.f32.mrb[0].mxu0
  %244 = vmatprep.mubr.f32.mxu0 0.0
  %245 = vmatmul.mubr.f32.gmra.mrb[0].mxu0 %v75
  %v246 = vpop.f32.mrb[0].mxu0
  %v247 = vadd.f32 %v56, %v246
  %v248 = vpop.f32.mrb[0].mxu0
  %249 = vmatprep.mubr.f32.mxu0 0.0
  %250 = vmatmul.mubr.f32.gmra.mrb[0].mxu0 %v78
  %v251 = vpop.f32.mrb[0].mxu0
  %v252 = vadd.f32 %v56, %v251
  %v253 = vpop.f32.mrb[0].mxu0
  %254 = vmatprep.mubr.f32.mxu0 0.0
  %255 = vmatmul.mubr.f32.gmra.mrb[0].mxu0 %v81
  %v256 = vpop.f32.mrb[0].mxu0
  %v257 = vadd.f32 %v56, %v256
  %v258 = vpop.f32.mrb[0].mxu0
  %259 = vmatprep.mubr.f32.mxu0 0.0
  %260 = vmatmul.mubr.f32.gmra.mrb[0].mxu0 %v84
  %v261 = vpop.f32.mrb[0].mxu0
  %v262 = vadd.f32 %v56, %v261
  %v263 = vpop.f32.mrb[0].mxu0
  %264 = vmatprep.mubr.f32.mxu0 0.0
  %265 = vmatmul.mubr.f32.gmra.mrb[0].mxu0 %v87
  %v266 = vpop.f32.mrb[0].mxu0
  %v267 = vadd.f32 %v56, %v266
  %v268 = vpop.f32.mrb[0].mxu0
  %269 = vmatprep.mubr.f32.mxu0 0.0
  %270 = vmatmul.mubr.f32.gmra.mrb[0].mxu0 %v90
  %v271 = vpop.f32.mrb[0].mxu0
  %v272 = vadd.f32 %v56, %v271
  %v273 = vpop.f32.mrb[0].mxu0
  %274 = vmatprep.mubr.f32.mxu0 0.0
  %275 = vmatmul.mubr.f32.gmra.mrb[0].mxu0 %v93
  %v276 = vpop.f32.mrb[0].mxu0
  %v277 = vadd.f32 %v56, %v276
  %v278 = vpop.f32.mrb[0].mxu0
  %279 = vmatprep.mubr.f32.mxu0 0.0
  %280 = vmatmul.mubr.f32.gmra.mrb[0].mxu0 %v96
  %v281 = vpop.f32.mrb[0].mxu0
  %v282 = vadd.f32 %v56, %v281
  %v283 = vpop.f32.mrb[0].mxu0
  %284 = vmatprep.mubr.f32.mxu0 0.0
  %285 = vmatmul.mubr.f32.gmra.mrb[0].mxu0 %v99
  %v286 = vpop.f32.mrb[0].mxu0
  %v287 = vadd.f32 %v56, %v286
  %v288 = vpop.f32.mrb[0].mxu0
  %289 = vmatprep.mubr.f32.mxu0 0.0
  %290 = vmatmul.mubr.f32.gmra.mrb[0].mxu0 %v102
  %v291 = vpop.f32.mrb[0].mxu0
  %v292 = vadd.f32 %v56, %v291
  %v293 = vpop.f32.mrb[0].mxu0
  %294 = vmatprep.mubr.f32.mxu0 0.0
  %295 = vmatmul.mubr.f32.gmra.mrb[0].mxu0 %v105
  %v296 = vpop.f32.mrb[0].mxu0
  %v297 = vadd.f32 %v56, %v296
  %v298 = vpop.f32.mrb[0].mxu0
  %299 = vmatprep.mubr.f32.mxu0 0.0
  %300 = vmatmul.mubr.f32.gmra.mrb[0].mxu0 %v108
  %v301 = vpop.f32.mrb[0].mxu0
  %v302 = vadd.f32 %v56, %v301
  %v303 = vpop.f32.mrb[0].mxu0
  %304 = vmatprep.mubr.f32.mxu0 0.0
  %305 = vmatmul.mubr.f32.gmra.mrb[0].mxu0 %v111
  %v306 = vpop.f32.mrb[0].mxu0
  %v307 = vadd.f32 %v56, %v306
  %v308 = vpop.f32.mrb[0].mxu0
  %309 = vmatprep.mubr.f32.mxu0 0.0
  %310 = vmatmul.mubr.f32.gmra.mrb[0].mxu0 %v114
  %v311 = vpop.f32.mrb[0].mxu0
  %v312 = vadd.f32 %v56, %v311
  %v313 = vpop.f32.mrb[0].mxu0
  %314 = vmatprep.mubr.f32.mxu0 0.0
  %315 = vmatmul.mubr.f32.gmra.mrb[0].mxu0 %v117
  %v316 = vpop.f32.mrb[0].mxu0
  %v317 = vadd.f32 %v56, %v316
  %v318 = vpop.f32.mrb[0].mxu0
  %319 = vmatprep.mubr.f32.mxu0 0.0
  %320 = vmatmul.mubr.f32.gmra.mrb[0].mxu0 %v120
  %v321 = vpop.f32.mrb[0].mxu0
  %v322 = vadd.f32 %v56, %v321
  %v323 = vpop.f32.mrb[0].mxu0
  %324 = vmatprep.mubr.f32.mxu0 0.0
  %325 = vmatmul.mubr.f32.gmra.mrb[0].mxu0 %v123
  %v326 = vpop.f32.mrb[0].mxu0
  %v327 = vadd.f32 %v56, %v326
  %v328 = vpop.f32.mrb[0].mxu0
  %329 = vmatprep.mubr.f32.mxu0 0.0
  %330 = vmatmul.mubr.f32.gmra.mrb[0].mxu0 %v126
  %v331 = vpop.f32.mrb[0].mxu0
  %v332 = vadd.f32 %v56, %v331
  %v333 = vpop.f32.mrb[0].mxu0
  %334 = vmatprep.mubr.f32.mxu0 0.0
  %335 = vmatmul.mubr.f32.gmra.mrb[0].mxu0 %v129
  %v336 = vpop.f32.mrb[0].mxu0
  %v337 = vadd.f32 %v56, %v336
  %v338 = vpop.f32.mrb[0].mxu0
  %339 = vmatprep.mubr.f32.mxu0 0.0
  %340 = vmatmul.mubr.f32.gmra.mrb[0].mxu0 %v132
  %v341 = vpop.f32.mrb[0].mxu0
  %v342 = vadd.f32 %v56, %v341
  %v343 = vpop.f32.mrb[0].mxu0
  %344 = vmatprep.mubr.f32.mxu0 0.0
  %345 = vmatmul.mubr.f32.gmra.mrb[0].mxu0 %v135
  %v346 = vpop.f32.mrb[0].mxu0
  %v347 = vadd.f32 %v56, %v346
  %v348 = vpop.f32.mrb[0].mxu0
  %349 = vmatprep.mubr.f32.mxu0 0.0
  %350 = vmatmul.mubr.f32.gmra.mrb[0].mxu0 %v138
  %v351 = vpop.f32.mrb[0].mxu0
  %v352 = vadd.f32 %v56, %v351
  %v353 = vpop.f32.mrb[0].mxu0
  %354 = vmatprep.mubr.f32.mxu0 0.0
  %355 = vmatmul.mubr.f32.gmra.mrb[0].mxu0 %v141
  %v356 = vpop.f32.mrb[0].mxu0
  %v357 = vadd.f32 %v56, %v356
  %v358 = vpop.f32.mrb[0].mxu0
  %359 = vmatprep.mubr.f32.mxu0 0.0
  %360 = vmatmul.mubr.f32.gmra.mrb[0].mxu0 %v144
  %v361 = vpop.f32.mrb[0].mxu0
  %v362 = vadd.f32 %v56, %v361
  %v363 = vpop.f32.mrb[0].mxu0
  %364 = vmatprep.mubr.f32.mxu0 0.0
  %365 = vmatmul.mubr.f32.gmra.mrb[0].mxu0 %v147
  %v366 = vpop.f32.mrb[0].mxu0
  %v367 = vadd.f32 %v56, %v366
  %v368 = vpop.f32.mrb[0].mxu0
  %369 = vmatprep.mubr.f32.mxu0 0.0
  %370 = vmatmul.mubr.f32.gmra.mrb[0].mxu0 %v150
  %v371 = vpop.f32.mrb[0].mxu0
  %v372 = vadd.f32 %v56, %v371
  %v373 = vpop.f32.mrb[0].mxu0
  %374 = vmatprep.mubr.f32.mxu0 0.0
  %375 = vmatmul.mubr.f32.gmra.mrb[0].mxu0 %v153
  %v376 = vpop.f32.mrb[0].mxu0
  %v377 = vadd.f32 %v56, %v376
  %v378 = vpop.f32.mrb[0].mxu0
  %379 = vdwg.mxu0
  %vm380 = vcmp.ge.f32.partialorder %v222, 0.0
  %vm381 = vcmp.ge.f32.partialorder %v227, 0.0
  %vm382 = vcmp.ge.f32.partialorder %v232, 0.0
  %vm383 = vcmp.ge.f32.partialorder %v237, 0.0
  %vm384 = vcmp.ge.f32.partialorder %v242, 0.0
  %vm385 = vcmp.ge.f32.partialorder %v247, 0.0
  %vm386 = vcmp.ge.f32.partialorder %v252, 0.0
  %vm387 = vcmp.ge.f32.partialorder %v257, 0.0
  %vm388 = vcmp.ge.f32.partialorder %v262, 0.0
  %vm389 = vcmp.ge.f32.partialorder %v267, 0.0
  %vm390 = vcmp.ge.f32.partialorder %v272, 0.0
  %vm391 = vcmp.ge.f32.partialorder %v277, 0.0
  %vm392 = vcmp.ge.f32.partialorder %v282, 0.0
  %vm393 = vcmp.ge.f32.partialorder %v287, 0.0
  %vm394 = vcmp.ge.f32.partialorder %v292, 0.0
  %vm395 = vcmp.ge.f32.partialorder %v297, 0.0
  %vm396 = vcmp.ge.f32.partialorder %v302, 0.0
  %vm397 = vcmp.ge.f32.partialorder %v307, 0.0
  %vm398 = vcmp.ge.f32.partialorder %v312, 0.0
  %vm399 = vcmp.ge.f32.partialorder %v317, 0.0
  %vm400 = vcmp.ge.f32.partialorder %v322, 0.0
  %vm401 = vcmp.ge.f32.partialorder %v327, 0.0
  %vm402 = vcmp.ge.f32.partialorder %v332, 0.0
  %vm403 = vcmp.ge.f32.partialorder %v337, 0.0
  %vm404 = vcmp.ge.f32.partialorder %v342, 0.0
  %vm405 = vcmp.ge.f32.partialorder %v347, 0.0
  %vm406 = vcmp.ge.f32.partialorder %v352, 0.0
  %vm407 = vcmp.ge.f32.partialorder %v357, 0.0
  %vm408 = vcmp.ge.f32.partialorder %v362, 0.0
  %vm409 = vcmp.ge.f32.partialorder %v367, 0.0
  %vm410 = vcmp.ge.f32.partialorder %v372, 0.0
  %vm411 = vcmp.ge.f32.partialorder %v377, 0.0
  %v412 = vld [vmem:[%s3] sm:$0x1]
  %v414 = vlaneseq
  %v415 = vshrl.u32 %v414, 7
  %v416 = vsub.s32 0, %v415
  %v417 = vrot.slane %v412, %v416
  %v419 = vmul.f32 %v417, %v222
  %v420 = vmul.f32 %v417, %v227
  %v421 = vmul.f32 %v417, %v232
  %v422 = vmul.f32 %v417, %v237
  %v423 = vmul.f32 %v417, %v242
  %v424 = vmul.f32 %v417, %v247
  %v425 = vmul.f32 %v417, %v252
  %v426 = vmul.f32 %v417, %v257
  %v427 = vmul.f32 %v417, %v262
  %v428 = vmul.f32 %v417, %v267
  %v429 = vmul.f32 %v417, %v272
  %v430 = vmul.f32 %v417, %v277
  %v431 = vmul.f32 %v417, %v282
  %v432 = vmul.f32 %v417, %v287
  %v433 = vmul.f32 %v417, %v292
  %v434 = vmul.f32 %v417, %v297
  %v435 = vmul.f32 %v417, %v302
  %v436 = vmul.f32 %v417, %v307
  %v437 = vmul.f32 %v417, %v312
  %v438 = vmul.f32 %v417, %v317
  %v439 = vmul.f32 %v417, %v322
  %v440 = vmul.f32 %v417, %v327
  %v441 = vmul.f32 %v417, %v332
  %v442 = vmul.f32 %v417, %v337
  %v443 = vmul.f32 %v417, %v342
  %v444 = vmul.f32 %v417, %v347
  %v445 = vmul.f32 %v417, %v352
  %v446 = vmul.f32 %v417, %v357
  %v447 = vmul.f32 %v417, %v362
  %v448 = vmul.f32 %v417, %v367
  %v449 = vmul.f32 %v417, %v372
  %v450 = vmul.f32 %v417, %v377
  %v451 = vsel %vm380, %v222, %v419
  %v452 = vsel %vm381, %v227, %v420
  %v453 = vsel %vm382, %v232, %v421
  %v454 = vsel %vm383, %v237, %v422
  %v455 = vsel %vm384, %v242, %v423
  %v456 = vsel %vm385, %v247, %v424
  %v457 = vsel %vm386, %v252, %v425
  %v458 = vsel %vm387, %v257, %v426
  %v459 = vsel %vm388, %v262, %v427
  %v460 = vsel %vm389, %v267, %v428
  %v461 = vsel %vm390, %v272, %v429
  %v462 = vsel %vm391, %v277, %v430
  %v463 = vsel %vm392, %v282, %v431
  %v464 = vsel %vm393, %v287, %v432
  %v465 = vsel %vm394, %v292, %v433
  %v466 = vsel %vm395, %v297, %v434
  %v467 = vsel %vm396, %v302, %v435
  %v468 = vsel %vm397, %v307, %v436
  %v469 = vsel %vm398, %v312, %v437
  %v470 = vsel %vm399, %v317, %v438
  %v471 = vsel %vm400, %v322, %v439
  %v472 = vsel %vm401, %v327, %v440
  %v473 = vsel %vm402, %v332, %v441
  %v474 = vsel %vm403, %v337, %v442
  %v475 = vsel %vm404, %v342, %v443
  %v476 = vsel %vm405, %v347, %v444
  %v477 = vsel %vm406, %v352, %v445
  %v478 = vsel %vm407, %v357, %v446
  %v479 = vsel %vm408, %v362, %v447
  %v480 = vsel %vm409, %v367, %v448
  %v481 = vsel %vm410, %v372, %v449
  %v482 = vsel %vm411, %v377, %v450
  %vm483 = vcmask 392192
  %484 = vst.msk [vmem:[%s4] sm:$0xff] %vm483, %v451
  %485 = vst.msk [vmem:[%s4 + $0x8] sm:$0xff] %vm483, %v452
  %486 = vst.msk [vmem:[%s4 + $0x10] sm:$0xff] %vm483, %v453
  %487 = vst.msk [vmem:[%s4 + $0x18] sm:$0xff] %vm483, %v454
  %488 = vst.msk [vmem:[%s4 + $0x20] sm:$0xff] %vm483, %v455
  %489 = vst.msk [vmem:[%s4 + $0x28] sm:$0xff] %vm483, %v456
  %490 = vst.msk [vmem:[%s4 + $0x30] sm:$0xff] %vm483, %v457
  %491 = vst.msk [vmem:[%s4 + $0x38] sm:$0xff] %vm483, %v458
  %492 = vst.msk [vmem:[%s4 + $0x40] sm:$0xff] %vm483, %v459
  %493 = vst.msk [vmem:[%s4 + $0x48] sm:$0xff] %vm483, %v460
  %494 = vst.msk [vmem:[%s4 + $0x50] sm:$0xff] %vm483, %v461
  %495 = vst.msk [vmem:[%s4 + $0x58] sm:$0xff] %vm483, %v462
  %496 = vst.msk [vmem:[%s4 + $0x60] sm:$0xff] %vm483, %v463
  %497 = vst.msk [vmem:[%s4 + $0x68] sm:$0xff] %vm483, %v464
  %498 = vst.msk [vmem:[%s4 + $0x70] sm:$0xff] %vm483, %v465
  %499 = vst.msk [vmem:[%s4 + $0x78] sm:$0xff] %vm483, %v466
  %500 = vst.msk [vmem:[%s4 + $0x80] sm:$0xff] %vm483, %v467
  %501 = vst.msk [vmem:[%s4 + $0x88] sm:$0xff] %vm483, %v468
  %502 = vst.msk [vmem:[%s4 + $0x90] sm:$0xff] %vm483, %v469
  %503 = vst.msk [vmem:[%s4 + $0x98] sm:$0xff] %vm483, %v470
  %504 = vst.msk [vmem:[%s4 + $0xa0] sm:$0xff] %vm483, %v471
  %505 = vst.msk [vmem:[%s4 + $0xa8] sm:$0xff] %vm483, %v472
  %506 = vst.msk [vmem:[%s4 + $0xb0] sm:$0xff] %vm483, %v473
  %507 = vst.msk [vmem:[%s4 + $0xb8] sm:$0xff] %vm483, %v474
  %508 = vst.msk [vmem:[%s4 + $0xc0] sm:$0xff] %vm483, %v475
  %509 = vst.msk [vmem:[%s4 + $0xc8] sm:$0xff] %vm483, %v476
  %510 = vst.msk [vmem:[%s4 + $0xd0] sm:$0xff] %vm483, %v477
  %511 = vst.msk [vmem:[%s4 + $0xd8] sm:$0xff] %vm483, %v478
  %512 = vst.msk [vmem:[%s4 + $0xe0] sm:$0xff] %vm483, %v479
  %513 = vst.msk [vmem:[%s4 + $0xe8] sm:$0xff] %vm483, %v480
  %514 = vst.msk [vmem:[%s4 + $0xf0] sm:$0xff] %vm483, %v481
  %515 = vst.msk [vmem:[%s4 + $0xf8] sm:$0xff] %vm483, %v482
  // Predicated region
  $region18: #{_lambda_.18} parent=0 // pred_check
    _
  $region19: #{_lambda_.18} parent=0 // pred_check_branch
    %517 = sbr.rel (0) target = $region21
  $region20: #{_lambda_.18} parent=0 // pred_region
    _
  $region21: #{_lambda_.18} parent=0 // pred_fallthru
    _
  // Predicated region
  $region22: #{_lambda_.18} parent=0 // pred_check
    _
  $region23: #{_lambda_.18} parent=0 // pred_check_branch
    %519 = sbr.rel (0) target = $region25
  $region24: #{_lambda_.18} parent=0 // pred_region
    _
  $region25: #{_lambda_.18} parent=0 // pred_fallthru
    _

// kernel: _lambda_.21
$region0: #{_lambda_.21}
  #allocation0 [shape = 'u32[]', space=smem, size = 0x4, offset = 0x4, fixed_abs, tag = 'smem constant byte address 0x4 - core index']
  #allocation1 [shape = 'u32[144,128]{1,0:T(1,128)}', space=vmem, size = 0x12000, scoped, tag = 'internal scratch']
  %s0 = inlined_call_operand.vmem [shape: f32[64,64], index: 0, kind: input, shape index: {}]
  %s1 = inlined_call_operand.vmem [shape: f32[1,64], index: 1, kind: input, shape index: {}]
  %s2 = inlined_call_operand.vmem [shape: f32[1,64], index: 2, kind: input, shape index: {}]
  %s3 = inlined_call_operand.vmem [shape: f32[64,64], index: 3, kind: output, shape index: {}]
  %s4 = sld [smem:[#allocation0]]
  $region22: #{_lambda_.21} parent=0
    _
  %s6 = ssub.s32 1, %s4
  %s7 = scalar_select 0, %s6, %s4
  // Predicated region
  $region2: #{_lambda_.21} parent=0 // pred_check
    _
  $region3: #{_lambda_.21} parent=0 // pred_check_branch
    %9 = sbr.rel (0) target = $region5
  $region4: #{_lambda_.21} parent=0 // pred_region
    _
  $region5: #{_lambda_.21} parent=0 // pred_fallthru
    _
  // Predicated region
  $region6: #{_lambda_.21} parent=0 // pred_check
    _
  $region7: #{_lambda_.21} parent=0 // pred_check_branch
    %11 = sbr.rel (0) target = $region9
  $region8: #{_lambda_.21} parent=0 // pred_region
    _
  $region9: #{_lambda_.21} parent=0 // pred_fallthru
    _
  // Predicated region
  $region10: #{_lambda_.21} parent=0 // pred_check
    _
  $region11: #{_lambda_.21} parent=0 // pred_check_branch
    %13 = sbr.rel (0) target = $region13
  $region12: #{_lambda_.21} parent=0 // pred_region
    _
  $region13: #{_lambda_.21} parent=0 // pred_fallthru
    _
  %v14 = vld [vmem:[%s0] sm:$0xff]
  %v15 = vld [vmem:[%s0 + $0x8] sm:$0xff]
  %v16 = vld [vmem:[%s0 + $0x10] sm:$0xff]
  %v17 = vld [vmem:[%s0 + $0x18] sm:$0xff]
  %v18 = vld [vmem:[%s0 + $0x20] sm:$0xff]
  %v19 = vld [vmem:[%s0 + $0x28] sm:$0xff]
  %v20 = vld [vmem:[%s0 + $0x30] sm:$0xff]
  %v21 = vld [vmem:[%s0 + $0x38] sm:$0xff]
  %vm22 = vcmask 523264
  %v23 = vsel %vm22, %v14, 0.0
  %24 = vadd.xlane.f32.xlu0 %v23
  %v25 = vpop.xlane.xlu0 %24
  %v26 = vsel %vm22, %v15, 0.0
  %27 = vadd.xlane.f32.xlu0 %v26
  %v28 = vpop.xlane.xlu0 %27
  %v29 = vsel %vm22, %v16, 0.0
  %30 = vadd.xlane.f32.xlu0 %v29
  %v31 = vpop.xlane.xlu0 %30
  %v32 = vsel %vm22, %v17, 0.0
  %33 = vadd.xlane.f32.xlu0 %v32
  %v34 = vpop.xlane.xlu0 %33
  %v35 = vsel %vm22, %v18, 0.0
  %36 = vadd.xlane.f32.xlu0 %v35
  %v37 = vpop.xlane.xlu0 %36
  %v38 = vsel %vm22, %v19, 0.0
  %39 = vadd.xlane.f32.xlu0 %v38
  %v40 = vpop.xlane.xlu0 %39
  %v41 = vsel %vm22, %v20, 0.0
  %42 = vadd.xlane.f32.xlu0 %v41
  %v43 = vpop.xlane.xlu0 %42
  %v44 = vsel %vm22, %v21, 0.0
  %45 = vadd.xlane.f32.xlu0 %v44
  %v46 = vpop.xlane.xlu0 %45
  %v47 = vrcp.pop 64.0
  %v48 = vmul.f32 %v25, %v47
  %v49 = vmul.f32 %v28, %v47
  %v50 = vmul.f32 %v31, %v47
  %v51 = vmul.f32 %v34, %v47
  %v52 = vmul.f32 %v37, %v47
  %v53 = vmul.f32 %v40, %v47
  %v54 = vmul.f32 %v43, %v47
  %v55 = vmul.f32 %v46, %v47
  %v56 = vsub.f32 %v14, %v48
  %v57 = vsub.f32 %v15, %v49
  %v58 = vsub.f32 %v16, %v50
  %v59 = vsub.f32 %v17, %v51
  %v60 = vsub.f32 %v18, %v52
  %v61 = vsub.f32 %v19, %v53
  %v62 = vsub.f32 %v20, %v54
  %v63 = vsub.f32 %v21, %v55
  %v64 = vmul.f32 %v56, %v56
  %v65 = vmul.f32 %v57, %v57
  %v66 = vmul.f32 %v58, %v58
  %v67 = vmul.f32 %v59, %v59
  %v68 = vmul.f32 %v60, %v60
  %v69 = vmul.f32 %v61, %v61
  %v70 = vmul.f32 %v62, %v62
  %v71 = vmul.f32 %v63, %v63
  %v72 = vsel %vm22, %v64, 0.0
  %73 = vadd.xlane.f32.xlu0 %v72
  %v74 = vpop.xlane.xlu0 %73
  %v75 = vsel %vm22, %v65, 0.0
  %76 = vadd.xlane.f32.xlu0 %v75
  %v77 = vpop.xlane.xlu0 %76
  %v78 = vsel %vm22, %v66, 0.0
  %79 = vadd.xlane.f32.xlu0 %v78
  %v80 = vpop.xlane.xlu0 %79
  %v81 = vsel %vm22, %v67, 0.0
  %82 = vadd.xlane.f32.xlu0 %v81
  %v83 = vpop.xlane.xlu0 %82
  %v84 = vsel %vm22, %v68, 0.0
  %85 = vadd.xlane.f32.xlu0 %v84
  %v86 = vpop.xlane.xlu0 %85
  %v87 = vsel %vm22, %v69, 0.0
  %88 = vadd.xlane.f32.xlu0 %v87
  %v89 = vpop.xlane.xlu0 %88
  %v90 = vsel %vm22, %v70, 0.0
  %91 = vadd.xlane.f32.xlu0 %v90
  %v92 = vpop.xlane.xlu0 %91
  %v93 = vsel %vm22, %v71, 0.0
  %94 = vadd.xlane.f32.xlu0 %v93
  %v95 = vpop.xlane.xlu0 %94
  %v96 = vmul.f32 %v74, %v47
  %v97 = vmul.f32 %v77, %v47
  %v98 = vmul.f32 %v80, %v47
  %v99 = vmul.f32 %v83, %v47
  %v100 = vmul.f32 %v86, %v47
  %v101 = vmul.f32 %v89, %v47
  %v102 = vmul.f32 %v92, %v47
  %v103 = vmul.f32 %v95, %v47
  %v104 = vadd.f32 %v96, 1e-05
  %v105 = vadd.f32 %v97, 1e-05
  %v106 = vadd.f32 %v98, 1e-05
  %v107 = vadd.f32 %v99, 1e-05
  %v108 = vadd.f32 %v100, 1e-05
  %v109 = vadd.f32 %v101, 1e-05
  %v110 = vadd.f32 %v102, 1e-05
  %v111 = vadd.f32 %v103, 1e-05
  %v112 = vrsqrt.pop %v104
  %v113 = vrsqrt.pop %v105
  %v114 = vrsqrt.pop %v106
  %v115 = vrsqrt.pop %v107
  %v116 = vrsqrt.pop %v108
  %v117 = vrsqrt.pop %v109
  %v118 = vrsqrt.pop %v110
  %v119 = vrsqrt.pop %v111
  %v120 = vmul.f32 %v56, %v112
  %v121 = vmul.f32 %v57, %v113
  %v122 = vmul.f32 %v58, %v114
  %v123 = vmul.f32 %v59, %v115
  %v124 = vmul.f32 %v60, %v116
  %v125 = vmul.f32 %v61, %v117
  %v126 = vmul.f32 %v62, %v118
  %v127 = vmul.f32 %v63, %v119
  %v128 = vld [vmem:[%s1] sm:$0x1]
  %v130 = vlaneseq
  %v131 = vshrl.u32 %v130, 7
  %v132 = vsub.s32 0, %v131
  %v133 = vrot.slane %v128, %v132
  %v135 = vmul.f32 %v120, %v133
  %v136 = vmul.f32 %v121, %v133
  %v137 = vmul.f32 %v122, %v133
  %v138 = vmul.f32 %v123, %v133
  %v139 = vmul.f32 %v124, %v133
  %v140 = vmul.f32 %v125, %v133
  %v141 = vmul.f32 %v126, %v133
  %v142 = vmul.f32 %v127, %v133
  %v143 = vld [vmem:[%s2] sm:$0x1]
  %v145 = vlaneseq
  %v146 = vshrl.u32 %v145, 7
  %v147 = vsub.s32 0, %v146
  %v148 = vrot.slane %v143, %v147
  %v150 = vadd.f32 %v135, %v148
  %v151 = vadd.f32 %v136, %v148
  %v152 = vadd.f32 %v137, %v148
  %v153 = vadd.f32 %v138, %v148
  %v154 = vadd.f32 %v139, %v148
  %v155 = vadd.f32 %v140, %v148
  %v156 = vadd.f32 %v141, %v148
  %v157 = vadd.f32 %v142, %v148
  %158 = vst.msk [vmem:[%s3] sm:$0xff] %vm22, %v150
  %159 = vst.msk [vmem:[%s3 + $0x8] sm:$0xff] %vm22, %v151
  %160 = vst.msk [vmem:[%s3 + $0x10] sm:$0xff] %vm22, %v152
  %161 = vst.msk [vmem:[%s3 + $0x18] sm:$0xff] %vm22, %v153
  %162 = vst.msk [vmem:[%s3 + $0x20] sm:$0xff] %vm22, %v154
  %163 = vst.msk [vmem:[%s3 + $0x28] sm:$0xff] %vm22, %v155
  %164 = vst.msk [vmem:[%s3 + $0x30] sm:$0xff] %vm22, %v156
  %165 = vst.msk [vmem:[%s3 + $0x38] sm:$0xff] %vm22, %v157
  // Predicated region
  $region14: #{_lambda_.21} parent=0 // pred_check
    _
  $region15: #{_lambda_.21} parent=0 // pred_check_branch
    %167 = sbr.rel (0) target = $region17
  $region16: #{_lambda_.21} parent=0 // pred_region
    _
  $region17: #{_lambda_.21} parent=0 // pred_fallthru
    _
  // Predicated region
  $region18: #{_lambda_.21} parent=0 // pred_check
    _
  $region19: #{_lambda_.21} parent=0 // pred_check_branch
    %169 = sbr.rel (0) target = $region21
  $region20: #{_lambda_.21} parent=0 // pred_region
    _
  $region21: #{_lambda_.21} parent=0 // pred_fallthru
    _

// kernel: _lambda_.22
$region0: #{_lambda_.22}
  #allocation0 [shape = 'u32[]', space=smem, size = 0x4, offset = 0x4, fixed_abs, tag = 'smem constant byte address 0x4 - core index']
  #allocation1 [shape = 'u32[144,128]{1,0:T(1,128)}', space=vmem, size = 0x12000, scoped, tag = 'internal scratch']
  %s0 = inlined_call_operand.vmem [shape: f32[8,8,64], index: 0, kind: input, shape index: {}]
  %s1 = inlined_call_operand.vmem [shape: f32[8,11,64], index: 1, kind: input, shape index: {}]
  %s2 = inlined_call_operand.vmem [shape: f32[8,11,64], index: 2, kind: input, shape index: {}]
  %s3 = inlined_call_operand.vmem [shape: f32[8,8,64], index: 3, kind: output, shape index: {}]
  %s4 = sld [smem:[#allocation0]]
  $region22: #{_lambda_.22} parent=0
    _
  %s6 = ssub.s32 1, %s4
  %s7 = scalar_select 0, %s6, %s4
  // Predicated region
  $region2: #{_lambda_.22} parent=0 // pred_check
    _
  $region3: #{_lambda_.22} parent=0 // pred_check_branch
    %9 = sbr.rel (0) target = $region5
  $region4: #{_lambda_.22} parent=0 // pred_region
    _
  $region5: #{_lambda_.22} parent=0 // pred_fallthru
    _
  // Predicated region
  $region6: #{_lambda_.22} parent=0 // pred_check
    _
  $region7: #{_lambda_.22} parent=0 // pred_check_branch
    %11 = sbr.rel (0) target = $region9
  $region8: #{_lambda_.22} parent=0 // pred_region
    _
  $region9: #{_lambda_.22} parent=0 // pred_fallthru
    _
  // Predicated region
  $region10: #{_lambda_.22} parent=0 // pred_check
    _
  $region11: #{_lambda_.22} parent=0 // pred_check_branch
    %13 = sbr.rel (0) target = $region13
  $region12: #{_lambda_.22} parent=0 // pred_region
    _
  $region13: #{_lambda_.22} parent=0 // pred_fallthru
    _
  %s14 = smul.u32 0, 8
  %v15 = vld [vmem:[%s0] sm:$0xff]
  %v16 = vld [vmem:[%s0 + $0x8] sm:$0xff]
  %v17 = vld [vmem:[%s0 + $0x10] sm:$0xff]
  %v18 = vld [vmem:[%s0 + $0x18] sm:$0xff]
  %v19 = vld [vmem:[%s0 + $0x20] sm:$0xff]
  %v20 = vld [vmem:[%s0 + $0x28] sm:$0xff]
  %v21 = vld [vmem:[%s0 + $0x30] sm:$0xff]
  %v22 = vld [vmem:[%s0 + $0x38] sm:$0xff]
  %s23 = scalar_lea.vmem %s1, %s14
  %v24 = vld [vmem:[%s23] sm:$0xff]
  %v25 = vld [vmem:[%s23 + $0x8] sm:$0x7]
  %v26 = vld [vmem:[%s23 + $0x10] sm:$0xff]
  %v27 = vld [vmem:[%s23 + $0x18] sm:$0x7]
  %v28 = vld [vmem:[%s23 + $0x20] sm:$0xff]
  %v29 = vld [vmem:[%s23 + $0x28] sm:$0x7]
  %v30 = vld [vmem:[%s23 + $0x30] sm:$0xff]
  %v31 = vld [vmem:[%s23 + $0x38] sm:$0x7]
  %v32 = vld [vmem:[%s23 + $0x40] sm:$0xff]
  %v33 = vld [vmem:[%s23 + $0x48] sm:$0x7]
  %v34 = vld [vmem:[%s23 + $0x50] sm:$0xff]
  %v35 = vld [vmem:[%s23 + $0x58] sm:$0x7]
  %v36 = vld [vmem:[%s23 + $0x60] sm:$0xff]
  %v37 = vld [vmem:[%s23 + $0x68] sm:$0x7]
  %v38 = vld [vmem:[%s23 + $0x70] sm:$0xff]
  %v39 = vld [vmem:[%s23 + $0x78] sm:$0x7]
  %s40 = scalar_lea.vmem %s2, %s14
  %v41 = vld [vmem:[%s40] sm:$0xff]
  %v42 = vld [vmem:[%s40 + $0x8] sm:$0x7]
  %v43 = vld [vmem:[%s40 + $0x10] sm:$0xff]
  %v44 = vld [vmem:[%s40 + $0x18] sm:$0x7]
  %v45 = vld [vmem:[%s40 + $0x20] sm:$0xff]
  %v46 = vld [vmem:[%s40 + $0x28] sm:$0x7]
  %v47 = vld [vmem:[%s40 + $0x30] sm:$0xff]
  %v48 = vld [vmem:[%s40 + $0x38] sm:$0x7]
  %v49 = vld [vmem:[%s40 + $0x40] sm:$0xff]
  %v50 = vld [vmem:[%s40 + $0x48] sm:$0x7]
  %v51 = vld [vmem:[%s40 + $0x50] sm:$0xff]
  %v52 = vld [vmem:[%s40 + $0x58] sm:$0x7]
  %v53 = vld [vmem:[%s40 + $0x60] sm:$0xff]
  %v54 = vld [vmem:[%s40 + $0x68] sm:$0x7]
  %v55 = vld [vmem:[%s40 + $0x70] sm:$0xff]
  %v56 = vld [vmem:[%s40 + $0x78] sm:$0x7]
  %vm57 = vcmask 523264
  %v59 = vsel %vm57, %v15, 0
  %v62 = vsel %vm57, %v24, 0
  %v65 = vsel %vm57, %v25, 0
  %67 = vmatprep.subr.mxu0 0.0
  %68 = vmatpush1.xpose.msra.mxu0 %v62
  %69 = vmatprep.subr.mxu0 0.0
  %70 = vmatpush1.xpose.msra.mxu0 %v65
  %71 = vmatprep.subr.mxu0 0.0
  %72 = vmatpush1.xpose.msra.mxu0 0.0
  %73 = vmatprep.subr.mxu0 0.0
  %74 = vmatpush1.xpose.msra.mxu0 0.0
  %75 = vmatprep.subr.mxu0 0.0
  %76 = vmatpush1.xpose.msra.mxu0 0.0
  %77 = vmatprep.subr.mxu0 0.0
  %78 = vmatpush1.xpose.msra.mxu0 0.0
  %79 = vmatprep.subr.mxu0 0.0
  %80 = vmatpush1.xpose.msra.mxu0 0.0
  %81 = vmatprep.subr.mxu0 0.0
  %82 = vmatpush1.xpose.msra.mxu0 0.0
  %83 = vmatprep.subr.mxu0 0.0
  %84 = vmatpush1.xpose.msra.mxu0 0.0
  %85 = vmatprep.subr.mxu0 0.0
  %86 = vmatpush1.xpose.msra.mxu0 0.0
  %87 = vmatprep.subr.mxu0 0.0
  %88 = vmatpush1.xpose.msra.mxu0 0.0
  %89 = vmatprep.subr.mxu0 0.0
  %90 = vmatpush1.xpose.msra.mxu0 0.0
  %91 = vmatprep.subr.mxu0 0.0
  %92 = vmatpush1.xpose.msra.mxu0 0.0
  %93 = vmatprep.subr.mxu0 0.0
  %94 = vmatpush1.xpose.msra.mxu0 0.0
  %95 = vmatprep.subr.mxu0 0.0
  %96 = vmatpush1.xpose.msra.mxu0 0.0
  %97 = vmatprep.subr.mxu0 0.0
  %98 = vmatpush1.xpose.msra.mxu0 0.0
  %99 = vmatprep.subr.mxu0 0.0
  %100 = vmatpush1.xpose.msra.mxu0 0.0
  %101 = vmatprep.subr.mxu0 0.0
  %102 = vmatpush1.xpose.msra.mxu0 0.0
  %103 = vmatprep.subr.mxu0 0.0
  %104 = vmatpush1.xpose.msra.mxu0 0.0
  %105 = vmatprep.subr.mxu0 0.0
  %106 = vmatpush1.xpose.msra.mxu0 0.0
  %107 = vmatprep.subr.mxu0 0.0
  %108 = vmatpush1.xpose.msra.mxu0 0.0
  %109 = vmatprep.subr.mxu0 0.0
  %110 = vmatpush1.xpose.msra.mxu0 0.0
  %111 = vmatprep.subr.mxu0 0.0
  %112 = vmatpush1.xpose.msra.mxu0 0.0
  %113 = vmatprep.subr.mxu0 0.0
  %114 = vmatpush1.xpose.msra.mxu0 0.0
  %115 = vmatprep.subr.mxu0 0.0
  %116 = vmatpush1.xpose.msra.mxu0 0.0
  %117 = vmatprep.subr.mxu0 0.0
  %118 = vmatpush1.xpose.msra.mxu0 0.0
  %119 = vmatprep.subr.mxu0 0.0
  %120 = vmatpush1.xpose.msra.mxu0 0.0
  %121 = vmatprep.subr.mxu0 0.0
  %122 = vmatpush1.xpose.msra.mxu0 0.0
  %123 = vmatprep.subr.mxu0 0.0
  %124 = vmatpush1.xpose.msra.mxu0 0.0
  %125 = vmatprep.subr.mxu0 0.0
  %126 = vmatpush1.xpose.msra.mxu0 0.0
  %127 = vmatprep.subr.mxu0 0.0
  %128 = vmatpush1.xpose.msra.mxu0 0.0
  %129 = vmatprep.subr.mxu0 0.0
  %130 = vmatpush1.xpose.msra.mxu0 0.0
  %131 = vmatprep.mubr.f32.mxu0 0.0
  %132 = vmatmul.mubr.f32.gmra.mrb[0].mxu0 %v59
  %v133 = vpop.f32.mrb[0].mxu0
  %v134 = vadd.f32 0.0, %v133
  %v135 = vpop.f32.mrb[0].mxu0
  %136 = vdwg.mxu0
  %v138 = vsel %vm57, %v16, 0
  %v141 = vsel %vm57, %v26, 0
  %v144 = vsel %vm57, %v27, 0
  %146 = vmatprep.subr.mxu0 0.0
  %147 = vmatpush1.xpose.msra.mxu0 %v141
  %148 = vmatprep.subr.mxu0 0.0
  %149 = vmatpush1.xpose.msra.mxu0 %v144
  %150 = vmatprep.subr.mxu0 0.0
  %151 = vmatpush1.xpose.msra.mxu0 0.0
  %152 = vmatprep.subr.mxu0 0.0
  %153 = vmatpush1.xpose.msra.mxu0 0.0
  %154 = vmatprep.subr.mxu0 0.0
  %155 = vmatpush1.xpose.msra.mxu0 0.0
  %156 = vmatprep.subr.mxu0 0.0
  %157 = vmatpush1.xpose.msra.mxu0 0.0
  %158 = vmatprep.subr.mxu0 0.0
  %159 = vmatpush1.xpose.msra.mxu0 0.0
  %160 = vmatprep.subr.mxu0 0.0
  %161 = vmatpush1.xpose.msra.mxu0 0.0
  %162 = vmatprep.subr.mxu0 0.0
  %163 = vmatpush1.xpose.msra.mxu0 0.0
  %164 = vmatprep.subr.mxu0 0.0
  %165 = vmatpush1.xpose.msra.mxu0 0.0
  %166 = vmatprep.subr.mxu0 0.0
  %167 = vmatpush1.xpose.msra.mxu0 0.0
  %168 = vmatprep.subr.mxu0 0.0
  %169 = vmatpush1.xpose.msra.mxu0 0.0
  %170 = vmatprep.subr.mxu0 0.0
  %171 = vmatpush1.xpose.msra.mxu0 0.0
  %172 = vmatprep.subr.mxu0 0.0
  %173 = vmatpush1.xpose.msra.mxu0 0.0
  %174 = vmatprep.subr.mxu0 0.0
  %175 = vmatpush1.xpose.msra.mxu0 0.0
  %176 = vmatprep.subr.mxu0 0.0
  %177 = vmatpush1.xpose.msra.mxu0 0.0
  %178 = vmatprep.subr.mxu0 0.0
  %179 = vmatpush1.xpose.msra.mxu0 0.0
  %180 = vmatprep.subr.mxu0 0.0
  %181 = vmatpush1.xpose.msra.mxu0 0.0
  %182 = vmatprep.subr.mxu0 0.0
  %183 = vmatpush1.xpose.msra.mxu0 0.0
  %184 = vmatprep.subr.mxu0 0.0
  %185 = vmatpush1.xpose.msra.mxu0 0.0
  %186 = vmatprep.subr.mxu0 0.0
  %187 = vmatpush1.xpose.msra.mxu0 0.0
  %188 = vmatprep.subr.mxu0 0.0
  %189 = vmatpush1.xpose.msra.mxu0 0.0
  %190 = vmatprep.subr.mxu0 0.0
  %191 = vmatpush1.xpose.msra.mxu0 0.0
  %192 = vmatprep.subr.mxu0 0.0
  %193 = vmatpush1.xpose.msra.mxu0 0.0
  %194 = vmatprep.subr.mxu0 0.0
  %195 = vmatpush1.xpose.msra.mxu0 0.0
  %196 = vmatprep.subr.mxu0 0.0
  %197 = vmatpush1.xpose.msra.mxu0 0.0
  %198 = vmatprep.subr.mxu0 0.0
  %199 = vmatpush1.xpose.msra.mxu0 0.0
  %200 = vmatprep.subr.mxu0 0.0
  %201 = vmatpush1.xpose.msra.mxu0 0.0
  %202 = vmatprep.subr.mxu0 0.0
  %203 = vmatpush1.xpose.msra.mxu0 0.0
  %204 = vmatprep.subr.mxu0 0.0
  %205 = vmatpush1.xpose.msra.mxu0 0.0
  %206 = vmatprep.subr.mxu0 0.0
  %207 = vmatpush1.xpose.msra.mxu0 0.0
  %208 = vmatprep.subr.mxu0 0.0
  %209 = vmatpush1.xpose.msra.mxu0 0.0
  %210 = vmatprep.mubr.f32.mxu0 0.0
  %211 = vmatmul.mubr.f32.gmra.mrb[0].mxu0 %v138
  %v212 = vpop.f32.mrb[0].mxu0
  %v213 = vadd.f32 0.0, %v212
  %v214 = vpop.f32.mrb[0].mxu0
  %215 = vdwg.mxu0
  %v217 = vsel %vm57, %v17, 0
  %v220 = vsel %vm57, %v28, 0
  %v223 = vsel %vm57, %v29, 0
  %225 = vmatprep.subr.mxu0 0.0
  %226 = vmatpush1.xpose.msra.mxu0 %v220
  %227 = vmatprep.subr.mxu0 0.0
  %228 = vmatpush1.xpose.msra.mxu0 %v223
  %229 = vmatprep.subr.mxu0 0.0
  %230 = vmatpush1.xpose.msra.mxu0 0.0
  %231 = vmatprep.subr.mxu0 0.0
  %232 = vmatpush1.xpose.msra.mxu0 0.0
  %233 = vmatprep.subr.mxu0 0.0
  %234 = vmatpush1.xpose.msra.mxu0 0.0
  %235 = vmatprep.subr.mxu0 0.0
  %236 = vmatpush1.xpose.msra.mxu0 0.0
  %237 = vmatprep.subr.mxu0 0.0
  %238 = vmatpush1.xpose.msra.mxu0 0.0
  %239 = vmatprep.subr.mxu0 0.0
  %240 = vmatpush1.xpose.msra.mxu0 0.0
  %241 = vmatprep.subr.mxu0 0.0
  %242 = vmatpush1.xpose.msra.mxu0 0.0
  %243 = vmatprep.subr.mxu0 0.0
  %244 = vmatpush1.xpose.msra.mxu0 0.0
  %245 = vmatprep.subr.mxu0 0.0
  %246 = vmatpush1.xpose.msra.mxu0 0.0
  %247 = vmatprep.subr.mxu0 0.0
  %248 = vmatpush1.xpose.msra.mxu0 0.0
  %249 = vmatprep.subr.mxu0 0.0
  %250 = vmatpush1.xpose.msra.mxu0 0.0
  %251 = vmatprep.subr.mxu0 0.0
  %252 = vmatpush1.xpose.msra.mxu0 0.0
  %253 = vmatprep.subr.mxu0 0.0
  %254 = vmatpush1.xpose.msra.mxu0 0.0
  %255 = vmatprep.subr.mxu0 0.0
  %256 = vmatpush1.xpose.msra.mxu0 0.0
  %257 = vmatprep.subr.mxu0 0.0
  %258 = vmatpush1.xpose.msra.mxu0 0.0
  %259 = vmatprep.subr.mxu0 0.0
  %260 = vmatpush1.xpose.msra.mxu0 0.0
  %261 = vmatprep.subr.mxu0 0.0
  %262 = vmatpush1.xpose.msra.mxu0 0.0
  %263 = vmatprep.subr.mxu0 0.0
  %264 = vmatpush1.xpose.msra.mxu0 0.0
  %265 = vmatprep.subr.mxu0 0.0
  %266 = vmatpush1.xpose.msra.mxu0 0.0
  %267 = vmatprep.subr.mxu0 0.0
  %268 = vmatpush1.xpose.msra.mxu0 0.0
  %269 = vmatprep.subr.mxu0 0.0
  %270 = vmatpush1.xpose.msra.mxu0 0.0
  %271 = vmatprep.subr.mxu0 0.0
  %272 = vmatpush1.xpose.msra.mxu0 0.0
  %273 = vmatprep.subr.mxu0 0.0
  %274 = vmatpush1.xpose.msra.mxu0 0.0
  %275 = vmatprep.subr.mxu0 0.0
  %276 = vmatpush1.xpose.msra.mxu0 0.0
  %277 = vmatprep.subr.mxu0 0.0
  %278 = vmatpush1.xpose.msra.mxu0 0.0
  %279 = vmatprep.subr.mxu0 0.0
  %280 = vmatpush1.xpose.msra.mxu0 0.0
  %281 = vmatprep.subr.mxu0 0.0
  %282 = vmatpush1.xpose.msra.mxu0 0.0
  %283 = vmatprep.subr.mxu0 0.0
  %284 = vmatpush1.xpose.msra.mxu0 0.0
  %285 = vmatprep.subr.mxu0 0.0
  %286 = vmatpush1.xpose.msra.mxu0 0.0
  %287 = vmatprep.subr.mxu0 0.0
  %288 = vmatpush1.xpose.msra.mxu0 0.0
  %289 = vmatprep.mubr.f32.mxu0 0.0
  %290 = vmatmul.mubr.f32.gmra.mrb[0].mxu0 %v217
  %v291 = vpop.f32.mrb[0].mxu0
  %v292 = vadd.f32 0.0, %v291
  %v293 = vpop.f32.mrb[0].mxu0
  %294 = vdwg.mxu0
  %v296 = vsel %vm57, %v18, 0
  %v299 = vsel %vm57, %v30, 0
  %v302 = vsel %vm57, %v31, 0
  %304 = vmatprep.subr.mxu0 0.0
  %305 = vmatpush1.xpose.msra.mxu0 %v299
  %306 = vmatprep.subr.mxu0 0.0
  %307 = vmatpush1.xpose.msra.mxu0 %v302
  %308 = vmatprep.subr.mxu0 0.0
  %309 = vmatpush1.xpose.msra.mxu0 0.0
  %310 = vmatprep.subr.mxu0 0.0
  %311 = vmatpush1.xpose.msra.mxu0 0.0
  %312 = vmatprep.subr.mxu0 0.0
  %313 = vmatpush1.xpose.msra.mxu0 0.0
  %314 = vmatprep.subr.mxu0 0.0
  %315 = vmatpush1.xpose.msra.mxu0 0.0
  %316 = vmatprep.subr.mxu0 0.0
  %317 = vmatpush1.xpose.msra.mxu0 0.0
  %318 = vmatprep.subr.mxu0 0.0
  %319 = vmatpush1.xpose.msra.mxu0 0.0
  %320 = vmatprep.subr.mxu0 0.0
  %321 = vmatpush1.xpose.msra.mxu0 0.0
  %322 = vmatprep.subr.mxu0 0.0
  %323 = vmatpush1.xpose.msra.mxu0 0.0
  %324 = vmatprep.subr.mxu0 0.0
  %325 = vmatpush1.xpose.msra.mxu0 0.0
  %326 = vmatprep.subr.mxu0 0.0
  %327 = vmatpush1.xpose.msra.mxu0 0.0
  %328 = vmatprep.subr.mxu0 0.0
  %329 = vmatpush1.xpose.msra.mxu0 0.0
  %330 = vmatprep.subr.mxu0 0.0
  %331 = vmatpush1.xpose.msra.mxu0 0.0
  %332 = vmatprep.subr.mxu0 0.0
  %333 = vmatpush1.xpose.msra.mxu0 0.0
  %334 = vmatprep.subr.mxu0 0.0
  %335 = vmatpush1.xpose.msra.mxu0 0.0
  %336 = vmatprep.subr.mxu0 0.0
  %337 = vmatpush1.xpose.msra.mxu0 0.0
  %338 = vmatprep.subr.mxu0 0.0
  %339 = vmatpush1.xpose.msra.mxu0 0.0
  %340 = vmatprep.subr.mxu0 0.0
  %341 = vmatpush1.xpose.msra.mxu0 0.0
  %342 = vmatprep.subr.mxu0 0.0
  %343 = vmatpush1.xpose.msra.mxu0 0.0
  %344 = vmatprep.subr.mxu0 0.0
  %345 = vmatpush1.xpose.msra.mxu0 0.0
  %346 = vmatprep.subr.mxu0 0.0
  %347 = vmatpush1.xpose.msra.mxu0 0.0
  %348 = vmatprep.subr.mxu0 0.0
  %349 = vmatpush1.xpose.msra.mxu0 0.0
  %350 = vmatprep.subr.mxu0 0.0
  %351 = vmatpush1.xpose.msra.mxu0 0.0
  %352 = vmatprep.subr.mxu0 0.0
  %353 = vmatpush1.xpose.msra.mxu0 0.0
  %354 = vmatprep.subr.mxu0 0.0
  %355 = vmatpush1.xpose.msra.mxu0 0.0
  %356 = vmatprep.subr.mxu0 0.0
  %357 = vmatpush1.xpose.msra.mxu0 0.0
  %358 = vmatprep.subr.mxu0 0.0
  %359 = vmatpush1.xpose.msra.mxu0 0.0
  %360 = vmatprep.subr.mxu0 0.0
  %361 = vmatpush1.xpose.msra.mxu0 0.0
  %362 = vmatprep.subr.mxu0 0.0
  %363 = vmatpush1.xpose.msra.mxu0 0.0
  %364 = vmatprep.subr.mxu0 0.0
  %365 = vmatpush1.xpose.msra.mxu0 0.0
  %366 = vmatprep.subr.mxu0 0.0
  %367 = vmatpush1.xpose.msra.mxu0 0.0
  %368 = vmatprep.mubr.f32.mxu0 0.0
  %369 = vmatmul.mubr.f32.gmra.mrb[0].mxu0 %v296
  %v370 = vpop.f32.mrb[0].mxu0
  %v371 = vadd.f32 0.0, %v370
  %v372 = vpop.f32.mrb[0].mxu0
  %373 = vdwg.mxu0
  %v375 = vsel %vm57, %v19, 0
  %v378 = vsel %vm57, %v32, 0
  %v381 = vsel %vm57, %v33, 0
  %383 = vmatprep.subr.mxu0 0.0
  %384 = vmatpush1.xpose.msra.mxu0 %v378
  %385 = vmatprep.subr.mxu0 0.0
  %386 = vmatpush1.xpose.msra.mxu0 %v381
  %387 = vmatprep.subr.mxu0 0.0
  %388 = vmatpush1.xpose.msra.mxu0 0.0
  %389 = vmatprep.subr.mxu0 0.0
  %390 = vmatpush1.xpose.msra.mxu0 0.0
  %391 = vmatprep.subr.mxu0 0.0
  %392 = vmatpush1.xpose.msra.mxu0 0.0
  %393 = vmatprep.subr.mxu0 0.0
  %394 = vmatpush1.xpose.msra.mxu0 0.0
  %395 = vmatprep.subr.mxu0 0.0
  %396 = vmatpush1.xpose.msra.mxu0 0.0
  %397 = vmatprep.subr.mxu0 0.0
  %398 = vmatpush1.xpose.msra.mxu0 0.0
  %399 = vmatprep.subr.mxu0 0.0
  %400 = vmatpush1.xpose.msra.mxu0 0.0
  %401 = vmatprep.subr.mxu0 0.0
  %402 = vmatpush1.xpose.msra.mxu0 0.0
  %403 = vmatprep.subr.mxu0 0.0
  %404 = vmatpush1.xpose.msra.mxu0 0.0
  %405 = vmatprep.subr.mxu0 0.0
  %406 = vmatpush1.xpose.msra.mxu0 0.0
  %407 = vmatprep.subr.mxu0 0.0
  %408 = vmatpush1.xpose.msra.mxu0 0.0
  %409 = vmatprep.subr.mxu0 0.0
  %410 = vmatpush1.xpose.msra.mxu0 0.0
  %411 = vmatprep.subr.mxu0 0.0
  %412 = vmatpush1.xpose.msra.mxu0 0.0
  %413 = vmatprep.subr.mxu0 0.0
  %414 = vmatpush1.xpose.msra.mxu0 0.0
  %415 = vmatprep.subr.mxu0 0.0
  %416 = vmatpush1.xpose.msra.mxu0 0.0
  %417 = vmatprep.subr.mxu0 0.0
  %418 = vmatpush1.xpose.msra.mxu0 0.0
  %419 = vmatprep.subr.mxu0 0.0
  %420 = vmatpush1.xpose.msra.mxu0 0.0
  %421 = vmatprep.subr.mxu0 0.0
  %422 = vmatpush1.xpose.msra.mxu0 0.0
  %423 = vmatprep.subr.mxu0 0.0
  %424 = vmatpush1.xpose.msra.mxu0 0.0
  %425 = vmatprep.subr.mxu0 0.0
  %426 = vmatpush1.xpose.msra.mxu0 0.0
  %427 = vmatprep.subr.mxu0 0.0
  %428 = vmatpush1.xpose.msra.mxu0 0.0
  %429 = vmatprep.subr.mxu0 0.0
  %430 = vmatpush1.xpose.msra.mxu0 0.0
  %431 = vmatprep.subr.mxu0 0.0
  %432 = vmatpush1.xpose.msra.mxu0 0.0
  %433 = vmatprep.subr.mxu0 0.0
  %434 = vmatpush1.xpose.msra.mxu0 0.0
  %435 = vmatprep.subr.mxu0 0.0
  %436 = vmatpush1.xpose.msra.mxu0 0.0
  %437 = vmatprep.subr.mxu0 0.0
  %438 = vmatpush1.xpose.msra.mxu0 0.0
  %439 = vmatprep.subr.mxu0 0.0
  %440 = vmatpush1.xpose.msra.mxu0 0.0
  %441 = vmatprep.subr.mxu0 0.0
  %442 = vmatpush1.xpose.msra.mxu0 0.0
  %443 = vmatprep.subr.mxu0 0.0
  %444 = vmatpush1.xpose.msra.mxu0 0.0
  %445 = vmatprep.subr.mxu0 0.0
  %446 = vmatpush1.xpose.msra.mxu0 0.0
  %447 = vmatprep.mubr.f32.mxu0 0.0
  %448 = vmatmul.mubr.f32.gmra.mrb[0].mxu0 %v375
  %v449 = vpop.f32.mrb[0].mxu0
  %v450 = vadd.f32 0.0, %v449
  %v451 = vpop.f32.mrb[0].mxu0
  %452 = vdwg.mxu0
  %v454 = vsel %vm57, %v20, 0
  %v457 = vsel %vm57, %v34, 0
  %v460 = vsel %vm57, %v35, 0
  %462 = vmatprep.subr.mxu0 0.0
  %463 = vmatpush1.xpose.msra.mxu0 %v457
  %464 = vmatprep.subr.mxu0 0.0
  %465 = vmatpush1.xpose.msra.mxu0 %v460
  %466 = vmatprep.subr.mxu0 0.0
  %467 = vmatpush1.xpose.msra.mxu0 0.0
  %468 = vmatprep.subr.mxu0 0.0
  %469 = vmatpush1.xpose.msra.mxu0 0.0
  %470 = vmatprep.subr.mxu0 0.0
  %471 = vmatpush1.xpose.msra.mxu0 0.0
  %472 = vmatprep.subr.mxu0 0.0
  %473 = vmatpush1.xpose.msra.mxu0 0.0
  %474 = vmatprep.subr.mxu0 0.0
  %475 = vmatpush1.xpose.msra.mxu0 0.0
  %476 = vmatprep.subr.mxu0 0.0
  %477 = vmatpush1.xpose.msra.mxu0 0.0
  %478 = vmatprep.subr.mxu0 0.0
  %479 = vmatpush1.xpose.msra.mxu0 0.0
  %480 = vmatprep.subr.mxu0 0.0
  %481 = vmatpush1.xpose.msra.mxu0 0.0
  %482 = vmatprep.subr.mxu0 0.0
  %483 = vmatpush1.xpose.msra.mxu0 0.0
  %484 = vmatprep.subr.mxu0 0.0
  %485 = vmatpush1.xpose.msra.mxu0 0.0
  %486 = vmatprep.subr.mxu0 0.0
  %487 = vmatpush1.xpose.msra.mxu0 0.0
  %488 = vmatprep.subr.mxu0 0.0
  %489 = vmatpush1.xpose.msra.mxu0 0.0
  %490 = vmatprep.subr.mxu0 0.0
  %491 = vmatpush1.xpose.msra.mxu0 0.0
  %492 = vmatprep.subr.mxu0 0.0
  %493 = vmatpush1.xpose.msra.mxu0 0.0
  %494 = vmatprep.subr.mxu0 0.0
  %495 = vmatpush1.xpose.msra.mxu0 0.0
  %496 = vmatprep.subr.mxu0 0.0
  %497 = vmatpush1.xpose.msra.mxu0 0.0
  %498 = vmatprep.subr.mxu0 0.0
  %499 = vmatpush1.xpose.msra.mxu0 0.0
  %500 = vmatprep.subr.mxu0 0.0
  %501 = vmatpush1.xpose.msra.mxu0 0.0
  %502 = vmatprep.subr.mxu0 0.0
  %503 = vmatpush1.xpose.msra.mxu0 0.0
  %504 = vmatprep.subr.mxu0 0.0
  %505 = vmatpush1.xpose.msra.mxu0 0.0
  %506 = vmatprep.subr.mxu0 0.0
  %507 = vmatpush1.xpose.msra.mxu0 0.0
  %508 = vmatprep.subr.mxu0 0.0
  %509 = vmatpush1.xpose.msra.mxu0 0.0
  %510 = vmatprep.subr.mxu0 0.0
  %511 = vmatpush1.xpose.msra.mxu0 0.0
  %512 = vmatprep.subr.mxu0 0.0
  %513 = vmatpush1.xpose.msra.mxu0 0.0
  %514 = vmatprep.subr.mxu0 0.0
  %515 = vmatpush1.xpose.msra.mxu0 0.0
  %516 = vmatprep.subr.mxu0 0.0
  %517 = vmatpush1.xpose.msra.mxu0 0.0
  %518 = vmatprep.subr.mxu0 0.0
  %519 = vmatpush1.xpose.msra.mxu0 0.0
  %520 = vmatprep.subr.mxu0 0.0
  %521 = vmatpush1.xpose.msra.mxu0 0.0
  %522 = vmatprep.subr.mxu0 0.0
  %523 = vmatpush1.xpose.msra.mxu0 0.0
  %524 = vmatprep.subr.mxu0 0.0
  %525 = vmatpush1.xpose.msra.mxu0 0.0
  %526 = vmatprep.mubr.f32.mxu0 0.0
  %527 = vmatmul.mubr.f32.gmra.mrb[0].mxu0 %v454
  %v528 = vpop.f32.mrb[0].mxu0
  %v529 = vadd.f32 0.0, %v528
  %v530 = vpop.f32.mrb[0].mxu0
  %531 = vdwg.mxu0
  %v533 = vsel %vm57, %v21, 0
  %v536 = vsel %vm57, %v36, 0
  %v539 = vsel %vm57, %v37, 0
  %541 = vmatprep.subr.mxu0 0.0
  %542 = vmatpush1.xpose.msra.mxu0 %v536
  %543 = vmatprep.subr.mxu0 0.0
  %544 = vmatpush1.xpose.msra.mxu0 %v539
  %545 = vmatprep.subr.mxu0 0.0
  %546 = vmatpush1.xpose.msra.mxu0 0.0
  %547 = vmatprep.subr.mxu0 0.0
  %548 = vmatpush1.xpose.msra.mxu0 0.0
  %549 = vmatprep.subr.mxu0 0.0
  %550 = vmatpush1.xpose.msra.mxu0 0.0
  %551 = vmatprep.subr.mxu0 0.0
  %552 = vmatpush1.xpose.msra.mxu0 0.0
  %553 = vmatprep.subr.mxu0 0.0
  %554 = vmatpush1.xpose.msra.mxu0 0.0
  %555 = vmatprep.subr.mxu0 0.0
  %556 = vmatpush1.xpose.msra.mxu0 0.0
  %557 = vmatprep.subr.mxu0 0.0
  %558 = vmatpush1.xpose.msra.mxu0 0.0
  %559 = vmatprep.subr.mxu0 0.0
  %560 = vmatpush1.xpose.msra.mxu0 0.0
  %561 = vmatprep.subr.mxu0 0.0
  %562 = vmatpush1.xpose.msra.mxu0 0.0
  %563 = vmatprep.subr.mxu0 0.0
  %564 = vmatpush1.xpose.msra.mxu0 0.0
  %565 = vmatprep.subr.mxu0 0.0
  %566 = vmatpush1.xpose.msra.mxu0 0.0
  %567 = vmatprep.subr.mxu0 0.0
  %568 = vmatpush1.xpose.msra.mxu0 0.0
  %569 = vmatprep.subr.mxu0 0.0
  %570 = vmatpush1.xpose.msra.mxu0 0.0
  %571 = vmatprep.subr.mxu0 0.0
  %572 = vmatpush1.xpose.msra.mxu0 0.0
  %573 = vmatprep.subr.mxu0 0.0
  %574 = vmatpush1.xpose.msra.mxu0 0.0
  %575 = vmatprep.subr.mxu0 0.0
  %576 = vmatpush1.xpose.msra.mxu0 0.0
  %577 = vmatprep.subr.mxu0 0.0
  %578 = vmatpush1.xpose.msra.mxu0 0.0
  %579 = vmatprep.subr.mxu0 0.0
  %580 = vmatpush1.xpose.msra.mxu0 0.0
  %581 = vmatprep.subr.mxu0 0.0
  %582 = vmatpush1.xpose.msra.mxu0 0.0
  %583 = vmatprep.subr.mxu0 0.0
  %584 = vmatpush1.xpose.msra.mxu0 0.0
  %585 = vmatprep.subr.mxu0 0.0
  %586 = vmatpush1.xpose.msra.mxu0 0.0
  %587 = vmatprep.subr.mxu0 0.0
  %588 = vmatpush1.xpose.msra.mxu0 0.0
  %589 = vmatprep.subr.mxu0 0.0
  %590 = vmatpush1.xpose.msra.mxu0 0.0
  %591 = vmatprep.subr.mxu0 0.0
  %592 = vmatpush1.xpose.msra.mxu0 0.0
  %593 = vmatprep.subr.mxu0 0.0
  %594 = vmatpush1.xpose.msra.mxu0 0.0
  %595 = vmatprep.subr.mxu0 0.0
  %596 = vmatpush1.xpose.msra.mxu0 0.0
  %597 = vmatprep.subr.mxu0 0.0
  %598 = vmatpush1.xpose.msra.mxu0 0.0
  %599 = vmatprep.subr.mxu0 0.0
  %600 = vmatpush1.xpose.msra.mxu0 0.0
  %601 = vmatprep.subr.mxu0 0.0
  %602 = vmatpush1.xpose.msra.mxu0 0.0
  %603 = vmatprep.subr.mxu0 0.0
  %604 = vmatpush1.xpose.msra.mxu0 0.0
  %605 = vmatprep.mubr.f32.mxu0 0.0
  %606 = vmatmul.mubr.f32.gmra.mrb[0].mxu0 %v533
  %v607 = vpop.f32.mrb[0].mxu0
  %v608 = vadd.f32 0.0, %v607
  %v609 = vpop.f32.mrb[0].mxu0
  %610 = vdwg.mxu0
  %v612 = vsel %vm57, %v22, 0
  %v615 = vsel %vm57, %v38, 0
  %v618 = vsel %vm57, %v39, 0
  %620 = vmatprep.subr.mxu0 0.0
  %621 = vmatpush1.xpose.msra.mxu0 %v615
  %622 = vmatprep.subr.mxu0 0.0
  %623 = vmatpush1.xpose.msra.mxu0 %v618
  %624 = vmatprep.subr.mxu0 0.0
  %625 = vmatpush1.xpose.msra.mxu0 0.0
  %626 = vmatprep.subr.mxu0 0.0
  %627 = vmatpush1.xpose.msra.mxu0 0.0
  %628 = vmatprep.subr.mxu0 0.0
  %629 = vmatpush1.xpose.msra.mxu0 0.0
  %630 = vmatprep.subr.mxu0 0.0
  %631 = vmatpush1.xpose.msra.mxu0 0.0
  %632 = vmatprep.subr.mxu0 0.0
  %633 = vmatpush1.xpose.msra.mxu0 0.0
  %634 = vmatprep.subr.mxu0 0.0
  %635 = vmatpush1.xpose.msra.mxu0 0.0
  %636 = vmatprep.subr.mxu0 0.0
  %637 = vmatpush1.xpose.msra.mxu0 0.0
  %638 = vmatprep.subr.mxu0 0.0
  %639 = vmatpush1.xpose.msra.mxu0 0.0
  %640 = vmatprep.subr.mxu0 0.0
  %641 = vmatpush1.xpose.msra.mxu0 0.0
  %642 = vmatprep.subr.mxu0 0.0
  %643 = vmatpush1.xpose.msra.mxu0 0.0
  %644 = vmatprep.subr.mxu0 0.0
  %645 = vmatpush1.xpose.msra.mxu0 0.0
  %646 = vmatprep.subr.mxu0 0.0
  %647 = vmatpush1.xpose.msra.mxu0 0.0
  %648 = vmatprep.subr.mxu0 0.0
  %649 = vmatpush1.xpose.msra.mxu0 0.0
  %650 = vmatprep.subr.mxu0 0.0
  %651 = vmatpush1.xpose.msra.mxu0 0.0
  %652 = vmatprep.subr.mxu0 0.0
  %653 = vmatpush1.xpose.msra.mxu0 0.0
  %654 = vmatprep.subr.mxu0 0.0
  %655 = vmatpush1.xpose.msra.mxu0 0.0
  %656 = vmatprep.subr.mxu0 0.0
  %657 = vmatpush1.xpose.msra.mxu0 0.0
  %658 = vmatprep.subr.mxu0 0.0
  %659 = vmatpush1.xpose.msra.mxu0 0.0
  %660 = vmatprep.subr.mxu0 0.0
  %661 = vmatpush1.xpose.msra.mxu0 0.0
  %662 = vmatprep.subr.mxu0 0.0
  %663 = vmatpush1.xpose.msra.mxu0 0.0
  %664 = vmatprep.subr.mxu0 0.0
  %665 = vmatpush1.xpose.msra.mxu0 0.0
  %666 = vmatprep.subr.mxu0 0.0
  %667 = vmatpush1.xpose.msra.mxu0 0.0
  %668 = vmatprep.subr.mxu0 0.0
  %669 = vmatpush1.xpose.msra.mxu0 0.0
  %670 = vmatprep.subr.mxu0 0.0
  %671 = vmatpush1.xpose.msra.mxu0 0.0
  %672 = vmatprep.subr.mxu0 0.0
  %673 = vmatpush1.xpose.msra.mxu0 0.0
  %674 = vmatprep.subr.mxu0 0.0
  %675 = vmatpush1.xpose.msra.mxu0 0.0
  %676 = vmatprep.subr.mxu0 0.0
  %677 = vmatpush1.xpose.msra.mxu0 0.0
  %678 = vmatprep.subr.mxu0 0.0
  %679 = vmatpush1.xpose.msra.mxu0 0.0
  %680 = vmatprep.subr.mxu0 0.0
  %681 = vmatpush1.xpose.msra.mxu0 0.0
  %682 = vmatprep.subr.mxu0 0.0
  %683 = vmatpush1.xpose.msra.mxu0 0.0
  %684 = vmatprep.mubr.f32.mxu0 0.0
  %685 = vmatmul.mubr.f32.gmra.mrb[0].mxu0 %v612
  %v686 = vpop.f32.mrb[0].mxu0
  %v687 = vadd.f32 0.0, %v686
  %v688 = vpop.f32.mrb[0].mxu0
  %689 = vdwg.mxu0
  %v690 = vmul.f32 %v134, 0.125
  %v691 = vmul.f32 %v213, 0.125
  %v692 = vmul.f32 %v292, 0.125
  %v693 = vmul.f32 %v371, 0.125
  %v694 = vmul.f32 %v450, 0.125
  %v695 = vmul.f32 %v529, 0.125
  %v696 = vmul.f32 %v608, 0.125
  %v697 = vmul.f32 %v687, 0.125
  %v698 = vlaneseq
  %v699 = vshrl.u32 %v698, 7
  %v700 = vlaneseq
  %v701 = vand.u32 %v700, 127
  %vm702 = vcmp.ge.s32.totalorder %v701, %v699
  %v703 = vadd.s32 %v699, 4
  %vm704 = vcmp.lt.s32.totalorder %v701, %v703
  %vm705 = vmand %vm702, %vm704
  %v706 = vsel %vm705, %v690, -inf
  %v707 = vsel %vm705, %v691, -inf
  %v708 = vsel %vm705, %v692, -inf
  %v709 = vsel %vm705, %v693, -inf
  %v710 = vsel %vm705, %v694, -inf
  %v711 = vsel %vm705, %v695, -inf
  %v712 = vsel %vm705, %v696, -inf
  %v713 = vsel %vm705, %v697, -inf
  %vm714 = vcmask 89088
  %v715 = vsel %vm714, %v706, -inf
  %716 = vmax.xlane.f32.xlu0 %v715
  %v717 = vpop.xlane.xlu0 %716
  %v718 = vsel %vm714, %v707, -inf
  %719 = vmax.xlane.f32.xlu0 %v718
  %v720 = vpop.xlane.xlu0 %719
  %v721 = vsel %vm714, %v708, -inf
  %722 = vmax.xlane.f32.xlu0 %v721
  %v723 = vpop.xlane.xlu0 %722
  %v724 = vsel %vm714, %v709, -inf
  %725 = vmax.xlane.f32.xlu0 %v724
  %v726 = vpop.xlane.xlu0 %725
  %v727 = vsel %vm714, %v710, -inf
  %728 = vmax.xlane.f32.xlu0 %v727
  %v729 = vpop.xlane.xlu0 %728
  %v730 = vsel %vm714, %v711, -inf
  %731 = vmax.xlane.f32.xlu0 %v730
  %v732 = vpop.xlane.xlu0 %731
  %v733 = vsel %vm714, %v712, -inf
  %734 = vmax.xlane.f32.xlu0 %v733
  %v735 = vpop.xlane.xlu0 %734
  %v736 = vsel %vm714, %v713, -inf
  %737 = vmax.xlane.f32.xlu0 %v736
  %v738 = vpop.xlane.xlu0 %737
  %v739 = vsub.f32 %v706, %v717
  %v740 = vsub.f32 %v707, %v720
  %v741 = vsub.f32 %v708, %v723
  %v742 = vsub.f32 %v709, %v726
  %v743 = vsub.f32 %v710, %v729
  %v744 = vsub.f32 %v711, %v732
  %v745 = vsub.f32 %v712, %v735
  %v746 = vsub.f32 %v713, %v738
  %v747 = vmul.f32 %v739, 1.442695
  %v748 = vpow.pop %v747
  %v749 = vmul.f32 %v740, 1.442695
  %v750 = vpow.pop %v749
  %v751 = vmul.f32 %v741, 1.442695
  %v752 = vpow.pop %v751
  %v753 = vmul.f32 %v742, 1.442695
  %v754 = vpow.pop %v753
  %v755 = vmul.f32 %v743, 1.442695
  %v756 = vpow.pop %v755
  %v757 = vmul.f32 %v744, 1.442695
  %v758 = vpow.pop %v757
  %v759 = vmul.f32 %v745, 1.442695
  %v760 = vpow.pop %v759
  %v761 = vmul.f32 %v746, 1.442695
  %v762 = vpow.pop %v761
  %v763 = vsel %vm705, %v748, 0.0
  %v764 = vsel %vm705, %v750, 0.0
  %v765 = vsel %vm705, %v752, 0.0
  %v766 = vsel %vm705, %v754, 0.0
  %v767 = vsel %vm705, %v756, 0.0
  %v768 = vsel %vm705, %v758, 0.0
  %v769 = vsel %vm705, %v760, 0.0
  %v770 = vsel %vm705, %v762, 0.0
  %v771 = vsel %vm714, %v763, 0.0
  %772 = vadd.xlane.f32.xlu0 %v771
  %v773 = vpop.xlane.xlu0 %772
  %v774 = vsel %vm714, %v764, 0.0
  %775 = vadd.xlane.f32.xlu0 %v774
  %v776 = vpop.xlane.xlu0 %775
  %v777 = vsel %vm714, %v765, 0.0
  %778 = vadd.xlane.f32.xlu0 %v777
  %v779 = vpop.xlane.xlu0 %778
  %v780 = vsel %vm714, %v766, 0.0
  %781 = vadd.xlane.f32.xlu0 %v780
  %v782 = vpop.xlane.xlu0 %781
  %v783 = vsel %vm714, %v767, 0.0
  %784 = vadd.xlane.f32.xlu0 %v783
  %v785 = vpop.xlane.xlu0 %784
  %v786 = vsel %vm714, %v768, 0.0
  %787 = vadd.xlane.f32.xlu0 %v786
  %v788 = vpop.xlane.xlu0 %787
  %v789 = vsel %vm714, %v769, 0.0
  %790 = vadd.xlane.f32.xlu0 %v789
  %v791 = vpop.xlane.xlu0 %790
  %v792 = vsel %vm714, %v770, 0.0
  %793 = vadd.xlane.f32.xlu0 %v792
  %v794 = vpop.xlane.xlu0 %793
  %v795 = vrcp.pop %v773
  %v796 = vrcp.pop %v776
  %v797 = vrcp.pop %v779
  %v798 = vrcp.pop %v782
  %v799 = vrcp.pop %v785
  %v800 = vrcp.pop %v788
  %v801 = vrcp.pop %v791
  %v802 = vrcp.pop %v794
  %v803 = vmul.f32 %v763, %v795
  %v804 = vmul.f32 %v764, %v796
  %v805 = vmul.f32 %v765, %v797
  %v806 = vmul.f32 %v766, %v798
  %v807 = vmul.f32 %v767, %v799
  %v808 = vmul.f32 %v768, %v800
  %v809 = vmul.f32 %v769, %v801
  %v810 = vmul.f32 %v770, %v802
  %v812 = vsel %vm714, %v803, 0
  %vm814 = vcmask 1042432
  %v816 = vsel %vm814, %v42, 0
  %818 = vmatprep.subr.mxu0 0.0
  %819 = vmatpush1.msra.mxu0 %v41
  %820 = vmatprep.subr.mxu0 0.0
  %821 = vmatpush1.msra.mxu0 %v816
  %822 = vmatprep.subr.mxu0 0.0
  %823 = vmatpush1.msra.mxu0 0.0
  %824 = vmatprep.subr.mxu0 0.0
  %825 = vmatpush1.msra.mxu0 0.0
  %826 = vmatprep.subr.mxu0 0.0
  %827 = vmatpush1.msra.mxu0 0.0
  %828 = vmatprep.subr.mxu0 0.0
  %829 = vmatpush1.msra.mxu0 0.0
  %830 = vmatprep.subr.mxu0 0.0
  %831 = vmatpush1.msra.mxu0 0.0
  %832 = vmatprep.subr.mxu0 0.0
  %833 = vmatpush1.msra.mxu0 0.0
  %834 = vmatprep.subr.mxu0 0.0
  %835 = vmatpush1.msra.mxu0 0.0
  %836 = vmatprep.subr.mxu0 0.0
  %837 = vmatpush1.msra.mxu0 0.0
  %838 = vmatprep.subr.mxu0 0.0
  %839 = vmatpush1.msra.mxu0 0.0
  %840 = vmatprep.subr.mxu0 0.0
  %841 = vmatpush1.msra.mxu0 0.0
  %842 = vmatprep.subr.mxu0 0.0
  %843 = vmatpush1.msra.mxu0 0.0
  %844 = vmatprep.subr.mxu0 0.0
  %845 = vmatpush1.msra.mxu0 0.0
  %846 = vmatprep.subr.mxu0 0.0
  %847 = vmatpush1.msra.mxu0 0.0
  %848 = vmatprep.subr.mxu0 0.0
  %849 = vmatpush1.msra.mxu0 0.0
  %850 = vmatprep.subr.mxu0 0.0
  %851 = vmatpush1.msra.mxu0 0.0
  %852 = vmatprep.subr.mxu0 0.0
  %853 = vmatpush1.msra.mxu0 0.0
  %854 = vmatprep.subr.mxu0 0.0
  %855 = vmatpush1.msra.mxu0 0.0
  %856 = vmatprep.subr.mxu0 0.0
  %857 = vmatpush1.msra.mxu0 0.0
  %858 = vmatprep.subr.mxu0 0.0
  %859 = vmatpush1.msra.mxu0 0.0
  %860 = vmatprep.subr.mxu0 0.0
  %861 = vmatpush1.msra.mxu0 0.0
  %862 = vmatprep.subr.mxu0 0.0
  %863 = vmatpush1.msra.mxu0 0.0
  %864 = vmatprep.subr.mxu0 0.0
  %865 = vmatpush1.msra.mxu0 0.0
  %866 = vmatprep.subr.mxu0 0.0
  %867 = vmatpush1.msra.mxu0 0.0
  %868 = vmatprep.subr.mxu0 0.0
  %869 = vmatpush1.msra.mxu0 0.0
  %870 = vmatprep.subr.mxu0 0.0
  %871 = vmatpush1.msra.mxu0 0.0
  %872 = vmatprep.subr.mxu0 0.0
  %873 = vmatpush1.msra.mxu0 0.0
  %874 = vmatprep.subr.mxu0 0.0
  %875 = vmatpush1.msra.mxu0 0.0
  %876 = vmatprep.subr.mxu0 0.0
  %877 = vmatpush1.msra.mxu0 0.0
  %878 = vmatprep.subr.mxu0 0.0
  %879 = vmatpush1.msra.mxu0 0.0
  %880 = vmatprep.subr.mxu0 0.0
  %881 = vmatpush1.msra.mxu0 0.0
  %882 = vmatprep.mubr.f32.mxu0 0.0
  %883 = vmatmul.mubr.f32.gmra.mrb[0].mxu0 %v812
  %v884 = vpop.f32.mrb[0].mxu0
  %v885 = vadd.f32 0.0, %v884
  %v886 = vpop.f32.mrb[0].mxu0
  %887 = vdwg.mxu0
  %v889 = vsel %vm714, %v804, 0
  %v892 = vsel %vm814, %v44, 0
  %894 = vmatprep.subr.mxu0 0.0
  %895 = vmatpush1.msra.mxu0 %v43
  %896 = vmatprep.subr.mxu0 0.0
  %897 = vmatpush1.msra.mxu0 %v892
  %898 = vmatprep.subr.mxu0 0.0
  %899 = vmatpush1.msra.mxu0 0.0
  %900 = vmatprep.subr.mxu0 0.0
  %901 = vmatpush1.msra.mxu0 0.0
  %902 = vmatprep.subr.mxu0 0.0
  %903 = vmatpush1.msra.mxu0 0.0
  %904 = vmatprep.subr.mxu0 0.0
  %905 = vmatpush1.msra.mxu0 0.0
  %906 = vmatprep.subr.mxu0 0.0
  %907 = vmatpush1.msra.mxu0 0.0
  %908 = vmatprep.subr.mxu0 0.0
  %909 = vmatpush1.msra.mxu0 0.0
  %910 = vmatprep.subr.mxu0 0.0
  %911 = vmatpush1.msra.mxu0 0.0
  %912 = vmatprep.subr.mxu0 0.0
  %913 = vmatpush1.msra.mxu0 0.0
  %914 = vmatprep.subr.mxu0 0.0
  %915 = vmatpush1.msra.mxu0 0.0
  %916 = vmatprep.subr.mxu0 0.0
  %917 = vmatpush1.msra.mxu0 0.0
  %918 = vmatprep.subr.mxu0 0.0
  %919 = vmatpush1.msra.mxu0 0.0
  %920 = vmatprep.subr.mxu0 0.0
  %921 = vmatpush1.msra.mxu0 0.0
  %922 = vmatprep.subr.mxu0 0.0
  %923 = vmatpush1.msra.mxu0 0.0
  %924 = vmatprep.subr.mxu0 0.0
  %925 = vmatpush1.msra.mxu0 0.0
  %926 = vmatprep.subr.mxu0 0.0
  %927 = vmatpush1.msra.mxu0 0.0
  %928 = vmatprep.subr.mxu0 0.0
  %929 = vmatpush1.msra.mxu0 0.0
  %930 = vmatprep.subr.mxu0 0.0
  %931 = vmatpush1.msra.mxu0 0.0
  %932 = vmatprep.subr.mxu0 0.0
  %933 = vmatpush1.msra.mxu0 0.0
  %934 = vmatprep.subr.mxu0 0.0
  %935 = vmatpush1.msra.mxu0 0.0
  %936 = vmatprep.subr.mxu0 0.0
  %937 = vmatpush1.msra.mxu0 0.0
  %938 = vmatprep.subr.mxu0 0.0
  %939 = vmatpush1.msra.mxu0 0.0
  %940 = vmatprep.subr.mxu0 0.0
  %941 = vmatpush1.msra.mxu0 0.0
  %942 = vmatprep.subr.mxu0 0.0
  %943 = vmatpush1.msra.mxu0 0.0
  %944 = vmatprep.subr.mxu0 0.0
  %945 = vmatpush1.msra.mxu0 0.0
  %946 = vmatprep.subr.mxu0 0.0
  %947 = vmatpush1.msra.mxu0 0.0
  %948 = vmatprep.subr.mxu0 0.0
  %949 = vmatpush1.msra.mxu0 0.0
  %950 = vmatprep.subr.mxu0 0.0
  %951 = vmatpush1.msra.mxu0 0.0
  %952 = vmatprep.subr.mxu0 0.0
  %953 = vmatpush1.msra.mxu0 0.0
  %954 = vmatprep.subr.mxu0 0.0
  %955 = vmatpush1.msra.mxu0 0.0
  %956 = vmatprep.subr.mxu0 0.0
  %957 = vmatpush1.msra.mxu0 0.0
  %958 = vmatprep.mubr.f32.mxu0 0.0
  %959 = vmatmul.mubr.f32.gmra.mrb[0].mxu0 %v889
  %v960 = vpop.f32.mrb[0].mxu0
  %v961 = vadd.f32 0.0, %v960
  %v962 = vpop.f32.mrb[0].mxu0
  %963 = vdwg.mxu0
  %v965 = vsel %vm714, %v805, 0
  %v968 = vsel %vm814, %v46, 0
  %970 = vmatprep.subr.mxu0 0.0
  %971 = vmatpush1.msra.mxu0 %v45
  %972 = vmatprep.subr.mxu0 0.0
  %973 = vmatpush1.msra.mxu0 %v968
  %974 = vmatprep.subr.mxu0 0.0
  %975 = vmatpush1.msra.mxu0 0.0
  %976 = vmatprep.subr.mxu0 0.0
  %977 = vmatpush1.msra.mxu0 0.0
  %978 = vmatprep.subr.mxu0 0.0
  %979 = vmatpush1.msra.mxu0 0.0
  %980 = vmatprep.subr.mxu0 0.0
  %981 = vmatpush1.msra.mxu0 0.0
  %982 = vmatprep.subr.mxu0 0.0
  %983 = vmatpush1.msra.mxu0 0.0
  %984 = vmatprep.subr.mxu0 0.0
  %985 = vmatpush1.msra.mxu0 0.0
  %986 = vmatprep.subr.mxu0 0.0
  %987 = vmatpush1.msra.mxu0 0.0
  %988 = vmatprep.subr.mxu0 0.0
  %989 = vmatpush1.msra.mxu0 0.0
  %990 = vmatprep.subr.mxu0 0.0
  %991 = vmatpush1.msra.mxu0 0.0
  %992 = vmatprep.subr.mxu0 0.0
  %993 = vmatpush1.msra.mxu0 0.0
  %994 = vmatprep.subr.mxu0 0.0
  %995 = vmatpush1.msra.mxu0 0.0
  %996 = vmatprep.subr.mxu0 0.0
  %997 = vmatpush1.msra.mxu0 0.0
  %998 = vmatprep.subr.mxu0 0.0
  %999 = vmatpush1.msra.mxu0 0.0
  %1000 = vmatprep.subr.mxu0 0.0
  %1001 = vmatpush1.msra.mxu0 0.0
  %1002 = vmatprep.subr.mxu0 0.0
  %1003 = vmatpush1.msra.mxu0 0.0
  %1004 = vmatprep.subr.mxu0 0.0
  %1005 = vmatpush1.msra.mxu0 0.0
  %1006 = vmatprep.subr.mxu0 0.0
  %1007 = vmatpush1.msra.mxu0 0.0
  %1008 = vmatprep.subr.mxu0 0.0
  %1009 = vmatpush1.msra.mxu0 0.0
  %1010 = vmatprep.subr.mxu0 0.0
  %1011 = vmatpush1.msra.mxu0 0.0
  %1012 = vmatprep.subr.mxu0 0.0
  %1013 = vmatpush1.msra.mxu0 0.0
  %1014 = vmatprep.subr.mxu0 0.0
  %1015 = vmatpush1.msra.mxu0 0.0
  %1016 = vmatprep.subr.mxu0 0.0
  %1017 = vmatpush1.msra.mxu0 0.0
  %1018 = vmatprep.subr.mxu0 0.0
  %1019 = vmatpush1.msra.mxu0 0.0
  %1020 = vmatprep.subr.mxu0 0.0
  %1021 = vmatpush1.msra.mxu0 0.0
  %1022 = vmatprep.subr.mxu0 0.0
  %1023 = vmatpush1.msra.mxu0 0.0
  %1024 = vmatprep.subr.mxu0 0.0
  %1025 = vmatpush1.msra.mxu0 0.0
  %1026 = vmatprep.subr.mxu0 0.0
  %1027 = vmatpush1.msra.mxu0 0.0
  %1028 = vmatprep.subr.mxu0 0.0
  %1029 = vmatpush1.msra.mxu0 0.0
  %1030 = vmatprep.subr.mxu0 0.0
  %1031 = vmatpush1.msra.mxu0 0.0
  %1032 = vmatprep.subr.mxu0 0.0
  %1033 = vmatpush1.msra.mxu0 0.0
  %1034 = vmatprep.mubr.f32.mxu0 0.0
  %1035 = vmatmul.mubr.f32.gmra.mrb[0].mxu0 %v965
  %v1036 = vpop.f32.mrb[0].mxu0
  %v1037 = vadd.f32 0.0, %v1036
  %v1038 = vpop.f32.mrb[0].mxu0
  %1039 = vdwg.mxu0
  %v1041 = vsel %vm714, %v806, 0
  %v1044 = vsel %vm814, %v48, 0
  %1046 = vmatprep.subr.mxu0 0.0
  %1047 = vmatpush1.msra.mxu0 %v47
  %1048 = vmatprep.subr.mxu0 0.0
  %1049 = vmatpush1.msra.mxu0 %v1044
  %1050 = vmatprep.subr.mxu0 0.0
  %1051 = vmatpush1.msra.mxu0 0.0
  %1052 = vmatprep.subr.mxu0 0.0
  %1053 = vmatpush1.msra.mxu0 0.0
  %1054 = vmatprep.subr.mxu0 0.0
  %1055 = vmatpush1.msra.mxu0 0.0
  %1056 = vmatprep.subr.mxu0 0.0
  %1057 = vmatpush1.msra.mxu0 0.0
  %1058 = vmatprep.subr.mxu0 0.0
  %1059 = vmatpush1.msra.mxu0 0.0
  %1060 = vmatprep.subr.mxu0 0.0
  %1061 = vmatpush1.msra.mxu0 0.0
  %1062 = vmatprep.subr.mxu0 0.0
  %1063 = vmatpush1.msra.mxu0 0.0
  %1064 = vmatprep.subr.mxu0 0.0
  %1065 = vmatpush1.msra.mxu0 0.0
  %1066 = vmatprep.subr.mxu0 0.0
  %1067 = vmatpush1.msra.mxu0 0.0
  %1068 = vmatprep.subr.mxu0 0.0
  %1069 = vmatpush1.msra.mxu0 0.0
  %1070 = vmatprep.subr.mxu0 0.0
  %1071 = vmatpush1.msra.mxu0 0.0
  %1072 = vmatprep.subr.mxu0 0.0
  %1073 = vmatpush1.msra.mxu0 0.0
  %1074 = vmatprep.subr.mxu0 0.0
  %1075 = vmatpush1.msra.mxu0 0.0
  %1076 = vmatprep.subr.mxu0 0.0
  %1077 = vmatpush1.msra.mxu0 0.0
  %1078 = vmatprep.subr.mxu0 0.0
  %1079 = vmatpush1.msra.mxu0 0.0
  %1080 = vmatprep.subr.mxu0 0.0
  %1081 = vmatpush1.msra.mxu0 0.0
  %1082 = vmatprep.subr.mxu0 0.0
  %1083 = vmatpush1.msra.mxu0 0.0
  %1084 = vmatprep.subr.mxu0 0.0
  %1085 = vmatpush1.msra.mxu0 0.0
  %1086 = vmatprep.subr.mxu0 0.0
  %1087 = vmatpush1.msra.mxu0 0.0
  %1088 = vmatprep.subr.mxu0 0.0
  %1089 = vmatpush1.msra.mxu0 0.0
  %1090 = vmatprep.subr.mxu0 0.0
  %1091 = vmatpush1.msra.mxu0 0.0
  %1092 = vmatprep.subr.mxu0 0.0
  %1093 = vmatpush1.msra.mxu0 0.0
  %1094 = vmatprep.subr.mxu0 0.0
  %1095 = vmatpush1.msra.mxu0 0.0
  %1096 = vmatprep.subr.mxu0 0.0
  %1097 = vmatpush1.msra.mxu0 0.0
  %1098 = vmatprep.subr.mxu0 0.0
  %1099 = vmatpush1.msra.mxu0 0.0
  %1100 = vmatprep.subr.mxu0 0.0
  %1101 = vmatpush1.msra.mxu0 0.0
  %1102 = vmatprep.subr.mxu0 0.0
  %1103 = vmatpush1.msra.mxu0 0.0
  %1104 = vmatprep.subr.mxu0 0.0
  %1105 = vmatpush1.msra.mxu0 0.0
  %1106 = vmatprep.subr.mxu0 0.0
  %1107 = vmatpush1.msra.mxu0 0.0
  %1108 = vmatprep.subr.mxu0 0.0
  %1109 = vmatpush1.msra.mxu0 0.0
  %1110 = vmatprep.mubr.f32.mxu0 0.0
  %1111 = vmatmul.mubr.f32.gmra.mrb[0].mxu0 %v1041
  %v1112 = vpop.f32.mrb[0].mxu0
  %v1113 = vadd.f32 0.0, %v1112
  %v1114 = vpop.f32.mrb[0].mxu0
  %1115 = vdwg.mxu0
  %v1117 = vsel %vm714, %v807, 0
  %v1120 = vsel %vm814, %v50, 0
  %1122 = vmatprep.subr.mxu0 0.0
  %1123 = vmatpush1.msra.mxu0 %v49
  %1124 = vmatprep.subr.mxu0 0.0
  %1125 = vmatpush1.msra.mxu0 %v1120
  %1126 = vmatprep.subr.mxu0 0.0
  %1127 = vmatpush1.msra.mxu0 0.0
  %1128 = vmatprep.subr.mxu0 0.0
  %1129 = vmatpush1.msra.mxu0 0.0
  %1130 = vmatprep.subr.mxu0 0.0
  %1131 = vmatpush1.msra.mxu0 0.0
  %1132 = vmatprep.subr.mxu0 0.0
  %1133 = vmatpush1.msra.mxu0 0.0
  %1134 = vmatprep.subr.mxu0 0.0
  %1135 = vmatpush1.msra.mxu0 0.0
  %1136 = vmatprep.subr.mxu0 0.0
  %1137 = vmatpush1.msra.mxu0 0.0
  %1138 = vmatprep.subr.mxu0 0.0
  %1139 = vmatpush1.msra.mxu0 0.0
  %1140 = vmatprep.subr.mxu0 0.0
  %1141 = vmatpush1.msra.mxu0 0.0
  %1142 = vmatprep.subr.mxu0 0.0
  %1143 = vmatpush1.msra.mxu0 0.0
  %1144 = vmatprep.subr.mxu0 0.0
  %1145 = vmatpush1.msra.mxu0 0.0
  %1146 = vmatprep.subr.mxu0 0.0
  %1147 = vmatpush1.msra.mxu0 0.0
  %1148 = vmatprep.subr.mxu0 0.0
  %1149 = vmatpush1.msra.mxu0 0.0
  %1150 = vmatprep.subr.mxu0 0.0
  %1151 = vmatpush1.msra.mxu0 0.0
  %1152 = vmatprep.subr.mxu0 0.0
  %1153 = vmatpush1.msra.mxu0 0.0
  %1154 = vmatprep.subr.mxu0 0.0
  %1155 = vmatpush1.msra.mxu0 0.0
  %1156 = vmatprep.subr.mxu0 0.0
  %1157 = vmatpush1.msra.mxu0 0.0
  %1158 = vmatprep.subr.mxu0 0.0
  %1159 = vmatpush1.msra.mxu0 0.0
  %1160 = vmatprep.subr.mxu0 0.0
  %1161 = vmatpush1.msra.mxu0 0.0
  %1162 = vmatprep.subr.mxu0 0.0
  %1163 = vmatpush1.msra.mxu0 0.0
  %1164 = vmatprep.subr.mxu0 0.0
  %1165 = vmatpush1.msra.mxu0 0.0
  %1166 = vmatprep.subr.mxu0 0.0
  %1167 = vmatpush1.msra.mxu0 0.0
  %1168 = vmatprep.subr.mxu0 0.0
  %1169 = vmatpush1.msra.mxu0 0.0
  %1170 = vmatprep.subr.mxu0 0.0
  %1171 = vmatpush1.msra.mxu0 0.0
  %1172 = vmatprep.subr.mxu0 0.0
  %1173 = vmatpush1.msra.mxu0 0.0
  %1174 = vmatprep.subr.mxu0 0.0
  %1175 = vmatpush1.msra.mxu0 0.0
  %1176 = vmatprep.subr.mxu0 0.0
  %1177 = vmatpush1.msra.mxu0 0.0
  %1178 = vmatprep.subr.mxu0 0.0
  %1179 = vmatpush1.msra.mxu0 0.0
  %1180 = vmatprep.subr.mxu0 0.0
  %1181 = vmatpush1.msra.mxu0 0.0
  %1182 = vmatprep.subr.mxu0 0.0
  %1183 = vmatpush1.msra.mxu0 0.0
  %1184 = vmatprep.subr.mxu0 0.0
  %1185 = vmatpush1.msra.mxu0 0.0
  %1186 = vmatprep.mubr.f32.mxu0 0.0
  %1187 = vmatmul.mubr.f32.gmra.mrb[0].mxu0 %v1117
  %v1188 = vpop.f32.mrb[0].mxu0
  %v1189 = vadd.f32 0.0, %v1188
  %v1190 = vpop.f32.mrb[0].mxu0
  %1191 = vdwg.mxu0
  %v1193 = vsel %vm714, %v808, 0
  %v1196 = vsel %vm814, %v52, 0
  %1198 = vmatprep.subr.mxu0 0.0
  %1199 = vmatpush1.msra.mxu0 %v51
  %1200 = vmatprep.subr.mxu0 0.0
  %1201 = vmatpush1.msra.mxu0 %v1196
  %1202 = vmatprep.subr.mxu0 0.0
  %1203 = vmatpush1.msra.mxu0 0.0
  %1204 = vmatprep.subr.mxu0 0.0
  %1205 = vmatpush1.msra.mxu0 0.0
  %1206 = vmatprep.subr.mxu0 0.0
  %1207 = vmatpush1.msra.mxu0 0.0
  %1208 = vmatprep.subr.mxu0 0.0
  %1209 = vmatpush1.msra.mxu0 0.0
  %1210 = vmatprep.subr.mxu0 0.0
  %1211 = vmatpush1.msra.mxu0 0.0
  %1212 = vmatprep.subr.mxu0 0.0
  %1213 = vmatpush1.msra.mxu0 0.0
  %1214 = vmatprep.subr.mxu0 0.0
  %1215 = vmatpush1.msra.mxu0 0.0
  %1216 = vmatprep.subr.mxu0 0.0
  %1217 = vmatpush1.msra.mxu0 0.0
  %1218 = vmatprep.subr.mxu0 0.0
  %1219 = vmatpush1.msra.mxu0 0.0
  %1220 = vmatprep.subr.mxu0 0.0
  %1221 = vmatpush1.msra.mxu0 0.0
  %1222 = vmatprep.subr.mxu0 0.0
  %1223 = vmatpush1.msra.mxu0 0.0
  %1224 = vmatprep.subr.mxu0 0.0
  %1225 = vmatpush1.msra.mxu0 0.0
  %1226 = vmatprep.subr.mxu0 0.0
  %1227 = vmatpush1.msra.mxu0 0.0
  %1228 = vmatprep.subr.mxu0 0.0
  %1229 = vmatpush1.msra.mxu0 0.0
  %1230 = vmatprep.subr.mxu0 0.0
  %1231 = vmatpush1.msra.mxu0 0.0
  %1232 = vmatprep.subr.mxu0 0.0
  %1233 = vmatpush1.msra.mxu0 0.0
  %1234 = vmatprep.subr.mxu0 0.0
  %1235 = vmatpush1.msra.mxu0 0.0
  %1236 = vmatprep.subr.mxu0 0.0
  %1237 = vmatpush1.msra.mxu0 0.0
  %1238 = vmatprep.subr.mxu0 0.0
  %1239 = vmatpush1.msra.mxu0 0.0
  %1240 = vmatprep.subr.mxu0 0.0
  %1241 = vmatpush1.msra.mxu0 0.0
  %1242 = vmatprep.subr.mxu0 0.0
  %1243 = vmatpush1.msra.mxu0 0.0
  %1244 = vmatprep.subr.mxu0 0.0
  %1245 = vmatpush1.msra.mxu0 0.0
  %1246 = vmatprep.subr.mxu0 0.0
  %1247 = vmatpush1.msra.mxu0 0.0
  %1248 = vmatprep.subr.mxu0 0.0
  %1249 = vmatpush1.msra.mxu0 0.0
  %1250 = vmatprep.subr.mxu0 0.0
  %1251 = vmatpush1.msra.mxu0 0.0
  %1252 = vmatprep.subr.mxu0 0.0
  %1253 = vmatpush1.msra.mxu0 0.0
  %1254 = vmatprep.subr.mxu0 0.0
  %1255 = vmatpush1.msra.mxu0 0.0
  %1256 = vmatprep.subr.mxu0 0.0
  %1257 = vmatpush1.msra.mxu0 0.0
  %1258 = vmatprep.subr.mxu0 0.0
  %1259 = vmatpush1.msra.mxu0 0.0
  %1260 = vmatprep.subr.mxu0 0.0
  %1261 = vmatpush1.msra.mxu0 0.0
  %1262 = vmatprep.mubr.f32.mxu0 0.0
  %1263 = vmatmul.mubr.f32.gmra.mrb[0].mxu0 %v1193
  %v1264 = vpop.f32.mrb[0].mxu0
  %v1265 = vadd.f32 0.0, %v1264
  %v1266 = vpop.f32.mrb[0].mxu0
  %1267 = vdwg.mxu0
  %v1269 = vsel %vm714, %v809, 0
  %v1272 = vsel %vm814, %v54, 0
  %1274 = vmatprep.subr.mxu0 0.0
  %1275 = vmatpush1.msra.mxu0 %v53
  %1276 = vmatprep.subr.mxu0 0.0
  %1277 = vmatpush1.msra.mxu0 %v1272
  %1278 = vmatprep.subr.mxu0 0.0
  %1279 = vmatpush1.msra.mxu0 0.0
  %1280 = vmatprep.subr.mxu0 0.0
  %1281 = vmatpush1.msra.mxu0 0.0
  %1282 = vmatprep.subr.mxu0 0.0
  %1283 = vmatpush1.msra.mxu0 0.0
  %1284 = vmatprep.subr.mxu0 0.0
  %1285 = vmatpush1.msra.mxu0 0.0
  %1286 = vmatprep.subr.mxu0 0.0
  %1287 = vmatpush1.msra.mxu0 0.0
  %1288 = vmatprep.subr.mxu0 0.0
  %1289 = vmatpush1.msra.mxu0 0.0
  %1290 = vmatprep.subr.mxu0 0.0
  %1291 = vmatpush1.msra.mxu0 0.0
  %1292 = vmatprep.subr.mxu0 0.0
  %1293 = vmatpush1.msra.mxu0 0.0
  %1294 = vmatprep.subr.mxu0 0.0
  %1295 = vmatpush1.msra.mxu0 0.0
  %1296 = vmatprep.subr.mxu0 0.0
  %1297 = vmatpush1.msra.mxu0 0.0
  %1298 = vmatprep.subr.mxu0 0.0
  %1299 = vmatpush1.msra.mxu0 0.0
  %1300 = vmatprep.subr.mxu0 0.0
  %1301 = vmatpush1.msra.mxu0 0.0
  %1302 = vmatprep.subr.mxu0 0.0
  %1303 = vmatpush1.msra.mxu0 0.0
  %1304 = vmatprep.subr.mxu0 0.0
  %1305 = vmatpush1.msra.mxu0 0.0
  %1306 = vmatprep.subr.mxu0 0.0
  %1307 = vmatpush1.msra.mxu0 0.0
  %1308 = vmatprep.subr.mxu0 0.0
  %1309 = vmatpush1.msra.mxu0 0.0
  %1310 = vmatprep.subr.mxu0 0.0
  %1311 = vmatpush1.msra.mxu0 0.0
  %1312 = vmatprep.subr.mxu0 0.0
  %1313 = vmatpush1.msra.mxu0 0.0
  %1314 = vmatprep.subr.mxu0 0.0
  %1315 = vmatpush1.msra.mxu0 0.0
  %1316 = vmatprep.subr.mxu0 0.0
  %1317 = vmatpush1.msra.mxu0 0.0
  %1318 = vmatprep.subr.mxu0 0.0
  %1319 = vmatpush1.msra.mxu0 0.0
  %1320 = vmatprep.subr.mxu0 0.0
  %1321 = vmatpush1.msra.mxu0 0.0
  %1322 = vmatprep.subr.mxu0 0.0
  %1323 = vmatpush1.msra.mxu0 0.0
  %1324 = vmatprep.subr.mxu0 0.0
  %1325 = vmatpush1.msra.mxu0 0.0
  %1326 = vmatprep.subr.mxu0 0.0
  %1327 = vmatpush1.msra.mxu0 0.0
  %1328 = vmatprep.subr.mxu0 0.0
  %1329 = vmatpush1.msra.mxu0 0.0
  %1330 = vmatprep.subr.mxu0 0.0
  %1331 = vmatpush1.msra.mxu0 0.0
  %1332 = vmatprep.subr.mxu0 0.0
  %1333 = vmatpush1.msra.mxu0 0.0
  %1334 = vmatprep.subr.mxu0 0.0
  %1335 = vmatpush1.msra.mxu0 0.0
  %1336 = vmatprep.subr.mxu0 0.0
  %1337 = vmatpush1.msra.mxu0 0.0
  %1338 = vmatprep.mubr.f32.mxu0 0.0
  %1339 = vmatmul.mubr.f32.gmra.mrb[0].mxu0 %v1269
  %v1340 = vpop.f32.mrb[0].mxu0
  %v1341 = vadd.f32 0.0, %v1340
  %v1342 = vpop.f32.mrb[0].mxu0
  %1343 = vdwg.mxu0
  %v1345 = vsel %vm714, %v810, 0
  %v1348 = vsel %vm814, %v56, 0
  %1350 = vmatprep.subr.mxu0 0.0
  %1351 = vmatpush1.msra.mxu0 %v55
  %1352 = vmatprep.subr.mxu0 0.0
  %1353 = vmatpush1.msra.mxu0 %v1348
  %1354 = vmatprep.subr.mxu0 0.0
  %1355 = vmatpush1.msra.mxu0 0.0
  %1356 = vmatprep.subr.mxu0 0.0
  %1357 = vmatpush1.msra.mxu0 0.0
  %1358 = vmatprep.subr.mxu0 0.0
  %1359 = vmatpush1.msra.mxu0 0.0
  %1360 = vmatprep.subr.mxu0 0.0
  %1361 = vmatpush1.msra.mxu0 0.0
  %1362 = vmatprep.subr.mxu0 0.0
  %1363 = vmatpush1.msra.mxu0 0.0
  %1364 = vmatprep.subr.mxu0 0.0
  %1365 = vmatpush1.msra.mxu0 0.0
  %1366 = vmatprep.subr.mxu0 0.0
  %1367 = vmatpush1.msra.mxu0 0.0
  %1368 = vmatprep.subr.mxu0 0.0
  %1369 = vmatpush1.msra.mxu0 0.0
  %1370 = vmatprep.subr.mxu0 0.0
  %1371 = vmatpush1.msra.mxu0 0.0
  %1372 = vmatprep.subr.mxu0 0.0
  %1373 = vmatpush1.msra.mxu0 0.0
  %1374 = vmatprep.subr.mxu0 0.0
  %1375 = vmatpush1.msra.mxu0 0.0
  %1376 = vmatprep.subr.mxu0 0.0
  %1377 = vmatpush1.msra.mxu0 0.0
  %1378 = vmatprep.subr.mxu0 0.0
  %1379 = vmatpush1.msra.mxu0 0.0
  %1380 = vmatprep.subr.mxu0 0.0
  %1381 = vmatpush1.msra.mxu0 0.0
  %1382 = vmatprep.subr.mxu0 0.0
  %1383 = vmatpush1.msra.mxu0 0.0
  %1384 = vmatprep.subr.mxu0 0.0
  %1385 = vmatpush1.msra.mxu0 0.0
  %1386 = vmatprep.subr.mxu0 0.0
  %1387 = vmatpush1.msra.mxu0 0.0
  %1388 = vmatprep.subr.mxu0 0.0
  %1389 = vmatpush1.msra.mxu0 0.0
  %1390 = vmatprep.subr.mxu0 0.0
  %1391 = vmatpush1.msra.mxu0 0.0
  %1392 = vmatprep.subr.mxu0 0.0
  %1393 = vmatpush1.msra.mxu0 0.0
  %1394 = vmatprep.subr.mxu0 0.0
  %1395 = vmatpush1.msra.mxu0 0.0
  %1396 = vmatprep.subr.mxu0 0.0
  %1397 = vmatpush1.msra.mxu0 0.0
  %1398 = vmatprep.subr.mxu0 0.0
  %1399 = vmatpush1.msra.mxu0 0.0
  %1400 = vmatprep.subr.mxu0 0.0
  %1401 = vmatpush1.msra.mxu0 0.0
  %1402 = vmatprep.subr.mxu0 0.0
  %1403 = vmatpush1.msra.mxu0 0.0
  %1404 = vmatprep.subr.mxu0 0.0
  %1405 = vmatpush1.msra.mxu0 0.0
  %1406 = vmatprep.subr.mxu0 0.0
  %1407 = vmatpush1.msra.mxu0 0.0
  %1408 = vmatprep.subr.mxu0 0.0
  %1409 = vmatpush1.msra.mxu0 0.0
  %1410 = vmatprep.subr.mxu0 0.0
  %1411 = vmatpush1.msra.mxu0 0.0
  %1412 = vmatprep.subr.mxu0 0.0
  %1413 = vmatpush1.msra.mxu0 0.0
  %1414 = vmatprep.mubr.f32.mxu0 0.0
  %1415 = vmatmul.mubr.f32.gmra.mrb[0].mxu0 %v1345
  %v1416 = vpop.f32.mrb[0].mxu0
  %v1417 = vadd.f32 0.0, %v1416
  %v1418 = vpop.f32.mrb[0].mxu0
  %1419 = vdwg.mxu0
  %1420 = vst.msk [vmem:[%s3] sm:$0xff] %vm57, %v885
  %1421 = vst.msk [vmem:[%s3 + $0x8] sm:$0xff] %vm57, %v961
  %1422 = vst.msk [vmem:[%s3 + $0x10] sm:$0xff] %vm57, %v1037
  %1423 = vst.msk [vmem:[%s3 + $0x18] sm:$0xff] %vm57, %v1113
  %1424 = vst.msk [vmem:[%s3 + $0x20] sm:$0xff] %vm57, %v1189
  %1425 = vst.msk [vmem:[%s3 + $0x28] sm:$0xff] %vm57, %v1265
  %1426 = vst.msk [vmem:[%s3 + $0x30] sm:$0xff] %vm57, %v1341
  %1427 = vst.msk [vmem:[%s3 + $0x38] sm:$0xff] %vm57, %v1417
  // Predicated region
  $region14: #{_lambda_.22} parent=0 // pred_check
    _
  $region15: #{_lambda_.22} parent=0 // pred_check_branch
    %1429 = sbr.rel (0) target = $region17
  $region16: #{_lambda_.22} parent=0 // pred_region
    _
  $region17: #{_lambda_.22} parent=0 // pred_fallthru
    _
  // Predicated region
  $region18: #{_lambda_.22} parent=0 // pred_check
    _
  $region19: #{_lambda_.22} parent=0 // pred_check_branch
    %1431 = sbr.rel (0) target = $region21
  $region20: #{_lambda_.22} parent=0 // pred_region
    _
  $region21: #{_lambda_.22} parent=0 // pred_fallthru
    _

// kernel: _lambda_.23
$region0: #{_lambda_.23}
  #allocation0 [shape = 'u32[]', space=smem, size = 0x4, offset = 0x4, fixed_abs, tag = 'smem constant byte address 0x4 - core index']
  #allocation1 [shape = 'u32[144,128]{1,0:T(1,128)}', space=vmem, size = 0x12000, scoped, tag = 'internal scratch']
  %s0 = inlined_call_operand.vmem [shape: f32[16,256], index: 0, kind: input, shape index: {}]
  %s1 = inlined_call_operand.vmem [shape: f32[256,256], index: 1, kind: input, shape index: {}]
  %s2 = inlined_call_operand.vmem [shape: f32[1,256], index: 2, kind: input, shape index: {}]
  %s3 = inlined_call_operand.vmem [shape: f32[1,256], index: 3, kind: input, shape index: {}]
  %s4 = inlined_call_operand.vmem [shape: f32[1,256], index: 4, kind: input, shape index: {}]
  %s5 = inlined_call_operand.vmem [shape: f32[1,256], index: 5, kind: input, shape index: {}]
  %s6 = inlined_call_operand.vmem [shape: f32[16,256], index: 6, kind: output, shape index: {}]
  %s7 = sld [smem:[#allocation0]]
  $region34: #{_lambda_.23} parent=0
    _
  %s9 = ssub.s32 1, %s7
  %s10 = scalar_select 0, %s9, %s7
  // Predicated region
  $region2: #{_lambda_.23} parent=0 // pred_check
    _
  $region3: #{_lambda_.23} parent=0 // pred_check_branch
    %12 = sbr.rel (0) target = $region5
  $region4: #{_lambda_.23} parent=0 // pred_region
    _
  $region5: #{_lambda_.23} parent=0 // pred_fallthru
    _
  // Predicated region
  $region6: #{_lambda_.23} parent=0 // pred_check
    _
  $region7: #{_lambda_.23} parent=0 // pred_check_branch
    %14 = sbr.rel (0) target = $region9
  $region8: #{_lambda_.23} parent=0 // pred_region
    _
  $region9: #{_lambda_.23} parent=0 // pred_fallthru
    _
  // Predicated region
  $region10: #{_lambda_.23} parent=0 // pred_check
    _
  $region11: #{_lambda_.23} parent=0 // pred_check_branch
    %16 = sbr.rel (0) target = $region13
  $region12: #{_lambda_.23} parent=0 // pred_region
    _
  $region13: #{_lambda_.23} parent=0 // pred_fallthru
    _
  // Predicated region
  $region14: #{_lambda_.23} parent=0 // pred_check
    _
  $region15: #{_lambda_.23} parent=0 // pred_check_branch
    %18 = sbr.rel (0) target = $region17
  $region16: #{_lambda_.23} parent=0 // pred_region
    _
  $region17: #{_lambda_.23} parent=0 // pred_fallthru
    _
  // Predicated region
  $region18: #{_lambda_.23} parent=0 // pred_check
    _
  $region19: #{_lambda_.23} parent=0 // pred_check_branch
    %20 = sbr.rel (0) target = $region21
  $region20: #{_lambda_.23} parent=0 // pred_region
    _
  $region21: #{_lambda_.23} parent=0 // pred_fallthru
    _
  // Predicated region
  $region22: #{_lambda_.23} parent=0 // pred_check
    _
  $region23: #{_lambda_.23} parent=0 // pred_check_branch
    %22 = sbr.rel (0) target = $region25
  $region24: #{_lambda_.23} parent=0 // pred_region
    _
  $region25: #{_lambda_.23} parent=0 // pred_fallthru
    _
  %v23 = vld [vmem:[%s0] sm:$0xff]
  %v24 = vld [vmem:[%s0 + $0x8] sm:$0xff]
  %v25 = vld [vmem:[%s0 + $0x10] sm:$0xff]
  %v26 = vld [vmem:[%s0 + $0x18] sm:$0xff]
  %v27 = vld [vmem:[%s1] sm:$0xff]
  %v28 = vld [vmem:[%s1 + $0x8] sm:$0xff]
  %v29 = vld [vmem:[%s1 + $0x10] sm:$0xff]
  %v30 = vld [vmem:[%s1 + $0x18] sm:$0xff]
  %v31 = vld [vmem:[%s1 + $0x20] sm:$0xff]
  %v32 = vld [vmem:[%s1 + $0x28] sm:$0xff]
  %v33 = vld [vmem:[%s1 + $0x30] sm:$0xff]
  %v34 = vld [vmem:[%s1 + $0x38] sm:$0xff]
  %v35 = vld [vmem:[%s1 + $0x40] sm:$0xff]
  %v36 = vld [vmem:[%s1 + $0x48] sm:$0xff]
  %v37 = vld [vmem:[%s1 + $0x50] sm:$0xff]
  %v38 = vld [vmem:[%s1 + $0x58] sm:$0xff]
  %v39 = vld [vmem:[%s1 + $0x60] sm:$0xff]
  %v40 = vld [vmem:[%s1 + $0x68] sm:$0xff]
  %v41 = vld [vmem:[%s1 + $0x70] sm:$0xff]
  %v42 = vld [vmem:[%s1 + $0x78] sm:$0xff]
  %v43 = vld [vmem:[%s1 + $0x80] sm:$0xff]
  %v44 = vld [vmem:[%s1 + $0x88] sm:$0xff]
  %v45 = vld [vmem:[%s1 + $0x90] sm:$0xff]
  %v46 = vld [vmem:[%s1 + $0x98] sm:$0xff]
  %v47 = vld [vmem:[%s1 + $0xa0] sm:$0xff]
  %v48 = vld [vmem:[%s1 + $0xa8] sm:$0xff]
  %v49 = vld [vmem:[%s1 + $0xb0] sm:$0xff]
  %v50 = vld [vmem:[%s1 + $0xb8] sm:$0xff]
  %v51 = vld [vmem:[%s1 + $0xc0] sm:$0xff]
  %v52 = vld [vmem:[%s1 + $0xc8] sm:$0xff]
  %v53 = vld [vmem:[%s1 + $0xd0] sm:$0xff]
  %v54 = vld [vmem:[%s1 + $0xd8] sm:$0xff]
  %v55 = vld [vmem:[%s1 + $0xe0] sm:$0xff]
  %v56 = vld [vmem:[%s1 + $0xe8] sm:$0xff]
  %v57 = vld [vmem:[%s1 + $0xf0] sm:$0xff]
  %v58 = vld [vmem:[%s1 + $0xf8] sm:$0xff]
  %v59 = vld [vmem:[%s1 + $0x100] sm:$0xff]
  %v60 = vld [vmem:[%s1 + $0x108] sm:$0xff]
  %v61 = vld [vmem:[%s1 + $0x110] sm:$0xff]
  %v62 = vld [vmem:[%s1 + $0x118] sm:$0xff]
  %v63 = vld [vmem:[%s1 + $0x120] sm:$0xff]
  %v64 = vld [vmem:[%s1 + $0x128] sm:$0xff]
  %v65 = vld [vmem:[%s1 + $0x130] sm:$0xff]
  %v66 = vld [vmem:[%s1 + $0x138] sm:$0xff]
  %v67 = vld [vmem:[%s1 + $0x140] sm:$0xff]
  %v68 = vld [vmem:[%s1 + $0x148] sm:$0xff]
  %v69 = vld [vmem:[%s1 + $0x150] sm:$0xff]
  %v70 = vld [vmem:[%s1 + $0x158] sm:$0xff]
  %v71 = vld [vmem:[%s1 + $0x160] sm:$0xff]
  %v72 = vld [vmem:[%s1 + $0x168] sm:$0xff]
  %v73 = vld [vmem:[%s1 + $0x170] sm:$0xff]
  %v74 = vld [vmem:[%s1 + $0x178] sm:$0xff]
  %v75 = vld [vmem:[%s1 + $0x180] sm:$0xff]
  %v76 = vld [vmem:[%s1 + $0x188] sm:$0xff]
  %v77 = vld [vmem:[%s1 + $0x190] sm:$0xff]
  %v78 = vld [vmem:[%s1 + $0x198] sm:$0xff]
  %v79 = vld [vmem:[%s1 + $0x1a0] sm:$0xff]
  %v80 = vld [vmem:[%s1 + $0x1a8] sm:$0xff]
  %v81 = vld [vmem:[%s1 + $0x1b0] sm:$0xff]
  %v82 = vld [vmem:[%s1 + $0x1b8] sm:$0xff]
  %v83 = vld [vmem:[%s1 + $0x1c0] sm:$0xff]
  %v84 = vld [vmem:[%s1 + $0x1c8] sm:$0xff]
  %v85 = vld [vmem:[%s1 + $0x1d0] sm:$0xff]
  %v86 = vld [vmem:[%s1 + $0x1d8] sm:$0xff]
  %v87 = vld [vmem:[%s1 + $0x1e0] sm:$0xff]
  %v88 = vld [vmem:[%s1 + $0x1e8] sm:$0xff]
  %v89 = vld [vmem:[%s1 + $0x1f0] sm:$0xff]
  %v90 = vld [vmem:[%s1 + $0x1f8] sm:$0xff]
  %v91 = vld [vmem:[%s2] sm:$0x3]
  %v93 = vlaneseq
  %v94 = vshrl.u32 %v93, 7
  %v95 = vsub.s32 0, %v94
  %v96 = vrot.slane %v91, %v95
  %v97 = vlaneseq
  %v98 = vshrl.u32 %v97, 7
  %v99 = vsub.s32 1, %v98
  %v100 = vrot.slane %v91, %v99
  %103 = vmatprep.subr.mxu0 %v28
  %104 = vmatpush1.msra.mxu0 %v27
  %105 = vmatprep.subr.mxu0 %v30
  %106 = vmatpush1.msra.mxu0 %v29
  %107 = vmatprep.subr.mxu0 %v32
  %108 = vmatpush1.msra.mxu0 %v31
  %109 = vmatprep.subr.mxu0 %v34
  %110 = vmatpush1.msra.mxu0 %v33
  %111 = vmatprep.subr.mxu0 %v36
  %112 = vmatpush1.msra.mxu0 %v35
  %113 = vmatprep.subr.mxu0 %v38
  %114 = vmatpush1.msra.mxu0 %v37
  %115 = vmatprep.subr.mxu0 %v40
  %116 = vmatpush1.msra.mxu0 %v39
  %117 = vmatprep.subr.mxu0 %v42
  %118 = vmatpush1.msra.mxu0 %v41
  %119 = vmatprep.subr.mxu0 %v44
  %120 = vmatpush1.msra.mxu0 %v43
  %121 = vmatprep.subr.mxu0 %v46
  %122 = vmatpush1.msra.mxu0 %v45
  %123 = vmatprep.subr.mxu0 %v48
  %124 = vmatpush1.msra.mxu0 %v47
  %125 = vmatprep.subr.mxu0 %v50
  %126 = vmatpush1.msra.mxu0 %v49
  %127 = vmatprep.subr.mxu0 %v52
  %128 = vmatpush1.msra.mxu0 %v51
  %129 = vmatprep.subr.mxu0 %v54
  %130 = vmatpush1.msra.mxu0 %v53
  %131 = vmatprep.subr.mxu0 %v56
  %132 = vmatpush1.msra.mxu0 %v55
  %133 = vmatprep.subr.mxu0 %v58
  %134 = vmatpush1.msra.mxu0 %v57
  %135 = vmatprep.subr.mxu0 %v60
  %136 = vmatpush1.msra.mxu0 %v59
  %137 = vmatprep.subr.mxu0 %v62
  %138 = vmatpush1.msra.mxu0 %v61
  %139 = vmatprep.subr.mxu0 %v64
  %140 = vmatpush1.msra.mxu0 %v63
  %141 = vmatprep.subr.mxu0 %v66
  %142 = vmatpush1.msra.mxu0 %v65
  %143 = vmatprep.subr.mxu0 %v68
  %144 = vmatpush1.msra.mxu0 %v67
  %145 = vmatprep.subr.mxu0 %v70
  %146 = vmatpush1.msra.mxu0 %v69
  %147 = vmatprep.subr.mxu0 %v72
  %148 = vmatpush1.msra.mxu0 %v71
  %149 = vmatprep.subr.mxu0 %v74
  %150 = vmatpush1.msra.mxu0 %v73
  %151 = vmatprep.subr.mxu0 %v76
  %152 = vmatpush1.msra.mxu0 %v75
  %153 = vmatprep.subr.mxu0 %v78
  %154 = vmatpush1.msra.mxu0 %v77
  %155 = vmatprep.subr.mxu0 %v80
  %156 = vmatpush1.msra.mxu0 %v79
  %157 = vmatprep.subr.mxu0 %v82
  %158 = vmatpush1.msra.mxu0 %v81
  %159 = vmatprep.subr.mxu0 %v84
  %160 = vmatpush1.msra.mxu0 %v83
  %161 = vmatprep.subr.mxu0 %v86
  %162 = vmatpush1.msra.mxu0 %v85
  %163 = vmatprep.subr.mxu0 %v88
  %164 = vmatpush1.msra.mxu0 %v87
  %165 = vmatprep.subr.mxu0 %v90
  %166 = vmatpush1.msra.mxu0 %v89
  %167 = vmatprep.mubr.f32.mxu0 %v24
  %168 = vmatmul.mubr.f32.gmra.mrb[0].mxu0 %v23
  %v169 = vpop.f32.mrb[0].mxu0
  %v170 = vadd.f32 %v96, %v169
  %v171 = vpop.f32.mrb[0].mxu0
  %v172 = vadd.f32 %v100, %v171
  %173 = vmatprep.mubr.f32.mxu0 %v26
  %174 = vmatmul.mubr.f32.gmra.mrb[0].mxu0 %v25
  %v175 = vpop.f32.mrb[0].mxu0
  %v176 = vadd.f32 %v96, %v175
  %v177 = vpop.f32.mrb[0].mxu0
  %v178 = vadd.f32 %v100, %v177
  %179 = vdwg.mxu0
  %vm180 = vcmp.ge.f32.partialorder %v170, 0.0
  %vm181 = vcmp.ge.f32.partialorder %v172, 0.0
  %vm182 = vcmp.ge.f32.partialorder %v176, 0.0
  %vm183 = vcmp.ge.f32.partialorder %v178, 0.0
  %v184 = vld [vmem:[%s3] sm:$0x3]
  %v186 = vlaneseq
  %v187 = vshrl.u32 %v186, 7
  %v188 = vsub.s32 0, %v187
  %v189 = vrot.slane %v184, %v188
  %v190 = vlaneseq
  %v191 = vshrl.u32 %v190, 7
  %v192 = vsub.s32 1, %v191
  %v193 = vrot.slane %v184, %v192
  %v196 = vmul.f32 %v189, %v170
  %v197 = vmul.f32 %v193, %v172
  %v198 = vmul.f32 %v189, %v176
  %v199 = vmul.f32 %v193, %v178
  %v200 = vsel %vm180, %v170, %v196
  %v201 = vsel %vm181, %v172, %v197
  %v202 = vsel %vm182, %v176, %v198
  %v203 = vsel %vm183, %v178, %v199
  %v204 = vadd.f32 %v200, %v201
  %205 = vadd.xlane.f32.xlu0 %v204
  %v206 = vpop.xlane.xlu0 %205
  %v207 = vadd.f32 %v202, %v203
  %208 = vadd.xlane.f32.xlu0 %v207
  %v209 = vpop.xlane.xlu0 %208
  %v210 = vrcp.pop 256.0
  %v211 = vmul.f32 %v206, %v210
  %v212 = vmul.f32 %v209, %v210
  %v213 = vsub.f32 %v200, %v211
  %v214 = vsub.f32 %v201, %v211
  %v215 = vsub.f32 %v202, %v212
  %v216 = vsub.f32 %v203, %v212
  %v217 = vmul.f32 %v213, %v213
  %v218 = vmul.f32 %v214, %v214
  %v219 = vmul.f32 %v215, %v215
  %v220 = vmul.f32 %v216, %v216
  %v221 = vadd.f32 %v217, %v218
  %222 = vadd.xlane.f32.xlu0 %v221
  %v223 = vpop.xlane.xlu0 %222
  %v224 = vadd.f32 %v219, %v220
  %225 = vadd.xlane.f32.xlu0 %v224
  %v226 = vpop.xlane.xlu0 %225
  %v227 = vmul.f32 %v223, %v210
  %v228 = vmul.f32 %v226, %v210
  %v229 = vadd.f32 %v227, 1e-05
  %v230 = vadd.f32 %v228, 1e-05
  %v231 = vrsqrt.pop %v229
  %v232 = vrsqrt.pop %v230
  %v233 = vmul.f32 %v213, %v231
  %v234 = vmul.f32 %v214, %v231
  %v235 = vmul.f32 %v215, %v232
  %v236 = vmul.f32 %v216, %v232
  %v237 = vld [vmem:[%s4] sm:$0x3]
  %v239 = vlaneseq
  %v240 = vshrl.u32 %v239, 7
  %v241 = vsub.s32 0, %v240
  %v242 = vrot.slane %v237, %v241
  %v243 = vlaneseq
  %v244 = vshrl.u32 %v243, 7
  %v245 = vsub.s32 1, %v244
  %v246 = vrot.slane %v237, %v245
  %v249 = vmul.f32 %v233, %v242
  %v250 = vmul.f32 %v234, %v246
  %v251 = vmul.f32 %v235, %v242
  %v252 = vmul.f32 %v236, %v246
  %v253 = vld [vmem:[%s5] sm:$0x3]
  %v255 = vlaneseq
  %v256 = vshrl.u32 %v255, 7
  %v257 = vsub.s32 0, %v256
  %v258 = vrot.slane %v253, %v257
  %v259 = vlaneseq
  %v260 = vshrl.u32 %v259, 7
  %v261 = vsub.s32 1, %v260
  %v262 = vrot.slane %v253, %v261
  %v265 = vadd.f32 %v249, %v258
  %v266 = vadd.f32 %v250, %v262
  %v267 = vadd.f32 %v251, %v258
  %v268 = vadd.f32 %v252, %v262
  %269 = vst [vmem:[%s6] sm:$0xff] %v265
  %270 = vst [vmem:[%s6 + $0x8] sm:$0xff] %v266
  %271 = vst [vmem:[%s6 + $0x10] sm:$0xff] %v267
  %272 = vst [vmem:[%s6 + $0x18] sm:$0xff] %v268
  // Predicated region
  $region26: #{_lambda_.23} parent=0 // pred_check
    _
  $region27: #{_lambda_.23} parent=0 // pred_check_branch
    %274 = sbr.rel (0) target = $region29
  $region28: #{_lambda_.23} parent=0 // pred_region
    _
  $region29: #{_lambda_.23} parent=0 // pred_fallthru
    _
  // Predicated region
  $region30: #{_lambda_.23} parent=0 // pred_check
    _
  $region31: #{_lambda_.23} parent=0 // pred_check_branch
    %276 = sbr.rel (0) target = $region33
  $region32: #{_lambda_.23} parent=0 // pred_region
    _
  $region33: #{_lambda_.23} parent=0 // pred_fallthru
    _

</llo_original>
